<compile_context>
chip_gen: v6e
topology: v6e:2x2x1
jax: 0.10.0
libtpu: 0.0.40
codegen_flags: <defaults>
</compile_context>

<pallas_src>
import jax
import jax.numpy as jnp
from jax.experimental import pallas as pl
from jax.experimental.pallas import tpu as pltpu

_HP = jax.lax.Precision.HIGHEST
_EPS = 1e-5


def _abtc_kernel(x_ref, w1_ref, b1_ref, m_ref, v_ref, w3_ref, b3_ref, o_ref):
    # x_ref : (1, Cin, TP)      w1_ref: (mid, Cin)   b1_ref: (mid, 1)
    # m_ref : (S, mid, mid)     v_ref : (S, mid, 1)
    # w3_ref: (Cout, mid)       b3_ref: (Cout, 1)
    # o_ref : (1, S, Cout, TP)
    x = x_ref[0]                                                    # (Cin, TP)
    h1 = jnp.dot(w1_ref[...], x,
                 preferred_element_type=jnp.float32, precision=_HP)
    h1 = jnp.maximum(h1 + b1_ref[...], 0.0)                         # (mid, TP)

    w3 = w3_ref[...]
    b3 = b3_ref[...]
    num_subcells = m_ref.shape[0]
    for s in range(num_subcells):                                   # small static unroll
        h2 = jnp.dot(m_ref[s], h1,
                     preferred_element_type=jnp.float32, precision=_HP)
        h2 = jnp.maximum(h2 + v_ref[s], 0.0)                        # (mid, TP)
        o = jnp.dot(w3, h2,
                    preferred_element_type=jnp.float32, precision=_HP)
        o_ref[0, s] = jnp.maximum(o + b3, 0.0)                      # (Cout, TP)


def _fold_params(p, scale_factor):
    """Fold eval-mode BatchNorms into the conv weights / biases and collapse
    the three stride==kernel transpose convs into one (S, mid, mid) matrix +
    (S, mid) bias per output sub-cell."""
    s0, s1, s2 = scale_factor

    g1 = p["bn1_g"] / jnp.sqrt(p["bn1_v"] + _EPS)
    w1eff = g1[:, None] * p["w1"][:, :, 0, 0, 0]                    # (mid, Cin)
    b1eff = g1 * (p["b1"] - p["bn1_m"]) + p["bn1_b"]                # (mid,)

    A = p["wt0"][:, :, :, 0, 0]                                     # (in, out, s0)
    B = p["wt1"][:, :, 0, :, 0]                                     # (in, out, s1)
    C = p["wt2"][:, :, 0, 0, :]                                     # (in, out, s2)
    bt0, bt1, bt2 = p["bt0"], p["bt1"], p["bt2"]
    g2 = p["bn2_g"] / jnp.sqrt(p["bn2_v"] + _EPS)

    m_list, v_list = [], []
    for a in range(s0):
        for b in range(s1):
            for c in range(s2):
                Aa, Bb, Cc = A[:, :, a], B[:, :, b], C[:, :, c]
                m_abc = jnp.matmul(Cc.T,
                                   jnp.matmul(Bb.T, Aa.T, precision=_HP),
                                   precision=_HP)
                v_abc = (jnp.matmul(Cc.T,
                                    jnp.matmul(Bb.T, bt0, precision=_HP) + bt1,
                                    precision=_HP) + bt2)
                m_list.append(g2[:, None] * m_abc)
                v_list.append(g2 * (v_abc - p["bn2_m"]) + p["bn2_b"])
    m_eff = jnp.stack(m_list, axis=0)                               # (S, mid, mid)
    v_eff = jnp.stack(v_list, axis=0)[:, :, None]                   # (S, mid, 1)

    g3 = p["bn3_g"] / jnp.sqrt(p["bn3_v"] + _EPS)
    w3eff = g3[:, None] * p["w3"][:, :, 0, 0, 0]                    # (Cout, mid)
    b3eff = (g3 * (p["b3"] - p["bn3_m"]) + p["bn3_b"])[:, None]     # (Cout, 1)

    return (w1eff.astype(jnp.float32), b1eff[:, None].astype(jnp.float32),
            m_eff.astype(jnp.float32), v_eff.astype(jnp.float32),
            w3eff.astype(jnp.float32), b3eff.astype(jnp.float32))


def _pick_spatial_tile(p_total, max_lanes=2048):
    """Largest lane-dense tile (multiple of 128) dividing P, capped for VMEM."""
    if p_total <= max_lanes or p_total % 128 != 0:
        return p_total
    for t in range(max_lanes, 127, -128):
        if p_total % t == 0:
            return t
    return p_total


def asym_bottleneck_transpose_conv_forward(x, params, scale_factor=(2, 2, 2)):
    """x: (N, Cin, D, H, W) f32. Returns (N, Cout, D*s0, H*s1, W*s2) f32."""
    s0, s1, s2 = scale_factor
    n, cin, d, h, w = x.shape
    w1, b1, m_eff, v_eff, w3, b3 = _fold_params(params, scale_factor)
    mid = w1.shape[0]
    cout = w3.shape[0]
    num_sub = s0 * s1 * s2
    p_total = d * h * w

    x_flat = x.reshape(n, cin, p_total).astype(jnp.float32)
    tp = _pick_spatial_tile(p_total)
    num_tiles = p_total // tp
    assert tp * num_tiles == p_total

    grid_spec = pltpu.PrefetchScalarGridSpec(
        num_scalar_prefetch=0,
        grid=(n, num_tiles),
        in_specs=[
            pl.BlockSpec((1, cin, tp), lambda i, t: (i, 0, t)),
            pl.BlockSpec((mid, cin), lambda i, t: (0, 0)),
            pl.BlockSpec((mid, 1), lambda i, t: (0, 0)),
            pl.BlockSpec((num_sub, mid, mid), lambda i, t: (0, 0, 0)),
            pl.BlockSpec((num_sub, mid, 1), lambda i, t: (0, 0, 0)),
            pl.BlockSpec((cout, mid), lambda i, t: (0, 0)),
            pl.BlockSpec((cout, 1), lambda i, t: (0, 0)),
        ],
        out_specs=pl.BlockSpec((1, num_sub, cout, tp), lambda i, t: (i, 0, 0, t)),
    )

    flops = 2 * n * p_total * (mid * cin + num_sub * (mid * mid + cout * mid))
    bytes_accessed = 4 * n * p_total * (cin + num_sub * cout)
    cost = pl.CostEstimate(flops=flops, transcendentals=0,
                           bytes_accessed=bytes_accessed)

    out_flat = pl.pallas_call(
        _abtc_kernel,
        out_shape=jax.ShapeDtypeStruct((n, num_sub, cout, p_total), jnp.float32),
        grid_spec=grid_spec,
        compiler_params=pltpu.CompilerParams(
            dimension_semantics=("parallel", "parallel")),
        cost_estimate=cost,
    )(x_flat, w1, b1, m_eff, v_eff, w3, b3)

    # depth-to-space scatter (layout plumbing, done outside the kernel)
    out = out_flat.reshape(n, s0, s1, s2, cout, d, h, w)
    out = jnp.transpose(out, (0, 4, 5, 1, 6, 2, 7, 3))
    return out.reshape(n, cout, d * s0, h * s1, w * s2)


# ---------------------------------------------------------------------------
# pure-JAX reference (applies the PyTorch layer sequence literally, eval mode)
# ---------------------------------------------------------------------------
def _reference(x, p, scale_factor):
    s0, s1, s2 = scale_factor

    def bn(y, g, b, m, v):
        sc = (g / jnp.sqrt(v + _EPS))[None, :, None, None, None]
        return (y - m[None, :, None, None, None]) * sc + b[None, :, None, None, None]

    def bias(b):
        return b[None, :, None, None, None]

    y = jnp.einsum("oi,nidhw->nodhw", p["w1"][:, :, 0, 0, 0], x,
                   precision=_HP) + bias(p["b1"])
    y = jax.nn.relu(bn(y, p["bn1_g"], p["bn1_b"], p["bn1_m"], p["bn1_v"]))
    n, mid, d, h, w = y.shape

    t = jnp.einsum("nidhw,ioa->nodahw", y, p["wt0"][:, :, :, 0, 0], precision=_HP)
    z = t.reshape(n, mid, d * s0, h, w) + bias(p["bt0"])
    t = jnp.einsum("nidhw,iob->nodhbw", z, p["wt1"][:, :, 0, :, 0], precision=_HP)
    z = t.reshape(n, mid, d * s0, h * s1, w) + bias(p["bt1"])
    t = jnp.einsum("nidhw,ioc->nodhwc", z, p["wt2"][:, :, 0, 0, :], precision=_HP)
    z = t.reshape(n, mid, d * s0, h * s1, w * s2) + bias(p["bt2"])
    z = jax.nn.relu(bn(z, p["bn2_g"], p["bn2_b"], p["bn2_m"], p["bn2_v"]))

    o = jnp.einsum("oi,nidhw->nodhw", p["w3"][:, :, 0, 0, 0], z,
                   precision=_HP) + bias(p["b3"])
    return jax.nn.relu(bn(o, p["bn3_g"], p["bn3_b"], p["bn3_m"], p["bn3_v"]))


def _init_params(key, cin, cout, compress_factor, scale_factor):
    mid = cin // compress_factor
    s0, s1, s2 = scale_factor
    ks = jax.random.split(key, 22)

    def nrm(k, shape, scale=0.3):
        return scale * jax.random.normal(k, shape, dtype=jnp.float32)

    p = {
        "w1": nrm(ks[0], (mid, cin, 1, 1, 1)),
        "b1": nrm(ks[1], (mid,), 0.1),
        "bn1_g": 1.0 + 0.1 * jax.random.normal(ks[2], (mid,), dtype=jnp.float32),
        "bn1_b": nrm(ks[3], (mid,), 0.1),
        "bn1_m": nrm(ks[4], (mid,), 0.1),
        "bn1_v": jax.random.uniform(ks[5], (mid,), jnp.float32, 0.5, 1.5),
        "wt0": nrm(ks[6], (mid, mid, s0, 1, 1)),
        "bt0": nrm(ks[7], (mid,), 0.1),
        "wt1": nrm(ks[8], (mid, mid, 1, s1, 1)),
        "bt1": nrm(ks[9], (mid,), 0.1),
        "wt2": nrm(ks[10], (mid, mid, 1, 1, s2)),
        "bt2": nrm(ks[11], (mid,), 0.1),
        "bn2_g": 1.0 + 0.1 * jax.random.normal(ks[12], (mid,), dtype=jnp.float32),
        "bn2_b": nrm(ks[13], (mid,), 0.1),
        "bn2_m": nrm(ks[14], (mid,), 0.1),
        "bn2_v": jax.random.uniform(ks[15], (mid,), jnp.float32, 0.5, 1.5),
        "w3": nrm(ks[16], (cout, mid, 1, 1, 1)),
        "b3": nrm(ks[17], (cout,), 0.1),
        "bn3_g": 1.0 + 0.1 * jax.random.normal(ks[18], (cout,), dtype=jnp.float32),
        "bn3_b": nrm(ks[19], (cout,), 0.1),
        "bn3_m": nrm(ks[20], (cout,), 0.1),
        "bn3_v": jax.random.uniform(ks[21], (cout,), jnp.float32, 0.5, 1.5),
    }
    return p


if __name__ == "__main__":
    in_channels, out_channels = 16, 8
    compress_factor = 2
    scale_factor = (2, 2, 2)
    batch, depth, height, width = 2, 4, 8, 8

    key = jax.random.PRNGKey(0)
    k_param, k_x = jax.random.split(key)
    params = _init_params(k_param, in_channels, out_channels,
                          compress_factor, scale_factor)
    x = jax.random.normal(k_x, (batch, in_channels, depth, height, width),
                          dtype=jnp.float32)

    out = asym_bottleneck_transpose_conv_forward(x, params, scale_factor)
    out = jax.block_until_ready(out)

    ref = _reference(x, params, scale_factor)
    assert out.shape == (batch, out_channels,
                         depth * scale_factor[0],
                         height * scale_factor[1],
                         width * scale_factor[2]), out.shape
    assert jnp.allclose(out, ref, atol=1e-4, rtol=1e-4), (
        float(jnp.max(jnp.abs(out - ref))))

    print("KERNEL_OK")
</pallas_src>

<mosaic_0001>
module attributes {stable_mosaic.version = 11 : i64} {
  func.func @_abtc_kernel(%arg0: i32, %arg1: i32, %arg2: memref<1x16x256xf32, #tpu.memory_space<vmem>>, %arg3: memref<8x16xf32, #tpu.memory_space<vmem>>, %arg4: memref<8x1xf32, #tpu.memory_space<vmem>>, %arg5: memref<8x8x8xf32, #tpu.memory_space<vmem>>, %arg6: memref<8x8x1xf32, #tpu.memory_space<vmem>>, %arg7: memref<8x8xf32, #tpu.memory_space<vmem>>, %arg8: memref<8x1xf32, #tpu.memory_space<vmem>>, %arg9: memref<1x8x8x256xf32, #tpu.memory_space<vmem>>) attributes {dimension_semantics = [#tpu.dimension_semantics<parallel>, #tpu.dimension_semantics<parallel>], iteration_bounds = array<i64: 2, 1>, scalar_prefetch = 0 : i64, scratch_operands = 0 : i64, tpu.core_type = #tpu.core_type<tc>, window_params = [{transform_indices = @transform_0, window_bounds = array<i64: 1, 16, 256>}, {pipeline_mode = #tpu.pipeline_mode<synchronous>, transform_indices = @transform_1, window_bounds = array<i64: 8, 16>}, {pipeline_mode = #tpu.pipeline_mode<synchronous>, transform_indices = @transform_2, window_bounds = array<i64: 8, 1>}, {pipeline_mode = #tpu.pipeline_mode<synchronous>, transform_indices = @transform_3, window_bounds = array<i64: 8, 8, 8>}, {pipeline_mode = #tpu.pipeline_mode<synchronous>, transform_indices = @transform_4, window_bounds = array<i64: 8, 8, 1>}, {pipeline_mode = #tpu.pipeline_mode<synchronous>, transform_indices = @transform_5, window_bounds = array<i64: 8, 8>}, {pipeline_mode = #tpu.pipeline_mode<synchronous>, transform_indices = @transform_6, window_bounds = array<i64: 8, 1>}, {transform_indices = @transform_7, window_bounds = array<i64: 1, 8, 8, 256>}]} {
    %c0 = arith.constant 0 : index
    %c0_0 = arith.constant 0 : index
    %c0_1 = arith.constant 0 : index
    %0 = vector.load %arg2[%c0, %c0_0, %c0_1] : memref<1x16x256xf32, #tpu.memory_space<vmem>>, vector<1x16x256xf32>
    %1 = vector.shape_cast %0 : vector<1x16x256xf32> to vector<16x256xf32>
    %c0_2 = arith.constant 0 : index
    %c0_3 = arith.constant 0 : index
    %2 = vector.load %arg3[%c0_2, %c0_3] : memref<8x16xf32, #tpu.memory_space<vmem>>, vector<8x16xf32>
    %cst = arith.constant dense<0.000000e+00> : vector<8x256xf32>
    %3 = tpu.matmul %2, %1, %cst {dimension_numbers = #tpu.dot_dimension_numbers<[1], [0], [0], [1], [0, 0, 1, 1], [], []>, precision = #tpu.contract_precision<fp32>} : vector<8x16xf32>, vector<16x256xf32>, vector<8x256xf32> -> vector<8x256xf32>
    %c0_4 = arith.constant 0 : index
    %c0_5 = arith.constant 0 : index
    %4 = vector.load %arg4[%c0_4, %c0_5] : memref<8x1xf32, #tpu.memory_space<vmem>>, vector<8x1xf32>
    %5 = vector.broadcast %4 : vector<8x1xf32> to vector<8x256xf32>
    %6 = arith.addf %3, %5 : vector<8x256xf32>
    %cst_6 = arith.constant 0.000000e+00 : f32
    %7 = vector.broadcast %cst_6 : f32 to vector<8x256xf32>
    %8 = arith.maximumf %6, %7 : vector<8x256xf32>
    %c0_7 = arith.constant 0 : index
    %c0_8 = arith.constant 0 : index
    %9 = vector.load %arg7[%c0_7, %c0_8] : memref<8x8xf32, #tpu.memory_space<vmem>>, vector<8x8xf32>
    %c0_9 = arith.constant 0 : index
    %c0_10 = arith.constant 0 : index
    %10 = vector.load %arg8[%c0_9, %c0_10] : memref<8x1xf32, #tpu.memory_space<vmem>>, vector<8x1xf32>
    %c0_11 = arith.constant 0 : index
    %c0_12 = arith.constant 0 : index
    %c0_13 = arith.constant 0 : index
    %11 = vector.load %arg5[%c0_11, %c0_12, %c0_13] : memref<8x8x8xf32, #tpu.memory_space<vmem>>, vector<1x8x8xf32>
    %12 = vector.shape_cast %11 : vector<1x8x8xf32> to vector<8x8xf32>
    %cst_14 = arith.constant dense<0.000000e+00> : vector<8x256xf32>
    %13 = tpu.matmul %12, %8, %cst_14 {dimension_numbers = #tpu.dot_dimension_numbers<[1], [0], [0], [1], [0, 0, 1, 1], [], []>, precision = #tpu.contract_precision<fp32>} : vector<8x8xf32>, vector<8x256xf32>, vector<8x256xf32> -> vector<8x256xf32>
    %c0_15 = arith.constant 0 : index
    %c0_16 = arith.constant 0 : index
    %c0_17 = arith.constant 0 : index
    %14 = vector.load %arg6[%c0_15, %c0_16, %c0_17] : memref<8x8x1xf32, #tpu.memory_space<vmem>>, vector<1x8x1xf32>
    %15 = vector.shape_cast %14 : vector<1x8x1xf32> to vector<8x1xf32>
    %16 = vector.broadcast %15 : vector<8x1xf32> to vector<8x256xf32>
    %17 = arith.addf %13, %16 : vector<8x256xf32>
    %cst_18 = arith.constant 0.000000e+00 : f32
    %18 = vector.broadcast %cst_18 : f32 to vector<8x256xf32>
    %19 = arith.maximumf %17, %18 : vector<8x256xf32>
    %cst_19 = arith.constant dense<0.000000e+00> : vector<8x256xf32>
    %20 = tpu.matmul %9, %19, %cst_19 {dimension_numbers = #tpu.dot_dimension_numbers<[1], [0], [0], [1], [0, 0, 1, 1], [], []>, precision = #tpu.contract_precision<fp32>} : vector<8x8xf32>, vector<8x256xf32>, vector<8x256xf32> -> vector<8x256xf32>
    %21 = vector.broadcast %10 : vector<8x1xf32> to vector<8x256xf32>
    %22 = arith.addf %20, %21 : vector<8x256xf32>
    %cst_20 = arith.constant 0.000000e+00 : f32
    %23 = vector.broadcast %cst_20 : f32 to vector<8x256xf32>
    %24 = arith.maximumf %22, %23 : vector<8x256xf32>
    %c0_21 = arith.constant 0 : index
    %c0_22 = arith.constant 0 : index
    %c0_23 = arith.constant 0 : index
    %c0_24 = arith.constant 0 : index
    %25 = vector.load %arg9[%c0_21, %c0_22, %c0_23, %c0_24] : memref<1x8x8x256xf32, #tpu.memory_space<vmem>>, vector<1x1x8x256xf32>
    %26 = vector.shape_cast %25 : vector<1x1x8x256xf32> to vector<8x256xf32>
    %27 = vector.shape_cast %24 : vector<8x256xf32> to vector<1x1x8x256xf32>
    tpu.vector_store %arg9[%c0_21, %c0_22, %c0_23, %c0_24], %27 {strides = array<i32>} : memref<1x8x8x256xf32, #tpu.memory_space<vmem>>, vector<1x1x8x256xf32>,
    %c1 = arith.constant 1 : index
    %c0_25 = arith.constant 0 : index
    %c0_26 = arith.constant 0 : index
    %28 = vector.load %arg5[%c1, %c0_25, %c0_26] : memref<8x8x8xf32, #tpu.memory_space<vmem>>, vector<1x8x8xf32>
    %29 = vector.shape_cast %28 : vector<1x8x8xf32> to vector<8x8xf32>
    %cst_27 = arith.constant dense<0.000000e+00> : vector<8x256xf32>
    %30 = tpu.matmul %29, %8, %cst_27 {dimension_numbers = #tpu.dot_dimension_numbers<[1], [0], [0], [1], [0, 0, 1, 1], [], []>, precision = #tpu.contract_precision<fp32>} : vector<8x8xf32>, vector<8x256xf32>, vector<8x256xf32> -> vector<8x256xf32>
    %c1_28 = arith.constant 1 : index
    %c0_29 = arith.constant 0 : index
    %c0_30 = arith.constant 0 : index
    %31 = vector.load %arg6[%c1_28, %c0_29, %c0_30] : memref<8x8x1xf32, #tpu.memory_space<vmem>>, vector<1x8x1xf32>
    %32 = vector.shape_cast %31 : vector<1x8x1xf32> to vector<8x1xf32>
    %33 = vector.broadcast %32 : vector<8x1xf32> to vector<8x256xf32>
    %34 = arith.addf %30, %33 : vector<8x256xf32>
    %cst_31 = arith.constant 0.000000e+00 : f32
    %35 = vector.broadcast %cst_31 : f32 to vector<8x256xf32>
    %36 = arith.maximumf %34, %35 : vector<8x256xf32>
    %cst_32 = arith.constant dense<0.000000e+00> : vector<8x256xf32>
    %37 = tpu.matmul %9, %36, %cst_32 {dimension_numbers = #tpu.dot_dimension_numbers<[1], [0], [0], [1], [0, 0, 1, 1], [], []>, precision = #tpu.contract_precision<fp32>} : vector<8x8xf32>, vector<8x256xf32>, vector<8x256xf32> -> vector<8x256xf32>
    %38 = vector.broadcast %10 : vector<8x1xf32> to vector<8x256xf32>
    %39 = arith.addf %37, %38 : vector<8x256xf32>
    %cst_33 = arith.constant 0.000000e+00 : f32
    %40 = vector.broadcast %cst_33 : f32 to vector<8x256xf32>
    %41 = arith.maximumf %39, %40 : vector<8x256xf32>
    %c0_34 = arith.constant 0 : index
    %c1_35 = arith.constant 1 : index
    %c0_36 = arith.constant 0 : index
    %c0_37 = arith.constant 0 : index
    %42 = vector.load %arg9[%c0_34, %c1_35, %c0_36, %c0_37] : memref<1x8x8x256xf32, #tpu.memory_space<vmem>>, vector<1x1x8x256xf32>
    %43 = vector.shape_cast %42 : vector<1x1x8x256xf32> to vector<8x256xf32>
    %44 = vector.shape_cast %41 : vector<8x256xf32> to vector<1x1x8x256xf32>
    tpu.vector_store %arg9[%c0_34, %c1_35, %c0_36, %c0_37], %44 {strides = array<i32>} : memref<1x8x8x256xf32, #tpu.memory_space<vmem>>, vector<1x1x8x256xf32>,
    %c2 = arith.constant 2 : index
    %c0_38 = arith.constant 0 : index
    %c0_39 = arith.constant 0 : index
    %45 = vector.load %arg5[%c2, %c0_38, %c0_39] : memref<8x8x8xf32, #tpu.memory_space<vmem>>, vector<1x8x8xf32>
    %46 = vector.shape_cast %45 : vector<1x8x8xf32> to vector<8x8xf32>
    %cst_40 = arith.constant dense<0.000000e+00> : vector<8x256xf32>
    %47 = tpu.matmul %46, %8, %cst_40 {dimension_numbers = #tpu.dot_dimension_numbers<[1], [0], [0], [1], [0, 0, 1, 1], [], []>, precision = #tpu.contract_precision<fp32>} : vector<8x8xf32>, vector<8x256xf32>, vector<8x256xf32> -> vector<8x256xf32>
    %c2_41 = arith.constant 2 : index
    %c0_42 = arith.constant 0 : index
    %c0_43 = arith.constant 0 : index
    %48 = vector.load %arg6[%c2_41, %c0_42, %c0_43] : memref<8x8x1xf32, #tpu.memory_space<vmem>>, vector<1x8x1xf32>
    %49 = vector.shape_cast %48 : vector<1x8x1xf32> to vector<8x1xf32>
    %50 = vector.broadcast %49 : vector<8x1xf32> to vector<8x256xf32>
    %51 = arith.addf %47, %50 : vector<8x256xf32>
    %cst_44 = arith.constant 0.000000e+00 : f32
    %52 = vector.broadcast %cst_44 : f32 to vector<8x256xf32>
    %53 = arith.maximumf %51, %52 : vector<8x256xf32>
    %cst_45 = arith.constant dense<0.000000e+00> : vector<8x256xf32>
    %54 = tpu.matmul %9, %53, %cst_45 {dimension_numbers = #tpu.dot_dimension_numbers<[1], [0], [0], [1], [0, 0, 1, 1], [], []>, precision = #tpu.contract_precision<fp32>} : vector<8x8xf32>, vector<8x256xf32>, vector<8x256xf32> -> vector<8x256xf32>
    %55 = vector.broadcast %10 : vector<8x1xf32> to vector<8x256xf32>
    %56 = arith.addf %54, %55 : vector<8x256xf32>
    %cst_46 = arith.constant 0.000000e+00 : f32
    %57 = vector.broadcast %cst_46 : f32 to vector<8x256xf32>
    %58 = arith.maximumf %56, %57 : vector<8x256xf32>
    %c0_47 = arith.constant 0 : index
    %c2_48 = arith.constant 2 : index
    %c0_49 = arith.constant 0 : index
    %c0_50 = arith.constant 0 : index
    %59 = vector.load %arg9[%c0_47, %c2_48, %c0_49, %c0_50] : memref<1x8x8x256xf32, #tpu.memory_space<vmem>>, vector<1x1x8x256xf32>
    %60 = vector.shape_cast %59 : vector<1x1x8x256xf32> to vector<8x256xf32>
    %61 = vector.shape_cast %58 : vector<8x256xf32> to vector<1x1x8x256xf32>
    tpu.vector_store %arg9[%c0_47, %c2_48, %c0_49, %c0_50], %61 {strides = array<i32>} : memref<1x8x8x256xf32, #tpu.memory_space<vmem>>, vector<1x1x8x256xf32>,
    %c3 = arith.constant 3 : index
    %c0_51 = arith.constant 0 : index
    %c0_52 = arith.constant 0 : index
    %62 = vector.load %arg5[%c3, %c0_51, %c0_52] : memref<8x8x8xf32, #tpu.memory_space<vmem>>, vector<1x8x8xf32>
    %63 = vector.shape_cast %62 : vector<1x8x8xf32> to vector<8x8xf32>
    %cst_53 = arith.constant dense<0.000000e+00> : vector<8x256xf32>
    %64 = tpu.matmul %63, %8, %cst_53 {dimension_numbers = #tpu.dot_dimension_numbers<[1], [0], [0], [1], [0, 0, 1, 1], [], []>, precision = #tpu.contract_precision<fp32>} : vector<8x8xf32>, vector<8x256xf32>, vector<8x256xf32> -> vector<8x256xf32>
    %c3_54 = arith.constant 3 : index
    %c0_55 = arith.constant 0 : index
    %c0_56 = arith.constant 0 : index
    %65 = vector.load %arg6[%c3_54, %c0_55, %c0_56] : memref<8x8x1xf32, #tpu.memory_space<vmem>>, vector<1x8x1xf32>
    %66 = vector.shape_cast %65 : vector<1x8x1xf32> to vector<8x1xf32>
    %67 = vector.broadcast %66 : vector<8x1xf32> to vector<8x256xf32>
    %68 = arith.addf %64, %67 : vector<8x256xf32>
    %cst_57 = arith.constant 0.000000e+00 : f32
    %69 = vector.broadcast %cst_57 : f32 to vector<8x256xf32>
    %70 = arith.maximumf %68, %69 : vector<8x256xf32>
    %cst_58 = arith.constant dense<0.000000e+00> : vector<8x256xf32>
    %71 = tpu.matmul %9, %70, %cst_58 {dimension_numbers = #tpu.dot_dimension_numbers<[1], [0], [0], [1], [0, 0, 1, 1], [], []>, precision = #tpu.contract_precision<fp32>} : vector<8x8xf32>, vector<8x256xf32>, vector<8x256xf32> -> vector<8x256xf32>
    %72 = vector.broadcast %10 : vector<8x1xf32> to vector<8x256xf32>
    %73 = arith.addf %71, %72 : vector<8x256xf32>
    %cst_59 = arith.constant 0.000000e+00 : f32
    %74 = vector.broadcast %cst_59 : f32 to vector<8x256xf32>
    %75 = arith.maximumf %73, %74 : vector<8x256xf32>
    %c0_60 = arith.constant 0 : index
    %c3_61 = arith.constant 3 : index
    %c0_62 = arith.constant 0 : index
    %c0_63 = arith.constant 0 : index
    %76 = vector.load %arg9[%c0_60, %c3_61, %c0_62, %c0_63] : memref<1x8x8x256xf32, #tpu.memory_space<vmem>>, vector<1x1x8x256xf32>
    %77 = vector.shape_cast %76 : vector<1x1x8x256xf32> to vector<8x256xf32>
    %78 = vector.shape_cast %75 : vector<8x256xf32> to vector<1x1x8x256xf32>
    tpu.vector_store %arg9[%c0_60, %c3_61, %c0_62, %c0_63], %78 {strides = array<i32>} : memref<1x8x8x256xf32, #tpu.memory_space<vmem>>, vector<1x1x8x256xf32>,
    %c4 = arith.constant 4 : index
    %c0_64 = arith.constant 0 : index
    %c0_65 = arith.constant 0 : index
    %79 = vector.load %arg5[%c4, %c0_64, %c0_65] : memref<8x8x8xf32, #tpu.memory_space<vmem>>, vector<1x8x8xf32>
    %80 = vector.shape_cast %79 : vector<1x8x8xf32> to vector<8x8xf32>
    %cst_66 = arith.constant dense<0.000000e+00> : vector<8x256xf32>
    %81 = tpu.matmul %80, %8, %cst_66 {dimension_numbers = #tpu.dot_dimension_numbers<[1], [0], [0], [1], [0, 0, 1, 1], [], []>, precision = #tpu.contract_precision<fp32>} : vector<8x8xf32>, vector<8x256xf32>, vector<8x256xf32> -> vector<8x256xf32>
    %c4_67 = arith.constant 4 : index
    %c0_68 = arith.constant 0 : index
    %c0_69 = arith.constant 0 : index
    %82 = vector.load %arg6[%c4_67, %c0_68, %c0_69] : memref<8x8x1xf32, #tpu.memory_space<vmem>>, vector<1x8x1xf32>
    %83 = vector.shape_cast %82 : vector<1x8x1xf32> to vector<8x1xf32>
    %84 = vector.broadcast %83 : vector<8x1xf32> to vector<8x256xf32>
    %85 = arith.addf %81, %84 : vector<8x256xf32>
    %cst_70 = arith.constant 0.000000e+00 : f32
    %86 = vector.broadcast %cst_70 : f32 to vector<8x256xf32>
    %87 = arith.maximumf %85, %86 : vector<8x256xf32>
    %cst_71 = arith.constant dense<0.000000e+00> : vector<8x256xf32>
    %88 = tpu.matmul %9, %87, %cst_71 {dimension_numbers = #tpu.dot_dimension_numbers<[1], [0], [0], [1], [0, 0, 1, 1], [], []>, precision = #tpu.contract_precision<fp32>} : vector<8x8xf32>, vector<8x256xf32>, vector<8x256xf32> -> vector<8x256xf32>
    %89 = vector.broadcast %10 : vector<8x1xf32> to vector<8x256xf32>
    %90 = arith.addf %88, %89 : vector<8x256xf32>
    %cst_72 = arith.constant 0.000000e+00 : f32
    %91 = vector.broadcast %cst_72 : f32 to vector<8x256xf32>
    %92 = arith.maximumf %90, %91 : vector<8x256xf32>
    %c0_73 = arith.constant 0 : index
    %c4_74 = arith.constant 4 : index
    %c0_75 = arith.constant 0 : index
    %c0_76 = arith.constant 0 : index
    %93 = vector.load %arg9[%c0_73, %c4_74, %c0_75, %c0_76] : memref<1x8x8x256xf32, #tpu.memory_space<vmem>>, vector<1x1x8x256xf32>
    %94 = vector.shape_cast %93 : vector<1x1x8x256xf32> to vector<8x256xf32>
    %95 = vector.shape_cast %92 : vector<8x256xf32> to vector<1x1x8x256xf32>
    tpu.vector_store %arg9[%c0_73, %c4_74, %c0_75, %c0_76], %95 {strides = array<i32>} : memref<1x8x8x256xf32, #tpu.memory_space<vmem>>, vector<1x1x8x256xf32>,
    %c5 = arith.constant 5 : index
    %c0_77 = arith.constant 0 : index
    %c0_78 = arith.constant 0 : index
    %96 = vector.load %arg5[%c5, %c0_77, %c0_78] : memref<8x8x8xf32, #tpu.memory_space<vmem>>, vector<1x8x8xf32>
    %97 = vector.shape_cast %96 : vector<1x8x8xf32> to vector<8x8xf32>
    %cst_79 = arith.constant dense<0.000000e+00> : vector<8x256xf32>
    %98 = tpu.matmul %97, %8, %cst_79 {dimension_numbers = #tpu.dot_dimension_numbers<[1], [0], [0], [1], [0, 0, 1, 1], [], []>, precision = #tpu.contract_precision<fp32>} : vector<8x8xf32>, vector<8x256xf32>, vector<8x256xf32> -> vector<8x256xf32>
    %c5_80 = arith.constant 5 : index
    %c0_81 = arith.constant 0 : index
    %c0_82 = arith.constant 0 : index
    %99 = vector.load %arg6[%c5_80, %c0_81, %c0_82] : memref<8x8x1xf32, #tpu.memory_space<vmem>>, vector<1x8x1xf32>
    %100 = vector.shape_cast %99 : vector<1x8x1xf32> to vector<8x1xf32>
    %101 = vector.broadcast %100 : vector<8x1xf32> to vector<8x256xf32>
    %102 = arith.addf %98, %101 : vector<8x256xf32>
    %cst_83 = arith.constant 0.000000e+00 : f32
    %103 = vector.broadcast %cst_83 : f32 to vector<8x256xf32>
    %104 = arith.maximumf %102, %103 : vector<8x256xf32>
    %cst_84 = arith.constant dense<0.000000e+00> : vector<8x256xf32>
    %105 = tpu.matmul %9, %104, %cst_84 {dimension_numbers = #tpu.dot_dimension_numbers<[1], [0], [0], [1], [0, 0, 1, 1], [], []>, precision = #tpu.contract_precision<fp32>} : vector<8x8xf32>, vector<8x256xf32>, vector<8x256xf32> -> vector<8x256xf32>
    %106 = vector.broadcast %10 : vector<8x1xf32> to vector<8x256xf32>
    %107 = arith.addf %105, %106 : vector<8x256xf32>
    %cst_85 = arith.constant 0.000000e+00 : f32
    %108 = vector.broadcast %cst_85 : f32 to vector<8x256xf32>
    %109 = arith.maximumf %107, %108 : vector<8x256xf32>
    %c0_86 = arith.constant 0 : index
    %c5_87 = arith.constant 5 : index
    %c0_88 = arith.constant 0 : index
    %c0_89 = arith.constant 0 : index
    %110 = vector.load %arg9[%c0_86, %c5_87, %c0_88, %c0_89] : memref<1x8x8x256xf32, #tpu.memory_space<vmem>>, vector<1x1x8x256xf32>
    %111 = vector.shape_cast %110 : vector<1x1x8x256xf32> to vector<8x256xf32>
    %112 = vector.shape_cast %109 : vector<8x256xf32> to vector<1x1x8x256xf32>
    tpu.vector_store %arg9[%c0_86, %c5_87, %c0_88, %c0_89], %112 {strides = array<i32>} : memref<1x8x8x256xf32, #tpu.memory_space<vmem>>, vector<1x1x8x256xf32>,
    %c6 = arith.constant 6 : index
    %c0_90 = arith.constant 0 : index
    %c0_91 = arith.constant 0 : index
    %113 = vector.load %arg5[%c6, %c0_90, %c0_91] : memref<8x8x8xf32, #tpu.memory_space<vmem>>, vector<1x8x8xf32>
    %114 = vector.shape_cast %113 : vector<1x8x8xf32> to vector<8x8xf32>
    %cst_92 = arith.constant dense<0.000000e+00> : vector<8x256xf32>
    %115 = tpu.matmul %114, %8, %cst_92 {dimension_numbers = #tpu.dot_dimension_numbers<[1], [0], [0], [1], [0, 0, 1, 1], [], []>, precision = #tpu.contract_precision<fp32>} : vector<8x8xf32>, vector<8x256xf32>, vector<8x256xf32> -> vector<8x256xf32>
    %c6_93 = arith.constant 6 : index
    %c0_94 = arith.constant 0 : index
    %c0_95 = arith.constant 0 : index
    %116 = vector.load %arg6[%c6_93, %c0_94, %c0_95] : memref<8x8x1xf32, #tpu.memory_space<vmem>>, vector<1x8x1xf32>
    %117 = vector.shape_cast %116 : vector<1x8x1xf32> to vector<8x1xf32>
    %118 = vector.broadcast %117 : vector<8x1xf32> to vector<8x256xf32>
    %119 = arith.addf %115, %118 : vector<8x256xf32>
    %cst_96 = arith.constant 0.000000e+00 : f32
    %120 = vector.broadcast %cst_96 : f32 to vector<8x256xf32>
    %121 = arith.maximumf %119, %120 : vector<8x256xf32>
    %cst_97 = arith.constant dense<0.000000e+00> : vector<8x256xf32>
    %122 = tpu.matmul %9, %121, %cst_97 {dimension_numbers = #tpu.dot_dimension_numbers<[1], [0], [0], [1], [0, 0, 1, 1], [], []>, precision = #tpu.contract_precision<fp32>} : vector<8x8xf32>, vector<8x256xf32>, vector<8x256xf32> -> vector<8x256xf32>
    %123 = vector.broadcast %10 : vector<8x1xf32> to vector<8x256xf32>
    %124 = arith.addf %122, %123 : vector<8x256xf32>
    %cst_98 = arith.constant 0.000000e+00 : f32
    %125 = vector.broadcast %cst_98 : f32 to vector<8x256xf32>
    %126 = arith.maximumf %124, %125 : vector<8x256xf32>
    %c0_99 = arith.constant 0 : index
    %c6_100 = arith.constant 6 : index
    %c0_101 = arith.constant 0 : index
    %c0_102 = arith.constant 0 : index
    %127 = vector.load %arg9[%c0_99, %c6_100, %c0_101, %c0_102] : memref<1x8x8x256xf32, #tpu.memory_space<vmem>>, vector<1x1x8x256xf32>
    %128 = vector.shape_cast %127 : vector<1x1x8x256xf32> to vector<8x256xf32>
    %129 = vector.shape_cast %126 : vector<8x256xf32> to vector<1x1x8x256xf32>
    tpu.vector_store %arg9[%c0_99, %c6_100, %c0_101, %c0_102], %129 {strides = array<i32>} : memref<1x8x8x256xf32, #tpu.memory_space<vmem>>, vector<1x1x8x256xf32>,
    %c7 = arith.constant 7 : index
    %c0_103 = arith.constant 0 : index
    %c0_104 = arith.constant 0 : index
    %130 = vector.load %arg5[%c7, %c0_103, %c0_104] : memref<8x8x8xf32, #tpu.memory_space<vmem>>, vector<1x8x8xf32>
    %131 = vector.shape_cast %130 : vector<1x8x8xf32> to vector<8x8xf32>
    %cst_105 = arith.constant dense<0.000000e+00> : vector<8x256xf32>
    %132 = tpu.matmul %131, %8, %cst_105 {dimension_numbers = #tpu.dot_dimension_numbers<[1], [0], [0], [1], [0, 0, 1, 1], [], []>, precision = #tpu.contract_precision<fp32>} : vector<8x8xf32>, vector<8x256xf32>, vector<8x256xf32> -> vector<8x256xf32>
    %c7_106 = arith.constant 7 : index
    %c0_107 = arith.constant 0 : index
    %c0_108 = arith.constant 0 : index
    %133 = vector.load %arg6[%c7_106, %c0_107, %c0_108] : memref<8x8x1xf32, #tpu.memory_space<vmem>>, vector<1x8x1xf32>
    %134 = vector.shape_cast %133 : vector<1x8x1xf32> to vector<8x1xf32>
    %135 = vector.broadcast %134 : vector<8x1xf32> to vector<8x256xf32>
    %136 = arith.addf %132, %135 : vector<8x256xf32>
    %cst_109 = arith.constant 0.000000e+00 : f32
    %137 = vector.broadcast %cst_109 : f32 to vector<8x256xf32>
    %138 = arith.maximumf %136, %137 : vector<8x256xf32>
    %cst_110 = arith.constant dense<0.000000e+00> : vector<8x256xf32>
    %139 = tpu.matmul %9, %138, %cst_110 {dimension_numbers = #tpu.dot_dimension_numbers<[1], [0], [0], [1], [0, 0, 1, 1], [], []>, precision = #tpu.contract_precision<fp32>} : vector<8x8xf32>, vector<8x256xf32>, vector<8x256xf32> -> vector<8x256xf32>
    %140 = vector.broadcast %10 : vector<8x1xf32> to vector<8x256xf32>
    %141 = arith.addf %139, %140 : vector<8x256xf32>
    %cst_111 = arith.constant 0.000000e+00 : f32
    %142 = vector.broadcast %cst_111 : f32 to vector<8x256xf32>
    %143 = arith.maximumf %141, %142 : vector<8x256xf32>
    %c0_112 = arith.constant 0 : index
    %c7_113 = arith.constant 7 : index
    %c0_114 = arith.constant 0 : index
    %c0_115 = arith.constant 0 : index
    %144 = vector.load %arg9[%c0_112, %c7_113, %c0_114, %c0_115] : memref<1x8x8x256xf32, #tpu.memory_space<vmem>>, vector<1x1x8x256xf32>
    %145 = vector.shape_cast %144 : vector<1x1x8x256xf32> to vector<8x256xf32>
    %146 = vector.shape_cast %143 : vector<8x256xf32> to vector<1x1x8x256xf32>
    tpu.vector_store %arg9[%c0_112, %c7_113, %c0_114, %c0_115], %146 {strides = array<i32>} : memref<1x8x8x256xf32, #tpu.memory_space<vmem>>, vector<1x1x8x256xf32>,
    return
  }
  func.func @transform_0(%arg0: i32, %arg1: i32) -> (i32, i32, i32) {
    %c0_i32 = arith.constant 0 : i32
    %c0_i32_0 = arith.constant 0 : i32
    return %arg0, %c0_i32, %arg1 : i32, i32, i32
  }
  func.func @transform_1(%arg0: i32, %arg1: i32) -> (i32, i32) {
    %c0_i32 = arith.constant 0 : i32
    %c0_i32_0 = arith.constant 0 : i32
    %c0_i32_1 = arith.constant 0 : i32
    return %c0_i32, %c0_i32_0 : i32, i32
  }
  func.func @transform_2(%arg0: i32, %arg1: i32) -> (i32, i32) {
    %c0_i32 = arith.constant 0 : i32
    %c0_i32_0 = arith.constant 0 : i32
    %c0_i32_1 = arith.constant 0 : i32
    return %c0_i32, %c0_i32_0 : i32, i32
  }
  func.func @transform_3(%arg0: i32, %arg1: i32) -> (i32, i32, i32) {
    %c0_i32 = arith.constant 0 : i32
    %c0_i32_0 = arith.constant 0 : i32
    %c0_i32_1 = arith.constant 0 : i32
    %c0_i32_2 = arith.constant 0 : i32
    return %c0_i32, %c0_i32_0, %c0_i32_1 : i32, i32, i32
  }
  func.func @transform_4(%arg0: i32, %arg1: i32) -> (i32, i32, i32) {
    %c0_i32 = arith.constant 0 : i32
    %c0_i32_0 = arith.constant 0 : i32
    %c0_i32_1 = arith.constant 0 : i32
    %c0_i32_2 = arith.constant 0 : i32
    return %c0_i32, %c0_i32_0, %c0_i32_1 : i32, i32, i32
  }
  func.func @transform_5(%arg0: i32, %arg1: i32) -> (i32, i32) {
    %c0_i32 = arith.constant 0 : i32
    %c0_i32_0 = arith.constant 0 : i32
    %c0_i32_1 = arith.constant 0 : i32
    return %c0_i32, %c0_i32_0 : i32, i32
  }
  func.func @transform_6(%arg0: i32, %arg1: i32) -> (i32, i32) {
    %c0_i32 = arith.constant 0 : i32
    %c0_i32_0 = arith.constant 0 : i32
    %c0_i32_1 = arith.constant 0 : i32
    return %c0_i32, %c0_i32_0 : i32, i32
  }
  func.func @transform_7(%arg0: i32, %arg1: i32) -> (i32, i32, i32, i32) {
    %c0_i32 = arith.constant 0 : i32
    %c0_i32_0 = arith.constant 0 : i32
    %c0_i32_1 = arith.constant 0 : i32
    return %arg0, %c0_i32, %c0_i32_0, %arg1 : i32, i32, i32, i32
  }
}

</mosaic_0001>

<llo_original>
// kernel: tpu_custom_call.1
$region0: #{tpu_custom_call.1}
  #allocation0 [shape = 'u32[]', space=smem, size = 0x4, offset = 0x4, fixed_abs, tag = 'smem constant byte address 0x4 - core index']
  #allocation1 [shape = 'u32[144,128]{1,0:T(1,128)}', space=vmem, size = 0x12000, scoped, tag = 'internal scratch']
  %s0 = inlined_call_operand.vmem [shape: f32[2,16,256], index: 0, kind: input, shape index: {}]
  %s1 = inlined_call_operand.vmem [shape: f32[8,16], index: 1, kind: input, shape index: {}]
  %s2 = inlined_call_operand.vmem [shape: f32[8,1], index: 2, kind: input, shape index: {}]
  %s3 = inlined_call_operand.hbm [shape: f32[8,8,8], index: 3, kind: input, shape index: {}]
  %s4 = inlined_call_operand.vmem [shape: f32[8,8,1], index: 4, kind: input, shape index: {}]
  %s5 = inlined_call_operand.vmem [shape: f32[8,8], index: 5, kind: input, shape index: {}]
  %s6 = inlined_call_operand.vmem [shape: f32[8,1], index: 6, kind: input, shape index: {}]
  %s7 = inlined_call_operand.hbm [shape: f32[2,8,8,256], index: 7, kind: output, shape index: {}]
  %s8 = sld [smem:[#allocation0]]
  $region65: #{tpu_custom_call.1} parent=0
    _
  %s10 = ssub.s32 1, %s8
  %s11 = scalar_select 0, %s10, %s8
  $region1: #{tpu_custom_call.1} parent=0
    #allocation2 [shape = 'u8[32768]{0}', space=vmem, size = 0x8000, scoped, tag = 'input window, operand 3, single buffered']
    #allocation3 [shape = 's32[2]{0}', space=sflag, size = 0x8, scoped, tag = 'scoped memory for tpu_custom_call.1']
    #allocation4 [shape = 's32[2]{0}', space=sflag, size = 0x8, scoped, tag = 'scoped memory for tpu_custom_call.1']
    #allocation5 [shape = 'u8[131072]{0}', space=vmem, size = 0x20000, scoped, tag = 'output window, operand 0']
    %12 = vsyncpa [#allocation3], 0
    %13 = vsyncpa [#allocation4], 0
    %s14 = scalar_lea.sflag [#allocation4], 1
    %15 = vsyncpa %s14, 0
    loop: start=0, step=1, limit=4
    $region2: #{tpu_custom_call.1} parent=1 // loop_pre_header
      _
    $region3: #{tpu_custom_call.1} parent=1 // loop_header
      %s17 = sphi 0, %s21
      %p18 = scmp.ge.s32.totalorder %s17, 4
      %s24 = sphi 0, %s36
      %s25 = sphi 0, %s32
      %s26 = sphi 0, %s24
      %s27 = sphi 0, %s25
      %s28 = sphi 0, %s26
      %s29 = sphi 0, %s27
      %s41 = sphi 0, %s43
      %s44 = sphi 0, %s41
      %s45 = sphi 0, %s44
      %s61 = sphi 0, %s45
      %s65 = sphi 0, %s65
      %s67 = sphi 0, %s65
      %s68 = sphi 0, %s67
      %s82 = sphi 0, %s68
      %s86 = sphi 0, %s86
      %s88 = sphi 0, %s86
      %s89 = sphi 0, %s88
      %s103 = sphi 0, %s89
      %s107 = sphi 0, %s107
      %s109 = sphi 0, %s107
      %s110 = sphi 0, %s109
      %s124 = sphi 0, %s110
      %s128 = sphi 0, %s128
      %s130 = sphi 0, %s128
      %s131 = sphi 0, %s130
      %s145 = sphi 0, %s131
      %s149 = sphi 0, %s149
      %s151 = sphi 0, %s149
      %s152 = sphi 0, %s151
      %s166 = sphi 0, %s152
      %s170 = sphi 0, %s170
      %s172 = sphi 0, %s170
      %s173 = sphi 0, %s172
      %s187 = sphi 0, %s173
      %s195 = sphi 0, %s197
      %s198 = sphi 0, %s195
      %s199 = sphi 0, %s198
      %s215 = sphi 0, %s199
    $region4: #{tpu_custom_call.1} parent=1 // loop_header_branch
      %20 = sbr.rel (%p18) target = $region8
    $region5: #{tpu_custom_call.1} parent=1 // loop_body
      %s22 = ssub.s32 %s17, 1
      %s23 = ssub.s32 %s17, 2
      %s30 = sadd.s32 1, %s25
      %p31 = scmp.ge.s32.totalorder %s30, 1
      %s32 = scalar_select %p31, 0, %s30
      %s33 = sadd.s32 1, %s24
      %s34 = scalar_select %p31, %s33, %s24
      %p35 = scmp.ge.s32.totalorder %s34, 2
      %s36 = scalar_select %p35, 0, %s34
      %s37 = ssub.s32 %s24, %s36
      %s38 = ssub.s32 %s25, %s32
      %s39 = sor.u32 %s37, %s38
      %p40 = scmp.eq.s32.totalorder %s39, 0
      %s42 = sadd.s32 %s41, 1
      %s43 = scalar_select %p40, %s41, %s42
      %p46 = pneg %p40
      %p47 = scmp.eq.s32.totalorder %s17, 1
      %p48 = por %p46, %p47
      %p49 = scmp.ne.s32.totalorder %s41, %s44
      %p50 = scmp.eq.s32.totalorder %s17, 0
      %p51 = por %p49, %p50
      %p52 = scmp.ne.s32.totalorder %s41, %s44
      %p53 = scmp.eq.s32.totalorder %s22, 1
      %p54 = por %p52, %p53
      %p55 = scmp.ne.s32.totalorder %s44, %s45
      %p56 = scmp.eq.s32.totalorder %s22, 0
      %p57 = por %p55, %p56
      %p58 = scmp.ne.s32.totalorder %s44, %s45
      %p59 = scmp.eq.s32.totalorder %s23, 1
      %p60 = por %p58, %p59
      %p62 = scmp.ne.s32.totalorder %s45, %s61
      %p63 = scmp.eq.s32.totalorder %s23, 0
      %p64 = por %p62, %p63
      %s66 = sadd.s32 %s65, 1
      %p69 = scmp.eq.s32.totalorder %s17, 1
      %p70 = scmp.ne.s32.totalorder %s65, %s67
      %p71 = scmp.eq.s32.totalorder %s17, 0
      %p72 = por %p70, %p71
      %p73 = scmp.ne.s32.totalorder %s65, %s67
      %p74 = scmp.eq.s32.totalorder %s22, 1
      %p75 = por %p73, %p74
      %p76 = scmp.ne.s32.totalorder %s67, %s68
      %p77 = scmp.eq.s32.totalorder %s22, 0
      %p78 = por %p76, %p77
      %p79 = scmp.ne.s32.totalorder %s67, %s68
      %p80 = scmp.eq.s32.totalorder %s23, 1
      %p81 = por %p79, %p80
      %p83 = scmp.ne.s32.totalorder %s68, %s82
      %p84 = scmp.eq.s32.totalorder %s23, 0
      %p85 = por %p83, %p84
      %s87 = sadd.s32 %s86, 1
      %p90 = scmp.eq.s32.totalorder %s17, 1
      %p91 = scmp.ne.s32.totalorder %s86, %s88
      %p92 = scmp.eq.s32.totalorder %s17, 0
      %p93 = por %p91, %p92
      %p94 = scmp.ne.s32.totalorder %s86, %s88
      %p95 = scmp.eq.s32.totalorder %s22, 1
      %p96 = por %p94, %p95
      %p97 = scmp.ne.s32.totalorder %s88, %s89
      %p98 = scmp.eq.s32.totalorder %s22, 0
      %p99 = por %p97, %p98
      %p100 = scmp.ne.s32.totalorder %s88, %s89
      %p101 = scmp.eq.s32.totalorder %s23, 1
      %p102 = por %p100, %p101
      %p104 = scmp.ne.s32.totalorder %s89, %s103
      %p105 = scmp.eq.s32.totalorder %s23, 0
      %p106 = por %p104, %p105
      %s108 = sadd.s32 %s107, 1
      %p111 = scmp.eq.s32.totalorder %s17, 1
      %p112 = scmp.ne.s32.totalorder %s107, %s109
      %p113 = scmp.eq.s32.totalorder %s17, 0
      %p114 = por %p112, %p113
      %p115 = scmp.ne.s32.totalorder %s107, %s109
      %p116 = scmp.eq.s32.totalorder %s22, 1
      %p117 = por %p115, %p116
      %p118 = scmp.ne.s32.totalorder %s109, %s110
      %p119 = scmp.eq.s32.totalorder %s22, 0
      %p120 = por %p118, %p119
      %p121 = scmp.ne.s32.totalorder %s109, %s110
      %p122 = scmp.eq.s32.totalorder %s23, 1
      %p123 = por %p121, %p122
      %p125 = scmp.ne.s32.totalorder %s110, %s124
      %p126 = scmp.eq.s32.totalorder %s23, 0
      %p127 = por %p125, %p126
      %s129 = sadd.s32 %s128, 1
      %p132 = scmp.eq.s32.totalorder %s17, 1
      %p133 = scmp.ne.s32.totalorder %s128, %s130
      %p134 = scmp.eq.s32.totalorder %s17, 0
      %p135 = por %p133, %p134
      %p136 = scmp.ne.s32.totalorder %s128, %s130
      %p137 = scmp.eq.s32.totalorder %s22, 1
      %p138 = por %p136, %p137
      %p139 = scmp.ne.s32.totalorder %s130, %s131
      %p140 = scmp.eq.s32.totalorder %s22, 0
      %p141 = por %p139, %p140
      %p142 = scmp.ne.s32.totalorder %s130, %s131
      %p143 = scmp.eq.s32.totalorder %s23, 1
      %p144 = por %p142, %p143
      %p146 = scmp.ne.s32.totalorder %s131, %s145
      %p147 = scmp.eq.s32.totalorder %s23, 0
      %p148 = por %p146, %p147
      %s150 = sadd.s32 %s149, 1
      %p153 = scmp.eq.s32.totalorder %s17, 1
      %p154 = scmp.ne.s32.totalorder %s149, %s151
      %p155 = scmp.eq.s32.totalorder %s17, 0
      %p156 = por %p154, %p155
      %p157 = scmp.ne.s32.totalorder %s149, %s151
      %p158 = scmp.eq.s32.totalorder %s22, 1
      %p159 = por %p157, %p158
      %p160 = scmp.ne.s32.totalorder %s151, %s152
      %p161 = scmp.eq.s32.totalorder %s22, 0
      %p162 = por %p160, %p161
      %p163 = scmp.ne.s32.totalorder %s151, %s152
      %p164 = scmp.eq.s32.totalorder %s23, 1
      %p165 = por %p163, %p164
      %p167 = scmp.ne.s32.totalorder %s152, %s166
      %p168 = scmp.eq.s32.totalorder %s23, 0
      %p169 = por %p167, %p168
      %s171 = sadd.s32 %s170, 1
      %p174 = scmp.eq.s32.totalorder %s17, 1
      %p175 = scmp.ne.s32.totalorder %s170, %s172
      %p176 = scmp.eq.s32.totalorder %s17, 0
      %p177 = por %p175, %p176
      %p178 = scmp.ne.s32.totalorder %s170, %s172
      %p179 = scmp.eq.s32.totalorder %s22, 1
      %p180 = por %p178, %p179
      %p181 = scmp.ne.s32.totalorder %s172, %s173
      %p182 = scmp.eq.s32.totalorder %s22, 0
      %p183 = por %p181, %p182
      %p184 = scmp.ne.s32.totalorder %s172, %s173
      %p185 = scmp.eq.s32.totalorder %s23, 1
      %p186 = por %p184, %p185
      %p188 = scmp.ne.s32.totalorder %s173, %s187
      %p189 = scmp.eq.s32.totalorder %s23, 0
      %p190 = por %p188, %p189
      %s191 = ssub.s32 %s24, %s36
      %s192 = ssub.s32 %s25, %s32
      %s193 = sor.u32 %s191, %s192
      %p194 = scmp.eq.s32.totalorder %s193, 0
      %s196 = sadd.s32 %s195, 1
      %s197 = scalar_select %p194, %s195, %s196
      %p200 = pneg %p194
      %p201 = scmp.eq.s32.totalorder %s17, 1
      %p202 = por %p200, %p201
      %p203 = scmp.ne.s32.totalorder %s195, %s198
      %p204 = scmp.eq.s32.totalorder %s17, 0
      %p205 = por %p203, %p204
      %p206 = scmp.ne.s32.totalorder %s195, %s198
      %p207 = scmp.eq.s32.totalorder %s22, 1
      %p208 = por %p206, %p207
      %p209 = scmp.ne.s32.totalorder %s198, %s199
      %p210 = scmp.eq.s32.totalorder %s22, 0
      %p211 = por %p209, %p210
      %p212 = scmp.ne.s32.totalorder %s198, %s199
      %p213 = scmp.eq.s32.totalorder %s23, 1
      %p214 = por %p212, %p213
      %p216 = scmp.ne.s32.totalorder %s199, %s215
      %p217 = scmp.eq.s32.totalorder %s23, 0
      %p218 = por %p216, %p217
      %p219 = scmp.le.s32.totalorder 1, %s17
      %p220 = scmp.lt.s32.totalorder %s17, 3
      %p221 = pnand %p219, %p220
      %p222 = pneg %p221
      // Predicated region
      $region9: #{tpu_custom_call.1} parent=5 // pred_check
        _
      $region10: #{tpu_custom_call.1} parent=5 // pred_check_branch
        %224 = sbr.rel (%p221) target = $region12
      $region11: #{tpu_custom_call.1} parent=5 // pred_region
        %s225 = ssub.s32 %s17, 1
        // Predicated region
        $region13: #{tpu_custom_call.1} parent=11 // pred_check
          %p226 = pneg %p78
        $region14: #{tpu_custom_call.1} parent=11 // pred_check_branch
          %228 = sbr.rel (%p226) target = $region16
        $region15: #{tpu_custom_call.1} parent=11 // pred_region
          _
        $region16: #{tpu_custom_call.1} parent=11 // pred_fallthru
          _
        // Predicated region
        $region17: #{tpu_custom_call.1} parent=11 // pred_check
          %p229 = pneg %p99
        $region18: #{tpu_custom_call.1} parent=11 // pred_check_branch
          %231 = sbr.rel (%p229) target = $region20
        $region19: #{tpu_custom_call.1} parent=11 // pred_region
          _
        $region20: #{tpu_custom_call.1} parent=11 // pred_fallthru
          _
        // Predicated region
        $region21: #{tpu_custom_call.1} parent=11 // pred_check
          %p232 = pneg %p120
        $region22: #{tpu_custom_call.1} parent=11 // pred_check_branch
          %234 = sbr.rel (%p232) target = $region24
        $region23: #{tpu_custom_call.1} parent=11 // pred_region
          %s236 = ssub.s32 1024, 1024
          %237 = vsyncadd [#allocation3], %s236
          %s238 = sshll.u32 [#allocation2], 4
          %s239 = int_to_ptr.vmem [resolvable:$true] %s238
          %244 = dma.hbm_to_vmem [thread:$0]  %s3, 1024, %s239, [#allocation3], 128, 128, 8
        $region24: #{tpu_custom_call.1} parent=11 // pred_fallthru
          _
        // Predicated region
        $region25: #{tpu_custom_call.1} parent=11 // pred_check
          %p245 = pneg %p141
        $region26: #{tpu_custom_call.1} parent=11 // pred_check_branch
          %247 = sbr.rel (%p245) target = $region28
        $region27: #{tpu_custom_call.1} parent=11 // pred_region
          _
        $region28: #{tpu_custom_call.1} parent=11 // pred_fallthru
          _
        // Predicated region
        $region29: #{tpu_custom_call.1} parent=11 // pred_check
          %p248 = pneg %p162
        $region30: #{tpu_custom_call.1} parent=11 // pred_check_branch
          %250 = sbr.rel (%p248) target = $region32
        $region31: #{tpu_custom_call.1} parent=11 // pred_region
          _
        $region32: #{tpu_custom_call.1} parent=11 // pred_fallthru
          _
        // Predicated region
        $region33: #{tpu_custom_call.1} parent=11 // pred_check
          %p251 = pneg %p183
        $region34: #{tpu_custom_call.1} parent=11 // pred_check_branch
          %253 = sbr.rel (%p251) target = $region36
        $region35: #{tpu_custom_call.1} parent=11 // pred_region
          _
        $region36: #{tpu_custom_call.1} parent=11 // pred_fallthru
          _
      $region12: #{tpu_custom_call.1} parent=5 // pred_fallthru
        _
      %p254 = scmp.lt.s32.totalorder %s17, 2
      // Predicated region
      $region37: #{tpu_custom_call.1} parent=5 // pred_check
        %p255 = pneg %p254
      $region38: #{tpu_custom_call.1} parent=5 // pred_check_branch
        %257 = sbr.rel (%p255) target = $region40
      $region39: #{tpu_custom_call.1} parent=5 // pred_region
        // Predicated region
        $region41: #{tpu_custom_call.1} parent=39 // pred_check
          %p258 = pneg %p51
        $region42: #{tpu_custom_call.1} parent=39 // pred_check_branch
          %260 = sbr.rel (%p258) target = $region44
        $region43: #{tpu_custom_call.1} parent=39 // pred_region
          %s261 = smul.u32 2, %s25
          %p262 = scmp.lt.s32.totalorder %s24, 1
          %s263 = scalar_select %p262, %s24, 1
          %p264 = scmp.lt.s32.totalorder %s261, 1
          %s265 = scalar_select %p264, %s261, 1
          %s266 = smul.addr %s263, 4
          %s267 = sadd.s32 %s265, %s266
          %s268 = smul.addr %s267, 8
          %s269 = scalar_lea.vmem %s0, %s268
          %s270 = smul.u32 2, %s25
        $region44: #{tpu_custom_call.1} parent=39 // pred_fallthru
          _
      $region40: #{tpu_custom_call.1} parent=5 // pred_fallthru
        _
      %p271 = scmp.le.s32.totalorder 1, %s17
      %p272 = scmp.lt.s32.totalorder %s17, 3
      %p273 = pnand %p271, %p272
      %p274 = pneg %p273
      // Predicated region
      $region45: #{tpu_custom_call.1} parent=5 // pred_check
        _
      $region46: #{tpu_custom_call.1} parent=5 // pred_check_branch
        %276 = sbr.rel (%p273) target = $region48
      $region47: #{tpu_custom_call.1} parent=5 // pred_region
        %s277 = ssub.s32 %s17, 1
        // Predicated region
        $region49: #{tpu_custom_call.1} parent=47 // pred_check
          %p278 = pneg %p120
        $region50: #{tpu_custom_call.1} parent=47 // pred_check_branch
          %280 = sbr.rel (%p278) target = $region52
        $region51: #{tpu_custom_call.1} parent=47 // pred_region
          %281 = dma.done [#allocation3], 1024
        $region52: #{tpu_custom_call.1} parent=47 // pred_fallthru
          _
        %s282 = smul.u32 2, %s27
        %p283 = scmp.lt.s32.totalorder %s26, 1
        %s284 = scalar_select %p283, %s26, 1
        %p285 = scmp.lt.s32.totalorder %s282, 1
        %s286 = scalar_select %p285, %s282, 1
        %s287 = smul.addr %s284, 4
        %s288 = sadd.s32 %s286, %s287
        %s289 = smul.addr %s288, 8
        %s290 = scalar_lea.vmem %s0, %s289
        %p291 = pneg %p57
        %p292 = pneg %p54
        %p293 = pneg %p78
        %p294 = pneg %p75
        %p295 = pneg %p99
        %p296 = pneg %p96
        %p297 = pneg %p120
        %p298 = pneg %p117
        %p299 = pneg %p141
        %p300 = pneg %p138
        %p301 = pneg %p162
        %p302 = pneg %p159
        %p303 = pneg %p183
        %p304 = pneg %p180
        %p305 = pneg %p211
        %p306 = pneg %p208
        %s307 = sand.u32 %s198, 1
        %s308 = scalar_lea.sflag [#allocation4], %s307
        %s309 = sand.u32 %s198, 1
        %s310 = smul.addr %s309, 128
        %s311 = scalar_lea.vmem [#allocation5], %s310
        %s312 = smul.u32 2, %s27
        %p313 = scmp.lt.s32.totalorder %s26, 1
        %s314 = scalar_select %p313, %s26, 1
        %p315 = scmp.lt.s32.totalorder %s312, 1
        %s316 = scalar_select %p315, %s312, 1
        %s317 = smul.addr %s314, 4
        %s318 = sadd.s32 %s316, %s317
        %s319 = smul.addr %s318, 8
        %s320 = scalar_lea.vmem %s0, %s319
        %s321 = smul.u32 2, %s27
        %s322 = smul.u32 2, %s27
        %v323 = vld [vmem:[%s320] sm:$0xff]
        %v324 = vld [vmem:[%s320 + $0x8] sm:$0xff]
        %v325 = vld [vmem:[%s320 + $0x10] sm:$0xff]
        %v326 = vld [vmem:[%s320 + $0x18] sm:$0xff]
        %v327 = vld [vmem:[%s1] sm:$0xff]
        %v328 = vld [vmem:[%s2] sm:$0xff]
        %330 = vset.pattern.permute.xlu0 0
        %331 = vperm.xlu0 %330, %v328
        %v332 = vpop.permute.xlu0 %331
        %vm334 = vcmask 130048
        %v336 = vsel %vm334, %v327, 0
        %338 = vmatprep.subr.mxu0 0.0
        %339 = vmatpush1.msra.mxu0 0.0
        %340 = vmatprep.subr.mxu0 0.0
        %341 = vmatpush1.msra.mxu0 0.0
        %342 = vmatprep.subr.mxu0 0.0
        %343 = vmatpush1.msra.mxu0 0.0
        %344 = vmatprep.subr.mxu0 0.0
        %345 = vmatpush1.msra.mxu0 0.0
        %346 = vmatprep.subr.mxu0 0.0
        %347 = vmatpush1.msra.mxu0 0.0
        %348 = vmatprep.subr.mxu0 0.0
        %349 = vmatpush1.msra.mxu0 0.0
        %350 = vmatprep.subr.mxu0 0.0
        %351 = vmatpush1.msra.mxu0 0.0
        %352 = vmatprep.subr.mxu0 0.0
        %353 = vmatpush1.msra.mxu0 0.0
        %354 = vmatprep.subr.mxu0 0.0
        %355 = vmatpush1.msra.mxu0 0.0
        %356 = vmatprep.subr.mxu0 0.0
        %357 = vmatpush1.msra.mxu0 0.0
        %358 = vmatprep.subr.mxu0 0.0
        %359 = vmatpush1.msra.mxu0 0.0
        %360 = vmatprep.subr.mxu0 0.0
        %361 = vmatpush1.msra.mxu0 0.0
        %362 = vmatprep.subr.mxu0 0.0
        %363 = vmatpush1.msra.mxu0 0.0
        %364 = vmatprep.subr.mxu0 0.0
        %365 = vmatpush1.msra.mxu0 0.0
        %v366 = vand.u32 %v326, 4294901760
        %367 = vmatprep.subr.mxu0 %v366
        %v368 = vand.u32 %v325, 4294901760
        %369 = vmatpush1.msra.mxu0 %v368
        %v370 = vand.u32 %v324, 4294901760
        %371 = vmatprep.subr.mxu0 %v370
        %v372 = vand.u32 %v323, 4294901760
        %373 = vmatpush1.msra.mxu0 %v372
        %374 = vmatprep.subr.mxu0 0.0
        %375 = vmatpush2.msra.mxu0 0.0
        %376 = vmatprep.subr.mxu0 0.0
        %377 = vmatpush2.msra.mxu0 0.0
        %378 = vmatprep.subr.mxu0 0.0
        %379 = vmatpush2.msra.mxu0 0.0
        %380 = vmatprep.subr.mxu0 0.0
        %381 = vmatpush2.msra.mxu0 0.0
        %382 = vmatprep.subr.mxu0 0.0
        %383 = vmatpush2.msra.mxu0 0.0
        %384 = vmatprep.subr.mxu0 0.0
        %385 = vmatpush2.msra.mxu0 0.0
        %386 = vmatprep.subr.mxu0 0.0
        %387 = vmatpush2.msra.mxu0 0.0
        %388 = vmatprep.subr.mxu0 0.0
        %389 = vmatpush2.msra.mxu0 0.0
        %390 = vmatprep.subr.mxu0 0.0
        %391 = vmatpush2.msra.mxu0 0.0
        %392 = vmatprep.subr.mxu0 0.0
        %393 = vmatpush2.msra.mxu0 0.0
        %394 = vmatprep.subr.mxu0 0.0
        %395 = vmatpush2.msra.mxu0 0.0
        %396 = vmatprep.subr.mxu0 0.0
        %397 = vmatpush2.msra.mxu0 0.0
        %398 = vmatprep.subr.mxu0 0.0
        %399 = vmatpush2.msra.mxu0 0.0
        %400 = vmatprep.subr.mxu0 0.0
        %401 = vmatpush2.msra.mxu0 0.0
        %402 = vmatprep.subr.mxu0 0.0
        %403 = vmatpush2.msra.mxu0 0.0
        %404 = vmatprep.subr.mxu0 0.0
        %405 = vmatpush2.msra.mxu0 0.0
        %406 = vmatprep.mubr.f32.mxu0 0.0
        %v407 = vand.u32 %v336, 4294901760
        %v408 = vsub.f32 %v336, %v407
        %v409 = vand.u32 %v408, 4294901760
        %v410 = vsub.f32 %v408, %v409
        %v411 = vand.u32 %v410, 4294901760
        %412 = vmatmul.mubr.f32.gmra.mxu0 %v411
        %v413 = vpop.f32.mrf.mxu0
        %v414 = vadd.f32 %v332, %v413
        %v415 = vpop.f32.mrf.mxu0
        %v416 = vadd.f32 %v332, %v415
        %417 = vdwg.mxu0
        %418 = vmatprep.subr.mxu0 0.0
        %419 = vmatpush1.msra.mxu0 0.0
        %420 = vmatprep.subr.mxu0 0.0
        %421 = vmatpush1.msra.mxu0 0.0
        %422 = vmatprep.subr.mxu0 0.0
        %423 = vmatpush1.msra.mxu0 0.0
        %424 = vmatprep.subr.mxu0 0.0
        %425 = vmatpush1.msra.mxu0 0.0
        %426 = vmatprep.subr.mxu0 0.0
        %427 = vmatpush1.msra.mxu0 0.0
        %428 = vmatprep.subr.mxu0 0.0
        %429 = vmatpush1.msra.mxu0 0.0
        %430 = vmatprep.subr.mxu0 0.0
        %431 = vmatpush1.msra.mxu0 0.0
        %432 = vmatprep.subr.mxu0 0.0
        %433 = vmatpush1.msra.mxu0 0.0
        %434 = vmatprep.subr.mxu0 0.0
        %435 = vmatpush1.msra.mxu0 0.0
        %436 = vmatprep.subr.mxu0 0.0
        %437 = vmatpush1.msra.mxu0 0.0
        %438 = vmatprep.subr.mxu0 0.0
        %439 = vmatpush1.msra.mxu0 0.0
        %440 = vmatprep.subr.mxu0 0.0
        %441 = vmatpush1.msra.mxu0 0.0
        %442 = vmatprep.subr.mxu0 0.0
        %443 = vmatpush1.msra.mxu0 0.0
        %444 = vmatprep.subr.mxu0 0.0
        %445 = vmatpush1.msra.mxu0 0.0
        %v446 = vand.u32 %v326, 4294901760
        %v447 = vsub.f32 %v326, %v446
        %v448 = vand.u32 %v447, 4294901760
        %v449 = vsub.f32 %v447, %v448
        %v450 = vand.u32 %v449, 4294901760
        %451 = vmatprep.subr.mxu0 %v450
        %v452 = vand.u32 %v325, 4294901760
        %v453 = vsub.f32 %v325, %v452
        %v454 = vand.u32 %v453, 4294901760
        %v455 = vsub.f32 %v453, %v454
        %v456 = vand.u32 %v455, 4294901760
        %457 = vmatpush1.msra.mxu0 %v456
        %v458 = vand.u32 %v324, 4294901760
        %v459 = vsub.f32 %v324, %v458
        %v460 = vand.u32 %v459, 4294901760
        %v461 = vsub.f32 %v459, %v460
        %v462 = vand.u32 %v461, 4294901760
        %463 = vmatprep.subr.mxu0 %v462
        %v464 = vand.u32 %v323, 4294901760
        %v465 = vsub.f32 %v323, %v464
        %v466 = vand.u32 %v465, 4294901760
        %v467 = vsub.f32 %v465, %v466
        %v468 = vand.u32 %v467, 4294901760
        %469 = vmatpush1.msra.mxu0 %v468
        %470 = vmatprep.subr.mxu0 0.0
        %471 = vmatpush2.msra.mxu0 0.0
        %472 = vmatprep.subr.mxu0 0.0
        %473 = vmatpush2.msra.mxu0 0.0
        %474 = vmatprep.subr.mxu0 0.0
        %475 = vmatpush2.msra.mxu0 0.0
        %476 = vmatprep.subr.mxu0 0.0
        %477 = vmatpush2.msra.mxu0 0.0
        %478 = vmatprep.subr.mxu0 0.0
        %479 = vmatpush2.msra.mxu0 0.0
        %480 = vmatprep.subr.mxu0 0.0
        %481 = vmatpush2.msra.mxu0 0.0
        %482 = vmatprep.subr.mxu0 0.0
        %483 = vmatpush2.msra.mxu0 0.0
        %484 = vmatprep.subr.mxu0 0.0
        %485 = vmatpush2.msra.mxu0 0.0
        %486 = vmatprep.subr.mxu0 0.0
        %487 = vmatpush2.msra.mxu0 0.0
        %488 = vmatprep.subr.mxu0 0.0
        %489 = vmatpush2.msra.mxu0 0.0
        %490 = vmatprep.subr.mxu0 0.0
        %491 = vmatpush2.msra.mxu0 0.0
        %492 = vmatprep.subr.mxu0 0.0
        %493 = vmatpush2.msra.mxu0 0.0
        %494 = vmatprep.subr.mxu0 0.0
        %495 = vmatpush2.msra.mxu0 0.0
        %496 = vmatprep.subr.mxu0 0.0
        %497 = vmatpush2.msra.mxu0 0.0
        %498 = vmatprep.subr.mxu0 0.0
        %499 = vmatpush2.msra.mxu0 0.0
        %500 = vmatprep.subr.mxu0 0.0
        %501 = vmatpush2.msra.mxu0 0.0
        %502 = vmatprep.mubr.f32.mxu0 0.0
        %v503 = vand.u32 %v336, 4294901760
        %504 = vmatmul.mubr.f32.gmra.mxu0 %v503
        %v505 = vpop.f32.mrf.mxu0
        %v506 = vadd.f32 %v414, %v505
        %v507 = vpop.f32.mrf.mxu0
        %v508 = vadd.f32 %v416, %v507
        %509 = vdwg.mxu0
        %510 = vmatprep.subr.mxu0 0.0
        %511 = vmatpush1.msra.mxu0 0.0
        %512 = vmatprep.subr.mxu0 0.0
        %513 = vmatpush1.msra.mxu0 0.0
        %514 = vmatprep.subr.mxu0 0.0
        %515 = vmatpush1.msra.mxu0 0.0
        %516 = vmatprep.subr.mxu0 0.0
        %517 = vmatpush1.msra.mxu0 0.0
        %518 = vmatprep.subr.mxu0 0.0
        %519 = vmatpush1.msra.mxu0 0.0
        %520 = vmatprep.subr.mxu0 0.0
        %521 = vmatpush1.msra.mxu0 0.0
        %522 = vmatprep.subr.mxu0 0.0
        %523 = vmatpush1.msra.mxu0 0.0
        %524 = vmatprep.subr.mxu0 0.0
        %525 = vmatpush1.msra.mxu0 0.0
        %526 = vmatprep.subr.mxu0 0.0
        %527 = vmatpush1.msra.mxu0 0.0
        %528 = vmatprep.subr.mxu0 0.0
        %529 = vmatpush1.msra.mxu0 0.0
        %530 = vmatprep.subr.mxu0 0.0
        %531 = vmatpush1.msra.mxu0 0.0
        %532 = vmatprep.subr.mxu0 0.0
        %533 = vmatpush1.msra.mxu0 0.0
        %534 = vmatprep.subr.mxu0 0.0
        %535 = vmatpush1.msra.mxu0 0.0
        %536 = vmatprep.subr.mxu0 0.0
        %537 = vmatpush1.msra.mxu0 0.0
        %v538 = vand.u32 %v326, 4294901760
        %v539 = vsub.f32 %v326, %v538
        %540 = vmatprep.subr.mxu0 %v539
        %v541 = vand.u32 %v325, 4294901760
        %v542 = vsub.f32 %v325, %v541
        %543 = vmatpush1.msra.mxu0 %v542
        %v544 = vand.u32 %v324, 4294901760
        %v545 = vsub.f32 %v324, %v544
        %546 = vmatprep.subr.mxu0 %v545
        %v547 = vand.u32 %v323, 4294901760
        %v548 = vsub.f32 %v323, %v547
        %549 = vmatpush1.msra.mxu0 %v548
        %550 = vmatprep.subr.mxu0 0.0
        %551 = vmatpush2.msra.mxu0 0.0
        %552 = vmatprep.subr.mxu0 0.0
        %553 = vmatpush2.msra.mxu0 0.0
        %554 = vmatprep.subr.mxu0 0.0
        %555 = vmatpush2.msra.mxu0 0.0
        %556 = vmatprep.subr.mxu0 0.0
        %557 = vmatpush2.msra.mxu0 0.0
        %558 = vmatprep.subr.mxu0 0.0
        %559 = vmatpush2.msra.mxu0 0.0
        %560 = vmatprep.subr.mxu0 0.0
        %561 = vmatpush2.msra.mxu0 0.0
        %562 = vmatprep.subr.mxu0 0.0
        %563 = vmatpush2.msra.mxu0 0.0
        %564 = vmatprep.subr.mxu0 0.0
        %565 = vmatpush2.msra.mxu0 0.0
        %566 = vmatprep.subr.mxu0 0.0
        %567 = vmatpush2.msra.mxu0 0.0
        %568 = vmatprep.subr.mxu0 0.0
        %569 = vmatpush2.msra.mxu0 0.0
        %570 = vmatprep.subr.mxu0 0.0
        %571 = vmatpush2.msra.mxu0 0.0
        %572 = vmatprep.subr.mxu0 0.0
        %573 = vmatpush2.msra.mxu0 0.0
        %574 = vmatprep.subr.mxu0 0.0
        %575 = vmatpush2.msra.mxu0 0.0
        %576 = vmatprep.subr.mxu0 0.0
        %577 = vmatpush2.msra.mxu0 0.0
        %578 = vmatprep.subr.mxu0 0.0
        %579 = vmatpush2.msra.mxu0 0.0
        %580 = vmatprep.subr.mxu0 0.0
        %581 = vmatpush2.msra.mxu0 0.0
        %582 = vmatprep.mubr.f32.mxu0 0.0
        %v583 = vand.u32 %v336, 4294901760
        %v584 = vsub.f32 %v336, %v583
        %585 = vmatmul.mubr.f32.gmra.mxu0 %v584
        %v586 = vpop.f32.mrf.mxu0
        %v587 = vadd.f32 %v506, %v586
        %v588 = vpop.f32.mrf.mxu0
        %v589 = vadd.f32 %v508, %v588
        %590 = vdwg.mxu0
        %591 = vmatprep.subr.mxu0 0.0
        %592 = vmatpush1.msra.mxu0 0.0
        %593 = vmatprep.subr.mxu0 0.0
        %594 = vmatpush1.msra.mxu0 0.0
        %595 = vmatprep.subr.mxu0 0.0
        %596 = vmatpush1.msra.mxu0 0.0
        %597 = vmatprep.subr.mxu0 0.0
        %598 = vmatpush1.msra.mxu0 0.0
        %599 = vmatprep.subr.mxu0 0.0
        %600 = vmatpush1.msra.mxu0 0.0
        %601 = vmatprep.subr.mxu0 0.0
        %602 = vmatpush1.msra.mxu0 0.0
        %603 = vmatprep.subr.mxu0 0.0
        %604 = vmatpush1.msra.mxu0 0.0
        %605 = vmatprep.subr.mxu0 0.0
        %606 = vmatpush1.msra.mxu0 0.0
        %607 = vmatprep.subr.mxu0 0.0
        %608 = vmatpush1.msra.mxu0 0.0
        %609 = vmatprep.subr.mxu0 0.0
        %610 = vmatpush1.msra.mxu0 0.0
        %611 = vmatprep.subr.mxu0 0.0
        %612 = vmatpush1.msra.mxu0 0.0
        %613 = vmatprep.subr.mxu0 0.0
        %614 = vmatpush1.msra.mxu0 0.0
        %615 = vmatprep.subr.mxu0 0.0
        %616 = vmatpush1.msra.mxu0 0.0
        %617 = vmatprep.subr.mxu0 0.0
        %618 = vmatpush1.msra.mxu0 0.0
        %v619 = vand.u32 %v326, 4294901760
        %620 = vmatprep.subr.mxu0 %v619
        %v621 = vand.u32 %v325, 4294901760
        %622 = vmatpush1.msra.mxu0 %v621
        %v623 = vand.u32 %v324, 4294901760
        %624 = vmatprep.subr.mxu0 %v623
        %v625 = vand.u32 %v323, 4294901760
        %626 = vmatpush1.msra.mxu0 %v625
        %627 = vmatprep.subr.mxu0 0.0
        %628 = vmatpush2.msra.mxu0 0.0
        %629 = vmatprep.subr.mxu0 0.0
        %630 = vmatpush2.msra.mxu0 0.0
        %631 = vmatprep.subr.mxu0 0.0
        %632 = vmatpush2.msra.mxu0 0.0
        %633 = vmatprep.subr.mxu0 0.0
        %634 = vmatpush2.msra.mxu0 0.0
        %635 = vmatprep.subr.mxu0 0.0
        %636 = vmatpush2.msra.mxu0 0.0
        %637 = vmatprep.subr.mxu0 0.0
        %638 = vmatpush2.msra.mxu0 0.0
        %639 = vmatprep.subr.mxu0 0.0
        %640 = vmatpush2.msra.mxu0 0.0
        %641 = vmatprep.subr.mxu0 0.0
        %642 = vmatpush2.msra.mxu0 0.0
        %643 = vmatprep.subr.mxu0 0.0
        %644 = vmatpush2.msra.mxu0 0.0
        %645 = vmatprep.subr.mxu0 0.0
        %646 = vmatpush2.msra.mxu0 0.0
        %647 = vmatprep.subr.mxu0 0.0
        %648 = vmatpush2.msra.mxu0 0.0
        %649 = vmatprep.subr.mxu0 0.0
        %650 = vmatpush2.msra.mxu0 0.0
        %651 = vmatprep.subr.mxu0 0.0
        %652 = vmatpush2.msra.mxu0 0.0
        %653 = vmatprep.subr.mxu0 0.0
        %654 = vmatpush2.msra.mxu0 0.0
        %655 = vmatprep.subr.mxu0 0.0
        %656 = vmatpush2.msra.mxu0 0.0
        %657 = vmatprep.subr.mxu0 0.0
        %658 = vmatpush2.msra.mxu0 0.0
        %659 = vmatprep.mubr.f32.mxu0 0.0
        %v660 = vand.u32 %v336, 4294901760
        %v661 = vsub.f32 %v336, %v660
        %v662 = vand.u32 %v661, 4294901760
        %663 = vmatmul.mubr.f32.gmra.mxu0 %v662
        %v664 = vpop.f32.mrf.mxu0
        %v665 = vadd.f32 %v587, %v664
        %v666 = vpop.f32.mrf.mxu0
        %v667 = vadd.f32 %v589, %v666
        %668 = vdwg.mxu0
        %669 = vmatprep.subr.mxu0 0.0
        %670 = vmatpush1.msra.mxu0 0.0
        %671 = vmatprep.subr.mxu0 0.0
        %672 = vmatpush1.msra.mxu0 0.0
        %673 = vmatprep.subr.mxu0 0.0
        %674 = vmatpush1.msra.mxu0 0.0
        %675 = vmatprep.subr.mxu0 0.0
        %676 = vmatpush1.msra.mxu0 0.0
        %677 = vmatprep.subr.mxu0 0.0
        %678 = vmatpush1.msra.mxu0 0.0
        %679 = vmatprep.subr.mxu0 0.0
        %680 = vmatpush1.msra.mxu0 0.0
        %681 = vmatprep.subr.mxu0 0.0
        %682 = vmatpush1.msra.mxu0 0.0
        %683 = vmatprep.subr.mxu0 0.0
        %684 = vmatpush1.msra.mxu0 0.0
        %685 = vmatprep.subr.mxu0 0.0
        %686 = vmatpush1.msra.mxu0 0.0
        %687 = vmatprep.subr.mxu0 0.0
        %688 = vmatpush1.msra.mxu0 0.0
        %689 = vmatprep.subr.mxu0 0.0
        %690 = vmatpush1.msra.mxu0 0.0
        %691 = vmatprep.subr.mxu0 0.0
        %692 = vmatpush1.msra.mxu0 0.0
        %693 = vmatprep.subr.mxu0 0.0
        %694 = vmatpush1.msra.mxu0 0.0
        %695 = vmatprep.subr.mxu0 0.0
        %696 = vmatpush1.msra.mxu0 0.0
        %v697 = vand.u32 %v326, 4294901760
        %v698 = vsub.f32 %v326, %v697
        %v699 = vand.u32 %v698, 4294901760
        %700 = vmatprep.subr.mxu0 %v699
        %v701 = vand.u32 %v325, 4294901760
        %v702 = vsub.f32 %v325, %v701
        %v703 = vand.u32 %v702, 4294901760
        %704 = vmatpush1.msra.mxu0 %v703
        %v705 = vand.u32 %v324, 4294901760
        %v706 = vsub.f32 %v324, %v705
        %v707 = vand.u32 %v706, 4294901760
        %708 = vmatprep.subr.mxu0 %v707
        %v709 = vand.u32 %v323, 4294901760
        %v710 = vsub.f32 %v323, %v709
        %v711 = vand.u32 %v710, 4294901760
        %712 = vmatpush1.msra.mxu0 %v711
        %713 = vmatprep.subr.mxu0 0.0
        %714 = vmatpush2.msra.mxu0 0.0
        %715 = vmatprep.subr.mxu0 0.0
        %716 = vmatpush2.msra.mxu0 0.0
        %717 = vmatprep.subr.mxu0 0.0
        %718 = vmatpush2.msra.mxu0 0.0
        %719 = vmatprep.subr.mxu0 0.0
        %720 = vmatpush2.msra.mxu0 0.0
        %721 = vmatprep.subr.mxu0 0.0
        %722 = vmatpush2.msra.mxu0 0.0
        %723 = vmatprep.subr.mxu0 0.0
        %724 = vmatpush2.msra.mxu0 0.0
        %725 = vmatprep.subr.mxu0 0.0
        %726 = vmatpush2.msra.mxu0 0.0
        %727 = vmatprep.subr.mxu0 0.0
        %728 = vmatpush2.msra.mxu0 0.0
        %729 = vmatprep.subr.mxu0 0.0
        %730 = vmatpush2.msra.mxu0 0.0
        %731 = vmatprep.subr.mxu0 0.0
        %732 = vmatpush2.msra.mxu0 0.0
        %733 = vmatprep.subr.mxu0 0.0
        %734 = vmatpush2.msra.mxu0 0.0
        %735 = vmatprep.subr.mxu0 0.0
        %736 = vmatpush2.msra.mxu0 0.0
        %737 = vmatprep.subr.mxu0 0.0
        %738 = vmatpush2.msra.mxu0 0.0
        %739 = vmatprep.subr.mxu0 0.0
        %740 = vmatpush2.msra.mxu0 0.0
        %741 = vmatprep.subr.mxu0 0.0
        %742 = vmatpush2.msra.mxu0 0.0
        %743 = vmatprep.subr.mxu0 0.0
        %744 = vmatpush2.msra.mxu0 0.0
        %745 = vmatprep.mubr.f32.mxu0 0.0
        %v746 = vand.u32 %v336, 4294901760
        %747 = vmatmul.mubr.f32.gmra.mxu0 %v746
        %v748 = vpop.f32.mrf.mxu0
        %v749 = vadd.f32 %v665, %v748
        %v750 = vpop.f32.mrf.mxu0
        %v751 = vadd.f32 %v667, %v750
        %752 = vdwg.mxu0
        %753 = vmatprep.subr.mxu0 0.0
        %754 = vmatpush1.msra.mxu0 0.0
        %755 = vmatprep.subr.mxu0 0.0
        %756 = vmatpush1.msra.mxu0 0.0
        %757 = vmatprep.subr.mxu0 0.0
        %758 = vmatpush1.msra.mxu0 0.0
        %759 = vmatprep.subr.mxu0 0.0
        %760 = vmatpush1.msra.mxu0 0.0
        %761 = vmatprep.subr.mxu0 0.0
        %762 = vmatpush1.msra.mxu0 0.0
        %763 = vmatprep.subr.mxu0 0.0
        %764 = vmatpush1.msra.mxu0 0.0
        %765 = vmatprep.subr.mxu0 0.0
        %766 = vmatpush1.msra.mxu0 0.0
        %767 = vmatprep.subr.mxu0 0.0
        %768 = vmatpush1.msra.mxu0 0.0
        %769 = vmatprep.subr.mxu0 0.0
        %770 = vmatpush1.msra.mxu0 0.0
        %771 = vmatprep.subr.mxu0 0.0
        %772 = vmatpush1.msra.mxu0 0.0
        %773 = vmatprep.subr.mxu0 0.0
        %774 = vmatpush1.msra.mxu0 0.0
        %775 = vmatprep.subr.mxu0 0.0
        %776 = vmatpush1.msra.mxu0 0.0
        %777 = vmatprep.subr.mxu0 0.0
        %778 = vmatpush1.msra.mxu0 0.0
        %779 = vmatprep.subr.mxu0 0.0
        %780 = vmatpush1.msra.mxu0 0.0
        %v781 = vand.u32 %v326, 4294901760
        %782 = vmatprep.subr.mxu0 %v781
        %v783 = vand.u32 %v325, 4294901760
        %784 = vmatpush1.msra.mxu0 %v783
        %v785 = vand.u32 %v324, 4294901760
        %786 = vmatprep.subr.mxu0 %v785
        %v787 = vand.u32 %v323, 4294901760
        %788 = vmatpush1.msra.mxu0 %v787
        %789 = vmatprep.subr.mxu0 0.0
        %790 = vmatpush2.msra.mxu0 0.0
        %791 = vmatprep.subr.mxu0 0.0
        %792 = vmatpush2.msra.mxu0 0.0
        %793 = vmatprep.subr.mxu0 0.0
        %794 = vmatpush2.msra.mxu0 0.0
        %795 = vmatprep.subr.mxu0 0.0
        %796 = vmatpush2.msra.mxu0 0.0
        %797 = vmatprep.subr.mxu0 0.0
        %798 = vmatpush2.msra.mxu0 0.0
        %799 = vmatprep.subr.mxu0 0.0
        %800 = vmatpush2.msra.mxu0 0.0
        %801 = vmatprep.subr.mxu0 0.0
        %802 = vmatpush2.msra.mxu0 0.0
        %803 = vmatprep.subr.mxu0 0.0
        %804 = vmatpush2.msra.mxu0 0.0
        %805 = vmatprep.subr.mxu0 0.0
        %806 = vmatpush2.msra.mxu0 0.0
        %807 = vmatprep.subr.mxu0 0.0
        %808 = vmatpush2.msra.mxu0 0.0
        %809 = vmatprep.subr.mxu0 0.0
        %810 = vmatpush2.msra.mxu0 0.0
        %811 = vmatprep.subr.mxu0 0.0
        %812 = vmatpush2.msra.mxu0 0.0
        %813 = vmatprep.subr.mxu0 0.0
        %814 = vmatpush2.msra.mxu0 0.0
        %815 = vmatprep.subr.mxu0 0.0
        %816 = vmatpush2.msra.mxu0 0.0
        %817 = vmatprep.subr.mxu0 0.0
        %818 = vmatpush2.msra.mxu0 0.0
        %819 = vmatprep.subr.mxu0 0.0
        %820 = vmatpush2.msra.mxu0 0.0
        %821 = vmatprep.mubr.f32.mxu0 0.0
        %v822 = vand.u32 %v336, 4294901760
        %823 = vmatmul.mubr.f32.gmra.mxu0 %v822
        %v824 = vpop.f32.mrf.mxu0
        %v825 = vadd.f32 %v749, %v824
        %v826 = vpop.f32.mrf.mxu0
        %v827 = vadd.f32 %v751, %v826
        %828 = vdwg.mxu0
        %v829 = vmax.f32 %v825, 0.0
        %v830 = vmax.f32 %v827, 0.0
        %v831 = vld [vmem:[%s5] sm:$0xff]
        %v832 = vld [vmem:[%s6] sm:$0xff]
        %v833 = vld [vmem:[#allocation2] sm:$0xff]
        %v834 = vld [vmem:[%s4] sm:$0xff]
        %836 = vset.pattern.permute.xlu0 0
        %837 = vperm.xlu0 %836, %v834
        %v838 = vpop.permute.xlu0 %837
        %vm840 = vcmask 64512
        %v842 = vsel %vm840, %v833, 0
        %844 = vmatprep.subr.mxu0 0.0
        %845 = vmatpush1.msra.mxu0 0.0
        %846 = vmatprep.subr.mxu0 0.0
        %847 = vmatpush1.msra.mxu0 0.0
        %848 = vmatprep.subr.mxu0 0.0
        %849 = vmatpush1.msra.mxu0 0.0
        %850 = vmatprep.subr.mxu0 0.0
        %851 = vmatpush1.msra.mxu0 0.0
        %852 = vmatprep.subr.mxu0 0.0
        %853 = vmatpush1.msra.mxu0 0.0
        %854 = vmatprep.subr.mxu0 0.0
        %855 = vmatpush1.msra.mxu0 0.0
        %856 = vmatprep.subr.mxu0 0.0
        %857 = vmatpush1.msra.mxu0 0.0
        %858 = vmatprep.subr.mxu0 0.0
        %859 = vmatpush1.msra.mxu0 0.0
        %860 = vmatprep.subr.mxu0 0.0
        %861 = vmatpush1.msra.mxu0 0.0
        %862 = vmatprep.subr.mxu0 0.0
        %863 = vmatpush1.msra.mxu0 0.0
        %864 = vmatprep.subr.mxu0 0.0
        %865 = vmatpush1.msra.mxu0 0.0
        %866 = vmatprep.subr.mxu0 0.0
        %867 = vmatpush1.msra.mxu0 0.0
        %868 = vmatprep.subr.mxu0 0.0
        %869 = vmatpush1.msra.mxu0 0.0
        %870 = vmatprep.subr.mxu0 0.0
        %871 = vmatpush1.msra.mxu0 0.0
        %872 = vmatprep.subr.mxu0 0.0
        %873 = vmatpush1.msra.mxu0 0.0
        %v874 = vand.u32 %v830, 4294901760
        %875 = vmatprep.subr.mxu0 %v874
        %v876 = vand.u32 %v829, 4294901760
        %877 = vmatpush1.msra.mxu0 %v876
        %878 = vmatprep.subr.mxu0 0.0
        %879 = vmatpush2.msra.mxu0 0.0
        %880 = vmatprep.subr.mxu0 0.0
        %881 = vmatpush2.msra.mxu0 0.0
        %882 = vmatprep.subr.mxu0 0.0
        %883 = vmatpush2.msra.mxu0 0.0
        %884 = vmatprep.subr.mxu0 0.0
        %885 = vmatpush2.msra.mxu0 0.0
        %886 = vmatprep.subr.mxu0 0.0
        %887 = vmatpush2.msra.mxu0 0.0
        %888 = vmatprep.subr.mxu0 0.0
        %889 = vmatpush2.msra.mxu0 0.0
        %890 = vmatprep.subr.mxu0 0.0
        %891 = vmatpush2.msra.mxu0 0.0
        %892 = vmatprep.subr.mxu0 0.0
        %893 = vmatpush2.msra.mxu0 0.0
        %894 = vmatprep.subr.mxu0 0.0
        %895 = vmatpush2.msra.mxu0 0.0
        %896 = vmatprep.subr.mxu0 0.0
        %897 = vmatpush2.msra.mxu0 0.0
        %898 = vmatprep.subr.mxu0 0.0
        %899 = vmatpush2.msra.mxu0 0.0
        %900 = vmatprep.subr.mxu0 0.0
        %901 = vmatpush2.msra.mxu0 0.0
        %902 = vmatprep.subr.mxu0 0.0
        %903 = vmatpush2.msra.mxu0 0.0
        %904 = vmatprep.subr.mxu0 0.0
        %905 = vmatpush2.msra.mxu0 0.0
        %906 = vmatprep.subr.mxu0 0.0
        %907 = vmatpush2.msra.mxu0 0.0
        %908 = vmatprep.subr.mxu0 0.0
        %909 = vmatpush2.msra.mxu0 0.0
        %910 = vmatprep.mubr.f32.mxu0 0.0
        %v911 = vand.u32 %v842, 4294901760
        %v912 = vsub.f32 %v842, %v911
        %v913 = vand.u32 %v912, 4294901760
        %v914 = vsub.f32 %v912, %v913
        %v915 = vand.u32 %v914, 4294901760
        %916 = vmatmul.mubr.f32.gmra.mxu0 %v915
        %v917 = vpop.f32.mrf.mxu0
        %v918 = vadd.f32 %v838, %v917
        %v919 = vpop.f32.mrf.mxu0
        %v920 = vadd.f32 %v838, %v919
        %921 = vdwg.mxu0
        %922 = vmatprep.subr.mxu0 0.0
        %923 = vmatpush1.msra.mxu0 0.0
        %924 = vmatprep.subr.mxu0 0.0
        %925 = vmatpush1.msra.mxu0 0.0
        %926 = vmatprep.subr.mxu0 0.0
        %927 = vmatpush1.msra.mxu0 0.0
        %928 = vmatprep.subr.mxu0 0.0
        %929 = vmatpush1.msra.mxu0 0.0
        %930 = vmatprep.subr.mxu0 0.0
        %931 = vmatpush1.msra.mxu0 0.0
        %932 = vmatprep.subr.mxu0 0.0
        %933 = vmatpush1.msra.mxu0 0.0
        %934 = vmatprep.subr.mxu0 0.0
        %935 = vmatpush1.msra.mxu0 0.0
        %936 = vmatprep.subr.mxu0 0.0
        %937 = vmatpush1.msra.mxu0 0.0
        %938 = vmatprep.subr.mxu0 0.0
        %939 = vmatpush1.msra.mxu0 0.0
        %940 = vmatprep.subr.mxu0 0.0
        %941 = vmatpush1.msra.mxu0 0.0
        %942 = vmatprep.subr.mxu0 0.0
        %943 = vmatpush1.msra.mxu0 0.0
        %944 = vmatprep.subr.mxu0 0.0
        %945 = vmatpush1.msra.mxu0 0.0
        %946 = vmatprep.subr.mxu0 0.0
        %947 = vmatpush1.msra.mxu0 0.0
        %948 = vmatprep.subr.mxu0 0.0
        %949 = vmatpush1.msra.mxu0 0.0
        %950 = vmatprep.subr.mxu0 0.0
        %951 = vmatpush1.msra.mxu0 0.0
        %v952 = vand.u32 %v830, 4294901760
        %v953 = vsub.f32 %v830, %v952
        %v954 = vand.u32 %v953, 4294901760
        %v955 = vsub.f32 %v953, %v954
        %v956 = vand.u32 %v955, 4294901760
        %957 = vmatprep.subr.mxu0 %v956
        %v958 = vand.u32 %v829, 4294901760
        %v959 = vsub.f32 %v829, %v958
        %v960 = vand.u32 %v959, 4294901760
        %v961 = vsub.f32 %v959, %v960
        %v962 = vand.u32 %v961, 4294901760
        %963 = vmatpush1.msra.mxu0 %v962
        %964 = vmatprep.subr.mxu0 0.0
        %965 = vmatpush2.msra.mxu0 0.0
        %966 = vmatprep.subr.mxu0 0.0
        %967 = vmatpush2.msra.mxu0 0.0
        %968 = vmatprep.subr.mxu0 0.0
        %969 = vmatpush2.msra.mxu0 0.0
        %970 = vmatprep.subr.mxu0 0.0
        %971 = vmatpush2.msra.mxu0 0.0
        %972 = vmatprep.subr.mxu0 0.0
        %973 = vmatpush2.msra.mxu0 0.0
        %974 = vmatprep.subr.mxu0 0.0
        %975 = vmatpush2.msra.mxu0 0.0
        %976 = vmatprep.subr.mxu0 0.0
        %977 = vmatpush2.msra.mxu0 0.0
        %978 = vmatprep.subr.mxu0 0.0
        %979 = vmatpush2.msra.mxu0 0.0
        %980 = vmatprep.subr.mxu0 0.0
        %981 = vmatpush2.msra.mxu0 0.0
        %982 = vmatprep.subr.mxu0 0.0
        %983 = vmatpush2.msra.mxu0 0.0
        %984 = vmatprep.subr.mxu0 0.0
        %985 = vmatpush2.msra.mxu0 0.0
        %986 = vmatprep.subr.mxu0 0.0
        %987 = vmatpush2.msra.mxu0 0.0
        %988 = vmatprep.subr.mxu0 0.0
        %989 = vmatpush2.msra.mxu0 0.0
        %990 = vmatprep.subr.mxu0 0.0
        %991 = vmatpush2.msra.mxu0 0.0
        %992 = vmatprep.subr.mxu0 0.0
        %993 = vmatpush2.msra.mxu0 0.0
        %994 = vmatprep.subr.mxu0 0.0
        %995 = vmatpush2.msra.mxu0 0.0
        %996 = vmatprep.mubr.f32.mxu0 0.0
        %v997 = vand.u32 %v842, 4294901760
        %998 = vmatmul.mubr.f32.gmra.mxu0 %v997
        %v999 = vpop.f32.mrf.mxu0
        %v1000 = vadd.f32 %v918, %v999
        %v1001 = vpop.f32.mrf.mxu0
        %v1002 = vadd.f32 %v920, %v1001
        %1003 = vdwg.mxu0
        %1004 = vmatprep.subr.mxu0 0.0
        %1005 = vmatpush1.msra.mxu0 0.0
        %1006 = vmatprep.subr.mxu0 0.0
        %1007 = vmatpush1.msra.mxu0 0.0
        %1008 = vmatprep.subr.mxu0 0.0
        %1009 = vmatpush1.msra.mxu0 0.0
        %1010 = vmatprep.subr.mxu0 0.0
        %1011 = vmatpush1.msra.mxu0 0.0
        %1012 = vmatprep.subr.mxu0 0.0
        %1013 = vmatpush1.msra.mxu0 0.0
        %1014 = vmatprep.subr.mxu0 0.0
        %1015 = vmatpush1.msra.mxu0 0.0
        %1016 = vmatprep.subr.mxu0 0.0
        %1017 = vmatpush1.msra.mxu0 0.0
        %1018 = vmatprep.subr.mxu0 0.0
        %1019 = vmatpush1.msra.mxu0 0.0
        %1020 = vmatprep.subr.mxu0 0.0
        %1021 = vmatpush1.msra.mxu0 0.0
        %1022 = vmatprep.subr.mxu0 0.0
        %1023 = vmatpush1.msra.mxu0 0.0
        %1024 = vmatprep.subr.mxu0 0.0
        %1025 = vmatpush1.msra.mxu0 0.0
        %1026 = vmatprep.subr.mxu0 0.0
        %1027 = vmatpush1.msra.mxu0 0.0
        %1028 = vmatprep.subr.mxu0 0.0
        %1029 = vmatpush1.msra.mxu0 0.0
        %1030 = vmatprep.subr.mxu0 0.0
        %1031 = vmatpush1.msra.mxu0 0.0
        %1032 = vmatprep.subr.mxu0 0.0
        %1033 = vmatpush1.msra.mxu0 0.0
        %v1034 = vand.u32 %v830, 4294901760
        %v1035 = vsub.f32 %v830, %v1034
        %1036 = vmatprep.subr.mxu0 %v1035
        %v1037 = vand.u32 %v829, 4294901760
        %v1038 = vsub.f32 %v829, %v1037
        %1039 = vmatpush1.msra.mxu0 %v1038
        %1040 = vmatprep.subr.mxu0 0.0
        %1041 = vmatpush2.msra.mxu0 0.0
        %1042 = vmatprep.subr.mxu0 0.0
        %1043 = vmatpush2.msra.mxu0 0.0
        %1044 = vmatprep.subr.mxu0 0.0
        %1045 = vmatpush2.msra.mxu0 0.0
        %1046 = vmatprep.subr.mxu0 0.0
        %1047 = vmatpush2.msra.mxu0 0.0
        %1048 = vmatprep.subr.mxu0 0.0
        %1049 = vmatpush2.msra.mxu0 0.0
        %1050 = vmatprep.subr.mxu0 0.0
        %1051 = vmatpush2.msra.mxu0 0.0
        %1052 = vmatprep.subr.mxu0 0.0
        %1053 = vmatpush2.msra.mxu0 0.0
        %1054 = vmatprep.subr.mxu0 0.0
        %1055 = vmatpush2.msra.mxu0 0.0
        %1056 = vmatprep.subr.mxu0 0.0
        %1057 = vmatpush2.msra.mxu0 0.0
        %1058 = vmatprep.subr.mxu0 0.0
        %1059 = vmatpush2.msra.mxu0 0.0
        %1060 = vmatprep.subr.mxu0 0.0
        %1061 = vmatpush2.msra.mxu0 0.0
        %1062 = vmatprep.subr.mxu0 0.0
        %1063 = vmatpush2.msra.mxu0 0.0
        %1064 = vmatprep.subr.mxu0 0.0
        %1065 = vmatpush2.msra.mxu0 0.0
        %1066 = vmatprep.subr.mxu0 0.0
        %1067 = vmatpush2.msra.mxu0 0.0
        %1068 = vmatprep.subr.mxu0 0.0
        %1069 = vmatpush2.msra.mxu0 0.0
        %1070 = vmatprep.subr.mxu0 0.0
        %1071 = vmatpush2.msra.mxu0 0.0
        %1072 = vmatprep.mubr.f32.mxu0 0.0
        %v1073 = vand.u32 %v842, 4294901760
        %v1074 = vsub.f32 %v842, %v1073
        %1075 = vmatmul.mubr.f32.gmra.mxu0 %v1074
        %v1076 = vpop.f32.mrf.mxu0
        %v1077 = vadd.f32 %v1000, %v1076
        %v1078 = vpop.f32.mrf.mxu0
        %v1079 = vadd.f32 %v1002, %v1078
        %1080 = vdwg.mxu0
        %1081 = vmatprep.subr.mxu0 0.0
        %1082 = vmatpush1.msra.mxu0 0.0
        %1083 = vmatprep.subr.mxu0 0.0
        %1084 = vmatpush1.msra.mxu0 0.0
        %1085 = vmatprep.subr.mxu0 0.0
        %1086 = vmatpush1.msra.mxu0 0.0
        %1087 = vmatprep.subr.mxu0 0.0
        %1088 = vmatpush1.msra.mxu0 0.0
        %1089 = vmatprep.subr.mxu0 0.0
        %1090 = vmatpush1.msra.mxu0 0.0
        %1091 = vmatprep.subr.mxu0 0.0
        %1092 = vmatpush1.msra.mxu0 0.0
        %1093 = vmatprep.subr.mxu0 0.0
        %1094 = vmatpush1.msra.mxu0 0.0
        %1095 = vmatprep.subr.mxu0 0.0
        %1096 = vmatpush1.msra.mxu0 0.0
        %1097 = vmatprep.subr.mxu0 0.0
        %1098 = vmatpush1.msra.mxu0 0.0
        %1099 = vmatprep.subr.mxu0 0.0
        %1100 = vmatpush1.msra.mxu0 0.0
        %1101 = vmatprep.subr.mxu0 0.0
        %1102 = vmatpush1.msra.mxu0 0.0
        %1103 = vmatprep.subr.mxu0 0.0
        %1104 = vmatpush1.msra.mxu0 0.0
        %1105 = vmatprep.subr.mxu0 0.0
        %1106 = vmatpush1.msra.mxu0 0.0
        %1107 = vmatprep.subr.mxu0 0.0
        %1108 = vmatpush1.msra.mxu0 0.0
        %1109 = vmatprep.subr.mxu0 0.0
        %1110 = vmatpush1.msra.mxu0 0.0
        %v1111 = vand.u32 %v830, 4294901760
        %1112 = vmatprep.subr.mxu0 %v1111
        %v1113 = vand.u32 %v829, 4294901760
        %1114 = vmatpush1.msra.mxu0 %v1113
        %1115 = vmatprep.subr.mxu0 0.0
        %1116 = vmatpush2.msra.mxu0 0.0
        %1117 = vmatprep.subr.mxu0 0.0
        %1118 = vmatpush2.msra.mxu0 0.0
        %1119 = vmatprep.subr.mxu0 0.0
        %1120 = vmatpush2.msra.mxu0 0.0
        %1121 = vmatprep.subr.mxu0 0.0
        %1122 = vmatpush2.msra.mxu0 0.0
        %1123 = vmatprep.subr.mxu0 0.0
        %1124 = vmatpush2.msra.mxu0 0.0
        %1125 = vmatprep.subr.mxu0 0.0
        %1126 = vmatpush2.msra.mxu0 0.0
        %1127 = vmatprep.subr.mxu0 0.0
        %1128 = vmatpush2.msra.mxu0 0.0
        %1129 = vmatprep.subr.mxu0 0.0
        %1130 = vmatpush2.msra.mxu0 0.0
        %1131 = vmatprep.subr.mxu0 0.0
        %1132 = vmatpush2.msra.mxu0 0.0
        %1133 = vmatprep.subr.mxu0 0.0
        %1134 = vmatpush2.msra.mxu0 0.0
        %1135 = vmatprep.subr.mxu0 0.0
        %1136 = vmatpush2.msra.mxu0 0.0
        %1137 = vmatprep.subr.mxu0 0.0
        %1138 = vmatpush2.msra.mxu0 0.0
        %1139 = vmatprep.subr.mxu0 0.0
        %1140 = vmatpush2.msra.mxu0 0.0
        %1141 = vmatprep.subr.mxu0 0.0
        %1142 = vmatpush2.msra.mxu0 0.0
        %1143 = vmatprep.subr.mxu0 0.0
        %1144 = vmatpush2.msra.mxu0 0.0
        %1145 = vmatprep.subr.mxu0 0.0
        %1146 = vmatpush2.msra.mxu0 0.0
        %1147 = vmatprep.mubr.f32.mxu0 0.0
        %v1148 = vand.u32 %v842, 4294901760
        %v1149 = vsub.f32 %v842, %v1148
        %v1150 = vand.u32 %v1149, 4294901760
        %1151 = vmatmul.mubr.f32.gmra.mxu0 %v1150
        %v1152 = vpop.f32.mrf.mxu0
        %v1153 = vadd.f32 %v1077, %v1152
        %v1154 = vpop.f32.mrf.mxu0
        %v1155 = vadd.f32 %v1079, %v1154
        %1156 = vdwg.mxu0
        %1157 = vmatprep.subr.mxu0 0.0
        %1158 = vmatpush1.msra.mxu0 0.0
        %1159 = vmatprep.subr.mxu0 0.0
        %1160 = vmatpush1.msra.mxu0 0.0
        %1161 = vmatprep.subr.mxu0 0.0
        %1162 = vmatpush1.msra.mxu0 0.0
        %1163 = vmatprep.subr.mxu0 0.0
        %1164 = vmatpush1.msra.mxu0 0.0
        %1165 = vmatprep.subr.mxu0 0.0
        %1166 = vmatpush1.msra.mxu0 0.0
        %1167 = vmatprep.subr.mxu0 0.0
        %1168 = vmatpush1.msra.mxu0 0.0
        %1169 = vmatprep.subr.mxu0 0.0
        %1170 = vmatpush1.msra.mxu0 0.0
        %1171 = vmatprep.subr.mxu0 0.0
        %1172 = vmatpush1.msra.mxu0 0.0
        %1173 = vmatprep.subr.mxu0 0.0
        %1174 = vmatpush1.msra.mxu0 0.0
        %1175 = vmatprep.subr.mxu0 0.0
        %1176 = vmatpush1.msra.mxu0 0.0
        %1177 = vmatprep.subr.mxu0 0.0
        %1178 = vmatpush1.msra.mxu0 0.0
        %1179 = vmatprep.subr.mxu0 0.0
        %1180 = vmatpush1.msra.mxu0 0.0
        %1181 = vmatprep.subr.mxu0 0.0
        %1182 = vmatpush1.msra.mxu0 0.0
        %1183 = vmatprep.subr.mxu0 0.0
        %1184 = vmatpush1.msra.mxu0 0.0
        %1185 = vmatprep.subr.mxu0 0.0
        %1186 = vmatpush1.msra.mxu0 0.0
        %v1187 = vand.u32 %v830, 4294901760
        %v1188 = vsub.f32 %v830, %v1187
        %v1189 = vand.u32 %v1188, 4294901760
        %1190 = vmatprep.subr.mxu0 %v1189
        %v1191 = vand.u32 %v829, 4294901760
        %v1192 = vsub.f32 %v829, %v1191
        %v1193 = vand.u32 %v1192, 4294901760
        %1194 = vmatpush1.msra.mxu0 %v1193
        %1195 = vmatprep.subr.mxu0 0.0
        %1196 = vmatpush2.msra.mxu0 0.0
        %1197 = vmatprep.subr.mxu0 0.0
        %1198 = vmatpush2.msra.mxu0 0.0
        %1199 = vmatprep.subr.mxu0 0.0
        %1200 = vmatpush2.msra.mxu0 0.0
        %1201 = vmatprep.subr.mxu0 0.0
        %1202 = vmatpush2.msra.mxu0 0.0
        %1203 = vmatprep.subr.mxu0 0.0
        %1204 = vmatpush2.msra.mxu0 0.0
        %1205 = vmatprep.subr.mxu0 0.0
        %1206 = vmatpush2.msra.mxu0 0.0
        %1207 = vmatprep.subr.mxu0 0.0
        %1208 = vmatpush2.msra.mxu0 0.0
        %1209 = vmatprep.subr.mxu0 0.0
        %1210 = vmatpush2.msra.mxu0 0.0
        %1211 = vmatprep.subr.mxu0 0.0
        %1212 = vmatpush2.msra.mxu0 0.0
        %1213 = vmatprep.subr.mxu0 0.0
        %1214 = vmatpush2.msra.mxu0 0.0
        %1215 = vmatprep.subr.mxu0 0.0
        %1216 = vmatpush2.msra.mxu0 0.0
        %1217 = vmatprep.subr.mxu0 0.0
        %1218 = vmatpush2.msra.mxu0 0.0
        %1219 = vmatprep.subr.mxu0 0.0
        %1220 = vmatpush2.msra.mxu0 0.0
        %1221 = vmatprep.subr.mxu0 0.0
        %1222 = vmatpush2.msra.mxu0 0.0
        %1223 = vmatprep.subr.mxu0 0.0
        %1224 = vmatpush2.msra.mxu0 0.0
        %1225 = vmatprep.subr.mxu0 0.0
        %1226 = vmatpush2.msra.mxu0 0.0
        %1227 = vmatprep.mubr.f32.mxu0 0.0
        %v1228 = vand.u32 %v842, 4294901760
        %1229 = vmatmul.mubr.f32.gmra.mxu0 %v1228
        %v1230 = vpop.f32.mrf.mxu0
        %v1231 = vadd.f32 %v1153, %v1230
        %v1232 = vpop.f32.mrf.mxu0
        %v1233 = vadd.f32 %v1155, %v1232
        %1234 = vdwg.mxu0
        %1235 = vmatprep.subr.mxu0 0.0
        %1236 = vmatpush1.msra.mxu0 0.0
        %1237 = vmatprep.subr.mxu0 0.0
        %1238 = vmatpush1.msra.mxu0 0.0
        %1239 = vmatprep.subr.mxu0 0.0
        %1240 = vmatpush1.msra.mxu0 0.0
        %1241 = vmatprep.subr.mxu0 0.0
        %1242 = vmatpush1.msra.mxu0 0.0
        %1243 = vmatprep.subr.mxu0 0.0
        %1244 = vmatpush1.msra.mxu0 0.0
        %1245 = vmatprep.subr.mxu0 0.0
        %1246 = vmatpush1.msra.mxu0 0.0
        %1247 = vmatprep.subr.mxu0 0.0
        %1248 = vmatpush1.msra.mxu0 0.0
        %1249 = vmatprep.subr.mxu0 0.0
        %1250 = vmatpush1.msra.mxu0 0.0
        %1251 = vmatprep.subr.mxu0 0.0
        %1252 = vmatpush1.msra.mxu0 0.0
        %1253 = vmatprep.subr.mxu0 0.0
        %1254 = vmatpush1.msra.mxu0 0.0
        %1255 = vmatprep.subr.mxu0 0.0
        %1256 = vmatpush1.msra.mxu0 0.0
        %1257 = vmatprep.subr.mxu0 0.0
        %1258 = vmatpush1.msra.mxu0 0.0
        %1259 = vmatprep.subr.mxu0 0.0
        %1260 = vmatpush1.msra.mxu0 0.0
        %1261 = vmatprep.subr.mxu0 0.0
        %1262 = vmatpush1.msra.mxu0 0.0
        %1263 = vmatprep.subr.mxu0 0.0
        %1264 = vmatpush1.msra.mxu0 0.0
        %v1265 = vand.u32 %v830, 4294901760
        %1266 = vmatprep.subr.mxu0 %v1265
        %v1267 = vand.u32 %v829, 4294901760
        %1268 = vmatpush1.msra.mxu0 %v1267
        %1269 = vmatprep.subr.mxu0 0.0
        %1270 = vmatpush2.msra.mxu0 0.0
        %1271 = vmatprep.subr.mxu0 0.0
        %1272 = vmatpush2.msra.mxu0 0.0
        %1273 = vmatprep.subr.mxu0 0.0
        %1274 = vmatpush2.msra.mxu0 0.0
        %1275 = vmatprep.subr.mxu0 0.0
        %1276 = vmatpush2.msra.mxu0 0.0
        %1277 = vmatprep.subr.mxu0 0.0
        %1278 = vmatpush2.msra.mxu0 0.0
        %1279 = vmatprep.subr.mxu0 0.0
        %1280 = vmatpush2.msra.mxu0 0.0
        %1281 = vmatprep.subr.mxu0 0.0
        %1282 = vmatpush2.msra.mxu0 0.0
        %1283 = vmatprep.subr.mxu0 0.0
        %1284 = vmatpush2.msra.mxu0 0.0
        %1285 = vmatprep.subr.mxu0 0.0
        %1286 = vmatpush2.msra.mxu0 0.0
        %1287 = vmatprep.subr.mxu0 0.0
        %1288 = vmatpush2.msra.mxu0 0.0
        %1289 = vmatprep.subr.mxu0 0.0
        %1290 = vmatpush2.msra.mxu0 0.0
        %1291 = vmatprep.subr.mxu0 0.0
        %1292 = vmatpush2.msra.mxu0 0.0
        %1293 = vmatprep.subr.mxu0 0.0
        %1294 = vmatpush2.msra.mxu0 0.0
        %1295 = vmatprep.subr.mxu0 0.0
        %1296 = vmatpush2.msra.mxu0 0.0
        %1297 = vmatprep.subr.mxu0 0.0
        %1298 = vmatpush2.msra.mxu0 0.0
        %1299 = vmatprep.subr.mxu0 0.0
        %1300 = vmatpush2.msra.mxu0 0.0
        %1301 = vmatprep.mubr.f32.mxu0 0.0
        %v1302 = vand.u32 %v842, 4294901760
        %1303 = vmatmul.mubr.f32.gmra.mxu0 %v1302
        %v1304 = vpop.f32.mrf.mxu0
        %v1305 = vadd.f32 %v1231, %v1304
        %v1306 = vpop.f32.mrf.mxu0
        %v1307 = vadd.f32 %v1233, %v1306
        %1308 = vdwg.mxu0
        %v1309 = vmax.f32 %v1305, 0.0
        %v1310 = vmax.f32 %v1307, 0.0
        %1312 = vset.pattern.permute.xlu0 0
        %1313 = vperm.xlu0 %1312, %v832
        %v1314 = vpop.permute.xlu0 %1313
        %v1317 = vsel %vm840, %v831, 0
        %1319 = vmatprep.subr.mxu0 0.0
        %1320 = vmatpush1.msra.mxu0 0.0
        %1321 = vmatprep.subr.mxu0 0.0
        %1322 = vmatpush1.msra.mxu0 0.0
        %1323 = vmatprep.subr.mxu0 0.0
        %1324 = vmatpush1.msra.mxu0 0.0
        %1325 = vmatprep.subr.mxu0 0.0
        %1326 = vmatpush1.msra.mxu0 0.0
        %1327 = vmatprep.subr.mxu0 0.0
        %1328 = vmatpush1.msra.mxu0 0.0
        %1329 = vmatprep.subr.mxu0 0.0
        %1330 = vmatpush1.msra.mxu0 0.0
        %1331 = vmatprep.subr.mxu0 0.0
        %1332 = vmatpush1.msra.mxu0 0.0
        %1333 = vmatprep.subr.mxu0 0.0
        %1334 = vmatpush1.msra.mxu0 0.0
        %1335 = vmatprep.subr.mxu0 0.0
        %1336 = vmatpush1.msra.mxu0 0.0
        %1337 = vmatprep.subr.mxu0 0.0
        %1338 = vmatpush1.msra.mxu0 0.0
        %1339 = vmatprep.subr.mxu0 0.0
        %1340 = vmatpush1.msra.mxu0 0.0
        %1341 = vmatprep.subr.mxu0 0.0
        %1342 = vmatpush1.msra.mxu0 0.0
        %1343 = vmatprep.subr.mxu0 0.0
        %1344 = vmatpush1.msra.mxu0 0.0
        %1345 = vmatprep.subr.mxu0 0.0
        %1346 = vmatpush1.msra.mxu0 0.0
        %1347 = vmatprep.subr.mxu0 0.0
        %1348 = vmatpush1.msra.mxu0 0.0
        %v1349 = vand.u32 %v1310, 4294901760
        %1350 = vmatprep.subr.mxu0 %v1349
        %v1351 = vand.u32 %v1309, 4294901760
        %1352 = vmatpush1.msra.mxu0 %v1351
        %1353 = vmatprep.subr.mxu0 0.0
        %1354 = vmatpush2.msra.mxu0 0.0
        %1355 = vmatprep.subr.mxu0 0.0
        %1356 = vmatpush2.msra.mxu0 0.0
        %1357 = vmatprep.subr.mxu0 0.0
        %1358 = vmatpush2.msra.mxu0 0.0
        %1359 = vmatprep.subr.mxu0 0.0
        %1360 = vmatpush2.msra.mxu0 0.0
        %1361 = vmatprep.subr.mxu0 0.0
        %1362 = vmatpush2.msra.mxu0 0.0
        %1363 = vmatprep.subr.mxu0 0.0
        %1364 = vmatpush2.msra.mxu0 0.0
        %1365 = vmatprep.subr.mxu0 0.0
        %1366 = vmatpush2.msra.mxu0 0.0
        %1367 = vmatprep.subr.mxu0 0.0
        %1368 = vmatpush2.msra.mxu0 0.0
        %1369 = vmatprep.subr.mxu0 0.0
        %1370 = vmatpush2.msra.mxu0 0.0
        %1371 = vmatprep.subr.mxu0 0.0
        %1372 = vmatpush2.msra.mxu0 0.0
        %1373 = vmatprep.subr.mxu0 0.0
        %1374 = vmatpush2.msra.mxu0 0.0
        %1375 = vmatprep.subr.mxu0 0.0
        %1376 = vmatpush2.msra.mxu0 0.0
        %1377 = vmatprep.subr.mxu0 0.0
        %1378 = vmatpush2.msra.mxu0 0.0
        %1379 = vmatprep.subr.mxu0 0.0
        %1380 = vmatpush2.msra.mxu0 0.0
        %1381 = vmatprep.subr.mxu0 0.0
        %1382 = vmatpush2.msra.mxu0 0.0
        %1383 = vmatprep.subr.mxu0 0.0
        %1384 = vmatpush2.msra.mxu0 0.0
        %1385 = vmatprep.mubr.f32.mxu0 0.0
        %v1386 = vand.u32 %v1317, 4294901760
        %v1387 = vsub.f32 %v1317, %v1386
        %v1388 = vand.u32 %v1387, 4294901760
        %v1389 = vsub.f32 %v1387, %v1388
        %v1390 = vand.u32 %v1389, 4294901760
        %1391 = vmatmul.mubr.f32.gmra.mxu0 %v1390
        %v1392 = vpop.f32.mrf.mxu0
        %v1393 = vadd.f32 %v1314, %v1392
        %v1394 = vpop.f32.mrf.mxu0
        %v1395 = vadd.f32 %v1314, %v1394
        %1396 = vdwg.mxu0
        %1397 = vmatprep.subr.mxu0 0.0
        %1398 = vmatpush1.msra.mxu0 0.0
        %1399 = vmatprep.subr.mxu0 0.0
        %1400 = vmatpush1.msra.mxu0 0.0
        %1401 = vmatprep.subr.mxu0 0.0
        %1402 = vmatpush1.msra.mxu0 0.0
        %1403 = vmatprep.subr.mxu0 0.0
        %1404 = vmatpush1.msra.mxu0 0.0
        %1405 = vmatprep.subr.mxu0 0.0
        %1406 = vmatpush1.msra.mxu0 0.0
        %1407 = vmatprep.subr.mxu0 0.0
        %1408 = vmatpush1.msra.mxu0 0.0
        %1409 = vmatprep.subr.mxu0 0.0
        %1410 = vmatpush1.msra.mxu0 0.0
        %1411 = vmatprep.subr.mxu0 0.0
        %1412 = vmatpush1.msra.mxu0 0.0
        %1413 = vmatprep.subr.mxu0 0.0
        %1414 = vmatpush1.msra.mxu0 0.0
        %1415 = vmatprep.subr.mxu0 0.0
        %1416 = vmatpush1.msra.mxu0 0.0
        %1417 = vmatprep.subr.mxu0 0.0
        %1418 = vmatpush1.msra.mxu0 0.0
        %1419 = vmatprep.subr.mxu0 0.0
        %1420 = vmatpush1.msra.mxu0 0.0
        %1421 = vmatprep.subr.mxu0 0.0
        %1422 = vmatpush1.msra.mxu0 0.0
        %1423 = vmatprep.subr.mxu0 0.0
        %1424 = vmatpush1.msra.mxu0 0.0
        %1425 = vmatprep.subr.mxu0 0.0
        %1426 = vmatpush1.msra.mxu0 0.0
        %v1427 = vand.u32 %v1310, 4294901760
        %v1428 = vsub.f32 %v1310, %v1427
        %v1429 = vand.u32 %v1428, 4294901760
        %v1430 = vsub.f32 %v1428, %v1429
        %v1431 = vand.u32 %v1430, 4294901760
        %1432 = vmatprep.subr.mxu0 %v1431
        %v1433 = vand.u32 %v1309, 4294901760
        %v1434 = vsub.f32 %v1309, %v1433
        %v1435 = vand.u32 %v1434, 4294901760
        %v1436 = vsub.f32 %v1434, %v1435
        %v1437 = vand.u32 %v1436, 4294901760
        %1438 = vmatpush1.msra.mxu0 %v1437
        %1439 = vmatprep.subr.mxu0 0.0
        %1440 = vmatpush2.msra.mxu0 0.0
        %1441 = vmatprep.subr.mxu0 0.0
        %1442 = vmatpush2.msra.mxu0 0.0
        %1443 = vmatprep.subr.mxu0 0.0
        %1444 = vmatpush2.msra.mxu0 0.0
        %1445 = vmatprep.subr.mxu0 0.0
        %1446 = vmatpush2.msra.mxu0 0.0
        %1447 = vmatprep.subr.mxu0 0.0
        %1448 = vmatpush2.msra.mxu0 0.0
        %1449 = vmatprep.subr.mxu0 0.0
        %1450 = vmatpush2.msra.mxu0 0.0
        %1451 = vmatprep.subr.mxu0 0.0
        %1452 = vmatpush2.msra.mxu0 0.0
        %1453 = vmatprep.subr.mxu0 0.0
        %1454 = vmatpush2.msra.mxu0 0.0
        %1455 = vmatprep.subr.mxu0 0.0
        %1456 = vmatpush2.msra.mxu0 0.0
        %1457 = vmatprep.subr.mxu0 0.0
        %1458 = vmatpush2.msra.mxu0 0.0
        %1459 = vmatprep.subr.mxu0 0.0
        %1460 = vmatpush2.msra.mxu0 0.0
        %1461 = vmatprep.subr.mxu0 0.0
        %1462 = vmatpush2.msra.mxu0 0.0
        %1463 = vmatprep.subr.mxu0 0.0
        %1464 = vmatpush2.msra.mxu0 0.0
        %1465 = vmatprep.subr.mxu0 0.0
        %1466 = vmatpush2.msra.mxu0 0.0
        %1467 = vmatprep.subr.mxu0 0.0
        %1468 = vmatpush2.msra.mxu0 0.0
        %1469 = vmatprep.subr.mxu0 0.0
        %1470 = vmatpush2.msra.mxu0 0.0
        %1471 = vmatprep.mubr.f32.mxu0 0.0
        %v1472 = vand.u32 %v1317, 4294901760
        %1473 = vmatmul.mubr.f32.gmra.mxu0 %v1472
        %v1474 = vpop.f32.mrf.mxu0
        %v1475 = vadd.f32 %v1393, %v1474
        %v1476 = vpop.f32.mrf.mxu0
        %v1477 = vadd.f32 %v1395, %v1476
        %1478 = vdwg.mxu0
        %1479 = vmatprep.subr.mxu0 0.0
        %1480 = vmatpush1.msra.mxu0 0.0
        %1481 = vmatprep.subr.mxu0 0.0
        %1482 = vmatpush1.msra.mxu0 0.0
        %1483 = vmatprep.subr.mxu0 0.0
        %1484 = vmatpush1.msra.mxu0 0.0
        %1485 = vmatprep.subr.mxu0 0.0
        %1486 = vmatpush1.msra.mxu0 0.0
        %1487 = vmatprep.subr.mxu0 0.0
        %1488 = vmatpush1.msra.mxu0 0.0
        %1489 = vmatprep.subr.mxu0 0.0
        %1490 = vmatpush1.msra.mxu0 0.0
        %1491 = vmatprep.subr.mxu0 0.0
        %1492 = vmatpush1.msra.mxu0 0.0
        %1493 = vmatprep.subr.mxu0 0.0
        %1494 = vmatpush1.msra.mxu0 0.0
        %1495 = vmatprep.subr.mxu0 0.0
        %1496 = vmatpush1.msra.mxu0 0.0
        %1497 = vmatprep.subr.mxu0 0.0
        %1498 = vmatpush1.msra.mxu0 0.0
        %1499 = vmatprep.subr.mxu0 0.0
        %1500 = vmatpush1.msra.mxu0 0.0
        %1501 = vmatprep.subr.mxu0 0.0
        %1502 = vmatpush1.msra.mxu0 0.0
        %1503 = vmatprep.subr.mxu0 0.0
        %1504 = vmatpush1.msra.mxu0 0.0
        %1505 = vmatprep.subr.mxu0 0.0
        %1506 = vmatpush1.msra.mxu0 0.0
        %1507 = vmatprep.subr.mxu0 0.0
        %1508 = vmatpush1.msra.mxu0 0.0
        %v1509 = vand.u32 %v1310, 4294901760
        %v1510 = vsub.f32 %v1310, %v1509
        %1511 = vmatprep.subr.mxu0 %v1510
        %v1512 = vand.u32 %v1309, 4294901760
        %v1513 = vsub.f32 %v1309, %v1512
        %1514 = vmatpush1.msra.mxu0 %v1513
        %1515 = vmatprep.subr.mxu0 0.0
        %1516 = vmatpush2.msra.mxu0 0.0
        %1517 = vmatprep.subr.mxu0 0.0
        %1518 = vmatpush2.msra.mxu0 0.0
        %1519 = vmatprep.subr.mxu0 0.0
        %1520 = vmatpush2.msra.mxu0 0.0
        %1521 = vmatprep.subr.mxu0 0.0
        %1522 = vmatpush2.msra.mxu0 0.0
        %1523 = vmatprep.subr.mxu0 0.0
        %1524 = vmatpush2.msra.mxu0 0.0
        %1525 = vmatprep.subr.mxu0 0.0
        %1526 = vmatpush2.msra.mxu0 0.0
        %1527 = vmatprep.subr.mxu0 0.0
        %1528 = vmatpush2.msra.mxu0 0.0
        %1529 = vmatprep.subr.mxu0 0.0
        %1530 = vmatpush2.msra.mxu0 0.0
        %1531 = vmatprep.subr.mxu0 0.0
        %1532 = vmatpush2.msra.mxu0 0.0
        %1533 = vmatprep.subr.mxu0 0.0
        %1534 = vmatpush2.msra.mxu0 0.0
        %1535 = vmatprep.subr.mxu0 0.0
        %1536 = vmatpush2.msra.mxu0 0.0
        %1537 = vmatprep.subr.mxu0 0.0
        %1538 = vmatpush2.msra.mxu0 0.0
        %1539 = vmatprep.subr.mxu0 0.0
        %1540 = vmatpush2.msra.mxu0 0.0
        %1541 = vmatprep.subr.mxu0 0.0
        %1542 = vmatpush2.msra.mxu0 0.0
        %1543 = vmatprep.subr.mxu0 0.0
        %1544 = vmatpush2.msra.mxu0 0.0
        %1545 = vmatprep.subr.mxu0 0.0
        %1546 = vmatpush2.msra.mxu0 0.0
        %1547 = vmatprep.mubr.f32.mxu0 0.0
        %v1548 = vand.u32 %v1317, 4294901760
        %v1549 = vsub.f32 %v1317, %v1548
        %1550 = vmatmul.mubr.f32.gmra.mxu0 %v1549
        %v1551 = vpop.f32.mrf.mxu0
        %v1552 = vadd.f32 %v1475, %v1551
        %v1553 = vpop.f32.mrf.mxu0
        %v1554 = vadd.f32 %v1477, %v1553
        %1555 = vdwg.mxu0
        %1556 = vmatprep.subr.mxu0 0.0
        %1557 = vmatpush1.msra.mxu0 0.0
        %1558 = vmatprep.subr.mxu0 0.0
        %1559 = vmatpush1.msra.mxu0 0.0
        %1560 = vmatprep.subr.mxu0 0.0
        %1561 = vmatpush1.msra.mxu0 0.0
        %1562 = vmatprep.subr.mxu0 0.0
        %1563 = vmatpush1.msra.mxu0 0.0
        %1564 = vmatprep.subr.mxu0 0.0
        %1565 = vmatpush1.msra.mxu0 0.0
        %1566 = vmatprep.subr.mxu0 0.0
        %1567 = vmatpush1.msra.mxu0 0.0
        %1568 = vmatprep.subr.mxu0 0.0
        %1569 = vmatpush1.msra.mxu0 0.0
        %1570 = vmatprep.subr.mxu0 0.0
        %1571 = vmatpush1.msra.mxu0 0.0
        %1572 = vmatprep.subr.mxu0 0.0
        %1573 = vmatpush1.msra.mxu0 0.0
        %1574 = vmatprep.subr.mxu0 0.0
        %1575 = vmatpush1.msra.mxu0 0.0
        %1576 = vmatprep.subr.mxu0 0.0
        %1577 = vmatpush1.msra.mxu0 0.0
        %1578 = vmatprep.subr.mxu0 0.0
        %1579 = vmatpush1.msra.mxu0 0.0
        %1580 = vmatprep.subr.mxu0 0.0
        %1581 = vmatpush1.msra.mxu0 0.0
        %1582 = vmatprep.subr.mxu0 0.0
        %1583 = vmatpush1.msra.mxu0 0.0
        %1584 = vmatprep.subr.mxu0 0.0
        %1585 = vmatpush1.msra.mxu0 0.0
        %v1586 = vand.u32 %v1310, 4294901760
        %1587 = vmatprep.subr.mxu0 %v1586
        %v1588 = vand.u32 %v1309, 4294901760
        %1589 = vmatpush1.msra.mxu0 %v1588
        %1590 = vmatprep.subr.mxu0 0.0
        %1591 = vmatpush2.msra.mxu0 0.0
        %1592 = vmatprep.subr.mxu0 0.0
        %1593 = vmatpush2.msra.mxu0 0.0
        %1594 = vmatprep.subr.mxu0 0.0
        %1595 = vmatpush2.msra.mxu0 0.0
        %1596 = vmatprep.subr.mxu0 0.0
        %1597 = vmatpush2.msra.mxu0 0.0
        %1598 = vmatprep.subr.mxu0 0.0
        %1599 = vmatpush2.msra.mxu0 0.0
        %1600 = vmatprep.subr.mxu0 0.0
        %1601 = vmatpush2.msra.mxu0 0.0
        %1602 = vmatprep.subr.mxu0 0.0
        %1603 = vmatpush2.msra.mxu0 0.0
        %1604 = vmatprep.subr.mxu0 0.0
        %1605 = vmatpush2.msra.mxu0 0.0
        %1606 = vmatprep.subr.mxu0 0.0
        %1607 = vmatpush2.msra.mxu0 0.0
        %1608 = vmatprep.subr.mxu0 0.0
        %1609 = vmatpush2.msra.mxu0 0.0
        %1610 = vmatprep.subr.mxu0 0.0
        %1611 = vmatpush2.msra.mxu0 0.0
        %1612 = vmatprep.subr.mxu0 0.0
        %1613 = vmatpush2.msra.mxu0 0.0
        %1614 = vmatprep.subr.mxu0 0.0
        %1615 = vmatpush2.msra.mxu0 0.0
        %1616 = vmatprep.subr.mxu0 0.0
        %1617 = vmatpush2.msra.mxu0 0.0
        %1618 = vmatprep.subr.mxu0 0.0
        %1619 = vmatpush2.msra.mxu0 0.0
        %1620 = vmatprep.subr.mxu0 0.0
        %1621 = vmatpush2.msra.mxu0 0.0
        %1622 = vmatprep.mubr.f32.mxu0 0.0
        %v1623 = vand.u32 %v1317, 4294901760
        %v1624 = vsub.f32 %v1317, %v1623
        %v1625 = vand.u32 %v1624, 4294901760
        %1626 = vmatmul.mubr.f32.gmra.mxu0 %v1625
        %v1627 = vpop.f32.mrf.mxu0
        %v1628 = vadd.f32 %v1552, %v1627
        %v1629 = vpop.f32.mrf.mxu0
        %v1630 = vadd.f32 %v1554, %v1629
        %1631 = vdwg.mxu0
        %1632 = vmatprep.subr.mxu0 0.0
        %1633 = vmatpush1.msra.mxu0 0.0
        %1634 = vmatprep.subr.mxu0 0.0
        %1635 = vmatpush1.msra.mxu0 0.0
        %1636 = vmatprep.subr.mxu0 0.0
        %1637 = vmatpush1.msra.mxu0 0.0
        %1638 = vmatprep.subr.mxu0 0.0
        %1639 = vmatpush1.msra.mxu0 0.0
        %1640 = vmatprep.subr.mxu0 0.0
        %1641 = vmatpush1.msra.mxu0 0.0
        %1642 = vmatprep.subr.mxu0 0.0
        %1643 = vmatpush1.msra.mxu0 0.0
        %1644 = vmatprep.subr.mxu0 0.0
        %1645 = vmatpush1.msra.mxu0 0.0
        %1646 = vmatprep.subr.mxu0 0.0
        %1647 = vmatpush1.msra.mxu0 0.0
        %1648 = vmatprep.subr.mxu0 0.0
        %1649 = vmatpush1.msra.mxu0 0.0
        %1650 = vmatprep.subr.mxu0 0.0
        %1651 = vmatpush1.msra.mxu0 0.0
        %1652 = vmatprep.subr.mxu0 0.0
        %1653 = vmatpush1.msra.mxu0 0.0
        %1654 = vmatprep.subr.mxu0 0.0
        %1655 = vmatpush1.msra.mxu0 0.0
        %1656 = vmatprep.subr.mxu0 0.0
        %1657 = vmatpush1.msra.mxu0 0.0
        %1658 = vmatprep.subr.mxu0 0.0
        %1659 = vmatpush1.msra.mxu0 0.0
        %1660 = vmatprep.subr.mxu0 0.0
        %1661 = vmatpush1.msra.mxu0 0.0
        %v1662 = vand.u32 %v1310, 4294901760
        %v1663 = vsub.f32 %v1310, %v1662
        %v1664 = vand.u32 %v1663, 4294901760
        %1665 = vmatprep.subr.mxu0 %v1664
        %v1666 = vand.u32 %v1309, 4294901760
        %v1667 = vsub.f32 %v1309, %v1666
        %v1668 = vand.u32 %v1667, 4294901760
        %1669 = vmatpush1.msra.mxu0 %v1668
        %1670 = vmatprep.subr.mxu0 0.0
        %1671 = vmatpush2.msra.mxu0 0.0
        %1672 = vmatprep.subr.mxu0 0.0
        %1673 = vmatpush2.msra.mxu0 0.0
        %1674 = vmatprep.subr.mxu0 0.0
        %1675 = vmatpush2.msra.mxu0 0.0
        %1676 = vmatprep.subr.mxu0 0.0
        %1677 = vmatpush2.msra.mxu0 0.0
        %1678 = vmatprep.subr.mxu0 0.0
        %1679 = vmatpush2.msra.mxu0 0.0
        %1680 = vmatprep.subr.mxu0 0.0
        %1681 = vmatpush2.msra.mxu0 0.0
        %1682 = vmatprep.subr.mxu0 0.0
        %1683 = vmatpush2.msra.mxu0 0.0
        %1684 = vmatprep.subr.mxu0 0.0
        %1685 = vmatpush2.msra.mxu0 0.0
        %1686 = vmatprep.subr.mxu0 0.0
        %1687 = vmatpush2.msra.mxu0 0.0
        %1688 = vmatprep.subr.mxu0 0.0
        %1689 = vmatpush2.msra.mxu0 0.0
        %1690 = vmatprep.subr.mxu0 0.0
        %1691 = vmatpush2.msra.mxu0 0.0
        %1692 = vmatprep.subr.mxu0 0.0
        %1693 = vmatpush2.msra.mxu0 0.0
        %1694 = vmatprep.subr.mxu0 0.0
        %1695 = vmatpush2.msra.mxu0 0.0
        %1696 = vmatprep.subr.mxu0 0.0
        %1697 = vmatpush2.msra.mxu0 0.0
        %1698 = vmatprep.subr.mxu0 0.0
        %1699 = vmatpush2.msra.mxu0 0.0
        %1700 = vmatprep.subr.mxu0 0.0
        %1701 = vmatpush2.msra.mxu0 0.0
        %1702 = vmatprep.mubr.f32.mxu0 0.0
        %v1703 = vand.u32 %v1317, 4294901760
        %1704 = vmatmul.mubr.f32.gmra.mxu0 %v1703
        %v1705 = vpop.f32.mrf.mxu0
        %v1706 = vadd.f32 %v1628, %v1705
        %v1707 = vpop.f32.mrf.mxu0
        %v1708 = vadd.f32 %v1630, %v1707
        %1709 = vdwg.mxu0
        %1710 = vmatprep.subr.mxu0 0.0
        %1711 = vmatpush1.msra.mxu0 0.0
        %1712 = vmatprep.subr.mxu0 0.0
        %1713 = vmatpush1.msra.mxu0 0.0
        %1714 = vmatprep.subr.mxu0 0.0
        %1715 = vmatpush1.msra.mxu0 0.0
        %1716 = vmatprep.subr.mxu0 0.0
        %1717 = vmatpush1.msra.mxu0 0.0
        %1718 = vmatprep.subr.mxu0 0.0
        %1719 = vmatpush1.msra.mxu0 0.0
        %1720 = vmatprep.subr.mxu0 0.0
        %1721 = vmatpush1.msra.mxu0 0.0
        %1722 = vmatprep.subr.mxu0 0.0
        %1723 = vmatpush1.msra.mxu0 0.0
        %1724 = vmatprep.subr.mxu0 0.0
        %1725 = vmatpush1.msra.mxu0 0.0
        %1726 = vmatprep.subr.mxu0 0.0
        %1727 = vmatpush1.msra.mxu0 0.0
        %1728 = vmatprep.subr.mxu0 0.0
        %1729 = vmatpush1.msra.mxu0 0.0
        %1730 = vmatprep.subr.mxu0 0.0
        %1731 = vmatpush1.msra.mxu0 0.0
        %1732 = vmatprep.subr.mxu0 0.0
        %1733 = vmatpush1.msra.mxu0 0.0
        %1734 = vmatprep.subr.mxu0 0.0
        %1735 = vmatpush1.msra.mxu0 0.0
        %1736 = vmatprep.subr.mxu0 0.0
        %1737 = vmatpush1.msra.mxu0 0.0
        %1738 = vmatprep.subr.mxu0 0.0
        %1739 = vmatpush1.msra.mxu0 0.0
        %v1740 = vand.u32 %v1310, 4294901760
        %1741 = vmatprep.subr.mxu0 %v1740
        %v1742 = vand.u32 %v1309, 4294901760
        %1743 = vmatpush1.msra.mxu0 %v1742
        %1744 = vmatprep.subr.mxu0 0.0
        %1745 = vmatpush2.msra.mxu0 0.0
        %1746 = vmatprep.subr.mxu0 0.0
        %1747 = vmatpush2.msra.mxu0 0.0
        %1748 = vmatprep.subr.mxu0 0.0
        %1749 = vmatpush2.msra.mxu0 0.0
        %1750 = vmatprep.subr.mxu0 0.0
        %1751 = vmatpush2.msra.mxu0 0.0
        %1752 = vmatprep.subr.mxu0 0.0
        %1753 = vmatpush2.msra.mxu0 0.0
        %1754 = vmatprep.subr.mxu0 0.0
        %1755 = vmatpush2.msra.mxu0 0.0
        %1756 = vmatprep.subr.mxu0 0.0
        %1757 = vmatpush2.msra.mxu0 0.0
        %1758 = vmatprep.subr.mxu0 0.0
        %1759 = vmatpush2.msra.mxu0 0.0
        %1760 = vmatprep.subr.mxu0 0.0
        %1761 = vmatpush2.msra.mxu0 0.0
        %1762 = vmatprep.subr.mxu0 0.0
        %1763 = vmatpush2.msra.mxu0 0.0
        %1764 = vmatprep.subr.mxu0 0.0
        %1765 = vmatpush2.msra.mxu0 0.0
        %1766 = vmatprep.subr.mxu0 0.0
        %1767 = vmatpush2.msra.mxu0 0.0
        %1768 = vmatprep.subr.mxu0 0.0
        %1769 = vmatpush2.msra.mxu0 0.0
        %1770 = vmatprep.subr.mxu0 0.0
        %1771 = vmatpush2.msra.mxu0 0.0
        %1772 = vmatprep.subr.mxu0 0.0
        %1773 = vmatpush2.msra.mxu0 0.0
        %1774 = vmatprep.subr.mxu0 0.0
        %1775 = vmatpush2.msra.mxu0 0.0
        %1776 = vmatprep.mubr.f32.mxu0 0.0
        %v1777 = vand.u32 %v1317, 4294901760
        %1778 = vmatmul.mubr.f32.gmra.mxu0 %v1777
        %v1779 = vpop.f32.mrf.mxu0
        %v1780 = vadd.f32 %v1706, %v1779
        %v1781 = vpop.f32.mrf.mxu0
        %v1782 = vadd.f32 %v1708, %v1781
        %1783 = vdwg.mxu0
        %v1784 = vmax.f32 %v1780, 0.0
        %v1785 = vmax.f32 %v1782, 0.0
        %1786 = vst [vmem:[%s311] sm:$0xff] %v1784
        %1787 = vst [vmem:[%s311 + $0x8] sm:$0xff] %v1785
        %s1788 = scalar_lea.vmem [#allocation2], 8
        %v1789 = vld [vmem:[%s1788] sm:$0xff]
        %s1790 = scalar_lea.vmem %s4, 8
        %v1791 = vld [vmem:[%s1790] sm:$0xff]
        %1793 = vset.pattern.permute.xlu0 0
        %1794 = vperm.xlu0 %1793, %v1791
        %v1795 = vpop.permute.xlu0 %1794
        %v1798 = vsel %vm840, %v1789, 0
        %1800 = vmatprep.subr.mxu0 0.0
        %1801 = vmatpush1.msra.mxu0 0.0
        %1802 = vmatprep.subr.mxu0 0.0
        %1803 = vmatpush1.msra.mxu0 0.0
        %1804 = vmatprep.subr.mxu0 0.0
        %1805 = vmatpush1.msra.mxu0 0.0
        %1806 = vmatprep.subr.mxu0 0.0
        %1807 = vmatpush1.msra.mxu0 0.0
        %1808 = vmatprep.subr.mxu0 0.0
        %1809 = vmatpush1.msra.mxu0 0.0
        %1810 = vmatprep.subr.mxu0 0.0
        %1811 = vmatpush1.msra.mxu0 0.0
        %1812 = vmatprep.subr.mxu0 0.0
        %1813 = vmatpush1.msra.mxu0 0.0
        %1814 = vmatprep.subr.mxu0 0.0
        %1815 = vmatpush1.msra.mxu0 0.0
        %1816 = vmatprep.subr.mxu0 0.0
        %1817 = vmatpush1.msra.mxu0 0.0
        %1818 = vmatprep.subr.mxu0 0.0
        %1819 = vmatpush1.msra.mxu0 0.0
        %1820 = vmatprep.subr.mxu0 0.0
        %1821 = vmatpush1.msra.mxu0 0.0
        %1822 = vmatprep.subr.mxu0 0.0
        %1823 = vmatpush1.msra.mxu0 0.0
        %1824 = vmatprep.subr.mxu0 0.0
        %1825 = vmatpush1.msra.mxu0 0.0
        %1826 = vmatprep.subr.mxu0 0.0
        %1827 = vmatpush1.msra.mxu0 0.0
        %1828 = vmatprep.subr.mxu0 0.0
        %1829 = vmatpush1.msra.mxu0 0.0
        %v1830 = vand.u32 %v830, 4294901760
        %1831 = vmatprep.subr.mxu0 %v1830
        %v1832 = vand.u32 %v829, 4294901760
        %1833 = vmatpush1.msra.mxu0 %v1832
        %1834 = vmatprep.subr.mxu0 0.0
        %1835 = vmatpush2.msra.mxu0 0.0
        %1836 = vmatprep.subr.mxu0 0.0
        %1837 = vmatpush2.msra.mxu0 0.0
        %1838 = vmatprep.subr.mxu0 0.0
        %1839 = vmatpush2.msra.mxu0 0.0
        %1840 = vmatprep.subr.mxu0 0.0
        %1841 = vmatpush2.msra.mxu0 0.0
        %1842 = vmatprep.subr.mxu0 0.0
        %1843 = vmatpush2.msra.mxu0 0.0
        %1844 = vmatprep.subr.mxu0 0.0
        %1845 = vmatpush2.msra.mxu0 0.0
        %1846 = vmatprep.subr.mxu0 0.0
        %1847 = vmatpush2.msra.mxu0 0.0
        %1848 = vmatprep.subr.mxu0 0.0
        %1849 = vmatpush2.msra.mxu0 0.0
        %1850 = vmatprep.subr.mxu0 0.0
        %1851 = vmatpush2.msra.mxu0 0.0
        %1852 = vmatprep.subr.mxu0 0.0
        %1853 = vmatpush2.msra.mxu0 0.0
        %1854 = vmatprep.subr.mxu0 0.0
        %1855 = vmatpush2.msra.mxu0 0.0
        %1856 = vmatprep.subr.mxu0 0.0
        %1857 = vmatpush2.msra.mxu0 0.0
        %1858 = vmatprep.subr.mxu0 0.0
        %1859 = vmatpush2.msra.mxu0 0.0
        %1860 = vmatprep.subr.mxu0 0.0
        %1861 = vmatpush2.msra.mxu0 0.0
        %1862 = vmatprep.subr.mxu0 0.0
        %1863 = vmatpush2.msra.mxu0 0.0
        %1864 = vmatprep.subr.mxu0 0.0
        %1865 = vmatpush2.msra.mxu0 0.0
        %1866 = vmatprep.mubr.f32.mxu0 0.0
        %v1867 = vand.u32 %v1798, 4294901760
        %v1868 = vsub.f32 %v1798, %v1867
        %v1869 = vand.u32 %v1868, 4294901760
        %v1870 = vsub.f32 %v1868, %v1869
        %v1871 = vand.u32 %v1870, 4294901760
        %1872 = vmatmul.mubr.f32.gmra.mxu0 %v1871
        %v1873 = vpop.f32.mrf.mxu0
        %v1874 = vadd.f32 %v1795, %v1873
        %v1875 = vpop.f32.mrf.mxu0
        %v1876 = vadd.f32 %v1795, %v1875
        %1877 = vdwg.mxu0
        %1878 = vmatprep.subr.mxu0 0.0
        %1879 = vmatpush1.msra.mxu0 0.0
        %1880 = vmatprep.subr.mxu0 0.0
        %1881 = vmatpush1.msra.mxu0 0.0
        %1882 = vmatprep.subr.mxu0 0.0
        %1883 = vmatpush1.msra.mxu0 0.0
        %1884 = vmatprep.subr.mxu0 0.0
        %1885 = vmatpush1.msra.mxu0 0.0
        %1886 = vmatprep.subr.mxu0 0.0
        %1887 = vmatpush1.msra.mxu0 0.0
        %1888 = vmatprep.subr.mxu0 0.0
        %1889 = vmatpush1.msra.mxu0 0.0
        %1890 = vmatprep.subr.mxu0 0.0
        %1891 = vmatpush1.msra.mxu0 0.0
        %1892 = vmatprep.subr.mxu0 0.0
        %1893 = vmatpush1.msra.mxu0 0.0
        %1894 = vmatprep.subr.mxu0 0.0
        %1895 = vmatpush1.msra.mxu0 0.0
        %1896 = vmatprep.subr.mxu0 0.0
        %1897 = vmatpush1.msra.mxu0 0.0
        %1898 = vmatprep.subr.mxu0 0.0
        %1899 = vmatpush1.msra.mxu0 0.0
        %1900 = vmatprep.subr.mxu0 0.0
        %1901 = vmatpush1.msra.mxu0 0.0
        %1902 = vmatprep.subr.mxu0 0.0
        %1903 = vmatpush1.msra.mxu0 0.0
        %1904 = vmatprep.subr.mxu0 0.0
        %1905 = vmatpush1.msra.mxu0 0.0
        %1906 = vmatprep.subr.mxu0 0.0
        %1907 = vmatpush1.msra.mxu0 0.0
        %v1908 = vand.u32 %v830, 4294901760
        %v1909 = vsub.f32 %v830, %v1908
        %v1910 = vand.u32 %v1909, 4294901760
        %v1911 = vsub.f32 %v1909, %v1910
        %v1912 = vand.u32 %v1911, 4294901760
        %1913 = vmatprep.subr.mxu0 %v1912
        %v1914 = vand.u32 %v829, 4294901760
        %v1915 = vsub.f32 %v829, %v1914
        %v1916 = vand.u32 %v1915, 4294901760
        %v1917 = vsub.f32 %v1915, %v1916
        %v1918 = vand.u32 %v1917, 4294901760
        %1919 = vmatpush1.msra.mxu0 %v1918
        %1920 = vmatprep.subr.mxu0 0.0
        %1921 = vmatpush2.msra.mxu0 0.0
        %1922 = vmatprep.subr.mxu0 0.0
        %1923 = vmatpush2.msra.mxu0 0.0
        %1924 = vmatprep.subr.mxu0 0.0
        %1925 = vmatpush2.msra.mxu0 0.0
        %1926 = vmatprep.subr.mxu0 0.0
        %1927 = vmatpush2.msra.mxu0 0.0
        %1928 = vmatprep.subr.mxu0 0.0
        %1929 = vmatpush2.msra.mxu0 0.0
        %1930 = vmatprep.subr.mxu0 0.0
        %1931 = vmatpush2.msra.mxu0 0.0
        %1932 = vmatprep.subr.mxu0 0.0
        %1933 = vmatpush2.msra.mxu0 0.0
        %1934 = vmatprep.subr.mxu0 0.0
        %1935 = vmatpush2.msra.mxu0 0.0
        %1936 = vmatprep.subr.mxu0 0.0
        %1937 = vmatpush2.msra.mxu0 0.0
        %1938 = vmatprep.subr.mxu0 0.0
        %1939 = vmatpush2.msra.mxu0 0.0
        %1940 = vmatprep.subr.mxu0 0.0
        %1941 = vmatpush2.msra.mxu0 0.0
        %1942 = vmatprep.subr.mxu0 0.0
        %1943 = vmatpush2.msra.mxu0 0.0
        %1944 = vmatprep.subr.mxu0 0.0
        %1945 = vmatpush2.msra.mxu0 0.0
        %1946 = vmatprep.subr.mxu0 0.0
        %1947 = vmatpush2.msra.mxu0 0.0
        %1948 = vmatprep.subr.mxu0 0.0
        %1949 = vmatpush2.msra.mxu0 0.0
        %1950 = vmatprep.subr.mxu0 0.0
        %1951 = vmatpush2.msra.mxu0 0.0
        %1952 = vmatprep.mubr.f32.mxu0 0.0
        %v1953 = vand.u32 %v1798, 4294901760
        %1954 = vmatmul.mubr.f32.gmra.mxu0 %v1953
        %v1955 = vpop.f32.mrf.mxu0
        %v1956 = vadd.f32 %v1874, %v1955
        %v1957 = vpop.f32.mrf.mxu0
        %v1958 = vadd.f32 %v1876, %v1957
        %1959 = vdwg.mxu0
        %1960 = vmatprep.subr.mxu0 0.0
        %1961 = vmatpush1.msra.mxu0 0.0
        %1962 = vmatprep.subr.mxu0 0.0
        %1963 = vmatpush1.msra.mxu0 0.0
        %1964 = vmatprep.subr.mxu0 0.0
        %1965 = vmatpush1.msra.mxu0 0.0
        %1966 = vmatprep.subr.mxu0 0.0
        %1967 = vmatpush1.msra.mxu0 0.0
        %1968 = vmatprep.subr.mxu0 0.0
        %1969 = vmatpush1.msra.mxu0 0.0
        %1970 = vmatprep.subr.mxu0 0.0
        %1971 = vmatpush1.msra.mxu0 0.0
        %1972 = vmatprep.subr.mxu0 0.0
        %1973 = vmatpush1.msra.mxu0 0.0
        %1974 = vmatprep.subr.mxu0 0.0
        %1975 = vmatpush1.msra.mxu0 0.0
        %1976 = vmatprep.subr.mxu0 0.0
        %1977 = vmatpush1.msra.mxu0 0.0
        %1978 = vmatprep.subr.mxu0 0.0
        %1979 = vmatpush1.msra.mxu0 0.0
        %1980 = vmatprep.subr.mxu0 0.0
        %1981 = vmatpush1.msra.mxu0 0.0
        %1982 = vmatprep.subr.mxu0 0.0
        %1983 = vmatpush1.msra.mxu0 0.0
        %1984 = vmatprep.subr.mxu0 0.0
        %1985 = vmatpush1.msra.mxu0 0.0
        %1986 = vmatprep.subr.mxu0 0.0
        %1987 = vmatpush1.msra.mxu0 0.0
        %1988 = vmatprep.subr.mxu0 0.0
        %1989 = vmatpush1.msra.mxu0 0.0
        %v1990 = vand.u32 %v830, 4294901760
        %v1991 = vsub.f32 %v830, %v1990
        %1992 = vmatprep.subr.mxu0 %v1991
        %v1993 = vand.u32 %v829, 4294901760
        %v1994 = vsub.f32 %v829, %v1993
        %1995 = vmatpush1.msra.mxu0 %v1994
        %1996 = vmatprep.subr.mxu0 0.0
        %1997 = vmatpush2.msra.mxu0 0.0
        %1998 = vmatprep.subr.mxu0 0.0
        %1999 = vmatpush2.msra.mxu0 0.0
        %2000 = vmatprep.subr.mxu0 0.0
        %2001 = vmatpush2.msra.mxu0 0.0
        %2002 = vmatprep.subr.mxu0 0.0
        %2003 = vmatpush2.msra.mxu0 0.0
        %2004 = vmatprep.subr.mxu0 0.0
        %2005 = vmatpush2.msra.mxu0 0.0
        %2006 = vmatprep.subr.mxu0 0.0
        %2007 = vmatpush2.msra.mxu0 0.0
        %2008 = vmatprep.subr.mxu0 0.0
        %2009 = vmatpush2.msra.mxu0 0.0
        %2010 = vmatprep.subr.mxu0 0.0
        %2011 = vmatpush2.msra.mxu0 0.0
        %2012 = vmatprep.subr.mxu0 0.0
        %2013 = vmatpush2.msra.mxu0 0.0
        %2014 = vmatprep.subr.mxu0 0.0
        %2015 = vmatpush2.msra.mxu0 0.0
        %2016 = vmatprep.subr.mxu0 0.0
        %2017 = vmatpush2.msra.mxu0 0.0
        %2018 = vmatprep.subr.mxu0 0.0
        %2019 = vmatpush2.msra.mxu0 0.0
        %2020 = vmatprep.subr.mxu0 0.0
        %2021 = vmatpush2.msra.mxu0 0.0
        %2022 = vmatprep.subr.mxu0 0.0
        %2023 = vmatpush2.msra.mxu0 0.0
        %2024 = vmatprep.subr.mxu0 0.0
        %2025 = vmatpush2.msra.mxu0 0.0
        %2026 = vmatprep.subr.mxu0 0.0
        %2027 = vmatpush2.msra.mxu0 0.0
        %2028 = vmatprep.mubr.f32.mxu0 0.0
        %v2029 = vand.u32 %v1798, 4294901760
        %v2030 = vsub.f32 %v1798, %v2029
        %2031 = vmatmul.mubr.f32.gmra.mxu0 %v2030
        %v2032 = vpop.f32.mrf.mxu0
        %v2033 = vadd.f32 %v1956, %v2032
        %v2034 = vpop.f32.mrf.mxu0
        %v2035 = vadd.f32 %v1958, %v2034
        %2036 = vdwg.mxu0
        %2037 = vmatprep.subr.mxu0 0.0
        %2038 = vmatpush1.msra.mxu0 0.0
        %2039 = vmatprep.subr.mxu0 0.0
        %2040 = vmatpush1.msra.mxu0 0.0
        %2041 = vmatprep.subr.mxu0 0.0
        %2042 = vmatpush1.msra.mxu0 0.0
        %2043 = vmatprep.subr.mxu0 0.0
        %2044 = vmatpush1.msra.mxu0 0.0
        %2045 = vmatprep.subr.mxu0 0.0
        %2046 = vmatpush1.msra.mxu0 0.0
        %2047 = vmatprep.subr.mxu0 0.0
        %2048 = vmatpush1.msra.mxu0 0.0
        %2049 = vmatprep.subr.mxu0 0.0
        %2050 = vmatpush1.msra.mxu0 0.0
        %2051 = vmatprep.subr.mxu0 0.0
        %2052 = vmatpush1.msra.mxu0 0.0
        %2053 = vmatprep.subr.mxu0 0.0
        %2054 = vmatpush1.msra.mxu0 0.0
        %2055 = vmatprep.subr.mxu0 0.0
        %2056 = vmatpush1.msra.mxu0 0.0
        %2057 = vmatprep.subr.mxu0 0.0
        %2058 = vmatpush1.msra.mxu0 0.0
        %2059 = vmatprep.subr.mxu0 0.0
        %2060 = vmatpush1.msra.mxu0 0.0
        %2061 = vmatprep.subr.mxu0 0.0
        %2062 = vmatpush1.msra.mxu0 0.0
        %2063 = vmatprep.subr.mxu0 0.0
        %2064 = vmatpush1.msra.mxu0 0.0
        %2065 = vmatprep.subr.mxu0 0.0
        %2066 = vmatpush1.msra.mxu0 0.0
        %v2067 = vand.u32 %v830, 4294901760
        %2068 = vmatprep.subr.mxu0 %v2067
        %v2069 = vand.u32 %v829, 4294901760
        %2070 = vmatpush1.msra.mxu0 %v2069
        %2071 = vmatprep.subr.mxu0 0.0
        %2072 = vmatpush2.msra.mxu0 0.0
        %2073 = vmatprep.subr.mxu0 0.0
        %2074 = vmatpush2.msra.mxu0 0.0
        %2075 = vmatprep.subr.mxu0 0.0
        %2076 = vmatpush2.msra.mxu0 0.0
        %2077 = vmatprep.subr.mxu0 0.0
        %2078 = vmatpush2.msra.mxu0 0.0
        %2079 = vmatprep.subr.mxu0 0.0
        %2080 = vmatpush2.msra.mxu0 0.0
        %2081 = vmatprep.subr.mxu0 0.0
        %2082 = vmatpush2.msra.mxu0 0.0
        %2083 = vmatprep.subr.mxu0 0.0
        %2084 = vmatpush2.msra.mxu0 0.0
        %2085 = vmatprep.subr.mxu0 0.0
        %2086 = vmatpush2.msra.mxu0 0.0
        %2087 = vmatprep.subr.mxu0 0.0
        %2088 = vmatpush2.msra.mxu0 0.0
        %2089 = vmatprep.subr.mxu0 0.0
        %2090 = vmatpush2.msra.mxu0 0.0
        %2091 = vmatprep.subr.mxu0 0.0
        %2092 = vmatpush2.msra.mxu0 0.0
        %2093 = vmatprep.subr.mxu0 0.0
        %2094 = vmatpush2.msra.mxu0 0.0
        %2095 = vmatprep.subr.mxu0 0.0
        %2096 = vmatpush2.msra.mxu0 0.0
        %2097 = vmatprep.subr.mxu0 0.0
        %2098 = vmatpush2.msra.mxu0 0.0
        %2099 = vmatprep.subr.mxu0 0.0
        %2100 = vmatpush2.msra.mxu0 0.0
        %2101 = vmatprep.subr.mxu0 0.0
        %2102 = vmatpush2.msra.mxu0 0.0
        %2103 = vmatprep.mubr.f32.mxu0 0.0
        %v2104 = vand.u32 %v1798, 4294901760
        %v2105 = vsub.f32 %v1798, %v2104
        %v2106 = vand.u32 %v2105, 4294901760
        %2107 = vmatmul.mubr.f32.gmra.mxu0 %v2106
        %v2108 = vpop.f32.mrf.mxu0
        %v2109 = vadd.f32 %v2033, %v2108
        %v2110 = vpop.f32.mrf.mxu0
        %v2111 = vadd.f32 %v2035, %v2110
        %2112 = vdwg.mxu0
        %2113 = vmatprep.subr.mxu0 0.0
        %2114 = vmatpush1.msra.mxu0 0.0
        %2115 = vmatprep.subr.mxu0 0.0
        %2116 = vmatpush1.msra.mxu0 0.0
        %2117 = vmatprep.subr.mxu0 0.0
        %2118 = vmatpush1.msra.mxu0 0.0
        %2119 = vmatprep.subr.mxu0 0.0
        %2120 = vmatpush1.msra.mxu0 0.0
        %2121 = vmatprep.subr.mxu0 0.0
        %2122 = vmatpush1.msra.mxu0 0.0
        %2123 = vmatprep.subr.mxu0 0.0
        %2124 = vmatpush1.msra.mxu0 0.0
        %2125 = vmatprep.subr.mxu0 0.0
        %2126 = vmatpush1.msra.mxu0 0.0
        %2127 = vmatprep.subr.mxu0 0.0
        %2128 = vmatpush1.msra.mxu0 0.0
        %2129 = vmatprep.subr.mxu0 0.0
        %2130 = vmatpush1.msra.mxu0 0.0
        %2131 = vmatprep.subr.mxu0 0.0
        %2132 = vmatpush1.msra.mxu0 0.0
        %2133 = vmatprep.subr.mxu0 0.0
        %2134 = vmatpush1.msra.mxu0 0.0
        %2135 = vmatprep.subr.mxu0 0.0
        %2136 = vmatpush1.msra.mxu0 0.0
        %2137 = vmatprep.subr.mxu0 0.0
        %2138 = vmatpush1.msra.mxu0 0.0
        %2139 = vmatprep.subr.mxu0 0.0
        %2140 = vmatpush1.msra.mxu0 0.0
        %2141 = vmatprep.subr.mxu0 0.0
        %2142 = vmatpush1.msra.mxu0 0.0
        %v2143 = vand.u32 %v830, 4294901760
        %v2144 = vsub.f32 %v830, %v2143
        %v2145 = vand.u32 %v2144, 4294901760
        %2146 = vmatprep.subr.mxu0 %v2145
        %v2147 = vand.u32 %v829, 4294901760
        %v2148 = vsub.f32 %v829, %v2147
        %v2149 = vand.u32 %v2148, 4294901760
        %2150 = vmatpush1.msra.mxu0 %v2149
        %2151 = vmatprep.subr.mxu0 0.0
        %2152 = vmatpush2.msra.mxu0 0.0
        %2153 = vmatprep.subr.mxu0 0.0
        %2154 = vmatpush2.msra.mxu0 0.0
        %2155 = vmatprep.subr.mxu0 0.0
        %2156 = vmatpush2.msra.mxu0 0.0
        %2157 = vmatprep.subr.mxu0 0.0
        %2158 = vmatpush2.msra.mxu0 0.0
        %2159 = vmatprep.subr.mxu0 0.0
        %2160 = vmatpush2.msra.mxu0 0.0
        %2161 = vmatprep.subr.mxu0 0.0
        %2162 = vmatpush2.msra.mxu0 0.0
        %2163 = vmatprep.subr.mxu0 0.0
        %2164 = vmatpush2.msra.mxu0 0.0
        %2165 = vmatprep.subr.mxu0 0.0
        %2166 = vmatpush2.msra.mxu0 0.0
        %2167 = vmatprep.subr.mxu0 0.0
        %2168 = vmatpush2.msra.mxu0 0.0
        %2169 = vmatprep.subr.mxu0 0.0
        %2170 = vmatpush2.msra.mxu0 0.0
        %2171 = vmatprep.subr.mxu0 0.0
        %2172 = vmatpush2.msra.mxu0 0.0
        %2173 = vmatprep.subr.mxu0 0.0
        %2174 = vmatpush2.msra.mxu0 0.0
        %2175 = vmatprep.subr.mxu0 0.0
        %2176 = vmatpush2.msra.mxu0 0.0
        %2177 = vmatprep.subr.mxu0 0.0
        %2178 = vmatpush2.msra.mxu0 0.0
        %2179 = vmatprep.subr.mxu0 0.0
        %2180 = vmatpush2.msra.mxu0 0.0
        %2181 = vmatprep.subr.mxu0 0.0
        %2182 = vmatpush2.msra.mxu0 0.0
        %2183 = vmatprep.mubr.f32.mxu0 0.0
        %v2184 = vand.u32 %v1798, 4294901760
        %2185 = vmatmul.mubr.f32.gmra.mxu0 %v2184
        %v2186 = vpop.f32.mrf.mxu0
        %v2187 = vadd.f32 %v2109, %v2186
        %v2188 = vpop.f32.mrf.mxu0
        %v2189 = vadd.f32 %v2111, %v2188
        %2190 = vdwg.mxu0
        %2191 = vmatprep.subr.mxu0 0.0
        %2192 = vmatpush1.msra.mxu0 0.0
        %2193 = vmatprep.subr.mxu0 0.0
        %2194 = vmatpush1.msra.mxu0 0.0
        %2195 = vmatprep.subr.mxu0 0.0
        %2196 = vmatpush1.msra.mxu0 0.0
        %2197 = vmatprep.subr.mxu0 0.0
        %2198 = vmatpush1.msra.mxu0 0.0
        %2199 = vmatprep.subr.mxu0 0.0
        %2200 = vmatpush1.msra.mxu0 0.0
        %2201 = vmatprep.subr.mxu0 0.0
        %2202 = vmatpush1.msra.mxu0 0.0
        %2203 = vmatprep.subr.mxu0 0.0
        %2204 = vmatpush1.msra.mxu0 0.0
        %2205 = vmatprep.subr.mxu0 0.0
        %2206 = vmatpush1.msra.mxu0 0.0
        %2207 = vmatprep.subr.mxu0 0.0
        %2208 = vmatpush1.msra.mxu0 0.0
        %2209 = vmatprep.subr.mxu0 0.0
        %2210 = vmatpush1.msra.mxu0 0.0
        %2211 = vmatprep.subr.mxu0 0.0
        %2212 = vmatpush1.msra.mxu0 0.0
        %2213 = vmatprep.subr.mxu0 0.0
        %2214 = vmatpush1.msra.mxu0 0.0
        %2215 = vmatprep.subr.mxu0 0.0
        %2216 = vmatpush1.msra.mxu0 0.0
        %2217 = vmatprep.subr.mxu0 0.0
        %2218 = vmatpush1.msra.mxu0 0.0
        %2219 = vmatprep.subr.mxu0 0.0
        %2220 = vmatpush1.msra.mxu0 0.0
        %v2221 = vand.u32 %v830, 4294901760
        %2222 = vmatprep.subr.mxu0 %v2221
        %v2223 = vand.u32 %v829, 4294901760
        %2224 = vmatpush1.msra.mxu0 %v2223
        %2225 = vmatprep.subr.mxu0 0.0
        %2226 = vmatpush2.msra.mxu0 0.0
        %2227 = vmatprep.subr.mxu0 0.0
        %2228 = vmatpush2.msra.mxu0 0.0
        %2229 = vmatprep.subr.mxu0 0.0
        %2230 = vmatpush2.msra.mxu0 0.0
        %2231 = vmatprep.subr.mxu0 0.0
        %2232 = vmatpush2.msra.mxu0 0.0
        %2233 = vmatprep.subr.mxu0 0.0
        %2234 = vmatpush2.msra.mxu0 0.0
        %2235 = vmatprep.subr.mxu0 0.0
        %2236 = vmatpush2.msra.mxu0 0.0
        %2237 = vmatprep.subr.mxu0 0.0
        %2238 = vmatpush2.msra.mxu0 0.0
        %2239 = vmatprep.subr.mxu0 0.0
        %2240 = vmatpush2.msra.mxu0 0.0
        %2241 = vmatprep.subr.mxu0 0.0
        %2242 = vmatpush2.msra.mxu0 0.0
        %2243 = vmatprep.subr.mxu0 0.0
        %2244 = vmatpush2.msra.mxu0 0.0
        %2245 = vmatprep.subr.mxu0 0.0
        %2246 = vmatpush2.msra.mxu0 0.0
        %2247 = vmatprep.subr.mxu0 0.0
        %2248 = vmatpush2.msra.mxu0 0.0
        %2249 = vmatprep.subr.mxu0 0.0
        %2250 = vmatpush2.msra.mxu0 0.0
        %2251 = vmatprep.subr.mxu0 0.0
        %2252 = vmatpush2.msra.mxu0 0.0
        %2253 = vmatprep.subr.mxu0 0.0
        %2254 = vmatpush2.msra.mxu0 0.0
        %2255 = vmatprep.subr.mxu0 0.0
        %2256 = vmatpush2.msra.mxu0 0.0
        %2257 = vmatprep.mubr.f32.mxu0 0.0
        %v2258 = vand.u32 %v1798, 4294901760
        %2259 = vmatmul.mubr.f32.gmra.mxu0 %v2258
        %v2260 = vpop.f32.mrf.mxu0
        %v2261 = vadd.f32 %v2187, %v2260
        %v2262 = vpop.f32.mrf.mxu0
        %v2263 = vadd.f32 %v2189, %v2262
        %2264 = vdwg.mxu0
        %v2265 = vmax.f32 %v2261, 0.0
        %v2266 = vmax.f32 %v2263, 0.0
        %2267 = vmatprep.subr.mxu0 0.0
        %2268 = vmatpush1.msra.mxu0 0.0
        %2269 = vmatprep.subr.mxu0 0.0
        %2270 = vmatpush1.msra.mxu0 0.0
        %2271 = vmatprep.subr.mxu0 0.0
        %2272 = vmatpush1.msra.mxu0 0.0
        %2273 = vmatprep.subr.mxu0 0.0
        %2274 = vmatpush1.msra.mxu0 0.0
        %2275 = vmatprep.subr.mxu0 0.0
        %2276 = vmatpush1.msra.mxu0 0.0
        %2277 = vmatprep.subr.mxu0 0.0
        %2278 = vmatpush1.msra.mxu0 0.0
        %2279 = vmatprep.subr.mxu0 0.0
        %2280 = vmatpush1.msra.mxu0 0.0
        %2281 = vmatprep.subr.mxu0 0.0
        %2282 = vmatpush1.msra.mxu0 0.0
        %2283 = vmatprep.subr.mxu0 0.0
        %2284 = vmatpush1.msra.mxu0 0.0
        %2285 = vmatprep.subr.mxu0 0.0
        %2286 = vmatpush1.msra.mxu0 0.0
        %2287 = vmatprep.subr.mxu0 0.0
        %2288 = vmatpush1.msra.mxu0 0.0
        %2289 = vmatprep.subr.mxu0 0.0
        %2290 = vmatpush1.msra.mxu0 0.0
        %2291 = vmatprep.subr.mxu0 0.0
        %2292 = vmatpush1.msra.mxu0 0.0
        %2293 = vmatprep.subr.mxu0 0.0
        %2294 = vmatpush1.msra.mxu0 0.0
        %2295 = vmatprep.subr.mxu0 0.0
        %2296 = vmatpush1.msra.mxu0 0.0
        %v2297 = vand.u32 %v2266, 4294901760
        %2298 = vmatprep.subr.mxu0 %v2297
        %v2299 = vand.u32 %v2265, 4294901760
        %2300 = vmatpush1.msra.mxu0 %v2299
        %2301 = vmatprep.subr.mxu0 0.0
        %2302 = vmatpush2.msra.mxu0 0.0
        %2303 = vmatprep.subr.mxu0 0.0
        %2304 = vmatpush2.msra.mxu0 0.0
        %2305 = vmatprep.subr.mxu0 0.0
        %2306 = vmatpush2.msra.mxu0 0.0
        %2307 = vmatprep.subr.mxu0 0.0
        %2308 = vmatpush2.msra.mxu0 0.0
        %2309 = vmatprep.subr.mxu0 0.0
        %2310 = vmatpush2.msra.mxu0 0.0
        %2311 = vmatprep.subr.mxu0 0.0
        %2312 = vmatpush2.msra.mxu0 0.0
        %2313 = vmatprep.subr.mxu0 0.0
        %2314 = vmatpush2.msra.mxu0 0.0
        %2315 = vmatprep.subr.mxu0 0.0
        %2316 = vmatpush2.msra.mxu0 0.0
        %2317 = vmatprep.subr.mxu0 0.0
        %2318 = vmatpush2.msra.mxu0 0.0
        %2319 = vmatprep.subr.mxu0 0.0
        %2320 = vmatpush2.msra.mxu0 0.0
        %2321 = vmatprep.subr.mxu0 0.0
        %2322 = vmatpush2.msra.mxu0 0.0
        %2323 = vmatprep.subr.mxu0 0.0
        %2324 = vmatpush2.msra.mxu0 0.0
        %2325 = vmatprep.subr.mxu0 0.0
        %2326 = vmatpush2.msra.mxu0 0.0
        %2327 = vmatprep.subr.mxu0 0.0
        %2328 = vmatpush2.msra.mxu0 0.0
        %2329 = vmatprep.subr.mxu0 0.0
        %2330 = vmatpush2.msra.mxu0 0.0
        %2331 = vmatprep.subr.mxu0 0.0
        %2332 = vmatpush2.msra.mxu0 0.0
        %2333 = vmatprep.mubr.f32.mxu0 0.0
        %v2334 = vand.u32 %v1317, 4294901760
        %v2335 = vsub.f32 %v1317, %v2334
        %v2336 = vand.u32 %v2335, 4294901760
        %v2337 = vsub.f32 %v2335, %v2336
        %v2338 = vand.u32 %v2337, 4294901760
        %2339 = vmatmul.mubr.f32.gmra.mxu0 %v2338
        %v2340 = vpop.f32.mrf.mxu0
        %v2341 = vadd.f32 %v1314, %v2340
        %v2342 = vpop.f32.mrf.mxu0
        %v2343 = vadd.f32 %v1314, %v2342
        %2344 = vdwg.mxu0
        %2345 = vmatprep.subr.mxu0 0.0
        %2346 = vmatpush1.msra.mxu0 0.0
        %2347 = vmatprep.subr.mxu0 0.0
        %2348 = vmatpush1.msra.mxu0 0.0
        %2349 = vmatprep.subr.mxu0 0.0
        %2350 = vmatpush1.msra.mxu0 0.0
        %2351 = vmatprep.subr.mxu0 0.0
        %2352 = vmatpush1.msra.mxu0 0.0
        %2353 = vmatprep.subr.mxu0 0.0
        %2354 = vmatpush1.msra.mxu0 0.0
        %2355 = vmatprep.subr.mxu0 0.0
        %2356 = vmatpush1.msra.mxu0 0.0
        %2357 = vmatprep.subr.mxu0 0.0
        %2358 = vmatpush1.msra.mxu0 0.0
        %2359 = vmatprep.subr.mxu0 0.0
        %2360 = vmatpush1.msra.mxu0 0.0
        %2361 = vmatprep.subr.mxu0 0.0
        %2362 = vmatpush1.msra.mxu0 0.0
        %2363 = vmatprep.subr.mxu0 0.0
        %2364 = vmatpush1.msra.mxu0 0.0
        %2365 = vmatprep.subr.mxu0 0.0
        %2366 = vmatpush1.msra.mxu0 0.0
        %2367 = vmatprep.subr.mxu0 0.0
        %2368 = vmatpush1.msra.mxu0 0.0
        %2369 = vmatprep.subr.mxu0 0.0
        %2370 = vmatpush1.msra.mxu0 0.0
        %2371 = vmatprep.subr.mxu0 0.0
        %2372 = vmatpush1.msra.mxu0 0.0
        %2373 = vmatprep.subr.mxu0 0.0
        %2374 = vmatpush1.msra.mxu0 0.0
        %v2375 = vand.u32 %v2266, 4294901760
        %v2376 = vsub.f32 %v2266, %v2375
        %v2377 = vand.u32 %v2376, 4294901760
        %v2378 = vsub.f32 %v2376, %v2377
        %v2379 = vand.u32 %v2378, 4294901760
        %2380 = vmatprep.subr.mxu0 %v2379
        %v2381 = vand.u32 %v2265, 4294901760
        %v2382 = vsub.f32 %v2265, %v2381
        %v2383 = vand.u32 %v2382, 4294901760
        %v2384 = vsub.f32 %v2382, %v2383
        %v2385 = vand.u32 %v2384, 4294901760
        %2386 = vmatpush1.msra.mxu0 %v2385
        %2387 = vmatprep.subr.mxu0 0.0
        %2388 = vmatpush2.msra.mxu0 0.0
        %2389 = vmatprep.subr.mxu0 0.0
        %2390 = vmatpush2.msra.mxu0 0.0
        %2391 = vmatprep.subr.mxu0 0.0
        %2392 = vmatpush2.msra.mxu0 0.0
        %2393 = vmatprep.subr.mxu0 0.0
        %2394 = vmatpush2.msra.mxu0 0.0
        %2395 = vmatprep.subr.mxu0 0.0
        %2396 = vmatpush2.msra.mxu0 0.0
        %2397 = vmatprep.subr.mxu0 0.0
        %2398 = vmatpush2.msra.mxu0 0.0
        %2399 = vmatprep.subr.mxu0 0.0
        %2400 = vmatpush2.msra.mxu0 0.0
        %2401 = vmatprep.subr.mxu0 0.0
        %2402 = vmatpush2.msra.mxu0 0.0
        %2403 = vmatprep.subr.mxu0 0.0
        %2404 = vmatpush2.msra.mxu0 0.0
        %2405 = vmatprep.subr.mxu0 0.0
        %2406 = vmatpush2.msra.mxu0 0.0
        %2407 = vmatprep.subr.mxu0 0.0
        %2408 = vmatpush2.msra.mxu0 0.0
        %2409 = vmatprep.subr.mxu0 0.0
        %2410 = vmatpush2.msra.mxu0 0.0
        %2411 = vmatprep.subr.mxu0 0.0
        %2412 = vmatpush2.msra.mxu0 0.0
        %2413 = vmatprep.subr.mxu0 0.0
        %2414 = vmatpush2.msra.mxu0 0.0
        %2415 = vmatprep.subr.mxu0 0.0
        %2416 = vmatpush2.msra.mxu0 0.0
        %2417 = vmatprep.subr.mxu0 0.0
        %2418 = vmatpush2.msra.mxu0 0.0
        %2419 = vmatprep.mubr.f32.mxu0 0.0
        %v2420 = vand.u32 %v1317, 4294901760
        %2421 = vmatmul.mubr.f32.gmra.mxu0 %v2420
        %v2422 = vpop.f32.mrf.mxu0
        %v2423 = vadd.f32 %v2341, %v2422
        %v2424 = vpop.f32.mrf.mxu0
        %v2425 = vadd.f32 %v2343, %v2424
        %2426 = vdwg.mxu0
        %2427 = vmatprep.subr.mxu0 0.0
        %2428 = vmatpush1.msra.mxu0 0.0
        %2429 = vmatprep.subr.mxu0 0.0
        %2430 = vmatpush1.msra.mxu0 0.0
        %2431 = vmatprep.subr.mxu0 0.0
        %2432 = vmatpush1.msra.mxu0 0.0
        %2433 = vmatprep.subr.mxu0 0.0
        %2434 = vmatpush1.msra.mxu0 0.0
        %2435 = vmatprep.subr.mxu0 0.0
        %2436 = vmatpush1.msra.mxu0 0.0
        %2437 = vmatprep.subr.mxu0 0.0
        %2438 = vmatpush1.msra.mxu0 0.0
        %2439 = vmatprep.subr.mxu0 0.0
        %2440 = vmatpush1.msra.mxu0 0.0
        %2441 = vmatprep.subr.mxu0 0.0
        %2442 = vmatpush1.msra.mxu0 0.0
        %2443 = vmatprep.subr.mxu0 0.0
        %2444 = vmatpush1.msra.mxu0 0.0
        %2445 = vmatprep.subr.mxu0 0.0
        %2446 = vmatpush1.msra.mxu0 0.0
        %2447 = vmatprep.subr.mxu0 0.0
        %2448 = vmatpush1.msra.mxu0 0.0
        %2449 = vmatprep.subr.mxu0 0.0
        %2450 = vmatpush1.msra.mxu0 0.0
        %2451 = vmatprep.subr.mxu0 0.0
        %2452 = vmatpush1.msra.mxu0 0.0
        %2453 = vmatprep.subr.mxu0 0.0
        %2454 = vmatpush1.msra.mxu0 0.0
        %2455 = vmatprep.subr.mxu0 0.0
        %2456 = vmatpush1.msra.mxu0 0.0
        %v2457 = vand.u32 %v2266, 4294901760
        %v2458 = vsub.f32 %v2266, %v2457
        %2459 = vmatprep.subr.mxu0 %v2458
        %v2460 = vand.u32 %v2265, 4294901760
        %v2461 = vsub.f32 %v2265, %v2460
        %2462 = vmatpush1.msra.mxu0 %v2461
        %2463 = vmatprep.subr.mxu0 0.0
        %2464 = vmatpush2.msra.mxu0 0.0
        %2465 = vmatprep.subr.mxu0 0.0
        %2466 = vmatpush2.msra.mxu0 0.0
        %2467 = vmatprep.subr.mxu0 0.0
        %2468 = vmatpush2.msra.mxu0 0.0
        %2469 = vmatprep.subr.mxu0 0.0
        %2470 = vmatpush2.msra.mxu0 0.0
        %2471 = vmatprep.subr.mxu0 0.0
        %2472 = vmatpush2.msra.mxu0 0.0
        %2473 = vmatprep.subr.mxu0 0.0
        %2474 = vmatpush2.msra.mxu0 0.0
        %2475 = vmatprep.subr.mxu0 0.0
        %2476 = vmatpush2.msra.mxu0 0.0
        %2477 = vmatprep.subr.mxu0 0.0
        %2478 = vmatpush2.msra.mxu0 0.0
        %2479 = vmatprep.subr.mxu0 0.0
        %2480 = vmatpush2.msra.mxu0 0.0
        %2481 = vmatprep.subr.mxu0 0.0
        %2482 = vmatpush2.msra.mxu0 0.0
        %2483 = vmatprep.subr.mxu0 0.0
        %2484 = vmatpush2.msra.mxu0 0.0
        %2485 = vmatprep.subr.mxu0 0.0
        %2486 = vmatpush2.msra.mxu0 0.0
        %2487 = vmatprep.subr.mxu0 0.0
        %2488 = vmatpush2.msra.mxu0 0.0
        %2489 = vmatprep.subr.mxu0 0.0
        %2490 = vmatpush2.msra.mxu0 0.0
        %2491 = vmatprep.subr.mxu0 0.0
        %2492 = vmatpush2.msra.mxu0 0.0
        %2493 = vmatprep.subr.mxu0 0.0
        %2494 = vmatpush2.msra.mxu0 0.0
        %2495 = vmatprep.mubr.f32.mxu0 0.0
        %v2496 = vand.u32 %v1317, 4294901760
        %v2497 = vsub.f32 %v1317, %v2496
        %2498 = vmatmul.mubr.f32.gmra.mxu0 %v2497
        %v2499 = vpop.f32.mrf.mxu0
        %v2500 = vadd.f32 %v2423, %v2499
        %v2501 = vpop.f32.mrf.mxu0
        %v2502 = vadd.f32 %v2425, %v2501
        %2503 = vdwg.mxu0
        %2504 = vmatprep.subr.mxu0 0.0
        %2505 = vmatpush1.msra.mxu0 0.0
        %2506 = vmatprep.subr.mxu0 0.0
        %2507 = vmatpush1.msra.mxu0 0.0
        %2508 = vmatprep.subr.mxu0 0.0
        %2509 = vmatpush1.msra.mxu0 0.0
        %2510 = vmatprep.subr.mxu0 0.0
        %2511 = vmatpush1.msra.mxu0 0.0
        %2512 = vmatprep.subr.mxu0 0.0
        %2513 = vmatpush1.msra.mxu0 0.0
        %2514 = vmatprep.subr.mxu0 0.0
        %2515 = vmatpush1.msra.mxu0 0.0
        %2516 = vmatprep.subr.mxu0 0.0
        %2517 = vmatpush1.msra.mxu0 0.0
        %2518 = vmatprep.subr.mxu0 0.0
        %2519 = vmatpush1.msra.mxu0 0.0
        %2520 = vmatprep.subr.mxu0 0.0
        %2521 = vmatpush1.msra.mxu0 0.0
        %2522 = vmatprep.subr.mxu0 0.0
        %2523 = vmatpush1.msra.mxu0 0.0
        %2524 = vmatprep.subr.mxu0 0.0
        %2525 = vmatpush1.msra.mxu0 0.0
        %2526 = vmatprep.subr.mxu0 0.0
        %2527 = vmatpush1.msra.mxu0 0.0
        %2528 = vmatprep.subr.mxu0 0.0
        %2529 = vmatpush1.msra.mxu0 0.0
        %2530 = vmatprep.subr.mxu0 0.0
        %2531 = vmatpush1.msra.mxu0 0.0
        %2532 = vmatprep.subr.mxu0 0.0
        %2533 = vmatpush1.msra.mxu0 0.0
        %v2534 = vand.u32 %v2266, 4294901760
        %2535 = vmatprep.subr.mxu0 %v2534
        %v2536 = vand.u32 %v2265, 4294901760
        %2537 = vmatpush1.msra.mxu0 %v2536
        %2538 = vmatprep.subr.mxu0 0.0
        %2539 = vmatpush2.msra.mxu0 0.0
        %2540 = vmatprep.subr.mxu0 0.0
        %2541 = vmatpush2.msra.mxu0 0.0
        %2542 = vmatprep.subr.mxu0 0.0
        %2543 = vmatpush2.msra.mxu0 0.0
        %2544 = vmatprep.subr.mxu0 0.0
        %2545 = vmatpush2.msra.mxu0 0.0
        %2546 = vmatprep.subr.mxu0 0.0
        %2547 = vmatpush2.msra.mxu0 0.0
        %2548 = vmatprep.subr.mxu0 0.0
        %2549 = vmatpush2.msra.mxu0 0.0
        %2550 = vmatprep.subr.mxu0 0.0
        %2551 = vmatpush2.msra.mxu0 0.0
        %2552 = vmatprep.subr.mxu0 0.0
        %2553 = vmatpush2.msra.mxu0 0.0
        %2554 = vmatprep.subr.mxu0 0.0
        %2555 = vmatpush2.msra.mxu0 0.0
        %2556 = vmatprep.subr.mxu0 0.0
        %2557 = vmatpush2.msra.mxu0 0.0
        %2558 = vmatprep.subr.mxu0 0.0
        %2559 = vmatpush2.msra.mxu0 0.0
        %2560 = vmatprep.subr.mxu0 0.0
        %2561 = vmatpush2.msra.mxu0 0.0
        %2562 = vmatprep.subr.mxu0 0.0
        %2563 = vmatpush2.msra.mxu0 0.0
        %2564 = vmatprep.subr.mxu0 0.0
        %2565 = vmatpush2.msra.mxu0 0.0
        %2566 = vmatprep.subr.mxu0 0.0
        %2567 = vmatpush2.msra.mxu0 0.0
        %2568 = vmatprep.subr.mxu0 0.0
        %2569 = vmatpush2.msra.mxu0 0.0
        %2570 = vmatprep.mubr.f32.mxu0 0.0
        %v2571 = vand.u32 %v1317, 4294901760
        %v2572 = vsub.f32 %v1317, %v2571
        %v2573 = vand.u32 %v2572, 4294901760
        %2574 = vmatmul.mubr.f32.gmra.mxu0 %v2573
        %v2575 = vpop.f32.mrf.mxu0
        %v2576 = vadd.f32 %v2500, %v2575
        %v2577 = vpop.f32.mrf.mxu0
        %v2578 = vadd.f32 %v2502, %v2577
        %2579 = vdwg.mxu0
        %2580 = vmatprep.subr.mxu0 0.0
        %2581 = vmatpush1.msra.mxu0 0.0
        %2582 = vmatprep.subr.mxu0 0.0
        %2583 = vmatpush1.msra.mxu0 0.0
        %2584 = vmatprep.subr.mxu0 0.0
        %2585 = vmatpush1.msra.mxu0 0.0
        %2586 = vmatprep.subr.mxu0 0.0
        %2587 = vmatpush1.msra.mxu0 0.0
        %2588 = vmatprep.subr.mxu0 0.0
        %2589 = vmatpush1.msra.mxu0 0.0
        %2590 = vmatprep.subr.mxu0 0.0
        %2591 = vmatpush1.msra.mxu0 0.0
        %2592 = vmatprep.subr.mxu0 0.0
        %2593 = vmatpush1.msra.mxu0 0.0
        %2594 = vmatprep.subr.mxu0 0.0
        %2595 = vmatpush1.msra.mxu0 0.0
        %2596 = vmatprep.subr.mxu0 0.0
        %2597 = vmatpush1.msra.mxu0 0.0
        %2598 = vmatprep.subr.mxu0 0.0
        %2599 = vmatpush1.msra.mxu0 0.0
        %2600 = vmatprep.subr.mxu0 0.0
        %2601 = vmatpush1.msra.mxu0 0.0
        %2602 = vmatprep.subr.mxu0 0.0
        %2603 = vmatpush1.msra.mxu0 0.0
        %2604 = vmatprep.subr.mxu0 0.0
        %2605 = vmatpush1.msra.mxu0 0.0
        %2606 = vmatprep.subr.mxu0 0.0
        %2607 = vmatpush1.msra.mxu0 0.0
        %2608 = vmatprep.subr.mxu0 0.0
        %2609 = vmatpush1.msra.mxu0 0.0
        %v2610 = vand.u32 %v2266, 4294901760
        %v2611 = vsub.f32 %v2266, %v2610
        %v2612 = vand.u32 %v2611, 4294901760
        %2613 = vmatprep.subr.mxu0 %v2612
        %v2614 = vand.u32 %v2265, 4294901760
        %v2615 = vsub.f32 %v2265, %v2614
        %v2616 = vand.u32 %v2615, 4294901760
        %2617 = vmatpush1.msra.mxu0 %v2616
        %2618 = vmatprep.subr.mxu0 0.0
        %2619 = vmatpush2.msra.mxu0 0.0
        %2620 = vmatprep.subr.mxu0 0.0
        %2621 = vmatpush2.msra.mxu0 0.0
        %2622 = vmatprep.subr.mxu0 0.0
        %2623 = vmatpush2.msra.mxu0 0.0
        %2624 = vmatprep.subr.mxu0 0.0
        %2625 = vmatpush2.msra.mxu0 0.0
        %2626 = vmatprep.subr.mxu0 0.0
        %2627 = vmatpush2.msra.mxu0 0.0
        %2628 = vmatprep.subr.mxu0 0.0
        %2629 = vmatpush2.msra.mxu0 0.0
        %2630 = vmatprep.subr.mxu0 0.0
        %2631 = vmatpush2.msra.mxu0 0.0
        %2632 = vmatprep.subr.mxu0 0.0
        %2633 = vmatpush2.msra.mxu0 0.0
        %2634 = vmatprep.subr.mxu0 0.0
        %2635 = vmatpush2.msra.mxu0 0.0
        %2636 = vmatprep.subr.mxu0 0.0
        %2637 = vmatpush2.msra.mxu0 0.0
        %2638 = vmatprep.subr.mxu0 0.0
        %2639 = vmatpush2.msra.mxu0 0.0
        %2640 = vmatprep.subr.mxu0 0.0
        %2641 = vmatpush2.msra.mxu0 0.0
        %2642 = vmatprep.subr.mxu0 0.0
        %2643 = vmatpush2.msra.mxu0 0.0
        %2644 = vmatprep.subr.mxu0 0.0
        %2645 = vmatpush2.msra.mxu0 0.0
        %2646 = vmatprep.subr.mxu0 0.0
        %2647 = vmatpush2.msra.mxu0 0.0
        %2648 = vmatprep.subr.mxu0 0.0
        %2649 = vmatpush2.msra.mxu0 0.0
        %2650 = vmatprep.mubr.f32.mxu0 0.0
        %v2651 = vand.u32 %v1317, 4294901760
        %2652 = vmatmul.mubr.f32.gmra.mxu0 %v2651
        %v2653 = vpop.f32.mrf.mxu0
        %v2654 = vadd.f32 %v2576, %v2653
        %v2655 = vpop.f32.mrf.mxu0
        %v2656 = vadd.f32 %v2578, %v2655
        %2657 = vdwg.mxu0
        %2658 = vmatprep.subr.mxu0 0.0
        %2659 = vmatpush1.msra.mxu0 0.0
        %2660 = vmatprep.subr.mxu0 0.0
        %2661 = vmatpush1.msra.mxu0 0.0
        %2662 = vmatprep.subr.mxu0 0.0
        %2663 = vmatpush1.msra.mxu0 0.0
        %2664 = vmatprep.subr.mxu0 0.0
        %2665 = vmatpush1.msra.mxu0 0.0
        %2666 = vmatprep.subr.mxu0 0.0
        %2667 = vmatpush1.msra.mxu0 0.0
        %2668 = vmatprep.subr.mxu0 0.0
        %2669 = vmatpush1.msra.mxu0 0.0
        %2670 = vmatprep.subr.mxu0 0.0
        %2671 = vmatpush1.msra.mxu0 0.0
        %2672 = vmatprep.subr.mxu0 0.0
        %2673 = vmatpush1.msra.mxu0 0.0
        %2674 = vmatprep.subr.mxu0 0.0
        %2675 = vmatpush1.msra.mxu0 0.0
        %2676 = vmatprep.subr.mxu0 0.0
        %2677 = vmatpush1.msra.mxu0 0.0
        %2678 = vmatprep.subr.mxu0 0.0
        %2679 = vmatpush1.msra.mxu0 0.0
        %2680 = vmatprep.subr.mxu0 0.0
        %2681 = vmatpush1.msra.mxu0 0.0
        %2682 = vmatprep.subr.mxu0 0.0
        %2683 = vmatpush1.msra.mxu0 0.0
        %2684 = vmatprep.subr.mxu0 0.0
        %2685 = vmatpush1.msra.mxu0 0.0
        %2686 = vmatprep.subr.mxu0 0.0
        %2687 = vmatpush1.msra.mxu0 0.0
        %v2688 = vand.u32 %v2266, 4294901760
        %2689 = vmatprep.subr.mxu0 %v2688
        %v2690 = vand.u32 %v2265, 4294901760
        %2691 = vmatpush1.msra.mxu0 %v2690
        %2692 = vmatprep.subr.mxu0 0.0
        %2693 = vmatpush2.msra.mxu0 0.0
        %2694 = vmatprep.subr.mxu0 0.0
        %2695 = vmatpush2.msra.mxu0 0.0
        %2696 = vmatprep.subr.mxu0 0.0
        %2697 = vmatpush2.msra.mxu0 0.0
        %2698 = vmatprep.subr.mxu0 0.0
        %2699 = vmatpush2.msra.mxu0 0.0
        %2700 = vmatprep.subr.mxu0 0.0
        %2701 = vmatpush2.msra.mxu0 0.0
        %2702 = vmatprep.subr.mxu0 0.0
        %2703 = vmatpush2.msra.mxu0 0.0
        %2704 = vmatprep.subr.mxu0 0.0
        %2705 = vmatpush2.msra.mxu0 0.0
        %2706 = vmatprep.subr.mxu0 0.0
        %2707 = vmatpush2.msra.mxu0 0.0
        %2708 = vmatprep.subr.mxu0 0.0
        %2709 = vmatpush2.msra.mxu0 0.0
        %2710 = vmatprep.subr.mxu0 0.0
        %2711 = vmatpush2.msra.mxu0 0.0
        %2712 = vmatprep.subr.mxu0 0.0
        %2713 = vmatpush2.msra.mxu0 0.0
        %2714 = vmatprep.subr.mxu0 0.0
        %2715 = vmatpush2.msra.mxu0 0.0
        %2716 = vmatprep.subr.mxu0 0.0
        %2717 = vmatpush2.msra.mxu0 0.0
        %2718 = vmatprep.subr.mxu0 0.0
        %2719 = vmatpush2.msra.mxu0 0.0
        %2720 = vmatprep.subr.mxu0 0.0
        %2721 = vmatpush2.msra.mxu0 0.0
        %2722 = vmatprep.subr.mxu0 0.0
        %2723 = vmatpush2.msra.mxu0 0.0
        %2724 = vmatprep.mubr.f32.mxu0 0.0
        %v2725 = vand.u32 %v1317, 4294901760
        %2726 = vmatmul.mubr.f32.gmra.mxu0 %v2725
        %v2727 = vpop.f32.mrf.mxu0
        %v2728 = vadd.f32 %v2654, %v2727
        %v2729 = vpop.f32.mrf.mxu0
        %v2730 = vadd.f32 %v2656, %v2729
        %2731 = vdwg.mxu0
        %v2732 = vmax.f32 %v2728, 0.0
        %v2733 = vmax.f32 %v2730, 0.0
        %s2734 = scalar_lea.vmem %s311, 16 [#allocation5]
        %2735 = vst [vmem:[%s2734] sm:$0xff] %v2732
        %2736 = vst [vmem:[%s2734 + $0x8] sm:$0xff] %v2733
        %s2737 = scalar_lea.vmem [#allocation2], 16
        %v2738 = vld [vmem:[%s2737] sm:$0xff]
        %s2739 = scalar_lea.vmem %s4, 16
        %v2740 = vld [vmem:[%s2739] sm:$0xff]
        %2742 = vset.pattern.permute.xlu0 0
        %2743 = vperm.xlu0 %2742, %v2740
        %v2744 = vpop.permute.xlu0 %2743
        %v2747 = vsel %vm840, %v2738, 0
        %2749 = vmatprep.subr.mxu0 0.0
        %2750 = vmatpush1.msra.mxu0 0.0
        %2751 = vmatprep.subr.mxu0 0.0
        %2752 = vmatpush1.msra.mxu0 0.0
        %2753 = vmatprep.subr.mxu0 0.0
        %2754 = vmatpush1.msra.mxu0 0.0
        %2755 = vmatprep.subr.mxu0 0.0
        %2756 = vmatpush1.msra.mxu0 0.0
        %2757 = vmatprep.subr.mxu0 0.0
        %2758 = vmatpush1.msra.mxu0 0.0
        %2759 = vmatprep.subr.mxu0 0.0
        %2760 = vmatpush1.msra.mxu0 0.0
        %2761 = vmatprep.subr.mxu0 0.0
        %2762 = vmatpush1.msra.mxu0 0.0
        %2763 = vmatprep.subr.mxu0 0.0
        %2764 = vmatpush1.msra.mxu0 0.0
        %2765 = vmatprep.subr.mxu0 0.0
        %2766 = vmatpush1.msra.mxu0 0.0
        %2767 = vmatprep.subr.mxu0 0.0
        %2768 = vmatpush1.msra.mxu0 0.0
        %2769 = vmatprep.subr.mxu0 0.0
        %2770 = vmatpush1.msra.mxu0 0.0
        %2771 = vmatprep.subr.mxu0 0.0
        %2772 = vmatpush1.msra.mxu0 0.0
        %2773 = vmatprep.subr.mxu0 0.0
        %2774 = vmatpush1.msra.mxu0 0.0
        %2775 = vmatprep.subr.mxu0 0.0
        %2776 = vmatpush1.msra.mxu0 0.0
        %2777 = vmatprep.subr.mxu0 0.0
        %2778 = vmatpush1.msra.mxu0 0.0
        %v2779 = vand.u32 %v830, 4294901760
        %2780 = vmatprep.subr.mxu0 %v2779
        %v2781 = vand.u32 %v829, 4294901760
        %2782 = vmatpush1.msra.mxu0 %v2781
        %2783 = vmatprep.subr.mxu0 0.0
        %2784 = vmatpush2.msra.mxu0 0.0
        %2785 = vmatprep.subr.mxu0 0.0
        %2786 = vmatpush2.msra.mxu0 0.0
        %2787 = vmatprep.subr.mxu0 0.0
        %2788 = vmatpush2.msra.mxu0 0.0
        %2789 = vmatprep.subr.mxu0 0.0
        %2790 = vmatpush2.msra.mxu0 0.0
        %2791 = vmatprep.subr.mxu0 0.0
        %2792 = vmatpush2.msra.mxu0 0.0
        %2793 = vmatprep.subr.mxu0 0.0
        %2794 = vmatpush2.msra.mxu0 0.0
        %2795 = vmatprep.subr.mxu0 0.0
        %2796 = vmatpush2.msra.mxu0 0.0
        %2797 = vmatprep.subr.mxu0 0.0
        %2798 = vmatpush2.msra.mxu0 0.0
        %2799 = vmatprep.subr.mxu0 0.0
        %2800 = vmatpush2.msra.mxu0 0.0
        %2801 = vmatprep.subr.mxu0 0.0
        %2802 = vmatpush2.msra.mxu0 0.0
        %2803 = vmatprep.subr.mxu0 0.0
        %2804 = vmatpush2.msra.mxu0 0.0
        %2805 = vmatprep.subr.mxu0 0.0
        %2806 = vmatpush2.msra.mxu0 0.0
        %2807 = vmatprep.subr.mxu0 0.0
        %2808 = vmatpush2.msra.mxu0 0.0
        %2809 = vmatprep.subr.mxu0 0.0
        %2810 = vmatpush2.msra.mxu0 0.0
        %2811 = vmatprep.subr.mxu0 0.0
        %2812 = vmatpush2.msra.mxu0 0.0
        %2813 = vmatprep.subr.mxu0 0.0
        %2814 = vmatpush2.msra.mxu0 0.0
        %2815 = vmatprep.mubr.f32.mxu0 0.0
        %v2816 = vand.u32 %v2747, 4294901760
        %v2817 = vsub.f32 %v2747, %v2816
        %v2818 = vand.u32 %v2817, 4294901760
        %v2819 = vsub.f32 %v2817, %v2818
        %v2820 = vand.u32 %v2819, 4294901760
        %2821 = vmatmul.mubr.f32.gmra.mxu0 %v2820
        %v2822 = vpop.f32.mrf.mxu0
        %v2823 = vadd.f32 %v2744, %v2822
        %v2824 = vpop.f32.mrf.mxu0
        %v2825 = vadd.f32 %v2744, %v2824
        %2826 = vdwg.mxu0
        %2827 = vmatprep.subr.mxu0 0.0
        %2828 = vmatpush1.msra.mxu0 0.0
        %2829 = vmatprep.subr.mxu0 0.0
        %2830 = vmatpush1.msra.mxu0 0.0
        %2831 = vmatprep.subr.mxu0 0.0
        %2832 = vmatpush1.msra.mxu0 0.0
        %2833 = vmatprep.subr.mxu0 0.0
        %2834 = vmatpush1.msra.mxu0 0.0
        %2835 = vmatprep.subr.mxu0 0.0
        %2836 = vmatpush1.msra.mxu0 0.0
        %2837 = vmatprep.subr.mxu0 0.0
        %2838 = vmatpush1.msra.mxu0 0.0
        %2839 = vmatprep.subr.mxu0 0.0
        %2840 = vmatpush1.msra.mxu0 0.0
        %2841 = vmatprep.subr.mxu0 0.0
        %2842 = vmatpush1.msra.mxu0 0.0
        %2843 = vmatprep.subr.mxu0 0.0
        %2844 = vmatpush1.msra.mxu0 0.0
        %2845 = vmatprep.subr.mxu0 0.0
        %2846 = vmatpush1.msra.mxu0 0.0
        %2847 = vmatprep.subr.mxu0 0.0
        %2848 = vmatpush1.msra.mxu0 0.0
        %2849 = vmatprep.subr.mxu0 0.0
        %2850 = vmatpush1.msra.mxu0 0.0
        %2851 = vmatprep.subr.mxu0 0.0
        %2852 = vmatpush1.msra.mxu0 0.0
        %2853 = vmatprep.subr.mxu0 0.0
        %2854 = vmatpush1.msra.mxu0 0.0
        %2855 = vmatprep.subr.mxu0 0.0
        %2856 = vmatpush1.msra.mxu0 0.0
        %v2857 = vand.u32 %v830, 4294901760
        %v2858 = vsub.f32 %v830, %v2857
        %v2859 = vand.u32 %v2858, 4294901760
        %v2860 = vsub.f32 %v2858, %v2859
        %v2861 = vand.u32 %v2860, 4294901760
        %2862 = vmatprep.subr.mxu0 %v2861
        %v2863 = vand.u32 %v829, 4294901760
        %v2864 = vsub.f32 %v829, %v2863
        %v2865 = vand.u32 %v2864, 4294901760
        %v2866 = vsub.f32 %v2864, %v2865
        %v2867 = vand.u32 %v2866, 4294901760
        %2868 = vmatpush1.msra.mxu0 %v2867
        %2869 = vmatprep.subr.mxu0 0.0
        %2870 = vmatpush2.msra.mxu0 0.0
        %2871 = vmatprep.subr.mxu0 0.0
        %2872 = vmatpush2.msra.mxu0 0.0
        %2873 = vmatprep.subr.mxu0 0.0
        %2874 = vmatpush2.msra.mxu0 0.0
        %2875 = vmatprep.subr.mxu0 0.0
        %2876 = vmatpush2.msra.mxu0 0.0
        %2877 = vmatprep.subr.mxu0 0.0
        %2878 = vmatpush2.msra.mxu0 0.0
        %2879 = vmatprep.subr.mxu0 0.0
        %2880 = vmatpush2.msra.mxu0 0.0
        %2881 = vmatprep.subr.mxu0 0.0
        %2882 = vmatpush2.msra.mxu0 0.0
        %2883 = vmatprep.subr.mxu0 0.0
        %2884 = vmatpush2.msra.mxu0 0.0
        %2885 = vmatprep.subr.mxu0 0.0
        %2886 = vmatpush2.msra.mxu0 0.0
        %2887 = vmatprep.subr.mxu0 0.0
        %2888 = vmatpush2.msra.mxu0 0.0
        %2889 = vmatprep.subr.mxu0 0.0
        %2890 = vmatpush2.msra.mxu0 0.0
        %2891 = vmatprep.subr.mxu0 0.0
        %2892 = vmatpush2.msra.mxu0 0.0
        %2893 = vmatprep.subr.mxu0 0.0
        %2894 = vmatpush2.msra.mxu0 0.0
        %2895 = vmatprep.subr.mxu0 0.0
        %2896 = vmatpush2.msra.mxu0 0.0
        %2897 = vmatprep.subr.mxu0 0.0
        %2898 = vmatpush2.msra.mxu0 0.0
        %2899 = vmatprep.subr.mxu0 0.0
        %2900 = vmatpush2.msra.mxu0 0.0
        %2901 = vmatprep.mubr.f32.mxu0 0.0
        %v2902 = vand.u32 %v2747, 4294901760
        %2903 = vmatmul.mubr.f32.gmra.mxu0 %v2902
        %v2904 = vpop.f32.mrf.mxu0
        %v2905 = vadd.f32 %v2823, %v2904
        %v2906 = vpop.f32.mrf.mxu0
        %v2907 = vadd.f32 %v2825, %v2906
        %2908 = vdwg.mxu0
        %2909 = vmatprep.subr.mxu0 0.0
        %2910 = vmatpush1.msra.mxu0 0.0
        %2911 = vmatprep.subr.mxu0 0.0
        %2912 = vmatpush1.msra.mxu0 0.0
        %2913 = vmatprep.subr.mxu0 0.0
        %2914 = vmatpush1.msra.mxu0 0.0
        %2915 = vmatprep.subr.mxu0 0.0
        %2916 = vmatpush1.msra.mxu0 0.0
        %2917 = vmatprep.subr.mxu0 0.0
        %2918 = vmatpush1.msra.mxu0 0.0
        %2919 = vmatprep.subr.mxu0 0.0
        %2920 = vmatpush1.msra.mxu0 0.0
        %2921 = vmatprep.subr.mxu0 0.0
        %2922 = vmatpush1.msra.mxu0 0.0
        %2923 = vmatprep.subr.mxu0 0.0
        %2924 = vmatpush1.msra.mxu0 0.0
        %2925 = vmatprep.subr.mxu0 0.0
        %2926 = vmatpush1.msra.mxu0 0.0
        %2927 = vmatprep.subr.mxu0 0.0
        %2928 = vmatpush1.msra.mxu0 0.0
        %2929 = vmatprep.subr.mxu0 0.0
        %2930 = vmatpush1.msra.mxu0 0.0
        %2931 = vmatprep.subr.mxu0 0.0
        %2932 = vmatpush1.msra.mxu0 0.0
        %2933 = vmatprep.subr.mxu0 0.0
        %2934 = vmatpush1.msra.mxu0 0.0
        %2935 = vmatprep.subr.mxu0 0.0
        %2936 = vmatpush1.msra.mxu0 0.0
        %2937 = vmatprep.subr.mxu0 0.0
        %2938 = vmatpush1.msra.mxu0 0.0
        %v2939 = vand.u32 %v830, 4294901760
        %v2940 = vsub.f32 %v830, %v2939
        %2941 = vmatprep.subr.mxu0 %v2940
        %v2942 = vand.u32 %v829, 4294901760
        %v2943 = vsub.f32 %v829, %v2942
        %2944 = vmatpush1.msra.mxu0 %v2943
        %2945 = vmatprep.subr.mxu0 0.0
        %2946 = vmatpush2.msra.mxu0 0.0
        %2947 = vmatprep.subr.mxu0 0.0
        %2948 = vmatpush2.msra.mxu0 0.0
        %2949 = vmatprep.subr.mxu0 0.0
        %2950 = vmatpush2.msra.mxu0 0.0
        %2951 = vmatprep.subr.mxu0 0.0
        %2952 = vmatpush2.msra.mxu0 0.0
        %2953 = vmatprep.subr.mxu0 0.0
        %2954 = vmatpush2.msra.mxu0 0.0
        %2955 = vmatprep.subr.mxu0 0.0
        %2956 = vmatpush2.msra.mxu0 0.0
        %2957 = vmatprep.subr.mxu0 0.0
        %2958 = vmatpush2.msra.mxu0 0.0
        %2959 = vmatprep.subr.mxu0 0.0
        %2960 = vmatpush2.msra.mxu0 0.0
        %2961 = vmatprep.subr.mxu0 0.0
        %2962 = vmatpush2.msra.mxu0 0.0
        %2963 = vmatprep.subr.mxu0 0.0
        %2964 = vmatpush2.msra.mxu0 0.0
        %2965 = vmatprep.subr.mxu0 0.0
        %2966 = vmatpush2.msra.mxu0 0.0
        %2967 = vmatprep.subr.mxu0 0.0
        %2968 = vmatpush2.msra.mxu0 0.0
        %2969 = vmatprep.subr.mxu0 0.0
        %2970 = vmatpush2.msra.mxu0 0.0
        %2971 = vmatprep.subr.mxu0 0.0
        %2972 = vmatpush2.msra.mxu0 0.0
        %2973 = vmatprep.subr.mxu0 0.0
        %2974 = vmatpush2.msra.mxu0 0.0
        %2975 = vmatprep.subr.mxu0 0.0
        %2976 = vmatpush2.msra.mxu0 0.0
        %2977 = vmatprep.mubr.f32.mxu0 0.0
        %v2978 = vand.u32 %v2747, 4294901760
        %v2979 = vsub.f32 %v2747, %v2978
        %2980 = vmatmul.mubr.f32.gmra.mxu0 %v2979
        %v2981 = vpop.f32.mrf.mxu0
        %v2982 = vadd.f32 %v2905, %v2981
        %v2983 = vpop.f32.mrf.mxu0
        %v2984 = vadd.f32 %v2907, %v2983
        %2985 = vdwg.mxu0
        %2986 = vmatprep.subr.mxu0 0.0
        %2987 = vmatpush1.msra.mxu0 0.0
        %2988 = vmatprep.subr.mxu0 0.0
        %2989 = vmatpush1.msra.mxu0 0.0
        %2990 = vmatprep.subr.mxu0 0.0
        %2991 = vmatpush1.msra.mxu0 0.0
        %2992 = vmatprep.subr.mxu0 0.0
        %2993 = vmatpush1.msra.mxu0 0.0
        %2994 = vmatprep.subr.mxu0 0.0
        %2995 = vmatpush1.msra.mxu0 0.0
        %2996 = vmatprep.subr.mxu0 0.0
        %2997 = vmatpush1.msra.mxu0 0.0
        %2998 = vmatprep.subr.mxu0 0.0
        %2999 = vmatpush1.msra.mxu0 0.0
        %3000 = vmatprep.subr.mxu0 0.0
        %3001 = vmatpush1.msra.mxu0 0.0
        %3002 = vmatprep.subr.mxu0 0.0
        %3003 = vmatpush1.msra.mxu0 0.0
        %3004 = vmatprep.subr.mxu0 0.0
        %3005 = vmatpush1.msra.mxu0 0.0
        %3006 = vmatprep.subr.mxu0 0.0
        %3007 = vmatpush1.msra.mxu0 0.0
        %3008 = vmatprep.subr.mxu0 0.0
        %3009 = vmatpush1.msra.mxu0 0.0
        %3010 = vmatprep.subr.mxu0 0.0
        %3011 = vmatpush1.msra.mxu0 0.0
        %3012 = vmatprep.subr.mxu0 0.0
        %3013 = vmatpush1.msra.mxu0 0.0
        %3014 = vmatprep.subr.mxu0 0.0
        %3015 = vmatpush1.msra.mxu0 0.0
        %v3016 = vand.u32 %v830, 4294901760
        %3017 = vmatprep.subr.mxu0 %v3016
        %v3018 = vand.u32 %v829, 4294901760
        %3019 = vmatpush1.msra.mxu0 %v3018
        %3020 = vmatprep.subr.mxu0 0.0
        %3021 = vmatpush2.msra.mxu0 0.0
        %3022 = vmatprep.subr.mxu0 0.0
        %3023 = vmatpush2.msra.mxu0 0.0
        %3024 = vmatprep.subr.mxu0 0.0
        %3025 = vmatpush2.msra.mxu0 0.0
        %3026 = vmatprep.subr.mxu0 0.0
        %3027 = vmatpush2.msra.mxu0 0.0
        %3028 = vmatprep.subr.mxu0 0.0
        %3029 = vmatpush2.msra.mxu0 0.0
        %3030 = vmatprep.subr.mxu0 0.0
        %3031 = vmatpush2.msra.mxu0 0.0
        %3032 = vmatprep.subr.mxu0 0.0
        %3033 = vmatpush2.msra.mxu0 0.0
        %3034 = vmatprep.subr.mxu0 0.0
        %3035 = vmatpush2.msra.mxu0 0.0
        %3036 = vmatprep.subr.mxu0 0.0
        %3037 = vmatpush2.msra.mxu0 0.0
        %3038 = vmatprep.subr.mxu0 0.0
        %3039 = vmatpush2.msra.mxu0 0.0
        %3040 = vmatprep.subr.mxu0 0.0
        %3041 = vmatpush2.msra.mxu0 0.0
        %3042 = vmatprep.subr.mxu0 0.0
        %3043 = vmatpush2.msra.mxu0 0.0
        %3044 = vmatprep.subr.mxu0 0.0
        %3045 = vmatpush2.msra.mxu0 0.0
        %3046 = vmatprep.subr.mxu0 0.0
        %3047 = vmatpush2.msra.mxu0 0.0
        %3048 = vmatprep.subr.mxu0 0.0
        %3049 = vmatpush2.msra.mxu0 0.0
        %3050 = vmatprep.subr.mxu0 0.0
        %3051 = vmatpush2.msra.mxu0 0.0
        %3052 = vmatprep.mubr.f32.mxu0 0.0
        %v3053 = vand.u32 %v2747, 4294901760
        %v3054 = vsub.f32 %v2747, %v3053
        %v3055 = vand.u32 %v3054, 4294901760
        %3056 = vmatmul.mubr.f32.gmra.mxu0 %v3055
        %v3057 = vpop.f32.mrf.mxu0
        %v3058 = vadd.f32 %v2982, %v3057
        %v3059 = vpop.f32.mrf.mxu0
        %v3060 = vadd.f32 %v2984, %v3059
        %3061 = vdwg.mxu0
        %3062 = vmatprep.subr.mxu0 0.0
        %3063 = vmatpush1.msra.mxu0 0.0
        %3064 = vmatprep.subr.mxu0 0.0
        %3065 = vmatpush1.msra.mxu0 0.0
        %3066 = vmatprep.subr.mxu0 0.0
        %3067 = vmatpush1.msra.mxu0 0.0
        %3068 = vmatprep.subr.mxu0 0.0
        %3069 = vmatpush1.msra.mxu0 0.0
        %3070 = vmatprep.subr.mxu0 0.0
        %3071 = vmatpush1.msra.mxu0 0.0
        %3072 = vmatprep.subr.mxu0 0.0
        %3073 = vmatpush1.msra.mxu0 0.0
        %3074 = vmatprep.subr.mxu0 0.0
        %3075 = vmatpush1.msra.mxu0 0.0
        %3076 = vmatprep.subr.mxu0 0.0
        %3077 = vmatpush1.msra.mxu0 0.0
        %3078 = vmatprep.subr.mxu0 0.0
        %3079 = vmatpush1.msra.mxu0 0.0
        %3080 = vmatprep.subr.mxu0 0.0
        %3081 = vmatpush1.msra.mxu0 0.0
        %3082 = vmatprep.subr.mxu0 0.0
        %3083 = vmatpush1.msra.mxu0 0.0
        %3084 = vmatprep.subr.mxu0 0.0
        %3085 = vmatpush1.msra.mxu0 0.0
        %3086 = vmatprep.subr.mxu0 0.0
        %3087 = vmatpush1.msra.mxu0 0.0
        %3088 = vmatprep.subr.mxu0 0.0
        %3089 = vmatpush1.msra.mxu0 0.0
        %3090 = vmatprep.subr.mxu0 0.0
        %3091 = vmatpush1.msra.mxu0 0.0
        %v3092 = vand.u32 %v830, 4294901760
        %v3093 = vsub.f32 %v830, %v3092
        %v3094 = vand.u32 %v3093, 4294901760
        %3095 = vmatprep.subr.mxu0 %v3094
        %v3096 = vand.u32 %v829, 4294901760
        %v3097 = vsub.f32 %v829, %v3096
        %v3098 = vand.u32 %v3097, 4294901760
        %3099 = vmatpush1.msra.mxu0 %v3098
        %3100 = vmatprep.subr.mxu0 0.0
        %3101 = vmatpush2.msra.mxu0 0.0
        %3102 = vmatprep.subr.mxu0 0.0
        %3103 = vmatpush2.msra.mxu0 0.0
        %3104 = vmatprep.subr.mxu0 0.0
        %3105 = vmatpush2.msra.mxu0 0.0
        %3106 = vmatprep.subr.mxu0 0.0
        %3107 = vmatpush2.msra.mxu0 0.0
        %3108 = vmatprep.subr.mxu0 0.0
        %3109 = vmatpush2.msra.mxu0 0.0
        %3110 = vmatprep.subr.mxu0 0.0
        %3111 = vmatpush2.msra.mxu0 0.0
        %3112 = vmatprep.subr.mxu0 0.0
        %3113 = vmatpush2.msra.mxu0 0.0
        %3114 = vmatprep.subr.mxu0 0.0
        %3115 = vmatpush2.msra.mxu0 0.0
        %3116 = vmatprep.subr.mxu0 0.0
        %3117 = vmatpush2.msra.mxu0 0.0
        %3118 = vmatprep.subr.mxu0 0.0
        %3119 = vmatpush2.msra.mxu0 0.0
        %3120 = vmatprep.subr.mxu0 0.0
        %3121 = vmatpush2.msra.mxu0 0.0
        %3122 = vmatprep.subr.mxu0 0.0
        %3123 = vmatpush2.msra.mxu0 0.0
        %3124 = vmatprep.subr.mxu0 0.0
        %3125 = vmatpush2.msra.mxu0 0.0
        %3126 = vmatprep.subr.mxu0 0.0
        %3127 = vmatpush2.msra.mxu0 0.0
        %3128 = vmatprep.subr.mxu0 0.0
        %3129 = vmatpush2.msra.mxu0 0.0
        %3130 = vmatprep.subr.mxu0 0.0
        %3131 = vmatpush2.msra.mxu0 0.0
        %3132 = vmatprep.mubr.f32.mxu0 0.0
        %v3133 = vand.u32 %v2747, 4294901760
        %3134 = vmatmul.mubr.f32.gmra.mxu0 %v3133
        %v3135 = vpop.f32.mrf.mxu0
        %v3136 = vadd.f32 %v3058, %v3135
        %v3137 = vpop.f32.mrf.mxu0
        %v3138 = vadd.f32 %v3060, %v3137
        %3139 = vdwg.mxu0
        %3140 = vmatprep.subr.mxu0 0.0
        %3141 = vmatpush1.msra.mxu0 0.0
        %3142 = vmatprep.subr.mxu0 0.0
        %3143 = vmatpush1.msra.mxu0 0.0
        %3144 = vmatprep.subr.mxu0 0.0
        %3145 = vmatpush1.msra.mxu0 0.0
        %3146 = vmatprep.subr.mxu0 0.0
        %3147 = vmatpush1.msra.mxu0 0.0
        %3148 = vmatprep.subr.mxu0 0.0
        %3149 = vmatpush1.msra.mxu0 0.0
        %3150 = vmatprep.subr.mxu0 0.0
        %3151 = vmatpush1.msra.mxu0 0.0
        %3152 = vmatprep.subr.mxu0 0.0
        %3153 = vmatpush1.msra.mxu0 0.0
        %3154 = vmatprep.subr.mxu0 0.0
        %3155 = vmatpush1.msra.mxu0 0.0
        %3156 = vmatprep.subr.mxu0 0.0
        %3157 = vmatpush1.msra.mxu0 0.0
        %3158 = vmatprep.subr.mxu0 0.0
        %3159 = vmatpush1.msra.mxu0 0.0
        %3160 = vmatprep.subr.mxu0 0.0
        %3161 = vmatpush1.msra.mxu0 0.0
        %3162 = vmatprep.subr.mxu0 0.0
        %3163 = vmatpush1.msra.mxu0 0.0
        %3164 = vmatprep.subr.mxu0 0.0
        %3165 = vmatpush1.msra.mxu0 0.0
        %3166 = vmatprep.subr.mxu0 0.0
        %3167 = vmatpush1.msra.mxu0 0.0
        %3168 = vmatprep.subr.mxu0 0.0
        %3169 = vmatpush1.msra.mxu0 0.0
        %v3170 = vand.u32 %v830, 4294901760
        %3171 = vmatprep.subr.mxu0 %v3170
        %v3172 = vand.u32 %v829, 4294901760
        %3173 = vmatpush1.msra.mxu0 %v3172
        %3174 = vmatprep.subr.mxu0 0.0
        %3175 = vmatpush2.msra.mxu0 0.0
        %3176 = vmatprep.subr.mxu0 0.0
        %3177 = vmatpush2.msra.mxu0 0.0
        %3178 = vmatprep.subr.mxu0 0.0
        %3179 = vmatpush2.msra.mxu0 0.0
        %3180 = vmatprep.subr.mxu0 0.0
        %3181 = vmatpush2.msra.mxu0 0.0
        %3182 = vmatprep.subr.mxu0 0.0
        %3183 = vmatpush2.msra.mxu0 0.0
        %3184 = vmatprep.subr.mxu0 0.0
        %3185 = vmatpush2.msra.mxu0 0.0
        %3186 = vmatprep.subr.mxu0 0.0
        %3187 = vmatpush2.msra.mxu0 0.0
        %3188 = vmatprep.subr.mxu0 0.0
        %3189 = vmatpush2.msra.mxu0 0.0
        %3190 = vmatprep.subr.mxu0 0.0
        %3191 = vmatpush2.msra.mxu0 0.0
        %3192 = vmatprep.subr.mxu0 0.0
        %3193 = vmatpush2.msra.mxu0 0.0
        %3194 = vmatprep.subr.mxu0 0.0
        %3195 = vmatpush2.msra.mxu0 0.0
        %3196 = vmatprep.subr.mxu0 0.0
        %3197 = vmatpush2.msra.mxu0 0.0
        %3198 = vmatprep.subr.mxu0 0.0
        %3199 = vmatpush2.msra.mxu0 0.0
        %3200 = vmatprep.subr.mxu0 0.0
        %3201 = vmatpush2.msra.mxu0 0.0
        %3202 = vmatprep.subr.mxu0 0.0
        %3203 = vmatpush2.msra.mxu0 0.0
        %3204 = vmatprep.subr.mxu0 0.0
        %3205 = vmatpush2.msra.mxu0 0.0
        %3206 = vmatprep.mubr.f32.mxu0 0.0
        %v3207 = vand.u32 %v2747, 4294901760
        %3208 = vmatmul.mubr.f32.gmra.mxu0 %v3207
        %v3209 = vpop.f32.mrf.mxu0
        %v3210 = vadd.f32 %v3136, %v3209
        %v3211 = vpop.f32.mrf.mxu0
        %v3212 = vadd.f32 %v3138, %v3211
        %3213 = vdwg.mxu0
        %v3214 = vmax.f32 %v3210, 0.0
        %v3215 = vmax.f32 %v3212, 0.0
        %3216 = vmatprep.subr.mxu0 0.0
        %3217 = vmatpush1.msra.mxu0 0.0
        %3218 = vmatprep.subr.mxu0 0.0
        %3219 = vmatpush1.msra.mxu0 0.0
        %3220 = vmatprep.subr.mxu0 0.0
        %3221 = vmatpush1.msra.mxu0 0.0
        %3222 = vmatprep.subr.mxu0 0.0
        %3223 = vmatpush1.msra.mxu0 0.0
        %3224 = vmatprep.subr.mxu0 0.0
        %3225 = vmatpush1.msra.mxu0 0.0
        %3226 = vmatprep.subr.mxu0 0.0
        %3227 = vmatpush1.msra.mxu0 0.0
        %3228 = vmatprep.subr.mxu0 0.0
        %3229 = vmatpush1.msra.mxu0 0.0
        %3230 = vmatprep.subr.mxu0 0.0
        %3231 = vmatpush1.msra.mxu0 0.0
        %3232 = vmatprep.subr.mxu0 0.0
        %3233 = vmatpush1.msra.mxu0 0.0
        %3234 = vmatprep.subr.mxu0 0.0
        %3235 = vmatpush1.msra.mxu0 0.0
        %3236 = vmatprep.subr.mxu0 0.0
        %3237 = vmatpush1.msra.mxu0 0.0
        %3238 = vmatprep.subr.mxu0 0.0
        %3239 = vmatpush1.msra.mxu0 0.0
        %3240 = vmatprep.subr.mxu0 0.0
        %3241 = vmatpush1.msra.mxu0 0.0
        %3242 = vmatprep.subr.mxu0 0.0
        %3243 = vmatpush1.msra.mxu0 0.0
        %3244 = vmatprep.subr.mxu0 0.0
        %3245 = vmatpush1.msra.mxu0 0.0
        %v3246 = vand.u32 %v3215, 4294901760
        %3247 = vmatprep.subr.mxu0 %v3246
        %v3248 = vand.u32 %v3214, 4294901760
        %3249 = vmatpush1.msra.mxu0 %v3248
        %3250 = vmatprep.subr.mxu0 0.0
        %3251 = vmatpush2.msra.mxu0 0.0
        %3252 = vmatprep.subr.mxu0 0.0
        %3253 = vmatpush2.msra.mxu0 0.0
        %3254 = vmatprep.subr.mxu0 0.0
        %3255 = vmatpush2.msra.mxu0 0.0
        %3256 = vmatprep.subr.mxu0 0.0
        %3257 = vmatpush2.msra.mxu0 0.0
        %3258 = vmatprep.subr.mxu0 0.0
        %3259 = vmatpush2.msra.mxu0 0.0
        %3260 = vmatprep.subr.mxu0 0.0
        %3261 = vmatpush2.msra.mxu0 0.0
        %3262 = vmatprep.subr.mxu0 0.0
        %3263 = vmatpush2.msra.mxu0 0.0
        %3264 = vmatprep.subr.mxu0 0.0
        %3265 = vmatpush2.msra.mxu0 0.0
        %3266 = vmatprep.subr.mxu0 0.0
        %3267 = vmatpush2.msra.mxu0 0.0
        %3268 = vmatprep.subr.mxu0 0.0
        %3269 = vmatpush2.msra.mxu0 0.0
        %3270 = vmatprep.subr.mxu0 0.0
        %3271 = vmatpush2.msra.mxu0 0.0
        %3272 = vmatprep.subr.mxu0 0.0
        %3273 = vmatpush2.msra.mxu0 0.0
        %3274 = vmatprep.subr.mxu0 0.0
        %3275 = vmatpush2.msra.mxu0 0.0
        %3276 = vmatprep.subr.mxu0 0.0
        %3277 = vmatpush2.msra.mxu0 0.0
        %3278 = vmatprep.subr.mxu0 0.0
        %3279 = vmatpush2.msra.mxu0 0.0
        %3280 = vmatprep.subr.mxu0 0.0
        %3281 = vmatpush2.msra.mxu0 0.0
        %3282 = vmatprep.mubr.f32.mxu0 0.0
        %v3283 = vand.u32 %v1317, 4294901760
        %v3284 = vsub.f32 %v1317, %v3283
        %v3285 = vand.u32 %v3284, 4294901760
        %v3286 = vsub.f32 %v3284, %v3285
        %v3287 = vand.u32 %v3286, 4294901760
        %3288 = vmatmul.mubr.f32.gmra.mxu0 %v3287
        %v3289 = vpop.f32.mrf.mxu0
        %v3290 = vadd.f32 %v1314, %v3289
        %v3291 = vpop.f32.mrf.mxu0
        %v3292 = vadd.f32 %v1314, %v3291
        %3293 = vdwg.mxu0
        %3294 = vmatprep.subr.mxu0 0.0
        %3295 = vmatpush1.msra.mxu0 0.0
        %3296 = vmatprep.subr.mxu0 0.0
        %3297 = vmatpush1.msra.mxu0 0.0
        %3298 = vmatprep.subr.mxu0 0.0
        %3299 = vmatpush1.msra.mxu0 0.0
        %3300 = vmatprep.subr.mxu0 0.0
        %3301 = vmatpush1.msra.mxu0 0.0
        %3302 = vmatprep.subr.mxu0 0.0
        %3303 = vmatpush1.msra.mxu0 0.0
        %3304 = vmatprep.subr.mxu0 0.0
        %3305 = vmatpush1.msra.mxu0 0.0
        %3306 = vmatprep.subr.mxu0 0.0
        %3307 = vmatpush1.msra.mxu0 0.0
        %3308 = vmatprep.subr.mxu0 0.0
        %3309 = vmatpush1.msra.mxu0 0.0
        %3310 = vmatprep.subr.mxu0 0.0
        %3311 = vmatpush1.msra.mxu0 0.0
        %3312 = vmatprep.subr.mxu0 0.0
        %3313 = vmatpush1.msra.mxu0 0.0
        %3314 = vmatprep.subr.mxu0 0.0
        %3315 = vmatpush1.msra.mxu0 0.0
        %3316 = vmatprep.subr.mxu0 0.0
        %3317 = vmatpush1.msra.mxu0 0.0
        %3318 = vmatprep.subr.mxu0 0.0
        %3319 = vmatpush1.msra.mxu0 0.0
        %3320 = vmatprep.subr.mxu0 0.0
        %3321 = vmatpush1.msra.mxu0 0.0
        %3322 = vmatprep.subr.mxu0 0.0
        %3323 = vmatpush1.msra.mxu0 0.0
        %v3324 = vand.u32 %v3215, 4294901760
        %v3325 = vsub.f32 %v3215, %v3324
        %v3326 = vand.u32 %v3325, 4294901760
        %v3327 = vsub.f32 %v3325, %v3326
        %v3328 = vand.u32 %v3327, 4294901760
        %3329 = vmatprep.subr.mxu0 %v3328
        %v3330 = vand.u32 %v3214, 4294901760
        %v3331 = vsub.f32 %v3214, %v3330
        %v3332 = vand.u32 %v3331, 4294901760
        %v3333 = vsub.f32 %v3331, %v3332
        %v3334 = vand.u32 %v3333, 4294901760
        %3335 = vmatpush1.msra.mxu0 %v3334
        %3336 = vmatprep.subr.mxu0 0.0
        %3337 = vmatpush2.msra.mxu0 0.0
        %3338 = vmatprep.subr.mxu0 0.0
        %3339 = vmatpush2.msra.mxu0 0.0
        %3340 = vmatprep.subr.mxu0 0.0
        %3341 = vmatpush2.msra.mxu0 0.0
        %3342 = vmatprep.subr.mxu0 0.0
        %3343 = vmatpush2.msra.mxu0 0.0
        %3344 = vmatprep.subr.mxu0 0.0
        %3345 = vmatpush2.msra.mxu0 0.0
        %3346 = vmatprep.subr.mxu0 0.0
        %3347 = vmatpush2.msra.mxu0 0.0
        %3348 = vmatprep.subr.mxu0 0.0
        %3349 = vmatpush2.msra.mxu0 0.0
        %3350 = vmatprep.subr.mxu0 0.0
        %3351 = vmatpush2.msra.mxu0 0.0
        %3352 = vmatprep.subr.mxu0 0.0
        %3353 = vmatpush2.msra.mxu0 0.0
        %3354 = vmatprep.subr.mxu0 0.0
        %3355 = vmatpush2.msra.mxu0 0.0
        %3356 = vmatprep.subr.mxu0 0.0
        %3357 = vmatpush2.msra.mxu0 0.0
        %3358 = vmatprep.subr.mxu0 0.0
        %3359 = vmatpush2.msra.mxu0 0.0
        %3360 = vmatprep.subr.mxu0 0.0
        %3361 = vmatpush2.msra.mxu0 0.0
        %3362 = vmatprep.subr.mxu0 0.0
        %3363 = vmatpush2.msra.mxu0 0.0
        %3364 = vmatprep.subr.mxu0 0.0
        %3365 = vmatpush2.msra.mxu0 0.0
        %3366 = vmatprep.subr.mxu0 0.0
        %3367 = vmatpush2.msra.mxu0 0.0
        %3368 = vmatprep.mubr.f32.mxu0 0.0
        %v3369 = vand.u32 %v1317, 4294901760
        %3370 = vmatmul.mubr.f32.gmra.mxu0 %v3369
        %v3371 = vpop.f32.mrf.mxu0
        %v3372 = vadd.f32 %v3290, %v3371
        %v3373 = vpop.f32.mrf.mxu0
        %v3374 = vadd.f32 %v3292, %v3373
        %3375 = vdwg.mxu0
        %3376 = vmatprep.subr.mxu0 0.0
        %3377 = vmatpush1.msra.mxu0 0.0
        %3378 = vmatprep.subr.mxu0 0.0
        %3379 = vmatpush1.msra.mxu0 0.0
        %3380 = vmatprep.subr.mxu0 0.0
        %3381 = vmatpush1.msra.mxu0 0.0
        %3382 = vmatprep.subr.mxu0 0.0
        %3383 = vmatpush1.msra.mxu0 0.0
        %3384 = vmatprep.subr.mxu0 0.0
        %3385 = vmatpush1.msra.mxu0 0.0
        %3386 = vmatprep.subr.mxu0 0.0
        %3387 = vmatpush1.msra.mxu0 0.0
        %3388 = vmatprep.subr.mxu0 0.0
        %3389 = vmatpush1.msra.mxu0 0.0
        %3390 = vmatprep.subr.mxu0 0.0
        %3391 = vmatpush1.msra.mxu0 0.0
        %3392 = vmatprep.subr.mxu0 0.0
        %3393 = vmatpush1.msra.mxu0 0.0
        %3394 = vmatprep.subr.mxu0 0.0
        %3395 = vmatpush1.msra.mxu0 0.0
        %3396 = vmatprep.subr.mxu0 0.0
        %3397 = vmatpush1.msra.mxu0 0.0
        %3398 = vmatprep.subr.mxu0 0.0
        %3399 = vmatpush1.msra.mxu0 0.0
        %3400 = vmatprep.subr.mxu0 0.0
        %3401 = vmatpush1.msra.mxu0 0.0
        %3402 = vmatprep.subr.mxu0 0.0
        %3403 = vmatpush1.msra.mxu0 0.0
        %3404 = vmatprep.subr.mxu0 0.0
        %3405 = vmatpush1.msra.mxu0 0.0
        %v3406 = vand.u32 %v3215, 4294901760
        %v3407 = vsub.f32 %v3215, %v3406
        %3408 = vmatprep.subr.mxu0 %v3407
        %v3409 = vand.u32 %v3214, 4294901760
        %v3410 = vsub.f32 %v3214, %v3409
        %3411 = vmatpush1.msra.mxu0 %v3410
        %3412 = vmatprep.subr.mxu0 0.0
        %3413 = vmatpush2.msra.mxu0 0.0
        %3414 = vmatprep.subr.mxu0 0.0
        %3415 = vmatpush2.msra.mxu0 0.0
        %3416 = vmatprep.subr.mxu0 0.0
        %3417 = vmatpush2.msra.mxu0 0.0
        %3418 = vmatprep.subr.mxu0 0.0
        %3419 = vmatpush2.msra.mxu0 0.0
        %3420 = vmatprep.subr.mxu0 0.0
        %3421 = vmatpush2.msra.mxu0 0.0
        %3422 = vmatprep.subr.mxu0 0.0
        %3423 = vmatpush2.msra.mxu0 0.0
        %3424 = vmatprep.subr.mxu0 0.0
        %3425 = vmatpush2.msra.mxu0 0.0
        %3426 = vmatprep.subr.mxu0 0.0
        %3427 = vmatpush2.msra.mxu0 0.0
        %3428 = vmatprep.subr.mxu0 0.0
        %3429 = vmatpush2.msra.mxu0 0.0
        %3430 = vmatprep.subr.mxu0 0.0
        %3431 = vmatpush2.msra.mxu0 0.0
        %3432 = vmatprep.subr.mxu0 0.0
        %3433 = vmatpush2.msra.mxu0 0.0
        %3434 = vmatprep.subr.mxu0 0.0
        %3435 = vmatpush2.msra.mxu0 0.0
        %3436 = vmatprep.subr.mxu0 0.0
        %3437 = vmatpush2.msra.mxu0 0.0
        %3438 = vmatprep.subr.mxu0 0.0
        %3439 = vmatpush2.msra.mxu0 0.0
        %3440 = vmatprep.subr.mxu0 0.0
        %3441 = vmatpush2.msra.mxu0 0.0
        %3442 = vmatprep.subr.mxu0 0.0
        %3443 = vmatpush2.msra.mxu0 0.0
        %3444 = vmatprep.mubr.f32.mxu0 0.0
        %v3445 = vand.u32 %v1317, 4294901760
        %v3446 = vsub.f32 %v1317, %v3445
        %3447 = vmatmul.mubr.f32.gmra.mxu0 %v3446
        %v3448 = vpop.f32.mrf.mxu0
        %v3449 = vadd.f32 %v3372, %v3448
        %v3450 = vpop.f32.mrf.mxu0
        %v3451 = vadd.f32 %v3374, %v3450
        %3452 = vdwg.mxu0
        %3453 = vmatprep.subr.mxu0 0.0
        %3454 = vmatpush1.msra.mxu0 0.0
        %3455 = vmatprep.subr.mxu0 0.0
        %3456 = vmatpush1.msra.mxu0 0.0
        %3457 = vmatprep.subr.mxu0 0.0
        %3458 = vmatpush1.msra.mxu0 0.0
        %3459 = vmatprep.subr.mxu0 0.0
        %3460 = vmatpush1.msra.mxu0 0.0
        %3461 = vmatprep.subr.mxu0 0.0
        %3462 = vmatpush1.msra.mxu0 0.0
        %3463 = vmatprep.subr.mxu0 0.0
        %3464 = vmatpush1.msra.mxu0 0.0
        %3465 = vmatprep.subr.mxu0 0.0
        %3466 = vmatpush1.msra.mxu0 0.0
        %3467 = vmatprep.subr.mxu0 0.0
        %3468 = vmatpush1.msra.mxu0 0.0
        %3469 = vmatprep.subr.mxu0 0.0
        %3470 = vmatpush1.msra.mxu0 0.0
        %3471 = vmatprep.subr.mxu0 0.0
        %3472 = vmatpush1.msra.mxu0 0.0
        %3473 = vmatprep.subr.mxu0 0.0
        %3474 = vmatpush1.msra.mxu0 0.0
        %3475 = vmatprep.subr.mxu0 0.0
        %3476 = vmatpush1.msra.mxu0 0.0
        %3477 = vmatprep.subr.mxu0 0.0
        %3478 = vmatpush1.msra.mxu0 0.0
        %3479 = vmatprep.subr.mxu0 0.0
        %3480 = vmatpush1.msra.mxu0 0.0
        %3481 = vmatprep.subr.mxu0 0.0
        %3482 = vmatpush1.msra.mxu0 0.0
        %v3483 = vand.u32 %v3215, 4294901760
        %3484 = vmatprep.subr.mxu0 %v3483
        %v3485 = vand.u32 %v3214, 4294901760
        %3486 = vmatpush1.msra.mxu0 %v3485
        %3487 = vmatprep.subr.mxu0 0.0
        %3488 = vmatpush2.msra.mxu0 0.0
        %3489 = vmatprep.subr.mxu0 0.0
        %3490 = vmatpush2.msra.mxu0 0.0
        %3491 = vmatprep.subr.mxu0 0.0
        %3492 = vmatpush2.msra.mxu0 0.0
        %3493 = vmatprep.subr.mxu0 0.0
        %3494 = vmatpush2.msra.mxu0 0.0
        %3495 = vmatprep.subr.mxu0 0.0
        %3496 = vmatpush2.msra.mxu0 0.0
        %3497 = vmatprep.subr.mxu0 0.0
        %3498 = vmatpush2.msra.mxu0 0.0
        %3499 = vmatprep.subr.mxu0 0.0
        %3500 = vmatpush2.msra.mxu0 0.0
        %3501 = vmatprep.subr.mxu0 0.0
        %3502 = vmatpush2.msra.mxu0 0.0
        %3503 = vmatprep.subr.mxu0 0.0
        %3504 = vmatpush2.msra.mxu0 0.0
        %3505 = vmatprep.subr.mxu0 0.0
        %3506 = vmatpush2.msra.mxu0 0.0
        %3507 = vmatprep.subr.mxu0 0.0
        %3508 = vmatpush2.msra.mxu0 0.0
        %3509 = vmatprep.subr.mxu0 0.0
        %3510 = vmatpush2.msra.mxu0 0.0
        %3511 = vmatprep.subr.mxu0 0.0
        %3512 = vmatpush2.msra.mxu0 0.0
        %3513 = vmatprep.subr.mxu0 0.0
        %3514 = vmatpush2.msra.mxu0 0.0
        %3515 = vmatprep.subr.mxu0 0.0
        %3516 = vmatpush2.msra.mxu0 0.0
        %3517 = vmatprep.subr.mxu0 0.0
        %3518 = vmatpush2.msra.mxu0 0.0
        %3519 = vmatprep.mubr.f32.mxu0 0.0
        %v3520 = vand.u32 %v1317, 4294901760
        %v3521 = vsub.f32 %v1317, %v3520
        %v3522 = vand.u32 %v3521, 4294901760
        %3523 = vmatmul.mubr.f32.gmra.mxu0 %v3522
        %v3524 = vpop.f32.mrf.mxu0
        %v3525 = vadd.f32 %v3449, %v3524
        %v3526 = vpop.f32.mrf.mxu0
        %v3527 = vadd.f32 %v3451, %v3526
        %3528 = vdwg.mxu0
        %3529 = vmatprep.subr.mxu0 0.0
        %3530 = vmatpush1.msra.mxu0 0.0
        %3531 = vmatprep.subr.mxu0 0.0
        %3532 = vmatpush1.msra.mxu0 0.0
        %3533 = vmatprep.subr.mxu0 0.0
        %3534 = vmatpush1.msra.mxu0 0.0
        %3535 = vmatprep.subr.mxu0 0.0
        %3536 = vmatpush1.msra.mxu0 0.0
        %3537 = vmatprep.subr.mxu0 0.0
        %3538 = vmatpush1.msra.mxu0 0.0
        %3539 = vmatprep.subr.mxu0 0.0
        %3540 = vmatpush1.msra.mxu0 0.0
        %3541 = vmatprep.subr.mxu0 0.0
        %3542 = vmatpush1.msra.mxu0 0.0
        %3543 = vmatprep.subr.mxu0 0.0
        %3544 = vmatpush1.msra.mxu0 0.0
        %3545 = vmatprep.subr.mxu0 0.0
        %3546 = vmatpush1.msra.mxu0 0.0
        %3547 = vmatprep.subr.mxu0 0.0
        %3548 = vmatpush1.msra.mxu0 0.0
        %3549 = vmatprep.subr.mxu0 0.0
        %3550 = vmatpush1.msra.mxu0 0.0
        %3551 = vmatprep.subr.mxu0 0.0
        %3552 = vmatpush1.msra.mxu0 0.0
        %3553 = vmatprep.subr.mxu0 0.0
        %3554 = vmatpush1.msra.mxu0 0.0
        %3555 = vmatprep.subr.mxu0 0.0
        %3556 = vmatpush1.msra.mxu0 0.0
        %3557 = vmatprep.subr.mxu0 0.0
        %3558 = vmatpush1.msra.mxu0 0.0
        %v3559 = vand.u32 %v3215, 4294901760
        %v3560 = vsub.f32 %v3215, %v3559
        %v3561 = vand.u32 %v3560, 4294901760
        %3562 = vmatprep.subr.mxu0 %v3561
        %v3563 = vand.u32 %v3214, 4294901760
        %v3564 = vsub.f32 %v3214, %v3563
        %v3565 = vand.u32 %v3564, 4294901760
        %3566 = vmatpush1.msra.mxu0 %v3565
        %3567 = vmatprep.subr.mxu0 0.0
        %3568 = vmatpush2.msra.mxu0 0.0
        %3569 = vmatprep.subr.mxu0 0.0
        %3570 = vmatpush2.msra.mxu0 0.0
        %3571 = vmatprep.subr.mxu0 0.0
        %3572 = vmatpush2.msra.mxu0 0.0
        %3573 = vmatprep.subr.mxu0 0.0
        %3574 = vmatpush2.msra.mxu0 0.0
        %3575 = vmatprep.subr.mxu0 0.0
        %3576 = vmatpush2.msra.mxu0 0.0
        %3577 = vmatprep.subr.mxu0 0.0
        %3578 = vmatpush2.msra.mxu0 0.0
        %3579 = vmatprep.subr.mxu0 0.0
        %3580 = vmatpush2.msra.mxu0 0.0
        %3581 = vmatprep.subr.mxu0 0.0
        %3582 = vmatpush2.msra.mxu0 0.0
        %3583 = vmatprep.subr.mxu0 0.0
        %3584 = vmatpush2.msra.mxu0 0.0
        %3585 = vmatprep.subr.mxu0 0.0
        %3586 = vmatpush2.msra.mxu0 0.0
        %3587 = vmatprep.subr.mxu0 0.0
        %3588 = vmatpush2.msra.mxu0 0.0
        %3589 = vmatprep.subr.mxu0 0.0
        %3590 = vmatpush2.msra.mxu0 0.0
        %3591 = vmatprep.subr.mxu0 0.0
        %3592 = vmatpush2.msra.mxu0 0.0
        %3593 = vmatprep.subr.mxu0 0.0
        %3594 = vmatpush2.msra.mxu0 0.0
        %3595 = vmatprep.subr.mxu0 0.0
        %3596 = vmatpush2.msra.mxu0 0.0
        %3597 = vmatprep.subr.mxu0 0.0
        %3598 = vmatpush2.msra.mxu0 0.0
        %3599 = vmatprep.mubr.f32.mxu0 0.0
        %v3600 = vand.u32 %v1317, 4294901760
        %3601 = vmatmul.mubr.f32.gmra.mxu0 %v3600
        %v3602 = vpop.f32.mrf.mxu0
        %v3603 = vadd.f32 %v3525, %v3602
        %v3604 = vpop.f32.mrf.mxu0
        %v3605 = vadd.f32 %v3527, %v3604
        %3606 = vdwg.mxu0
        %3607 = vmatprep.subr.mxu0 0.0
        %3608 = vmatpush1.msra.mxu0 0.0
        %3609 = vmatprep.subr.mxu0 0.0
        %3610 = vmatpush1.msra.mxu0 0.0
        %3611 = vmatprep.subr.mxu0 0.0
        %3612 = vmatpush1.msra.mxu0 0.0
        %3613 = vmatprep.subr.mxu0 0.0
        %3614 = vmatpush1.msra.mxu0 0.0
        %3615 = vmatprep.subr.mxu0 0.0
        %3616 = vmatpush1.msra.mxu0 0.0
        %3617 = vmatprep.subr.mxu0 0.0
        %3618 = vmatpush1.msra.mxu0 0.0
        %3619 = vmatprep.subr.mxu0 0.0
        %3620 = vmatpush1.msra.mxu0 0.0
        %3621 = vmatprep.subr.mxu0 0.0
        %3622 = vmatpush1.msra.mxu0 0.0
        %3623 = vmatprep.subr.mxu0 0.0
        %3624 = vmatpush1.msra.mxu0 0.0
        %3625 = vmatprep.subr.mxu0 0.0
        %3626 = vmatpush1.msra.mxu0 0.0
        %3627 = vmatprep.subr.mxu0 0.0
        %3628 = vmatpush1.msra.mxu0 0.0
        %3629 = vmatprep.subr.mxu0 0.0
        %3630 = vmatpush1.msra.mxu0 0.0
        %3631 = vmatprep.subr.mxu0 0.0
        %3632 = vmatpush1.msra.mxu0 0.0
        %3633 = vmatprep.subr.mxu0 0.0
        %3634 = vmatpush1.msra.mxu0 0.0
        %3635 = vmatprep.subr.mxu0 0.0
        %3636 = vmatpush1.msra.mxu0 0.0
        %v3637 = vand.u32 %v3215, 4294901760
        %3638 = vmatprep.subr.mxu0 %v3637
        %v3639 = vand.u32 %v3214, 4294901760
        %3640 = vmatpush1.msra.mxu0 %v3639
        %3641 = vmatprep.subr.mxu0 0.0
        %3642 = vmatpush2.msra.mxu0 0.0
        %3643 = vmatprep.subr.mxu0 0.0
        %3644 = vmatpush2.msra.mxu0 0.0
        %3645 = vmatprep.subr.mxu0 0.0
        %3646 = vmatpush2.msra.mxu0 0.0
        %3647 = vmatprep.subr.mxu0 0.0
        %3648 = vmatpush2.msra.mxu0 0.0
        %3649 = vmatprep.subr.mxu0 0.0
        %3650 = vmatpush2.msra.mxu0 0.0
        %3651 = vmatprep.subr.mxu0 0.0
        %3652 = vmatpush2.msra.mxu0 0.0
        %3653 = vmatprep.subr.mxu0 0.0
        %3654 = vmatpush2.msra.mxu0 0.0
        %3655 = vmatprep.subr.mxu0 0.0
        %3656 = vmatpush2.msra.mxu0 0.0
        %3657 = vmatprep.subr.mxu0 0.0
        %3658 = vmatpush2.msra.mxu0 0.0
        %3659 = vmatprep.subr.mxu0 0.0
        %3660 = vmatpush2.msra.mxu0 0.0
        %3661 = vmatprep.subr.mxu0 0.0
        %3662 = vmatpush2.msra.mxu0 0.0
        %3663 = vmatprep.subr.mxu0 0.0
        %3664 = vmatpush2.msra.mxu0 0.0
        %3665 = vmatprep.subr.mxu0 0.0
        %3666 = vmatpush2.msra.mxu0 0.0
        %3667 = vmatprep.subr.mxu0 0.0
        %3668 = vmatpush2.msra.mxu0 0.0
        %3669 = vmatprep.subr.mxu0 0.0
        %3670 = vmatpush2.msra.mxu0 0.0
        %3671 = vmatprep.subr.mxu0 0.0
        %3672 = vmatpush2.msra.mxu0 0.0
        %3673 = vmatprep.mubr.f32.mxu0 0.0
        %v3674 = vand.u32 %v1317, 4294901760
        %3675 = vmatmul.mubr.f32.gmra.mxu0 %v3674
        %v3676 = vpop.f32.mrf.mxu0
        %v3677 = vadd.f32 %v3603, %v3676
        %v3678 = vpop.f32.mrf.mxu0
        %v3679 = vadd.f32 %v3605, %v3678
        %3680 = vdwg.mxu0
        %v3681 = vmax.f32 %v3677, 0.0
        %v3682 = vmax.f32 %v3679, 0.0
        %s3683 = scalar_lea.vmem %s311, 32 [#allocation5]
        %3684 = vst [vmem:[%s3683] sm:$0xff] %v3681
        %3685 = vst [vmem:[%s3683 + $0x8] sm:$0xff] %v3682
        %s3686 = scalar_lea.vmem [#allocation2], 24
        %v3687 = vld [vmem:[%s3686] sm:$0xff]
        %s3688 = scalar_lea.vmem %s4, 24
        %v3689 = vld [vmem:[%s3688] sm:$0xff]
        %3691 = vset.pattern.permute.xlu0 0
        %3692 = vperm.xlu0 %3691, %v3689
        %v3693 = vpop.permute.xlu0 %3692
        %v3696 = vsel %vm840, %v3687, 0
        %3698 = vmatprep.subr.mxu0 0.0
        %3699 = vmatpush1.msra.mxu0 0.0
        %3700 = vmatprep.subr.mxu0 0.0
        %3701 = vmatpush1.msra.mxu0 0.0
        %3702 = vmatprep.subr.mxu0 0.0
        %3703 = vmatpush1.msra.mxu0 0.0
        %3704 = vmatprep.subr.mxu0 0.0
        %3705 = vmatpush1.msra.mxu0 0.0
        %3706 = vmatprep.subr.mxu0 0.0
        %3707 = vmatpush1.msra.mxu0 0.0
        %3708 = vmatprep.subr.mxu0 0.0
        %3709 = vmatpush1.msra.mxu0 0.0
        %3710 = vmatprep.subr.mxu0 0.0
        %3711 = vmatpush1.msra.mxu0 0.0
        %3712 = vmatprep.subr.mxu0 0.0
        %3713 = vmatpush1.msra.mxu0 0.0
        %3714 = vmatprep.subr.mxu0 0.0
        %3715 = vmatpush1.msra.mxu0 0.0
        %3716 = vmatprep.subr.mxu0 0.0
        %3717 = vmatpush1.msra.mxu0 0.0
        %3718 = vmatprep.subr.mxu0 0.0
        %3719 = vmatpush1.msra.mxu0 0.0
        %3720 = vmatprep.subr.mxu0 0.0
        %3721 = vmatpush1.msra.mxu0 0.0
        %3722 = vmatprep.subr.mxu0 0.0
        %3723 = vmatpush1.msra.mxu0 0.0
        %3724 = vmatprep.subr.mxu0 0.0
        %3725 = vmatpush1.msra.mxu0 0.0
        %3726 = vmatprep.subr.mxu0 0.0
        %3727 = vmatpush1.msra.mxu0 0.0
        %v3728 = vand.u32 %v830, 4294901760
        %3729 = vmatprep.subr.mxu0 %v3728
        %v3730 = vand.u32 %v829, 4294901760
        %3731 = vmatpush1.msra.mxu0 %v3730
        %3732 = vmatprep.subr.mxu0 0.0
        %3733 = vmatpush2.msra.mxu0 0.0
        %3734 = vmatprep.subr.mxu0 0.0
        %3735 = vmatpush2.msra.mxu0 0.0
        %3736 = vmatprep.subr.mxu0 0.0
        %3737 = vmatpush2.msra.mxu0 0.0
        %3738 = vmatprep.subr.mxu0 0.0
        %3739 = vmatpush2.msra.mxu0 0.0
        %3740 = vmatprep.subr.mxu0 0.0
        %3741 = vmatpush2.msra.mxu0 0.0
        %3742 = vmatprep.subr.mxu0 0.0
        %3743 = vmatpush2.msra.mxu0 0.0
        %3744 = vmatprep.subr.mxu0 0.0
        %3745 = vmatpush2.msra.mxu0 0.0
        %3746 = vmatprep.subr.mxu0 0.0
        %3747 = vmatpush2.msra.mxu0 0.0
        %3748 = vmatprep.subr.mxu0 0.0
        %3749 = vmatpush2.msra.mxu0 0.0
        %3750 = vmatprep.subr.mxu0 0.0
        %3751 = vmatpush2.msra.mxu0 0.0
        %3752 = vmatprep.subr.mxu0 0.0
        %3753 = vmatpush2.msra.mxu0 0.0
        %3754 = vmatprep.subr.mxu0 0.0
        %3755 = vmatpush2.msra.mxu0 0.0
        %3756 = vmatprep.subr.mxu0 0.0
        %3757 = vmatpush2.msra.mxu0 0.0
        %3758 = vmatprep.subr.mxu0 0.0
        %3759 = vmatpush2.msra.mxu0 0.0
        %3760 = vmatprep.subr.mxu0 0.0
        %3761 = vmatpush2.msra.mxu0 0.0
        %3762 = vmatprep.subr.mxu0 0.0
        %3763 = vmatpush2.msra.mxu0 0.0
        %3764 = vmatprep.mubr.f32.mxu0 0.0
        %v3765 = vand.u32 %v3696, 4294901760
        %v3766 = vsub.f32 %v3696, %v3765
        %v3767 = vand.u32 %v3766, 4294901760
        %v3768 = vsub.f32 %v3766, %v3767
        %v3769 = vand.u32 %v3768, 4294901760
        %3770 = vmatmul.mubr.f32.gmra.mxu0 %v3769
        %v3771 = vpop.f32.mrf.mxu0
        %v3772 = vadd.f32 %v3693, %v3771
        %v3773 = vpop.f32.mrf.mxu0
        %v3774 = vadd.f32 %v3693, %v3773
        %3775 = vdwg.mxu0
        %3776 = vmatprep.subr.mxu0 0.0
        %3777 = vmatpush1.msra.mxu0 0.0
        %3778 = vmatprep.subr.mxu0 0.0
        %3779 = vmatpush1.msra.mxu0 0.0
        %3780 = vmatprep.subr.mxu0 0.0
        %3781 = vmatpush1.msra.mxu0 0.0
        %3782 = vmatprep.subr.mxu0 0.0
        %3783 = vmatpush1.msra.mxu0 0.0
        %3784 = vmatprep.subr.mxu0 0.0
        %3785 = vmatpush1.msra.mxu0 0.0
        %3786 = vmatprep.subr.mxu0 0.0
        %3787 = vmatpush1.msra.mxu0 0.0
        %3788 = vmatprep.subr.mxu0 0.0
        %3789 = vmatpush1.msra.mxu0 0.0
        %3790 = vmatprep.subr.mxu0 0.0
        %3791 = vmatpush1.msra.mxu0 0.0
        %3792 = vmatprep.subr.mxu0 0.0
        %3793 = vmatpush1.msra.mxu0 0.0
        %3794 = vmatprep.subr.mxu0 0.0
        %3795 = vmatpush1.msra.mxu0 0.0
        %3796 = vmatprep.subr.mxu0 0.0
        %3797 = vmatpush1.msra.mxu0 0.0
        %3798 = vmatprep.subr.mxu0 0.0
        %3799 = vmatpush1.msra.mxu0 0.0
        %3800 = vmatprep.subr.mxu0 0.0
        %3801 = vmatpush1.msra.mxu0 0.0
        %3802 = vmatprep.subr.mxu0 0.0
        %3803 = vmatpush1.msra.mxu0 0.0
        %3804 = vmatprep.subr.mxu0 0.0
        %3805 = vmatpush1.msra.mxu0 0.0
        %v3806 = vand.u32 %v830, 4294901760
        %v3807 = vsub.f32 %v830, %v3806
        %v3808 = vand.u32 %v3807, 4294901760
        %v3809 = vsub.f32 %v3807, %v3808
        %v3810 = vand.u32 %v3809, 4294901760
        %3811 = vmatprep.subr.mxu0 %v3810
        %v3812 = vand.u32 %v829, 4294901760
        %v3813 = vsub.f32 %v829, %v3812
        %v3814 = vand.u32 %v3813, 4294901760
        %v3815 = vsub.f32 %v3813, %v3814
        %v3816 = vand.u32 %v3815, 4294901760
        %3817 = vmatpush1.msra.mxu0 %v3816
        %3818 = vmatprep.subr.mxu0 0.0
        %3819 = vmatpush2.msra.mxu0 0.0
        %3820 = vmatprep.subr.mxu0 0.0
        %3821 = vmatpush2.msra.mxu0 0.0
        %3822 = vmatprep.subr.mxu0 0.0
        %3823 = vmatpush2.msra.mxu0 0.0
        %3824 = vmatprep.subr.mxu0 0.0
        %3825 = vmatpush2.msra.mxu0 0.0
        %3826 = vmatprep.subr.mxu0 0.0
        %3827 = vmatpush2.msra.mxu0 0.0
        %3828 = vmatprep.subr.mxu0 0.0
        %3829 = vmatpush2.msra.mxu0 0.0
        %3830 = vmatprep.subr.mxu0 0.0
        %3831 = vmatpush2.msra.mxu0 0.0
        %3832 = vmatprep.subr.mxu0 0.0
        %3833 = vmatpush2.msra.mxu0 0.0
        %3834 = vmatprep.subr.mxu0 0.0
        %3835 = vmatpush2.msra.mxu0 0.0
        %3836 = vmatprep.subr.mxu0 0.0
        %3837 = vmatpush2.msra.mxu0 0.0
        %3838 = vmatprep.subr.mxu0 0.0
        %3839 = vmatpush2.msra.mxu0 0.0
        %3840 = vmatprep.subr.mxu0 0.0
        %3841 = vmatpush2.msra.mxu0 0.0
        %3842 = vmatprep.subr.mxu0 0.0
        %3843 = vmatpush2.msra.mxu0 0.0
        %3844 = vmatprep.subr.mxu0 0.0
        %3845 = vmatpush2.msra.mxu0 0.0
        %3846 = vmatprep.subr.mxu0 0.0
        %3847 = vmatpush2.msra.mxu0 0.0
        %3848 = vmatprep.subr.mxu0 0.0
        %3849 = vmatpush2.msra.mxu0 0.0
        %3850 = vmatprep.mubr.f32.mxu0 0.0
        %v3851 = vand.u32 %v3696, 4294901760
        %3852 = vmatmul.mubr.f32.gmra.mxu0 %v3851
        %v3853 = vpop.f32.mrf.mxu0
        %v3854 = vadd.f32 %v3772, %v3853
        %v3855 = vpop.f32.mrf.mxu0
        %v3856 = vadd.f32 %v3774, %v3855
        %3857 = vdwg.mxu0
        %3858 = vmatprep.subr.mxu0 0.0
        %3859 = vmatpush1.msra.mxu0 0.0
        %3860 = vmatprep.subr.mxu0 0.0
        %3861 = vmatpush1.msra.mxu0 0.0
        %3862 = vmatprep.subr.mxu0 0.0
        %3863 = vmatpush1.msra.mxu0 0.0
        %3864 = vmatprep.subr.mxu0 0.0
        %3865 = vmatpush1.msra.mxu0 0.0
        %3866 = vmatprep.subr.mxu0 0.0
        %3867 = vmatpush1.msra.mxu0 0.0
        %3868 = vmatprep.subr.mxu0 0.0
        %3869 = vmatpush1.msra.mxu0 0.0
        %3870 = vmatprep.subr.mxu0 0.0
        %3871 = vmatpush1.msra.mxu0 0.0
        %3872 = vmatprep.subr.mxu0 0.0
        %3873 = vmatpush1.msra.mxu0 0.0
        %3874 = vmatprep.subr.mxu0 0.0
        %3875 = vmatpush1.msra.mxu0 0.0
        %3876 = vmatprep.subr.mxu0 0.0
        %3877 = vmatpush1.msra.mxu0 0.0
        %3878 = vmatprep.subr.mxu0 0.0
        %3879 = vmatpush1.msra.mxu0 0.0
        %3880 = vmatprep.subr.mxu0 0.0
        %3881 = vmatpush1.msra.mxu0 0.0
        %3882 = vmatprep.subr.mxu0 0.0
        %3883 = vmatpush1.msra.mxu0 0.0
        %3884 = vmatprep.subr.mxu0 0.0
        %3885 = vmatpush1.msra.mxu0 0.0
        %3886 = vmatprep.subr.mxu0 0.0
        %3887 = vmatpush1.msra.mxu0 0.0
        %v3888 = vand.u32 %v830, 4294901760
        %v3889 = vsub.f32 %v830, %v3888
        %3890 = vmatprep.subr.mxu0 %v3889
        %v3891 = vand.u32 %v829, 4294901760
        %v3892 = vsub.f32 %v829, %v3891
        %3893 = vmatpush1.msra.mxu0 %v3892
        %3894 = vmatprep.subr.mxu0 0.0
        %3895 = vmatpush2.msra.mxu0 0.0
        %3896 = vmatprep.subr.mxu0 0.0
        %3897 = vmatpush2.msra.mxu0 0.0
        %3898 = vmatprep.subr.mxu0 0.0
        %3899 = vmatpush2.msra.mxu0 0.0
        %3900 = vmatprep.subr.mxu0 0.0
        %3901 = vmatpush2.msra.mxu0 0.0
        %3902 = vmatprep.subr.mxu0 0.0
        %3903 = vmatpush2.msra.mxu0 0.0
        %3904 = vmatprep.subr.mxu0 0.0
        %3905 = vmatpush2.msra.mxu0 0.0
        %3906 = vmatprep.subr.mxu0 0.0
        %3907 = vmatpush2.msra.mxu0 0.0
        %3908 = vmatprep.subr.mxu0 0.0
        %3909 = vmatpush2.msra.mxu0 0.0
        %3910 = vmatprep.subr.mxu0 0.0
        %3911 = vmatpush2.msra.mxu0 0.0
        %3912 = vmatprep.subr.mxu0 0.0
        %3913 = vmatpush2.msra.mxu0 0.0
        %3914 = vmatprep.subr.mxu0 0.0
        %3915 = vmatpush2.msra.mxu0 0.0
        %3916 = vmatprep.subr.mxu0 0.0
        %3917 = vmatpush2.msra.mxu0 0.0
        %3918 = vmatprep.subr.mxu0 0.0
        %3919 = vmatpush2.msra.mxu0 0.0
        %3920 = vmatprep.subr.mxu0 0.0
        %3921 = vmatpush2.msra.mxu0 0.0
        %3922 = vmatprep.subr.mxu0 0.0
        %3923 = vmatpush2.msra.mxu0 0.0
        %3924 = vmatprep.subr.mxu0 0.0
        %3925 = vmatpush2.msra.mxu0 0.0
        %3926 = vmatprep.mubr.f32.mxu0 0.0
        %v3927 = vand.u32 %v3696, 4294901760
        %v3928 = vsub.f32 %v3696, %v3927
        %3929 = vmatmul.mubr.f32.gmra.mxu0 %v3928
        %v3930 = vpop.f32.mrf.mxu0
        %v3931 = vadd.f32 %v3854, %v3930
        %v3932 = vpop.f32.mrf.mxu0
        %v3933 = vadd.f32 %v3856, %v3932
        %3934 = vdwg.mxu0
        %3935 = vmatprep.subr.mxu0 0.0
        %3936 = vmatpush1.msra.mxu0 0.0
        %3937 = vmatprep.subr.mxu0 0.0
        %3938 = vmatpush1.msra.mxu0 0.0
        %3939 = vmatprep.subr.mxu0 0.0
        %3940 = vmatpush1.msra.mxu0 0.0
        %3941 = vmatprep.subr.mxu0 0.0
        %3942 = vmatpush1.msra.mxu0 0.0
        %3943 = vmatprep.subr.mxu0 0.0
        %3944 = vmatpush1.msra.mxu0 0.0
        %3945 = vmatprep.subr.mxu0 0.0
        %3946 = vmatpush1.msra.mxu0 0.0
        %3947 = vmatprep.subr.mxu0 0.0
        %3948 = vmatpush1.msra.mxu0 0.0
        %3949 = vmatprep.subr.mxu0 0.0
        %3950 = vmatpush1.msra.mxu0 0.0
        %3951 = vmatprep.subr.mxu0 0.0
        %3952 = vmatpush1.msra.mxu0 0.0
        %3953 = vmatprep.subr.mxu0 0.0
        %3954 = vmatpush1.msra.mxu0 0.0
        %3955 = vmatprep.subr.mxu0 0.0
        %3956 = vmatpush1.msra.mxu0 0.0
        %3957 = vmatprep.subr.mxu0 0.0
        %3958 = vmatpush1.msra.mxu0 0.0
        %3959 = vmatprep.subr.mxu0 0.0
        %3960 = vmatpush1.msra.mxu0 0.0
        %3961 = vmatprep.subr.mxu0 0.0
        %3962 = vmatpush1.msra.mxu0 0.0
        %3963 = vmatprep.subr.mxu0 0.0
        %3964 = vmatpush1.msra.mxu0 0.0
        %v3965 = vand.u32 %v830, 4294901760
        %3966 = vmatprep.subr.mxu0 %v3965
        %v3967 = vand.u32 %v829, 4294901760
        %3968 = vmatpush1.msra.mxu0 %v3967
        %3969 = vmatprep.subr.mxu0 0.0
        %3970 = vmatpush2.msra.mxu0 0.0
        %3971 = vmatprep.subr.mxu0 0.0
        %3972 = vmatpush2.msra.mxu0 0.0
        %3973 = vmatprep.subr.mxu0 0.0
        %3974 = vmatpush2.msra.mxu0 0.0
        %3975 = vmatprep.subr.mxu0 0.0
        %3976 = vmatpush2.msra.mxu0 0.0
        %3977 = vmatprep.subr.mxu0 0.0
        %3978 = vmatpush2.msra.mxu0 0.0
        %3979 = vmatprep.subr.mxu0 0.0
        %3980 = vmatpush2.msra.mxu0 0.0
        %3981 = vmatprep.subr.mxu0 0.0
        %3982 = vmatpush2.msra.mxu0 0.0
        %3983 = vmatprep.subr.mxu0 0.0
        %3984 = vmatpush2.msra.mxu0 0.0
        %3985 = vmatprep.subr.mxu0 0.0
        %3986 = vmatpush2.msra.mxu0 0.0
        %3987 = vmatprep.subr.mxu0 0.0
        %3988 = vmatpush2.msra.mxu0 0.0
        %3989 = vmatprep.subr.mxu0 0.0
        %3990 = vmatpush2.msra.mxu0 0.0
        %3991 = vmatprep.subr.mxu0 0.0
        %3992 = vmatpush2.msra.mxu0 0.0
        %3993 = vmatprep.subr.mxu0 0.0
        %3994 = vmatpush2.msra.mxu0 0.0
        %3995 = vmatprep.subr.mxu0 0.0
        %3996 = vmatpush2.msra.mxu0 0.0
        %3997 = vmatprep.subr.mxu0 0.0
        %3998 = vmatpush2.msra.mxu0 0.0
        %3999 = vmatprep.subr.mxu0 0.0
        %4000 = vmatpush2.msra.mxu0 0.0
        %4001 = vmatprep.mubr.f32.mxu0 0.0
        %v4002 = vand.u32 %v3696, 4294901760
        %v4003 = vsub.f32 %v3696, %v4002
        %v4004 = vand.u32 %v4003, 4294901760
        %4005 = vmatmul.mubr.f32.gmra.mxu0 %v4004
        %v4006 = vpop.f32.mrf.mxu0
        %v4007 = vadd.f32 %v3931, %v4006
        %v4008 = vpop.f32.mrf.mxu0
        %v4009 = vadd.f32 %v3933, %v4008
        %4010 = vdwg.mxu0
        %4011 = vmatprep.subr.mxu0 0.0
        %4012 = vmatpush1.msra.mxu0 0.0
        %4013 = vmatprep.subr.mxu0 0.0
        %4014 = vmatpush1.msra.mxu0 0.0
        %4015 = vmatprep.subr.mxu0 0.0
        %4016 = vmatpush1.msra.mxu0 0.0
        %4017 = vmatprep.subr.mxu0 0.0
        %4018 = vmatpush1.msra.mxu0 0.0
        %4019 = vmatprep.subr.mxu0 0.0
        %4020 = vmatpush1.msra.mxu0 0.0
        %4021 = vmatprep.subr.mxu0 0.0
        %4022 = vmatpush1.msra.mxu0 0.0
        %4023 = vmatprep.subr.mxu0 0.0
        %4024 = vmatpush1.msra.mxu0 0.0
        %4025 = vmatprep.subr.mxu0 0.0
        %4026 = vmatpush1.msra.mxu0 0.0
        %4027 = vmatprep.subr.mxu0 0.0
        %4028 = vmatpush1.msra.mxu0 0.0
        %4029 = vmatprep.subr.mxu0 0.0
        %4030 = vmatpush1.msra.mxu0 0.0
        %4031 = vmatprep.subr.mxu0 0.0
        %4032 = vmatpush1.msra.mxu0 0.0
        %4033 = vmatprep.subr.mxu0 0.0
        %4034 = vmatpush1.msra.mxu0 0.0
        %4035 = vmatprep.subr.mxu0 0.0
        %4036 = vmatpush1.msra.mxu0 0.0
        %4037 = vmatprep.subr.mxu0 0.0
        %4038 = vmatpush1.msra.mxu0 0.0
        %4039 = vmatprep.subr.mxu0 0.0
        %4040 = vmatpush1.msra.mxu0 0.0
        %v4041 = vand.u32 %v830, 4294901760
        %v4042 = vsub.f32 %v830, %v4041
        %v4043 = vand.u32 %v4042, 4294901760
        %4044 = vmatprep.subr.mxu0 %v4043
        %v4045 = vand.u32 %v829, 4294901760
        %v4046 = vsub.f32 %v829, %v4045
        %v4047 = vand.u32 %v4046, 4294901760
        %4048 = vmatpush1.msra.mxu0 %v4047
        %4049 = vmatprep.subr.mxu0 0.0
        %4050 = vmatpush2.msra.mxu0 0.0
        %4051 = vmatprep.subr.mxu0 0.0
        %4052 = vmatpush2.msra.mxu0 0.0
        %4053 = vmatprep.subr.mxu0 0.0
        %4054 = vmatpush2.msra.mxu0 0.0
        %4055 = vmatprep.subr.mxu0 0.0
        %4056 = vmatpush2.msra.mxu0 0.0
        %4057 = vmatprep.subr.mxu0 0.0
        %4058 = vmatpush2.msra.mxu0 0.0
        %4059 = vmatprep.subr.mxu0 0.0
        %4060 = vmatpush2.msra.mxu0 0.0
        %4061 = vmatprep.subr.mxu0 0.0
        %4062 = vmatpush2.msra.mxu0 0.0
        %4063 = vmatprep.subr.mxu0 0.0
        %4064 = vmatpush2.msra.mxu0 0.0
        %4065 = vmatprep.subr.mxu0 0.0
        %4066 = vmatpush2.msra.mxu0 0.0
        %4067 = vmatprep.subr.mxu0 0.0
        %4068 = vmatpush2.msra.mxu0 0.0
        %4069 = vmatprep.subr.mxu0 0.0
        %4070 = vmatpush2.msra.mxu0 0.0
        %4071 = vmatprep.subr.mxu0 0.0
        %4072 = vmatpush2.msra.mxu0 0.0
        %4073 = vmatprep.subr.mxu0 0.0
        %4074 = vmatpush2.msra.mxu0 0.0
        %4075 = vmatprep.subr.mxu0 0.0
        %4076 = vmatpush2.msra.mxu0 0.0
        %4077 = vmatprep.subr.mxu0 0.0
        %4078 = vmatpush2.msra.mxu0 0.0
        %4079 = vmatprep.subr.mxu0 0.0
        %4080 = vmatpush2.msra.mxu0 0.0
        %4081 = vmatprep.mubr.f32.mxu0 0.0
        %v4082 = vand.u32 %v3696, 4294901760
        %4083 = vmatmul.mubr.f32.gmra.mxu0 %v4082
        %v4084 = vpop.f32.mrf.mxu0
        %v4085 = vadd.f32 %v4007, %v4084
        %v4086 = vpop.f32.mrf.mxu0
        %v4087 = vadd.f32 %v4009, %v4086
        %4088 = vdwg.mxu0
        %4089 = vmatprep.subr.mxu0 0.0
        %4090 = vmatpush1.msra.mxu0 0.0
        %4091 = vmatprep.subr.mxu0 0.0
        %4092 = vmatpush1.msra.mxu0 0.0
        %4093 = vmatprep.subr.mxu0 0.0
        %4094 = vmatpush1.msra.mxu0 0.0
        %4095 = vmatprep.subr.mxu0 0.0
        %4096 = vmatpush1.msra.mxu0 0.0
        %4097 = vmatprep.subr.mxu0 0.0
        %4098 = vmatpush1.msra.mxu0 0.0
        %4099 = vmatprep.subr.mxu0 0.0
        %4100 = vmatpush1.msra.mxu0 0.0
        %4101 = vmatprep.subr.mxu0 0.0
        %4102 = vmatpush1.msra.mxu0 0.0
        %4103 = vmatprep.subr.mxu0 0.0
        %4104 = vmatpush1.msra.mxu0 0.0
        %4105 = vmatprep.subr.mxu0 0.0
        %4106 = vmatpush1.msra.mxu0 0.0
        %4107 = vmatprep.subr.mxu0 0.0
        %4108 = vmatpush1.msra.mxu0 0.0
        %4109 = vmatprep.subr.mxu0 0.0
        %4110 = vmatpush1.msra.mxu0 0.0
        %4111 = vmatprep.subr.mxu0 0.0
        %4112 = vmatpush1.msra.mxu0 0.0
        %4113 = vmatprep.subr.mxu0 0.0
        %4114 = vmatpush1.msra.mxu0 0.0
        %4115 = vmatprep.subr.mxu0 0.0
        %4116 = vmatpush1.msra.mxu0 0.0
        %4117 = vmatprep.subr.mxu0 0.0
        %4118 = vmatpush1.msra.mxu0 0.0
        %v4119 = vand.u32 %v830, 4294901760
        %4120 = vmatprep.subr.mxu0 %v4119
        %v4121 = vand.u32 %v829, 4294901760
        %4122 = vmatpush1.msra.mxu0 %v4121
        %4123 = vmatprep.subr.mxu0 0.0
        %4124 = vmatpush2.msra.mxu0 0.0
        %4125 = vmatprep.subr.mxu0 0.0
        %4126 = vmatpush2.msra.mxu0 0.0
        %4127 = vmatprep.subr.mxu0 0.0
        %4128 = vmatpush2.msra.mxu0 0.0
        %4129 = vmatprep.subr.mxu0 0.0
        %4130 = vmatpush2.msra.mxu0 0.0
        %4131 = vmatprep.subr.mxu0 0.0
        %4132 = vmatpush2.msra.mxu0 0.0
        %4133 = vmatprep.subr.mxu0 0.0
        %4134 = vmatpush2.msra.mxu0 0.0
        %4135 = vmatprep.subr.mxu0 0.0
        %4136 = vmatpush2.msra.mxu0 0.0
        %4137 = vmatprep.subr.mxu0 0.0
        %4138 = vmatpush2.msra.mxu0 0.0
        %4139 = vmatprep.subr.mxu0 0.0
        %4140 = vmatpush2.msra.mxu0 0.0
        %4141 = vmatprep.subr.mxu0 0.0
        %4142 = vmatpush2.msra.mxu0 0.0
        %4143 = vmatprep.subr.mxu0 0.0
        %4144 = vmatpush2.msra.mxu0 0.0
        %4145 = vmatprep.subr.mxu0 0.0
        %4146 = vmatpush2.msra.mxu0 0.0
        %4147 = vmatprep.subr.mxu0 0.0
        %4148 = vmatpush2.msra.mxu0 0.0
        %4149 = vmatprep.subr.mxu0 0.0
        %4150 = vmatpush2.msra.mxu0 0.0
        %4151 = vmatprep.subr.mxu0 0.0
        %4152 = vmatpush2.msra.mxu0 0.0
        %4153 = vmatprep.subr.mxu0 0.0
        %4154 = vmatpush2.msra.mxu0 0.0
        %4155 = vmatprep.mubr.f32.mxu0 0.0
        %v4156 = vand.u32 %v3696, 4294901760
        %4157 = vmatmul.mubr.f32.gmra.mxu0 %v4156
        %v4158 = vpop.f32.mrf.mxu0
        %v4159 = vadd.f32 %v4085, %v4158
        %v4160 = vpop.f32.mrf.mxu0
        %v4161 = vadd.f32 %v4087, %v4160
        %4162 = vdwg.mxu0
        %v4163 = vmax.f32 %v4159, 0.0
        %v4164 = vmax.f32 %v4161, 0.0
        %4165 = vmatprep.subr.mxu0 0.0
        %4166 = vmatpush1.msra.mxu0 0.0
        %4167 = vmatprep.subr.mxu0 0.0
        %4168 = vmatpush1.msra.mxu0 0.0
        %4169 = vmatprep.subr.mxu0 0.0
        %4170 = vmatpush1.msra.mxu0 0.0
        %4171 = vmatprep.subr.mxu0 0.0
        %4172 = vmatpush1.msra.mxu0 0.0
        %4173 = vmatprep.subr.mxu0 0.0
        %4174 = vmatpush1.msra.mxu0 0.0
        %4175 = vmatprep.subr.mxu0 0.0
        %4176 = vmatpush1.msra.mxu0 0.0
        %4177 = vmatprep.subr.mxu0 0.0
        %4178 = vmatpush1.msra.mxu0 0.0
        %4179 = vmatprep.subr.mxu0 0.0
        %4180 = vmatpush1.msra.mxu0 0.0
        %4181 = vmatprep.subr.mxu0 0.0
        %4182 = vmatpush1.msra.mxu0 0.0
        %4183 = vmatprep.subr.mxu0 0.0
        %4184 = vmatpush1.msra.mxu0 0.0
        %4185 = vmatprep.subr.mxu0 0.0
        %4186 = vmatpush1.msra.mxu0 0.0
        %4187 = vmatprep.subr.mxu0 0.0
        %4188 = vmatpush1.msra.mxu0 0.0
        %4189 = vmatprep.subr.mxu0 0.0
        %4190 = vmatpush1.msra.mxu0 0.0
        %4191 = vmatprep.subr.mxu0 0.0
        %4192 = vmatpush1.msra.mxu0 0.0
        %4193 = vmatprep.subr.mxu0 0.0
        %4194 = vmatpush1.msra.mxu0 0.0
        %v4195 = vand.u32 %v4164, 4294901760
        %4196 = vmatprep.subr.mxu0 %v4195
        %v4197 = vand.u32 %v4163, 4294901760
        %4198 = vmatpush1.msra.mxu0 %v4197
        %4199 = vmatprep.subr.mxu0 0.0
        %4200 = vmatpush2.msra.mxu0 0.0
        %4201 = vmatprep.subr.mxu0 0.0
        %4202 = vmatpush2.msra.mxu0 0.0
        %4203 = vmatprep.subr.mxu0 0.0
        %4204 = vmatpush2.msra.mxu0 0.0
        %4205 = vmatprep.subr.mxu0 0.0
        %4206 = vmatpush2.msra.mxu0 0.0
        %4207 = vmatprep.subr.mxu0 0.0
        %4208 = vmatpush2.msra.mxu0 0.0
        %4209 = vmatprep.subr.mxu0 0.0
        %4210 = vmatpush2.msra.mxu0 0.0
        %4211 = vmatprep.subr.mxu0 0.0
        %4212 = vmatpush2.msra.mxu0 0.0
        %4213 = vmatprep.subr.mxu0 0.0
        %4214 = vmatpush2.msra.mxu0 0.0
        %4215 = vmatprep.subr.mxu0 0.0
        %4216 = vmatpush2.msra.mxu0 0.0
        %4217 = vmatprep.subr.mxu0 0.0
        %4218 = vmatpush2.msra.mxu0 0.0
        %4219 = vmatprep.subr.mxu0 0.0
        %4220 = vmatpush2.msra.mxu0 0.0
        %4221 = vmatprep.subr.mxu0 0.0
        %4222 = vmatpush2.msra.mxu0 0.0
        %4223 = vmatprep.subr.mxu0 0.0
        %4224 = vmatpush2.msra.mxu0 0.0
        %4225 = vmatprep.subr.mxu0 0.0
        %4226 = vmatpush2.msra.mxu0 0.0
        %4227 = vmatprep.subr.mxu0 0.0
        %4228 = vmatpush2.msra.mxu0 0.0
        %4229 = vmatprep.subr.mxu0 0.0
        %4230 = vmatpush2.msra.mxu0 0.0
        %4231 = vmatprep.mubr.f32.mxu0 0.0
        %v4232 = vand.u32 %v1317, 4294901760
        %v4233 = vsub.f32 %v1317, %v4232
        %v4234 = vand.u32 %v4233, 4294901760
        %v4235 = vsub.f32 %v4233, %v4234
        %v4236 = vand.u32 %v4235, 4294901760
        %4237 = vmatmul.mubr.f32.gmra.mxu0 %v4236
        %v4238 = vpop.f32.mrf.mxu0
        %v4239 = vadd.f32 %v1314, %v4238
        %v4240 = vpop.f32.mrf.mxu0
        %v4241 = vadd.f32 %v1314, %v4240
        %4242 = vdwg.mxu0
        %4243 = vmatprep.subr.mxu0 0.0
        %4244 = vmatpush1.msra.mxu0 0.0
        %4245 = vmatprep.subr.mxu0 0.0
        %4246 = vmatpush1.msra.mxu0 0.0
        %4247 = vmatprep.subr.mxu0 0.0
        %4248 = vmatpush1.msra.mxu0 0.0
        %4249 = vmatprep.subr.mxu0 0.0
        %4250 = vmatpush1.msra.mxu0 0.0
        %4251 = vmatprep.subr.mxu0 0.0
        %4252 = vmatpush1.msra.mxu0 0.0
        %4253 = vmatprep.subr.mxu0 0.0
        %4254 = vmatpush1.msra.mxu0 0.0
        %4255 = vmatprep.subr.mxu0 0.0
        %4256 = vmatpush1.msra.mxu0 0.0
        %4257 = vmatprep.subr.mxu0 0.0
        %4258 = vmatpush1.msra.mxu0 0.0
        %4259 = vmatprep.subr.mxu0 0.0
        %4260 = vmatpush1.msra.mxu0 0.0
        %4261 = vmatprep.subr.mxu0 0.0
        %4262 = vmatpush1.msra.mxu0 0.0
        %4263 = vmatprep.subr.mxu0 0.0
        %4264 = vmatpush1.msra.mxu0 0.0
        %4265 = vmatprep.subr.mxu0 0.0
        %4266 = vmatpush1.msra.mxu0 0.0
        %4267 = vmatprep.subr.mxu0 0.0
        %4268 = vmatpush1.msra.mxu0 0.0
        %4269 = vmatprep.subr.mxu0 0.0
        %4270 = vmatpush1.msra.mxu0 0.0
        %4271 = vmatprep.subr.mxu0 0.0
        %4272 = vmatpush1.msra.mxu0 0.0
        %v4273 = vand.u32 %v4164, 4294901760
        %v4274 = vsub.f32 %v4164, %v4273
        %v4275 = vand.u32 %v4274, 4294901760
        %v4276 = vsub.f32 %v4274, %v4275
        %v4277 = vand.u32 %v4276, 4294901760
        %4278 = vmatprep.subr.mxu0 %v4277
        %v4279 = vand.u32 %v4163, 4294901760
        %v4280 = vsub.f32 %v4163, %v4279
        %v4281 = vand.u32 %v4280, 4294901760
        %v4282 = vsub.f32 %v4280, %v4281
        %v4283 = vand.u32 %v4282, 4294901760
        %4284 = vmatpush1.msra.mxu0 %v4283
        %4285 = vmatprep.subr.mxu0 0.0
        %4286 = vmatpush2.msra.mxu0 0.0
        %4287 = vmatprep.subr.mxu0 0.0
        %4288 = vmatpush2.msra.mxu0 0.0
        %4289 = vmatprep.subr.mxu0 0.0
        %4290 = vmatpush2.msra.mxu0 0.0
        %4291 = vmatprep.subr.mxu0 0.0
        %4292 = vmatpush2.msra.mxu0 0.0
        %4293 = vmatprep.subr.mxu0 0.0
        %4294 = vmatpush2.msra.mxu0 0.0
        %4295 = vmatprep.subr.mxu0 0.0
        %4296 = vmatpush2.msra.mxu0 0.0
        %4297 = vmatprep.subr.mxu0 0.0
        %4298 = vmatpush2.msra.mxu0 0.0
        %4299 = vmatprep.subr.mxu0 0.0
        %4300 = vmatpush2.msra.mxu0 0.0
        %4301 = vmatprep.subr.mxu0 0.0
        %4302 = vmatpush2.msra.mxu0 0.0
        %4303 = vmatprep.subr.mxu0 0.0
        %4304 = vmatpush2.msra.mxu0 0.0
        %4305 = vmatprep.subr.mxu0 0.0
        %4306 = vmatpush2.msra.mxu0 0.0
        %4307 = vmatprep.subr.mxu0 0.0
        %4308 = vmatpush2.msra.mxu0 0.0
        %4309 = vmatprep.subr.mxu0 0.0
        %4310 = vmatpush2.msra.mxu0 0.0
        %4311 = vmatprep.subr.mxu0 0.0
        %4312 = vmatpush2.msra.mxu0 0.0
        %4313 = vmatprep.subr.mxu0 0.0
        %4314 = vmatpush2.msra.mxu0 0.0
        %4315 = vmatprep.subr.mxu0 0.0
        %4316 = vmatpush2.msra.mxu0 0.0
        %4317 = vmatprep.mubr.f32.mxu0 0.0
        %v4318 = vand.u32 %v1317, 4294901760
        %4319 = vmatmul.mubr.f32.gmra.mxu0 %v4318
        %v4320 = vpop.f32.mrf.mxu0
        %v4321 = vadd.f32 %v4239, %v4320
        %v4322 = vpop.f32.mrf.mxu0
        %v4323 = vadd.f32 %v4241, %v4322
        %4324 = vdwg.mxu0
        %4325 = vmatprep.subr.mxu0 0.0
        %4326 = vmatpush1.msra.mxu0 0.0
        %4327 = vmatprep.subr.mxu0 0.0
        %4328 = vmatpush1.msra.mxu0 0.0
        %4329 = vmatprep.subr.mxu0 0.0
        %4330 = vmatpush1.msra.mxu0 0.0
        %4331 = vmatprep.subr.mxu0 0.0
        %4332 = vmatpush1.msra.mxu0 0.0
        %4333 = vmatprep.subr.mxu0 0.0
        %4334 = vmatpush1.msra.mxu0 0.0
        %4335 = vmatprep.subr.mxu0 0.0
        %4336 = vmatpush1.msra.mxu0 0.0
        %4337 = vmatprep.subr.mxu0 0.0
        %4338 = vmatpush1.msra.mxu0 0.0
        %4339 = vmatprep.subr.mxu0 0.0
        %4340 = vmatpush1.msra.mxu0 0.0
        %4341 = vmatprep.subr.mxu0 0.0
        %4342 = vmatpush1.msra.mxu0 0.0
        %4343 = vmatprep.subr.mxu0 0.0
        %4344 = vmatpush1.msra.mxu0 0.0
        %4345 = vmatprep.subr.mxu0 0.0
        %4346 = vmatpush1.msra.mxu0 0.0
        %4347 = vmatprep.subr.mxu0 0.0
        %4348 = vmatpush1.msra.mxu0 0.0
        %4349 = vmatprep.subr.mxu0 0.0
        %4350 = vmatpush1.msra.mxu0 0.0
        %4351 = vmatprep.subr.mxu0 0.0
        %4352 = vmatpush1.msra.mxu0 0.0
        %4353 = vmatprep.subr.mxu0 0.0
        %4354 = vmatpush1.msra.mxu0 0.0
        %v4355 = vand.u32 %v4164, 4294901760
        %v4356 = vsub.f32 %v4164, %v4355
        %4357 = vmatprep.subr.mxu0 %v4356
        %v4358 = vand.u32 %v4163, 4294901760
        %v4359 = vsub.f32 %v4163, %v4358
        %4360 = vmatpush1.msra.mxu0 %v4359
        %4361 = vmatprep.subr.mxu0 0.0
        %4362 = vmatpush2.msra.mxu0 0.0
        %4363 = vmatprep.subr.mxu0 0.0
        %4364 = vmatpush2.msra.mxu0 0.0
        %4365 = vmatprep.subr.mxu0 0.0
        %4366 = vmatpush2.msra.mxu0 0.0
        %4367 = vmatprep.subr.mxu0 0.0
        %4368 = vmatpush2.msra.mxu0 0.0
        %4369 = vmatprep.subr.mxu0 0.0
        %4370 = vmatpush2.msra.mxu0 0.0
        %4371 = vmatprep.subr.mxu0 0.0
        %4372 = vmatpush2.msra.mxu0 0.0
        %4373 = vmatprep.subr.mxu0 0.0
        %4374 = vmatpush2.msra.mxu0 0.0
        %4375 = vmatprep.subr.mxu0 0.0
        %4376 = vmatpush2.msra.mxu0 0.0
        %4377 = vmatprep.subr.mxu0 0.0
        %4378 = vmatpush2.msra.mxu0 0.0
        %4379 = vmatprep.subr.mxu0 0.0
        %4380 = vmatpush2.msra.mxu0 0.0
        %4381 = vmatprep.subr.mxu0 0.0
        %4382 = vmatpush2.msra.mxu0 0.0
        %4383 = vmatprep.subr.mxu0 0.0
        %4384 = vmatpush2.msra.mxu0 0.0
        %4385 = vmatprep.subr.mxu0 0.0
        %4386 = vmatpush2.msra.mxu0 0.0
        %4387 = vmatprep.subr.mxu0 0.0
        %4388 = vmatpush2.msra.mxu0 0.0
        %4389 = vmatprep.subr.mxu0 0.0
        %4390 = vmatpush2.msra.mxu0 0.0
        %4391 = vmatprep.subr.mxu0 0.0
        %4392 = vmatpush2.msra.mxu0 0.0
        %4393 = vmatprep.mubr.f32.mxu0 0.0
        %v4394 = vand.u32 %v1317, 4294901760
        %v4395 = vsub.f32 %v1317, %v4394
        %4396 = vmatmul.mubr.f32.gmra.mxu0 %v4395
        %v4397 = vpop.f32.mrf.mxu0
        %v4398 = vadd.f32 %v4321, %v4397
        %v4399 = vpop.f32.mrf.mxu0
        %v4400 = vadd.f32 %v4323, %v4399
        %4401 = vdwg.mxu0
        %4402 = vmatprep.subr.mxu0 0.0
        %4403 = vmatpush1.msra.mxu0 0.0
        %4404 = vmatprep.subr.mxu0 0.0
        %4405 = vmatpush1.msra.mxu0 0.0
        %4406 = vmatprep.subr.mxu0 0.0
        %4407 = vmatpush1.msra.mxu0 0.0
        %4408 = vmatprep.subr.mxu0 0.0
        %4409 = vmatpush1.msra.mxu0 0.0
        %4410 = vmatprep.subr.mxu0 0.0
        %4411 = vmatpush1.msra.mxu0 0.0
        %4412 = vmatprep.subr.mxu0 0.0
        %4413 = vmatpush1.msra.mxu0 0.0
        %4414 = vmatprep.subr.mxu0 0.0
        %4415 = vmatpush1.msra.mxu0 0.0
        %4416 = vmatprep.subr.mxu0 0.0
        %4417 = vmatpush1.msra.mxu0 0.0
        %4418 = vmatprep.subr.mxu0 0.0
        %4419 = vmatpush1.msra.mxu0 0.0
        %4420 = vmatprep.subr.mxu0 0.0
        %4421 = vmatpush1.msra.mxu0 0.0
        %4422 = vmatprep.subr.mxu0 0.0
        %4423 = vmatpush1.msra.mxu0 0.0
        %4424 = vmatprep.subr.mxu0 0.0
        %4425 = vmatpush1.msra.mxu0 0.0
        %4426 = vmatprep.subr.mxu0 0.0
        %4427 = vmatpush1.msra.mxu0 0.0
        %4428 = vmatprep.subr.mxu0 0.0
        %4429 = vmatpush1.msra.mxu0 0.0
        %4430 = vmatprep.subr.mxu0 0.0
        %4431 = vmatpush1.msra.mxu0 0.0
        %v4432 = vand.u32 %v4164, 4294901760
        %4433 = vmatprep.subr.mxu0 %v4432
        %v4434 = vand.u32 %v4163, 4294901760
        %4435 = vmatpush1.msra.mxu0 %v4434
        %4436 = vmatprep.subr.mxu0 0.0
        %4437 = vmatpush2.msra.mxu0 0.0
        %4438 = vmatprep.subr.mxu0 0.0
        %4439 = vmatpush2.msra.mxu0 0.0
        %4440 = vmatprep.subr.mxu0 0.0
        %4441 = vmatpush2.msra.mxu0 0.0
        %4442 = vmatprep.subr.mxu0 0.0
        %4443 = vmatpush2.msra.mxu0 0.0
        %4444 = vmatprep.subr.mxu0 0.0
        %4445 = vmatpush2.msra.mxu0 0.0
        %4446 = vmatprep.subr.mxu0 0.0
        %4447 = vmatpush2.msra.mxu0 0.0
        %4448 = vmatprep.subr.mxu0 0.0
        %4449 = vmatpush2.msra.mxu0 0.0
        %4450 = vmatprep.subr.mxu0 0.0
        %4451 = vmatpush2.msra.mxu0 0.0
        %4452 = vmatprep.subr.mxu0 0.0
        %4453 = vmatpush2.msra.mxu0 0.0
        %4454 = vmatprep.subr.mxu0 0.0
        %4455 = vmatpush2.msra.mxu0 0.0
        %4456 = vmatprep.subr.mxu0 0.0
        %4457 = vmatpush2.msra.mxu0 0.0
        %4458 = vmatprep.subr.mxu0 0.0
        %4459 = vmatpush2.msra.mxu0 0.0
        %4460 = vmatprep.subr.mxu0 0.0
        %4461 = vmatpush2.msra.mxu0 0.0
        %4462 = vmatprep.subr.mxu0 0.0
        %4463 = vmatpush2.msra.mxu0 0.0
        %4464 = vmatprep.subr.mxu0 0.0
        %4465 = vmatpush2.msra.mxu0 0.0
        %4466 = vmatprep.subr.mxu0 0.0
        %4467 = vmatpush2.msra.mxu0 0.0
        %4468 = vmatprep.mubr.f32.mxu0 0.0
        %v4469 = vand.u32 %v1317, 4294901760
        %v4470 = vsub.f32 %v1317, %v4469
        %v4471 = vand.u32 %v4470, 4294901760
        %4472 = vmatmul.mubr.f32.gmra.mxu0 %v4471
        %v4473 = vpop.f32.mrf.mxu0
        %v4474 = vadd.f32 %v4398, %v4473
        %v4475 = vpop.f32.mrf.mxu0
        %v4476 = vadd.f32 %v4400, %v4475
        %4477 = vdwg.mxu0
        %4478 = vmatprep.subr.mxu0 0.0
        %4479 = vmatpush1.msra.mxu0 0.0
        %4480 = vmatprep.subr.mxu0 0.0
        %4481 = vmatpush1.msra.mxu0 0.0
        %4482 = vmatprep.subr.mxu0 0.0
        %4483 = vmatpush1.msra.mxu0 0.0
        %4484 = vmatprep.subr.mxu0 0.0
        %4485 = vmatpush1.msra.mxu0 0.0
        %4486 = vmatprep.subr.mxu0 0.0
        %4487 = vmatpush1.msra.mxu0 0.0
        %4488 = vmatprep.subr.mxu0 0.0
        %4489 = vmatpush1.msra.mxu0 0.0
        %4490 = vmatprep.subr.mxu0 0.0
        %4491 = vmatpush1.msra.mxu0 0.0
        %4492 = vmatprep.subr.mxu0 0.0
        %4493 = vmatpush1.msra.mxu0 0.0
        %4494 = vmatprep.subr.mxu0 0.0
        %4495 = vmatpush1.msra.mxu0 0.0
        %4496 = vmatprep.subr.mxu0 0.0
        %4497 = vmatpush1.msra.mxu0 0.0
        %4498 = vmatprep.subr.mxu0 0.0
        %4499 = vmatpush1.msra.mxu0 0.0
        %4500 = vmatprep.subr.mxu0 0.0
        %4501 = vmatpush1.msra.mxu0 0.0
        %4502 = vmatprep.subr.mxu0 0.0
        %4503 = vmatpush1.msra.mxu0 0.0
        %4504 = vmatprep.subr.mxu0 0.0
        %4505 = vmatpush1.msra.mxu0 0.0
        %4506 = vmatprep.subr.mxu0 0.0
        %4507 = vmatpush1.msra.mxu0 0.0
        %v4508 = vand.u32 %v4164, 4294901760
        %v4509 = vsub.f32 %v4164, %v4508
        %v4510 = vand.u32 %v4509, 4294901760
        %4511 = vmatprep.subr.mxu0 %v4510
        %v4512 = vand.u32 %v4163, 4294901760
        %v4513 = vsub.f32 %v4163, %v4512
        %v4514 = vand.u32 %v4513, 4294901760
        %4515 = vmatpush1.msra.mxu0 %v4514
        %4516 = vmatprep.subr.mxu0 0.0
        %4517 = vmatpush2.msra.mxu0 0.0
        %4518 = vmatprep.subr.mxu0 0.0
        %4519 = vmatpush2.msra.mxu0 0.0
        %4520 = vmatprep.subr.mxu0 0.0
        %4521 = vmatpush2.msra.mxu0 0.0
        %4522 = vmatprep.subr.mxu0 0.0
        %4523 = vmatpush2.msra.mxu0 0.0
        %4524 = vmatprep.subr.mxu0 0.0
        %4525 = vmatpush2.msra.mxu0 0.0
        %4526 = vmatprep.subr.mxu0 0.0
        %4527 = vmatpush2.msra.mxu0 0.0
        %4528 = vmatprep.subr.mxu0 0.0
        %4529 = vmatpush2.msra.mxu0 0.0
        %4530 = vmatprep.subr.mxu0 0.0
        %4531 = vmatpush2.msra.mxu0 0.0
        %4532 = vmatprep.subr.mxu0 0.0
        %4533 = vmatpush2.msra.mxu0 0.0
        %4534 = vmatprep.subr.mxu0 0.0
        %4535 = vmatpush2.msra.mxu0 0.0
        %4536 = vmatprep.subr.mxu0 0.0
        %4537 = vmatpush2.msra.mxu0 0.0
        %4538 = vmatprep.subr.mxu0 0.0
        %4539 = vmatpush2.msra.mxu0 0.0
        %4540 = vmatprep.subr.mxu0 0.0
        %4541 = vmatpush2.msra.mxu0 0.0
        %4542 = vmatprep.subr.mxu0 0.0
        %4543 = vmatpush2.msra.mxu0 0.0
        %4544 = vmatprep.subr.mxu0 0.0
        %4545 = vmatpush2.msra.mxu0 0.0
        %4546 = vmatprep.subr.mxu0 0.0
        %4547 = vmatpush2.msra.mxu0 0.0
        %4548 = vmatprep.mubr.f32.mxu0 0.0
        %v4549 = vand.u32 %v1317, 4294901760
        %4550 = vmatmul.mubr.f32.gmra.mxu0 %v4549
        %v4551 = vpop.f32.mrf.mxu0
        %v4552 = vadd.f32 %v4474, %v4551
        %v4553 = vpop.f32.mrf.mxu0
        %v4554 = vadd.f32 %v4476, %v4553
        %4555 = vdwg.mxu0
        %4556 = vmatprep.subr.mxu0 0.0
        %4557 = vmatpush1.msra.mxu0 0.0
        %4558 = vmatprep.subr.mxu0 0.0
        %4559 = vmatpush1.msra.mxu0 0.0
        %4560 = vmatprep.subr.mxu0 0.0
        %4561 = vmatpush1.msra.mxu0 0.0
        %4562 = vmatprep.subr.mxu0 0.0
        %4563 = vmatpush1.msra.mxu0 0.0
        %4564 = vmatprep.subr.mxu0 0.0
        %4565 = vmatpush1.msra.mxu0 0.0
        %4566 = vmatprep.subr.mxu0 0.0
        %4567 = vmatpush1.msra.mxu0 0.0
        %4568 = vmatprep.subr.mxu0 0.0
        %4569 = vmatpush1.msra.mxu0 0.0
        %4570 = vmatprep.subr.mxu0 0.0
        %4571 = vmatpush1.msra.mxu0 0.0
        %4572 = vmatprep.subr.mxu0 0.0
        %4573 = vmatpush1.msra.mxu0 0.0
        %4574 = vmatprep.subr.mxu0 0.0
        %4575 = vmatpush1.msra.mxu0 0.0
        %4576 = vmatprep.subr.mxu0 0.0
        %4577 = vmatpush1.msra.mxu0 0.0
        %4578 = vmatprep.subr.mxu0 0.0
        %4579 = vmatpush1.msra.mxu0 0.0
        %4580 = vmatprep.subr.mxu0 0.0
        %4581 = vmatpush1.msra.mxu0 0.0
        %4582 = vmatprep.subr.mxu0 0.0
        %4583 = vmatpush1.msra.mxu0 0.0
        %4584 = vmatprep.subr.mxu0 0.0
        %4585 = vmatpush1.msra.mxu0 0.0
        %v4586 = vand.u32 %v4164, 4294901760
        %4587 = vmatprep.subr.mxu0 %v4586
        %v4588 = vand.u32 %v4163, 4294901760
        %4589 = vmatpush1.msra.mxu0 %v4588
        %4590 = vmatprep.subr.mxu0 0.0
        %4591 = vmatpush2.msra.mxu0 0.0
        %4592 = vmatprep.subr.mxu0 0.0
        %4593 = vmatpush2.msra.mxu0 0.0
        %4594 = vmatprep.subr.mxu0 0.0
        %4595 = vmatpush2.msra.mxu0 0.0
        %4596 = vmatprep.subr.mxu0 0.0
        %4597 = vmatpush2.msra.mxu0 0.0
        %4598 = vmatprep.subr.mxu0 0.0
        %4599 = vmatpush2.msra.mxu0 0.0
        %4600 = vmatprep.subr.mxu0 0.0
        %4601 = vmatpush2.msra.mxu0 0.0
        %4602 = vmatprep.subr.mxu0 0.0
        %4603 = vmatpush2.msra.mxu0 0.0
        %4604 = vmatprep.subr.mxu0 0.0
        %4605 = vmatpush2.msra.mxu0 0.0
        %4606 = vmatprep.subr.mxu0 0.0
        %4607 = vmatpush2.msra.mxu0 0.0
        %4608 = vmatprep.subr.mxu0 0.0
        %4609 = vmatpush2.msra.mxu0 0.0
        %4610 = vmatprep.subr.mxu0 0.0
        %4611 = vmatpush2.msra.mxu0 0.0
        %4612 = vmatprep.subr.mxu0 0.0
        %4613 = vmatpush2.msra.mxu0 0.0
        %4614 = vmatprep.subr.mxu0 0.0
        %4615 = vmatpush2.msra.mxu0 0.0
        %4616 = vmatprep.subr.mxu0 0.0
        %4617 = vmatpush2.msra.mxu0 0.0
        %4618 = vmatprep.subr.mxu0 0.0
        %4619 = vmatpush2.msra.mxu0 0.0
        %4620 = vmatprep.subr.mxu0 0.0
        %4621 = vmatpush2.msra.mxu0 0.0
        %4622 = vmatprep.mubr.f32.mxu0 0.0
        %v4623 = vand.u32 %v1317, 4294901760
        %4624 = vmatmul.mubr.f32.gmra.mxu0 %v4623
        %v4625 = vpop.f32.mrf.mxu0
        %v4626 = vadd.f32 %v4552, %v4625
        %v4627 = vpop.f32.mrf.mxu0
        %v4628 = vadd.f32 %v4554, %v4627
        %4629 = vdwg.mxu0
        %v4630 = vmax.f32 %v4626, 0.0
        %v4631 = vmax.f32 %v4628, 0.0
        %s4632 = scalar_lea.vmem %s311, 48 [#allocation5]
        %4633 = vst [vmem:[%s4632] sm:$0xff] %v4630
        %4634 = vst [vmem:[%s4632 + $0x8] sm:$0xff] %v4631
        %s4635 = scalar_lea.vmem [#allocation2], 32
        %v4636 = vld [vmem:[%s4635] sm:$0xff]
        %s4637 = scalar_lea.vmem %s4, 32
        %v4638 = vld [vmem:[%s4637] sm:$0xff]
        %4640 = vset.pattern.permute.xlu0 0
        %4641 = vperm.xlu0 %4640, %v4638
        %v4642 = vpop.permute.xlu0 %4641
        %v4645 = vsel %vm840, %v4636, 0
        %4647 = vmatprep.subr.mxu0 0.0
        %4648 = vmatpush1.msra.mxu0 0.0
        %4649 = vmatprep.subr.mxu0 0.0
        %4650 = vmatpush1.msra.mxu0 0.0
        %4651 = vmatprep.subr.mxu0 0.0
        %4652 = vmatpush1.msra.mxu0 0.0
        %4653 = vmatprep.subr.mxu0 0.0
        %4654 = vmatpush1.msra.mxu0 0.0
        %4655 = vmatprep.subr.mxu0 0.0
        %4656 = vmatpush1.msra.mxu0 0.0
        %4657 = vmatprep.subr.mxu0 0.0
        %4658 = vmatpush1.msra.mxu0 0.0
        %4659 = vmatprep.subr.mxu0 0.0
        %4660 = vmatpush1.msra.mxu0 0.0
        %4661 = vmatprep.subr.mxu0 0.0
        %4662 = vmatpush1.msra.mxu0 0.0
        %4663 = vmatprep.subr.mxu0 0.0
        %4664 = vmatpush1.msra.mxu0 0.0
        %4665 = vmatprep.subr.mxu0 0.0
        %4666 = vmatpush1.msra.mxu0 0.0
        %4667 = vmatprep.subr.mxu0 0.0
        %4668 = vmatpush1.msra.mxu0 0.0
        %4669 = vmatprep.subr.mxu0 0.0
        %4670 = vmatpush1.msra.mxu0 0.0
        %4671 = vmatprep.subr.mxu0 0.0
        %4672 = vmatpush1.msra.mxu0 0.0
        %4673 = vmatprep.subr.mxu0 0.0
        %4674 = vmatpush1.msra.mxu0 0.0
        %4675 = vmatprep.subr.mxu0 0.0
        %4676 = vmatpush1.msra.mxu0 0.0
        %v4677 = vand.u32 %v830, 4294901760
        %4678 = vmatprep.subr.mxu0 %v4677
        %v4679 = vand.u32 %v829, 4294901760
        %4680 = vmatpush1.msra.mxu0 %v4679
        %4681 = vmatprep.subr.mxu0 0.0
        %4682 = vmatpush2.msra.mxu0 0.0
        %4683 = vmatprep.subr.mxu0 0.0
        %4684 = vmatpush2.msra.mxu0 0.0
        %4685 = vmatprep.subr.mxu0 0.0
        %4686 = vmatpush2.msra.mxu0 0.0
        %4687 = vmatprep.subr.mxu0 0.0
        %4688 = vmatpush2.msra.mxu0 0.0
        %4689 = vmatprep.subr.mxu0 0.0
        %4690 = vmatpush2.msra.mxu0 0.0
        %4691 = vmatprep.subr.mxu0 0.0
        %4692 = vmatpush2.msra.mxu0 0.0
        %4693 = vmatprep.subr.mxu0 0.0
        %4694 = vmatpush2.msra.mxu0 0.0
        %4695 = vmatprep.subr.mxu0 0.0
        %4696 = vmatpush2.msra.mxu0 0.0
        %4697 = vmatprep.subr.mxu0 0.0
        %4698 = vmatpush2.msra.mxu0 0.0
        %4699 = vmatprep.subr.mxu0 0.0
        %4700 = vmatpush2.msra.mxu0 0.0
        %4701 = vmatprep.subr.mxu0 0.0
        %4702 = vmatpush2.msra.mxu0 0.0
        %4703 = vmatprep.subr.mxu0 0.0
        %4704 = vmatpush2.msra.mxu0 0.0
        %4705 = vmatprep.subr.mxu0 0.0
        %4706 = vmatpush2.msra.mxu0 0.0
        %4707 = vmatprep.subr.mxu0 0.0
        %4708 = vmatpush2.msra.mxu0 0.0
        %4709 = vmatprep.subr.mxu0 0.0
        %4710 = vmatpush2.msra.mxu0 0.0
        %4711 = vmatprep.subr.mxu0 0.0
        %4712 = vmatpush2.msra.mxu0 0.0
        %4713 = vmatprep.mubr.f32.mxu0 0.0
        %v4714 = vand.u32 %v4645, 4294901760
        %v4715 = vsub.f32 %v4645, %v4714
        %v4716 = vand.u32 %v4715, 4294901760
        %v4717 = vsub.f32 %v4715, %v4716
        %v4718 = vand.u32 %v4717, 4294901760
        %4719 = vmatmul.mubr.f32.gmra.mxu0 %v4718
        %v4720 = vpop.f32.mrf.mxu0
        %v4721 = vadd.f32 %v4642, %v4720
        %v4722 = vpop.f32.mrf.mxu0
        %v4723 = vadd.f32 %v4642, %v4722
        %4724 = vdwg.mxu0
        %4725 = vmatprep.subr.mxu0 0.0
        %4726 = vmatpush1.msra.mxu0 0.0
        %4727 = vmatprep.subr.mxu0 0.0
        %4728 = vmatpush1.msra.mxu0 0.0
        %4729 = vmatprep.subr.mxu0 0.0
        %4730 = vmatpush1.msra.mxu0 0.0
        %4731 = vmatprep.subr.mxu0 0.0
        %4732 = vmatpush1.msra.mxu0 0.0
        %4733 = vmatprep.subr.mxu0 0.0
        %4734 = vmatpush1.msra.mxu0 0.0
        %4735 = vmatprep.subr.mxu0 0.0
        %4736 = vmatpush1.msra.mxu0 0.0
        %4737 = vmatprep.subr.mxu0 0.0
        %4738 = vmatpush1.msra.mxu0 0.0
        %4739 = vmatprep.subr.mxu0 0.0
        %4740 = vmatpush1.msra.mxu0 0.0
        %4741 = vmatprep.subr.mxu0 0.0
        %4742 = vmatpush1.msra.mxu0 0.0
        %4743 = vmatprep.subr.mxu0 0.0
        %4744 = vmatpush1.msra.mxu0 0.0
        %4745 = vmatprep.subr.mxu0 0.0
        %4746 = vmatpush1.msra.mxu0 0.0
        %4747 = vmatprep.subr.mxu0 0.0
        %4748 = vmatpush1.msra.mxu0 0.0
        %4749 = vmatprep.subr.mxu0 0.0
        %4750 = vmatpush1.msra.mxu0 0.0
        %4751 = vmatprep.subr.mxu0 0.0
        %4752 = vmatpush1.msra.mxu0 0.0
        %4753 = vmatprep.subr.mxu0 0.0
        %4754 = vmatpush1.msra.mxu0 0.0
        %v4755 = vand.u32 %v830, 4294901760
        %v4756 = vsub.f32 %v830, %v4755
        %v4757 = vand.u32 %v4756, 4294901760
        %v4758 = vsub.f32 %v4756, %v4757
        %v4759 = vand.u32 %v4758, 4294901760
        %4760 = vmatprep.subr.mxu0 %v4759
        %v4761 = vand.u32 %v829, 4294901760
        %v4762 = vsub.f32 %v829, %v4761
        %v4763 = vand.u32 %v4762, 4294901760
        %v4764 = vsub.f32 %v4762, %v4763
        %v4765 = vand.u32 %v4764, 4294901760
        %4766 = vmatpush1.msra.mxu0 %v4765
        %4767 = vmatprep.subr.mxu0 0.0
        %4768 = vmatpush2.msra.mxu0 0.0
        %4769 = vmatprep.subr.mxu0 0.0
        %4770 = vmatpush2.msra.mxu0 0.0
        %4771 = vmatprep.subr.mxu0 0.0
        %4772 = vmatpush2.msra.mxu0 0.0
        %4773 = vmatprep.subr.mxu0 0.0
        %4774 = vmatpush2.msra.mxu0 0.0
        %4775 = vmatprep.subr.mxu0 0.0
        %4776 = vmatpush2.msra.mxu0 0.0
        %4777 = vmatprep.subr.mxu0 0.0
        %4778 = vmatpush2.msra.mxu0 0.0
        %4779 = vmatprep.subr.mxu0 0.0
        %4780 = vmatpush2.msra.mxu0 0.0
        %4781 = vmatprep.subr.mxu0 0.0
        %4782 = vmatpush2.msra.mxu0 0.0
        %4783 = vmatprep.subr.mxu0 0.0
        %4784 = vmatpush2.msra.mxu0 0.0
        %4785 = vmatprep.subr.mxu0 0.0
        %4786 = vmatpush2.msra.mxu0 0.0
        %4787 = vmatprep.subr.mxu0 0.0
        %4788 = vmatpush2.msra.mxu0 0.0
        %4789 = vmatprep.subr.mxu0 0.0
        %4790 = vmatpush2.msra.mxu0 0.0
        %4791 = vmatprep.subr.mxu0 0.0
        %4792 = vmatpush2.msra.mxu0 0.0
        %4793 = vmatprep.subr.mxu0 0.0
        %4794 = vmatpush2.msra.mxu0 0.0
        %4795 = vmatprep.subr.mxu0 0.0
        %4796 = vmatpush2.msra.mxu0 0.0
        %4797 = vmatprep.subr.mxu0 0.0
        %4798 = vmatpush2.msra.mxu0 0.0
        %4799 = vmatprep.mubr.f32.mxu0 0.0
        %v4800 = vand.u32 %v4645, 4294901760
        %4801 = vmatmul.mubr.f32.gmra.mxu0 %v4800
        %v4802 = vpop.f32.mrf.mxu0
        %v4803 = vadd.f32 %v4721, %v4802
        %v4804 = vpop.f32.mrf.mxu0
        %v4805 = vadd.f32 %v4723, %v4804
        %4806 = vdwg.mxu0
        %4807 = vmatprep.subr.mxu0 0.0
        %4808 = vmatpush1.msra.mxu0 0.0
        %4809 = vmatprep.subr.mxu0 0.0
        %4810 = vmatpush1.msra.mxu0 0.0
        %4811 = vmatprep.subr.mxu0 0.0
        %4812 = vmatpush1.msra.mxu0 0.0
        %4813 = vmatprep.subr.mxu0 0.0
        %4814 = vmatpush1.msra.mxu0 0.0
        %4815 = vmatprep.subr.mxu0 0.0
        %4816 = vmatpush1.msra.mxu0 0.0
        %4817 = vmatprep.subr.mxu0 0.0
        %4818 = vmatpush1.msra.mxu0 0.0
        %4819 = vmatprep.subr.mxu0 0.0
        %4820 = vmatpush1.msra.mxu0 0.0
        %4821 = vmatprep.subr.mxu0 0.0
        %4822 = vmatpush1.msra.mxu0 0.0
        %4823 = vmatprep.subr.mxu0 0.0
        %4824 = vmatpush1.msra.mxu0 0.0
        %4825 = vmatprep.subr.mxu0 0.0
        %4826 = vmatpush1.msra.mxu0 0.0
        %4827 = vmatprep.subr.mxu0 0.0
        %4828 = vmatpush1.msra.mxu0 0.0
        %4829 = vmatprep.subr.mxu0 0.0
        %4830 = vmatpush1.msra.mxu0 0.0
        %4831 = vmatprep.subr.mxu0 0.0
        %4832 = vmatpush1.msra.mxu0 0.0
        %4833 = vmatprep.subr.mxu0 0.0
        %4834 = vmatpush1.msra.mxu0 0.0
        %4835 = vmatprep.subr.mxu0 0.0
        %4836 = vmatpush1.msra.mxu0 0.0
        %v4837 = vand.u32 %v830, 4294901760
        %v4838 = vsub.f32 %v830, %v4837
        %4839 = vmatprep.subr.mxu0 %v4838
        %v4840 = vand.u32 %v829, 4294901760
        %v4841 = vsub.f32 %v829, %v4840
        %4842 = vmatpush1.msra.mxu0 %v4841
        %4843 = vmatprep.subr.mxu0 0.0
        %4844 = vmatpush2.msra.mxu0 0.0
        %4845 = vmatprep.subr.mxu0 0.0
        %4846 = vmatpush2.msra.mxu0 0.0
        %4847 = vmatprep.subr.mxu0 0.0
        %4848 = vmatpush2.msra.mxu0 0.0
        %4849 = vmatprep.subr.mxu0 0.0
        %4850 = vmatpush2.msra.mxu0 0.0
        %4851 = vmatprep.subr.mxu0 0.0
        %4852 = vmatpush2.msra.mxu0 0.0
        %4853 = vmatprep.subr.mxu0 0.0
        %4854 = vmatpush2.msra.mxu0 0.0
        %4855 = vmatprep.subr.mxu0 0.0
        %4856 = vmatpush2.msra.mxu0 0.0
        %4857 = vmatprep.subr.mxu0 0.0
        %4858 = vmatpush2.msra.mxu0 0.0
        %4859 = vmatprep.subr.mxu0 0.0
        %4860 = vmatpush2.msra.mxu0 0.0
        %4861 = vmatprep.subr.mxu0 0.0
        %4862 = vmatpush2.msra.mxu0 0.0
        %4863 = vmatprep.subr.mxu0 0.0
        %4864 = vmatpush2.msra.mxu0 0.0
        %4865 = vmatprep.subr.mxu0 0.0
        %4866 = vmatpush2.msra.mxu0 0.0
        %4867 = vmatprep.subr.mxu0 0.0
        %4868 = vmatpush2.msra.mxu0 0.0
        %4869 = vmatprep.subr.mxu0 0.0
        %4870 = vmatpush2.msra.mxu0 0.0
        %4871 = vmatprep.subr.mxu0 0.0
        %4872 = vmatpush2.msra.mxu0 0.0
        %4873 = vmatprep.subr.mxu0 0.0
        %4874 = vmatpush2.msra.mxu0 0.0
        %4875 = vmatprep.mubr.f32.mxu0 0.0
        %v4876 = vand.u32 %v4645, 4294901760
        %v4877 = vsub.f32 %v4645, %v4876
        %4878 = vmatmul.mubr.f32.gmra.mxu0 %v4877
        %v4879 = vpop.f32.mrf.mxu0
        %v4880 = vadd.f32 %v4803, %v4879
        %v4881 = vpop.f32.mrf.mxu0
        %v4882 = vadd.f32 %v4805, %v4881
        %4883 = vdwg.mxu0
        %4884 = vmatprep.subr.mxu0 0.0
        %4885 = vmatpush1.msra.mxu0 0.0
        %4886 = vmatprep.subr.mxu0 0.0
        %4887 = vmatpush1.msra.mxu0 0.0
        %4888 = vmatprep.subr.mxu0 0.0
        %4889 = vmatpush1.msra.mxu0 0.0
        %4890 = vmatprep.subr.mxu0 0.0
        %4891 = vmatpush1.msra.mxu0 0.0
        %4892 = vmatprep.subr.mxu0 0.0
        %4893 = vmatpush1.msra.mxu0 0.0
        %4894 = vmatprep.subr.mxu0 0.0
        %4895 = vmatpush1.msra.mxu0 0.0
        %4896 = vmatprep.subr.mxu0 0.0
        %4897 = vmatpush1.msra.mxu0 0.0
        %4898 = vmatprep.subr.mxu0 0.0
        %4899 = vmatpush1.msra.mxu0 0.0
        %4900 = vmatprep.subr.mxu0 0.0
        %4901 = vmatpush1.msra.mxu0 0.0
        %4902 = vmatprep.subr.mxu0 0.0
        %4903 = vmatpush1.msra.mxu0 0.0
        %4904 = vmatprep.subr.mxu0 0.0
        %4905 = vmatpush1.msra.mxu0 0.0
        %4906 = vmatprep.subr.mxu0 0.0
        %4907 = vmatpush1.msra.mxu0 0.0
        %4908 = vmatprep.subr.mxu0 0.0
        %4909 = vmatpush1.msra.mxu0 0.0
        %4910 = vmatprep.subr.mxu0 0.0
        %4911 = vmatpush1.msra.mxu0 0.0
        %4912 = vmatprep.subr.mxu0 0.0
        %4913 = vmatpush1.msra.mxu0 0.0
        %v4914 = vand.u32 %v830, 4294901760
        %4915 = vmatprep.subr.mxu0 %v4914
        %v4916 = vand.u32 %v829, 4294901760
        %4917 = vmatpush1.msra.mxu0 %v4916
        %4918 = vmatprep.subr.mxu0 0.0
        %4919 = vmatpush2.msra.mxu0 0.0
        %4920 = vmatprep.subr.mxu0 0.0
        %4921 = vmatpush2.msra.mxu0 0.0
        %4922 = vmatprep.subr.mxu0 0.0
        %4923 = vmatpush2.msra.mxu0 0.0
        %4924 = vmatprep.subr.mxu0 0.0
        %4925 = vmatpush2.msra.mxu0 0.0
        %4926 = vmatprep.subr.mxu0 0.0
        %4927 = vmatpush2.msra.mxu0 0.0
        %4928 = vmatprep.subr.mxu0 0.0
        %4929 = vmatpush2.msra.mxu0 0.0
        %4930 = vmatprep.subr.mxu0 0.0
        %4931 = vmatpush2.msra.mxu0 0.0
        %4932 = vmatprep.subr.mxu0 0.0
        %4933 = vmatpush2.msra.mxu0 0.0
        %4934 = vmatprep.subr.mxu0 0.0
        %4935 = vmatpush2.msra.mxu0 0.0
        %4936 = vmatprep.subr.mxu0 0.0
        %4937 = vmatpush2.msra.mxu0 0.0
        %4938 = vmatprep.subr.mxu0 0.0
        %4939 = vmatpush2.msra.mxu0 0.0
        %4940 = vmatprep.subr.mxu0 0.0
        %4941 = vmatpush2.msra.mxu0 0.0
        %4942 = vmatprep.subr.mxu0 0.0
        %4943 = vmatpush2.msra.mxu0 0.0
        %4944 = vmatprep.subr.mxu0 0.0
        %4945 = vmatpush2.msra.mxu0 0.0
        %4946 = vmatprep.subr.mxu0 0.0
        %4947 = vmatpush2.msra.mxu0 0.0
        %4948 = vmatprep.subr.mxu0 0.0
        %4949 = vmatpush2.msra.mxu0 0.0
        %4950 = vmatprep.mubr.f32.mxu0 0.0
        %v4951 = vand.u32 %v4645, 4294901760
        %v4952 = vsub.f32 %v4645, %v4951
        %v4953 = vand.u32 %v4952, 4294901760
        %4954 = vmatmul.mubr.f32.gmra.mxu0 %v4953
        %v4955 = vpop.f32.mrf.mxu0
        %v4956 = vadd.f32 %v4880, %v4955
        %v4957 = vpop.f32.mrf.mxu0
        %v4958 = vadd.f32 %v4882, %v4957
        %4959 = vdwg.mxu0
        %4960 = vmatprep.subr.mxu0 0.0
        %4961 = vmatpush1.msra.mxu0 0.0
        %4962 = vmatprep.subr.mxu0 0.0
        %4963 = vmatpush1.msra.mxu0 0.0
        %4964 = vmatprep.subr.mxu0 0.0
        %4965 = vmatpush1.msra.mxu0 0.0
        %4966 = vmatprep.subr.mxu0 0.0
        %4967 = vmatpush1.msra.mxu0 0.0
        %4968 = vmatprep.subr.mxu0 0.0
        %4969 = vmatpush1.msra.mxu0 0.0
        %4970 = vmatprep.subr.mxu0 0.0
        %4971 = vmatpush1.msra.mxu0 0.0
        %4972 = vmatprep.subr.mxu0 0.0
        %4973 = vmatpush1.msra.mxu0 0.0
        %4974 = vmatprep.subr.mxu0 0.0
        %4975 = vmatpush1.msra.mxu0 0.0
        %4976 = vmatprep.subr.mxu0 0.0
        %4977 = vmatpush1.msra.mxu0 0.0
        %4978 = vmatprep.subr.mxu0 0.0
        %4979 = vmatpush1.msra.mxu0 0.0
        %4980 = vmatprep.subr.mxu0 0.0
        %4981 = vmatpush1.msra.mxu0 0.0
        %4982 = vmatprep.subr.mxu0 0.0
        %4983 = vmatpush1.msra.mxu0 0.0
        %4984 = vmatprep.subr.mxu0 0.0
        %4985 = vmatpush1.msra.mxu0 0.0
        %4986 = vmatprep.subr.mxu0 0.0
        %4987 = vmatpush1.msra.mxu0 0.0
        %4988 = vmatprep.subr.mxu0 0.0
        %4989 = vmatpush1.msra.mxu0 0.0
        %v4990 = vand.u32 %v830, 4294901760
        %v4991 = vsub.f32 %v830, %v4990
        %v4992 = vand.u32 %v4991, 4294901760
        %4993 = vmatprep.subr.mxu0 %v4992
        %v4994 = vand.u32 %v829, 4294901760
        %v4995 = vsub.f32 %v829, %v4994
        %v4996 = vand.u32 %v4995, 4294901760
        %4997 = vmatpush1.msra.mxu0 %v4996
        %4998 = vmatprep.subr.mxu0 0.0
        %4999 = vmatpush2.msra.mxu0 0.0
        %5000 = vmatprep.subr.mxu0 0.0
        %5001 = vmatpush2.msra.mxu0 0.0
        %5002 = vmatprep.subr.mxu0 0.0
        %5003 = vmatpush2.msra.mxu0 0.0
        %5004 = vmatprep.subr.mxu0 0.0
        %5005 = vmatpush2.msra.mxu0 0.0
        %5006 = vmatprep.subr.mxu0 0.0
        %5007 = vmatpush2.msra.mxu0 0.0
        %5008 = vmatprep.subr.mxu0 0.0
        %5009 = vmatpush2.msra.mxu0 0.0
        %5010 = vmatprep.subr.mxu0 0.0
        %5011 = vmatpush2.msra.mxu0 0.0
        %5012 = vmatprep.subr.mxu0 0.0
        %5013 = vmatpush2.msra.mxu0 0.0
        %5014 = vmatprep.subr.mxu0 0.0
        %5015 = vmatpush2.msra.mxu0 0.0
        %5016 = vmatprep.subr.mxu0 0.0
        %5017 = vmatpush2.msra.mxu0 0.0
        %5018 = vmatprep.subr.mxu0 0.0
        %5019 = vmatpush2.msra.mxu0 0.0
        %5020 = vmatprep.subr.mxu0 0.0
        %5021 = vmatpush2.msra.mxu0 0.0
        %5022 = vmatprep.subr.mxu0 0.0
        %5023 = vmatpush2.msra.mxu0 0.0
        %5024 = vmatprep.subr.mxu0 0.0
        %5025 = vmatpush2.msra.mxu0 0.0
        %5026 = vmatprep.subr.mxu0 0.0
        %5027 = vmatpush2.msra.mxu0 0.0
        %5028 = vmatprep.subr.mxu0 0.0
        %5029 = vmatpush2.msra.mxu0 0.0
        %5030 = vmatprep.mubr.f32.mxu0 0.0
        %v5031 = vand.u32 %v4645, 4294901760
        %5032 = vmatmul.mubr.f32.gmra.mxu0 %v5031
        %v5033 = vpop.f32.mrf.mxu0
        %v5034 = vadd.f32 %v4956, %v5033
        %v5035 = vpop.f32.mrf.mxu0
        %v5036 = vadd.f32 %v4958, %v5035
        %5037 = vdwg.mxu0
        %5038 = vmatprep.subr.mxu0 0.0
        %5039 = vmatpush1.msra.mxu0 0.0
        %5040 = vmatprep.subr.mxu0 0.0
        %5041 = vmatpush1.msra.mxu0 0.0
        %5042 = vmatprep.subr.mxu0 0.0
        %5043 = vmatpush1.msra.mxu0 0.0
        %5044 = vmatprep.subr.mxu0 0.0
        %5045 = vmatpush1.msra.mxu0 0.0
        %5046 = vmatprep.subr.mxu0 0.0
        %5047 = vmatpush1.msra.mxu0 0.0
        %5048 = vmatprep.subr.mxu0 0.0
        %5049 = vmatpush1.msra.mxu0 0.0
        %5050 = vmatprep.subr.mxu0 0.0
        %5051 = vmatpush1.msra.mxu0 0.0
        %5052 = vmatprep.subr.mxu0 0.0
        %5053 = vmatpush1.msra.mxu0 0.0
        %5054 = vmatprep.subr.mxu0 0.0
        %5055 = vmatpush1.msra.mxu0 0.0
        %5056 = vmatprep.subr.mxu0 0.0
        %5057 = vmatpush1.msra.mxu0 0.0
        %5058 = vmatprep.subr.mxu0 0.0
        %5059 = vmatpush1.msra.mxu0 0.0
        %5060 = vmatprep.subr.mxu0 0.0
        %5061 = vmatpush1.msra.mxu0 0.0
        %5062 = vmatprep.subr.mxu0 0.0
        %5063 = vmatpush1.msra.mxu0 0.0
        %5064 = vmatprep.subr.mxu0 0.0
        %5065 = vmatpush1.msra.mxu0 0.0
        %5066 = vmatprep.subr.mxu0 0.0
        %5067 = vmatpush1.msra.mxu0 0.0
        %v5068 = vand.u32 %v830, 4294901760
        %5069 = vmatprep.subr.mxu0 %v5068
        %v5070 = vand.u32 %v829, 4294901760
        %5071 = vmatpush1.msra.mxu0 %v5070
        %5072 = vmatprep.subr.mxu0 0.0
        %5073 = vmatpush2.msra.mxu0 0.0
        %5074 = vmatprep.subr.mxu0 0.0
        %5075 = vmatpush2.msra.mxu0 0.0
        %5076 = vmatprep.subr.mxu0 0.0
        %5077 = vmatpush2.msra.mxu0 0.0
        %5078 = vmatprep.subr.mxu0 0.0
        %5079 = vmatpush2.msra.mxu0 0.0
        %5080 = vmatprep.subr.mxu0 0.0
        %5081 = vmatpush2.msra.mxu0 0.0
        %5082 = vmatprep.subr.mxu0 0.0
        %5083 = vmatpush2.msra.mxu0 0.0
        %5084 = vmatprep.subr.mxu0 0.0
        %5085 = vmatpush2.msra.mxu0 0.0
        %5086 = vmatprep.subr.mxu0 0.0
        %5087 = vmatpush2.msra.mxu0 0.0
        %5088 = vmatprep.subr.mxu0 0.0
        %5089 = vmatpush2.msra.mxu0 0.0
        %5090 = vmatprep.subr.mxu0 0.0
        %5091 = vmatpush2.msra.mxu0 0.0
        %5092 = vmatprep.subr.mxu0 0.0
        %5093 = vmatpush2.msra.mxu0 0.0
        %5094 = vmatprep.subr.mxu0 0.0
        %5095 = vmatpush2.msra.mxu0 0.0
        %5096 = vmatprep.subr.mxu0 0.0
        %5097 = vmatpush2.msra.mxu0 0.0
        %5098 = vmatprep.subr.mxu0 0.0
        %5099 = vmatpush2.msra.mxu0 0.0
        %5100 = vmatprep.subr.mxu0 0.0
        %5101 = vmatpush2.msra.mxu0 0.0
        %5102 = vmatprep.subr.mxu0 0.0
        %5103 = vmatpush2.msra.mxu0 0.0
        %5104 = vmatprep.mubr.f32.mxu0 0.0
        %v5105 = vand.u32 %v4645, 4294901760
        %5106 = vmatmul.mubr.f32.gmra.mxu0 %v5105
        %v5107 = vpop.f32.mrf.mxu0
        %v5108 = vadd.f32 %v5034, %v5107
        %v5109 = vpop.f32.mrf.mxu0
        %v5110 = vadd.f32 %v5036, %v5109
        %5111 = vdwg.mxu0
        %v5112 = vmax.f32 %v5108, 0.0
        %v5113 = vmax.f32 %v5110, 0.0
        %5114 = vmatprep.subr.mxu0 0.0
        %5115 = vmatpush1.msra.mxu0 0.0
        %5116 = vmatprep.subr.mxu0 0.0
        %5117 = vmatpush1.msra.mxu0 0.0
        %5118 = vmatprep.subr.mxu0 0.0
        %5119 = vmatpush1.msra.mxu0 0.0
        %5120 = vmatprep.subr.mxu0 0.0
        %5121 = vmatpush1.msra.mxu0 0.0
        %5122 = vmatprep.subr.mxu0 0.0
        %5123 = vmatpush1.msra.mxu0 0.0
        %5124 = vmatprep.subr.mxu0 0.0
        %5125 = vmatpush1.msra.mxu0 0.0
        %5126 = vmatprep.subr.mxu0 0.0
        %5127 = vmatpush1.msra.mxu0 0.0
        %5128 = vmatprep.subr.mxu0 0.0
        %5129 = vmatpush1.msra.mxu0 0.0
        %5130 = vmatprep.subr.mxu0 0.0
        %5131 = vmatpush1.msra.mxu0 0.0
        %5132 = vmatprep.subr.mxu0 0.0
        %5133 = vmatpush1.msra.mxu0 0.0
        %5134 = vmatprep.subr.mxu0 0.0
        %5135 = vmatpush1.msra.mxu0 0.0
        %5136 = vmatprep.subr.mxu0 0.0
        %5137 = vmatpush1.msra.mxu0 0.0
        %5138 = vmatprep.subr.mxu0 0.0
        %5139 = vmatpush1.msra.mxu0 0.0
        %5140 = vmatprep.subr.mxu0 0.0
        %5141 = vmatpush1.msra.mxu0 0.0
        %5142 = vmatprep.subr.mxu0 0.0
        %5143 = vmatpush1.msra.mxu0 0.0
        %v5144 = vand.u32 %v5113, 4294901760
        %5145 = vmatprep.subr.mxu0 %v5144
        %v5146 = vand.u32 %v5112, 4294901760
        %5147 = vmatpush1.msra.mxu0 %v5146
        %5148 = vmatprep.subr.mxu0 0.0
        %5149 = vmatpush2.msra.mxu0 0.0
        %5150 = vmatprep.subr.mxu0 0.0
        %5151 = vmatpush2.msra.mxu0 0.0
        %5152 = vmatprep.subr.mxu0 0.0
        %5153 = vmatpush2.msra.mxu0 0.0
        %5154 = vmatprep.subr.mxu0 0.0
        %5155 = vmatpush2.msra.mxu0 0.0
        %5156 = vmatprep.subr.mxu0 0.0
        %5157 = vmatpush2.msra.mxu0 0.0
        %5158 = vmatprep.subr.mxu0 0.0
        %5159 = vmatpush2.msra.mxu0 0.0
        %5160 = vmatprep.subr.mxu0 0.0
        %5161 = vmatpush2.msra.mxu0 0.0
        %5162 = vmatprep.subr.mxu0 0.0
        %5163 = vmatpush2.msra.mxu0 0.0
        %5164 = vmatprep.subr.mxu0 0.0
        %5165 = vmatpush2.msra.mxu0 0.0
        %5166 = vmatprep.subr.mxu0 0.0
        %5167 = vmatpush2.msra.mxu0 0.0
        %5168 = vmatprep.subr.mxu0 0.0
        %5169 = vmatpush2.msra.mxu0 0.0
        %5170 = vmatprep.subr.mxu0 0.0
        %5171 = vmatpush2.msra.mxu0 0.0
        %5172 = vmatprep.subr.mxu0 0.0
        %5173 = vmatpush2.msra.mxu0 0.0
        %5174 = vmatprep.subr.mxu0 0.0
        %5175 = vmatpush2.msra.mxu0 0.0
        %5176 = vmatprep.subr.mxu0 0.0
        %5177 = vmatpush2.msra.mxu0 0.0
        %5178 = vmatprep.subr.mxu0 0.0
        %5179 = vmatpush2.msra.mxu0 0.0
        %5180 = vmatprep.mubr.f32.mxu0 0.0
        %v5181 = vand.u32 %v1317, 4294901760
        %v5182 = vsub.f32 %v1317, %v5181
        %v5183 = vand.u32 %v5182, 4294901760
        %v5184 = vsub.f32 %v5182, %v5183
        %v5185 = vand.u32 %v5184, 4294901760
        %5186 = vmatmul.mubr.f32.gmra.mxu0 %v5185
        %v5187 = vpop.f32.mrf.mxu0
        %v5188 = vadd.f32 %v1314, %v5187
        %v5189 = vpop.f32.mrf.mxu0
        %v5190 = vadd.f32 %v1314, %v5189
        %5191 = vdwg.mxu0
        %5192 = vmatprep.subr.mxu0 0.0
        %5193 = vmatpush1.msra.mxu0 0.0
        %5194 = vmatprep.subr.mxu0 0.0
        %5195 = vmatpush1.msra.mxu0 0.0
        %5196 = vmatprep.subr.mxu0 0.0
        %5197 = vmatpush1.msra.mxu0 0.0
        %5198 = vmatprep.subr.mxu0 0.0
        %5199 = vmatpush1.msra.mxu0 0.0
        %5200 = vmatprep.subr.mxu0 0.0
        %5201 = vmatpush1.msra.mxu0 0.0
        %5202 = vmatprep.subr.mxu0 0.0
        %5203 = vmatpush1.msra.mxu0 0.0
        %5204 = vmatprep.subr.mxu0 0.0
        %5205 = vmatpush1.msra.mxu0 0.0
        %5206 = vmatprep.subr.mxu0 0.0
        %5207 = vmatpush1.msra.mxu0 0.0
        %5208 = vmatprep.subr.mxu0 0.0
        %5209 = vmatpush1.msra.mxu0 0.0
        %5210 = vmatprep.subr.mxu0 0.0
        %5211 = vmatpush1.msra.mxu0 0.0
        %5212 = vmatprep.subr.mxu0 0.0
        %5213 = vmatpush1.msra.mxu0 0.0
        %5214 = vmatprep.subr.mxu0 0.0
        %5215 = vmatpush1.msra.mxu0 0.0
        %5216 = vmatprep.subr.mxu0 0.0
        %5217 = vmatpush1.msra.mxu0 0.0
        %5218 = vmatprep.subr.mxu0 0.0
        %5219 = vmatpush1.msra.mxu0 0.0
        %5220 = vmatprep.subr.mxu0 0.0
        %5221 = vmatpush1.msra.mxu0 0.0
        %v5222 = vand.u32 %v5113, 4294901760
        %v5223 = vsub.f32 %v5113, %v5222
        %v5224 = vand.u32 %v5223, 4294901760
        %v5225 = vsub.f32 %v5223, %v5224
        %v5226 = vand.u32 %v5225, 4294901760
        %5227 = vmatprep.subr.mxu0 %v5226
        %v5228 = vand.u32 %v5112, 4294901760
        %v5229 = vsub.f32 %v5112, %v5228
        %v5230 = vand.u32 %v5229, 4294901760
        %v5231 = vsub.f32 %v5229, %v5230
        %v5232 = vand.u32 %v5231, 4294901760
        %5233 = vmatpush1.msra.mxu0 %v5232
        %5234 = vmatprep.subr.mxu0 0.0
        %5235 = vmatpush2.msra.mxu0 0.0
        %5236 = vmatprep.subr.mxu0 0.0
        %5237 = vmatpush2.msra.mxu0 0.0
        %5238 = vmatprep.subr.mxu0 0.0
        %5239 = vmatpush2.msra.mxu0 0.0
        %5240 = vmatprep.subr.mxu0 0.0
        %5241 = vmatpush2.msra.mxu0 0.0
        %5242 = vmatprep.subr.mxu0 0.0
        %5243 = vmatpush2.msra.mxu0 0.0
        %5244 = vmatprep.subr.mxu0 0.0
        %5245 = vmatpush2.msra.mxu0 0.0
        %5246 = vmatprep.subr.mxu0 0.0
        %5247 = vmatpush2.msra.mxu0 0.0
        %5248 = vmatprep.subr.mxu0 0.0
        %5249 = vmatpush2.msra.mxu0 0.0
        %5250 = vmatprep.subr.mxu0 0.0
        %5251 = vmatpush2.msra.mxu0 0.0
        %5252 = vmatprep.subr.mxu0 0.0
        %5253 = vmatpush2.msra.mxu0 0.0
        %5254 = vmatprep.subr.mxu0 0.0
        %5255 = vmatpush2.msra.mxu0 0.0
        %5256 = vmatprep.subr.mxu0 0.0
        %5257 = vmatpush2.msra.mxu0 0.0
        %5258 = vmatprep.subr.mxu0 0.0
        %5259 = vmatpush2.msra.mxu0 0.0
        %5260 = vmatprep.subr.mxu0 0.0
        %5261 = vmatpush2.msra.mxu0 0.0
        %5262 = vmatprep.subr.mxu0 0.0
        %5263 = vmatpush2.msra.mxu0 0.0
        %5264 = vmatprep.subr.mxu0 0.0
        %5265 = vmatpush2.msra.mxu0 0.0
        %5266 = vmatprep.mubr.f32.mxu0 0.0
        %v5267 = vand.u32 %v1317, 4294901760
        %5268 = vmatmul.mubr.f32.gmra.mxu0 %v5267
        %v5269 = vpop.f32.mrf.mxu0
        %v5270 = vadd.f32 %v5188, %v5269
        %v5271 = vpop.f32.mrf.mxu0
        %v5272 = vadd.f32 %v5190, %v5271
        %5273 = vdwg.mxu0
        %5274 = vmatprep.subr.mxu0 0.0
        %5275 = vmatpush1.msra.mxu0 0.0
        %5276 = vmatprep.subr.mxu0 0.0
        %5277 = vmatpush1.msra.mxu0 0.0
        %5278 = vmatprep.subr.mxu0 0.0
        %5279 = vmatpush1.msra.mxu0 0.0
        %5280 = vmatprep.subr.mxu0 0.0
        %5281 = vmatpush1.msra.mxu0 0.0
        %5282 = vmatprep.subr.mxu0 0.0
        %5283 = vmatpush1.msra.mxu0 0.0
        %5284 = vmatprep.subr.mxu0 0.0
        %5285 = vmatpush1.msra.mxu0 0.0
        %5286 = vmatprep.subr.mxu0 0.0
        %5287 = vmatpush1.msra.mxu0 0.0
        %5288 = vmatprep.subr.mxu0 0.0
        %5289 = vmatpush1.msra.mxu0 0.0
        %5290 = vmatprep.subr.mxu0 0.0
        %5291 = vmatpush1.msra.mxu0 0.0
        %5292 = vmatprep.subr.mxu0 0.0
        %5293 = vmatpush1.msra.mxu0 0.0
        %5294 = vmatprep.subr.mxu0 0.0
        %5295 = vmatpush1.msra.mxu0 0.0
        %5296 = vmatprep.subr.mxu0 0.0
        %5297 = vmatpush1.msra.mxu0 0.0
        %5298 = vmatprep.subr.mxu0 0.0
        %5299 = vmatpush1.msra.mxu0 0.0
        %5300 = vmatprep.subr.mxu0 0.0
        %5301 = vmatpush1.msra.mxu0 0.0
        %5302 = vmatprep.subr.mxu0 0.0
        %5303 = vmatpush1.msra.mxu0 0.0
        %v5304 = vand.u32 %v5113, 4294901760
        %v5305 = vsub.f32 %v5113, %v5304
        %5306 = vmatprep.subr.mxu0 %v5305
        %v5307 = vand.u32 %v5112, 4294901760
        %v5308 = vsub.f32 %v5112, %v5307
        %5309 = vmatpush1.msra.mxu0 %v5308
        %5310 = vmatprep.subr.mxu0 0.0
        %5311 = vmatpush2.msra.mxu0 0.0
        %5312 = vmatprep.subr.mxu0 0.0
        %5313 = vmatpush2.msra.mxu0 0.0
        %5314 = vmatprep.subr.mxu0 0.0
        %5315 = vmatpush2.msra.mxu0 0.0
        %5316 = vmatprep.subr.mxu0 0.0
        %5317 = vmatpush2.msra.mxu0 0.0
        %5318 = vmatprep.subr.mxu0 0.0
        %5319 = vmatpush2.msra.mxu0 0.0
        %5320 = vmatprep.subr.mxu0 0.0
        %5321 = vmatpush2.msra.mxu0 0.0
        %5322 = vmatprep.subr.mxu0 0.0
        %5323 = vmatpush2.msra.mxu0 0.0
        %5324 = vmatprep.subr.mxu0 0.0
        %5325 = vmatpush2.msra.mxu0 0.0
        %5326 = vmatprep.subr.mxu0 0.0
        %5327 = vmatpush2.msra.mxu0 0.0
        %5328 = vmatprep.subr.mxu0 0.0
        %5329 = vmatpush2.msra.mxu0 0.0
        %5330 = vmatprep.subr.mxu0 0.0
        %5331 = vmatpush2.msra.mxu0 0.0
        %5332 = vmatprep.subr.mxu0 0.0
        %5333 = vmatpush2.msra.mxu0 0.0
        %5334 = vmatprep.subr.mxu0 0.0
        %5335 = vmatpush2.msra.mxu0 0.0
        %5336 = vmatprep.subr.mxu0 0.0
        %5337 = vmatpush2.msra.mxu0 0.0
        %5338 = vmatprep.subr.mxu0 0.0
        %5339 = vmatpush2.msra.mxu0 0.0
        %5340 = vmatprep.subr.mxu0 0.0
        %5341 = vmatpush2.msra.mxu0 0.0
        %5342 = vmatprep.mubr.f32.mxu0 0.0
        %v5343 = vand.u32 %v1317, 4294901760
        %v5344 = vsub.f32 %v1317, %v5343
        %5345 = vmatmul.mubr.f32.gmra.mxu0 %v5344
        %v5346 = vpop.f32.mrf.mxu0
        %v5347 = vadd.f32 %v5270, %v5346
        %v5348 = vpop.f32.mrf.mxu0
        %v5349 = vadd.f32 %v5272, %v5348
        %5350 = vdwg.mxu0
        %5351 = vmatprep.subr.mxu0 0.0
        %5352 = vmatpush1.msra.mxu0 0.0
        %5353 = vmatprep.subr.mxu0 0.0
        %5354 = vmatpush1.msra.mxu0 0.0
        %5355 = vmatprep.subr.mxu0 0.0
        %5356 = vmatpush1.msra.mxu0 0.0
        %5357 = vmatprep.subr.mxu0 0.0
        %5358 = vmatpush1.msra.mxu0 0.0
        %5359 = vmatprep.subr.mxu0 0.0
        %5360 = vmatpush1.msra.mxu0 0.0
        %5361 = vmatprep.subr.mxu0 0.0
        %5362 = vmatpush1.msra.mxu0 0.0
        %5363 = vmatprep.subr.mxu0 0.0
        %5364 = vmatpush1.msra.mxu0 0.0
        %5365 = vmatprep.subr.mxu0 0.0
        %5366 = vmatpush1.msra.mxu0 0.0
        %5367 = vmatprep.subr.mxu0 0.0
        %5368 = vmatpush1.msra.mxu0 0.0
        %5369 = vmatprep.subr.mxu0 0.0
        %5370 = vmatpush1.msra.mxu0 0.0
        %5371 = vmatprep.subr.mxu0 0.0
        %5372 = vmatpush1.msra.mxu0 0.0
        %5373 = vmatprep.subr.mxu0 0.0
        %5374 = vmatpush1.msra.mxu0 0.0
        %5375 = vmatprep.subr.mxu0 0.0
        %5376 = vmatpush1.msra.mxu0 0.0
        %5377 = vmatprep.subr.mxu0 0.0
        %5378 = vmatpush1.msra.mxu0 0.0
        %5379 = vmatprep.subr.mxu0 0.0
        %5380 = vmatpush1.msra.mxu0 0.0
        %v5381 = vand.u32 %v5113, 4294901760
        %5382 = vmatprep.subr.mxu0 %v5381
        %v5383 = vand.u32 %v5112, 4294901760
        %5384 = vmatpush1.msra.mxu0 %v5383
        %5385 = vmatprep.subr.mxu0 0.0
        %5386 = vmatpush2.msra.mxu0 0.0
        %5387 = vmatprep.subr.mxu0 0.0
        %5388 = vmatpush2.msra.mxu0 0.0
        %5389 = vmatprep.subr.mxu0 0.0
        %5390 = vmatpush2.msra.mxu0 0.0
        %5391 = vmatprep.subr.mxu0 0.0
        %5392 = vmatpush2.msra.mxu0 0.0
        %5393 = vmatprep.subr.mxu0 0.0
        %5394 = vmatpush2.msra.mxu0 0.0
        %5395 = vmatprep.subr.mxu0 0.0
        %5396 = vmatpush2.msra.mxu0 0.0
        %5397 = vmatprep.subr.mxu0 0.0
        %5398 = vmatpush2.msra.mxu0 0.0
        %5399 = vmatprep.subr.mxu0 0.0
        %5400 = vmatpush2.msra.mxu0 0.0
        %5401 = vmatprep.subr.mxu0 0.0
        %5402 = vmatpush2.msra.mxu0 0.0
        %5403 = vmatprep.subr.mxu0 0.0
        %5404 = vmatpush2.msra.mxu0 0.0
        %5405 = vmatprep.subr.mxu0 0.0
        %5406 = vmatpush2.msra.mxu0 0.0
        %5407 = vmatprep.subr.mxu0 0.0
        %5408 = vmatpush2.msra.mxu0 0.0
        %5409 = vmatprep.subr.mxu0 0.0
        %5410 = vmatpush2.msra.mxu0 0.0
        %5411 = vmatprep.subr.mxu0 0.0
        %5412 = vmatpush2.msra.mxu0 0.0
        %5413 = vmatprep.subr.mxu0 0.0
        %5414 = vmatpush2.msra.mxu0 0.0
        %5415 = vmatprep.subr.mxu0 0.0
        %5416 = vmatpush2.msra.mxu0 0.0
        %5417 = vmatprep.mubr.f32.mxu0 0.0
        %v5418 = vand.u32 %v1317, 4294901760
        %v5419 = vsub.f32 %v1317, %v5418
        %v5420 = vand.u32 %v5419, 4294901760
        %5421 = vmatmul.mubr.f32.gmra.mxu0 %v5420
        %v5422 = vpop.f32.mrf.mxu0
        %v5423 = vadd.f32 %v5347, %v5422
        %v5424 = vpop.f32.mrf.mxu0
        %v5425 = vadd.f32 %v5349, %v5424
        %5426 = vdwg.mxu0
        %5427 = vmatprep.subr.mxu0 0.0
        %5428 = vmatpush1.msra.mxu0 0.0
        %5429 = vmatprep.subr.mxu0 0.0
        %5430 = vmatpush1.msra.mxu0 0.0
        %5431 = vmatprep.subr.mxu0 0.0
        %5432 = vmatpush1.msra.mxu0 0.0
        %5433 = vmatprep.subr.mxu0 0.0
        %5434 = vmatpush1.msra.mxu0 0.0
        %5435 = vmatprep.subr.mxu0 0.0
        %5436 = vmatpush1.msra.mxu0 0.0
        %5437 = vmatprep.subr.mxu0 0.0
        %5438 = vmatpush1.msra.mxu0 0.0
        %5439 = vmatprep.subr.mxu0 0.0
        %5440 = vmatpush1.msra.mxu0 0.0
        %5441 = vmatprep.subr.mxu0 0.0
        %5442 = vmatpush1.msra.mxu0 0.0
        %5443 = vmatprep.subr.mxu0 0.0
        %5444 = vmatpush1.msra.mxu0 0.0
        %5445 = vmatprep.subr.mxu0 0.0
        %5446 = vmatpush1.msra.mxu0 0.0
        %5447 = vmatprep.subr.mxu0 0.0
        %5448 = vmatpush1.msra.mxu0 0.0
        %5449 = vmatprep.subr.mxu0 0.0
        %5450 = vmatpush1.msra.mxu0 0.0
        %5451 = vmatprep.subr.mxu0 0.0
        %5452 = vmatpush1.msra.mxu0 0.0
        %5453 = vmatprep.subr.mxu0 0.0
        %5454 = vmatpush1.msra.mxu0 0.0
        %5455 = vmatprep.subr.mxu0 0.0
        %5456 = vmatpush1.msra.mxu0 0.0
        %v5457 = vand.u32 %v5113, 4294901760
        %v5458 = vsub.f32 %v5113, %v5457
        %v5459 = vand.u32 %v5458, 4294901760
        %5460 = vmatprep.subr.mxu0 %v5459
        %v5461 = vand.u32 %v5112, 4294901760
        %v5462 = vsub.f32 %v5112, %v5461
        %v5463 = vand.u32 %v5462, 4294901760
        %5464 = vmatpush1.msra.mxu0 %v5463
        %5465 = vmatprep.subr.mxu0 0.0
        %5466 = vmatpush2.msra.mxu0 0.0
        %5467 = vmatprep.subr.mxu0 0.0
        %5468 = vmatpush2.msra.mxu0 0.0
        %5469 = vmatprep.subr.mxu0 0.0
        %5470 = vmatpush2.msra.mxu0 0.0
        %5471 = vmatprep.subr.mxu0 0.0
        %5472 = vmatpush2.msra.mxu0 0.0
        %5473 = vmatprep.subr.mxu0 0.0
        %5474 = vmatpush2.msra.mxu0 0.0
        %5475 = vmatprep.subr.mxu0 0.0
        %5476 = vmatpush2.msra.mxu0 0.0
        %5477 = vmatprep.subr.mxu0 0.0
        %5478 = vmatpush2.msra.mxu0 0.0
        %5479 = vmatprep.subr.mxu0 0.0
        %5480 = vmatpush2.msra.mxu0 0.0
        %5481 = vmatprep.subr.mxu0 0.0
        %5482 = vmatpush2.msra.mxu0 0.0
        %5483 = vmatprep.subr.mxu0 0.0
        %5484 = vmatpush2.msra.mxu0 0.0
        %5485 = vmatprep.subr.mxu0 0.0
        %5486 = vmatpush2.msra.mxu0 0.0
        %5487 = vmatprep.subr.mxu0 0.0
        %5488 = vmatpush2.msra.mxu0 0.0
        %5489 = vmatprep.subr.mxu0 0.0
        %5490 = vmatpush2.msra.mxu0 0.0
        %5491 = vmatprep.subr.mxu0 0.0
        %5492 = vmatpush2.msra.mxu0 0.0
        %5493 = vmatprep.subr.mxu0 0.0
        %5494 = vmatpush2.msra.mxu0 0.0
        %5495 = vmatprep.subr.mxu0 0.0
        %5496 = vmatpush2.msra.mxu0 0.0
        %5497 = vmatprep.mubr.f32.mxu0 0.0
        %v5498 = vand.u32 %v1317, 4294901760
        %5499 = vmatmul.mubr.f32.gmra.mxu0 %v5498
        %v5500 = vpop.f32.mrf.mxu0
        %v5501 = vadd.f32 %v5423, %v5500
        %v5502 = vpop.f32.mrf.mxu0
        %v5503 = vadd.f32 %v5425, %v5502
        %5504 = vdwg.mxu0
        %5505 = vmatprep.subr.mxu0 0.0
        %5506 = vmatpush1.msra.mxu0 0.0
        %5507 = vmatprep.subr.mxu0 0.0
        %5508 = vmatpush1.msra.mxu0 0.0
        %5509 = vmatprep.subr.mxu0 0.0
        %5510 = vmatpush1.msra.mxu0 0.0
        %5511 = vmatprep.subr.mxu0 0.0
        %5512 = vmatpush1.msra.mxu0 0.0
        %5513 = vmatprep.subr.mxu0 0.0
        %5514 = vmatpush1.msra.mxu0 0.0
        %5515 = vmatprep.subr.mxu0 0.0
        %5516 = vmatpush1.msra.mxu0 0.0
        %5517 = vmatprep.subr.mxu0 0.0
        %5518 = vmatpush1.msra.mxu0 0.0
        %5519 = vmatprep.subr.mxu0 0.0
        %5520 = vmatpush1.msra.mxu0 0.0
        %5521 = vmatprep.subr.mxu0 0.0
        %5522 = vmatpush1.msra.mxu0 0.0
        %5523 = vmatprep.subr.mxu0 0.0
        %5524 = vmatpush1.msra.mxu0 0.0
        %5525 = vmatprep.subr.mxu0 0.0
        %5526 = vmatpush1.msra.mxu0 0.0
        %5527 = vmatprep.subr.mxu0 0.0
        %5528 = vmatpush1.msra.mxu0 0.0
        %5529 = vmatprep.subr.mxu0 0.0
        %5530 = vmatpush1.msra.mxu0 0.0
        %5531 = vmatprep.subr.mxu0 0.0
        %5532 = vmatpush1.msra.mxu0 0.0
        %5533 = vmatprep.subr.mxu0 0.0
        %5534 = vmatpush1.msra.mxu0 0.0
        %v5535 = vand.u32 %v5113, 4294901760
        %5536 = vmatprep.subr.mxu0 %v5535
        %v5537 = vand.u32 %v5112, 4294901760
        %5538 = vmatpush1.msra.mxu0 %v5537
        %5539 = vmatprep.subr.mxu0 0.0
        %5540 = vmatpush2.msra.mxu0 0.0
        %5541 = vmatprep.subr.mxu0 0.0
        %5542 = vmatpush2.msra.mxu0 0.0
        %5543 = vmatprep.subr.mxu0 0.0
        %5544 = vmatpush2.msra.mxu0 0.0
        %5545 = vmatprep.subr.mxu0 0.0
        %5546 = vmatpush2.msra.mxu0 0.0
        %5547 = vmatprep.subr.mxu0 0.0
        %5548 = vmatpush2.msra.mxu0 0.0
        %5549 = vmatprep.subr.mxu0 0.0
        %5550 = vmatpush2.msra.mxu0 0.0
        %5551 = vmatprep.subr.mxu0 0.0
        %5552 = vmatpush2.msra.mxu0 0.0
        %5553 = vmatprep.subr.mxu0 0.0
        %5554 = vmatpush2.msra.mxu0 0.0
        %5555 = vmatprep.subr.mxu0 0.0
        %5556 = vmatpush2.msra.mxu0 0.0
        %5557 = vmatprep.subr.mxu0 0.0
        %5558 = vmatpush2.msra.mxu0 0.0
        %5559 = vmatprep.subr.mxu0 0.0
        %5560 = vmatpush2.msra.mxu0 0.0
        %5561 = vmatprep.subr.mxu0 0.0
        %5562 = vmatpush2.msra.mxu0 0.0
        %5563 = vmatprep.subr.mxu0 0.0
        %5564 = vmatpush2.msra.mxu0 0.0
        %5565 = vmatprep.subr.mxu0 0.0
        %5566 = vmatpush2.msra.mxu0 0.0
        %5567 = vmatprep.subr.mxu0 0.0
        %5568 = vmatpush2.msra.mxu0 0.0
        %5569 = vmatprep.subr.mxu0 0.0
        %5570 = vmatpush2.msra.mxu0 0.0
        %5571 = vmatprep.mubr.f32.mxu0 0.0
        %v5572 = vand.u32 %v1317, 4294901760
        %5573 = vmatmul.mubr.f32.gmra.mxu0 %v5572
        %v5574 = vpop.f32.mrf.mxu0
        %v5575 = vadd.f32 %v5501, %v5574
        %v5576 = vpop.f32.mrf.mxu0
        %v5577 = vadd.f32 %v5503, %v5576
        %5578 = vdwg.mxu0
        %v5579 = vmax.f32 %v5575, 0.0
        %v5580 = vmax.f32 %v5577, 0.0
        %s5581 = scalar_lea.vmem %s311, 64 [#allocation5]
        %5582 = vst [vmem:[%s5581] sm:$0xff] %v5579
        %5583 = vst [vmem:[%s5581 + $0x8] sm:$0xff] %v5580
        %s5584 = scalar_lea.vmem [#allocation2], 40
        %v5585 = vld [vmem:[%s5584] sm:$0xff]
        %s5586 = scalar_lea.vmem %s4, 40
        %v5587 = vld [vmem:[%s5586] sm:$0xff]
        %5589 = vset.pattern.permute.xlu0 0
        %5590 = vperm.xlu0 %5589, %v5587
        %v5591 = vpop.permute.xlu0 %5590
        %v5594 = vsel %vm840, %v5585, 0
        %5596 = vmatprep.subr.mxu0 0.0
        %5597 = vmatpush1.msra.mxu0 0.0
        %5598 = vmatprep.subr.mxu0 0.0
        %5599 = vmatpush1.msra.mxu0 0.0
        %5600 = vmatprep.subr.mxu0 0.0
        %5601 = vmatpush1.msra.mxu0 0.0
        %5602 = vmatprep.subr.mxu0 0.0
        %5603 = vmatpush1.msra.mxu0 0.0
        %5604 = vmatprep.subr.mxu0 0.0
        %5605 = vmatpush1.msra.mxu0 0.0
        %5606 = vmatprep.subr.mxu0 0.0
        %5607 = vmatpush1.msra.mxu0 0.0
        %5608 = vmatprep.subr.mxu0 0.0
        %5609 = vmatpush1.msra.mxu0 0.0
        %5610 = vmatprep.subr.mxu0 0.0
        %5611 = vmatpush1.msra.mxu0 0.0
        %5612 = vmatprep.subr.mxu0 0.0
        %5613 = vmatpush1.msra.mxu0 0.0
        %5614 = vmatprep.subr.mxu0 0.0
        %5615 = vmatpush1.msra.mxu0 0.0
        %5616 = vmatprep.subr.mxu0 0.0
        %5617 = vmatpush1.msra.mxu0 0.0
        %5618 = vmatprep.subr.mxu0 0.0
        %5619 = vmatpush1.msra.mxu0 0.0
        %5620 = vmatprep.subr.mxu0 0.0
        %5621 = vmatpush1.msra.mxu0 0.0
        %5622 = vmatprep.subr.mxu0 0.0
        %5623 = vmatpush1.msra.mxu0 0.0
        %5624 = vmatprep.subr.mxu0 0.0
        %5625 = vmatpush1.msra.mxu0 0.0
        %v5626 = vand.u32 %v830, 4294901760
        %5627 = vmatprep.subr.mxu0 %v5626
        %v5628 = vand.u32 %v829, 4294901760
        %5629 = vmatpush1.msra.mxu0 %v5628
        %5630 = vmatprep.subr.mxu0 0.0
        %5631 = vmatpush2.msra.mxu0 0.0
        %5632 = vmatprep.subr.mxu0 0.0
        %5633 = vmatpush2.msra.mxu0 0.0
        %5634 = vmatprep.subr.mxu0 0.0
        %5635 = vmatpush2.msra.mxu0 0.0
        %5636 = vmatprep.subr.mxu0 0.0
        %5637 = vmatpush2.msra.mxu0 0.0
        %5638 = vmatprep.subr.mxu0 0.0
        %5639 = vmatpush2.msra.mxu0 0.0
        %5640 = vmatprep.subr.mxu0 0.0
        %5641 = vmatpush2.msra.mxu0 0.0
        %5642 = vmatprep.subr.mxu0 0.0
        %5643 = vmatpush2.msra.mxu0 0.0
        %5644 = vmatprep.subr.mxu0 0.0
        %5645 = vmatpush2.msra.mxu0 0.0
        %5646 = vmatprep.subr.mxu0 0.0
        %5647 = vmatpush2.msra.mxu0 0.0
        %5648 = vmatprep.subr.mxu0 0.0
        %5649 = vmatpush2.msra.mxu0 0.0
        %5650 = vmatprep.subr.mxu0 0.0
        %5651 = vmatpush2.msra.mxu0 0.0
        %5652 = vmatprep.subr.mxu0 0.0
        %5653 = vmatpush2.msra.mxu0 0.0
        %5654 = vmatprep.subr.mxu0 0.0
        %5655 = vmatpush2.msra.mxu0 0.0
        %5656 = vmatprep.subr.mxu0 0.0
        %5657 = vmatpush2.msra.mxu0 0.0
        %5658 = vmatprep.subr.mxu0 0.0
        %5659 = vmatpush2.msra.mxu0 0.0
        %5660 = vmatprep.subr.mxu0 0.0
        %5661 = vmatpush2.msra.mxu0 0.0
        %5662 = vmatprep.mubr.f32.mxu0 0.0
        %v5663 = vand.u32 %v5594, 4294901760
        %v5664 = vsub.f32 %v5594, %v5663
        %v5665 = vand.u32 %v5664, 4294901760
        %v5666 = vsub.f32 %v5664, %v5665
        %v5667 = vand.u32 %v5666, 4294901760
        %5668 = vmatmul.mubr.f32.gmra.mxu0 %v5667
        %v5669 = vpop.f32.mrf.mxu0
        %v5670 = vadd.f32 %v5591, %v5669
        %v5671 = vpop.f32.mrf.mxu0
        %v5672 = vadd.f32 %v5591, %v5671
        %5673 = vdwg.mxu0
        %5674 = vmatprep.subr.mxu0 0.0
        %5675 = vmatpush1.msra.mxu0 0.0
        %5676 = vmatprep.subr.mxu0 0.0
        %5677 = vmatpush1.msra.mxu0 0.0
        %5678 = vmatprep.subr.mxu0 0.0
        %5679 = vmatpush1.msra.mxu0 0.0
        %5680 = vmatprep.subr.mxu0 0.0
        %5681 = vmatpush1.msra.mxu0 0.0
        %5682 = vmatprep.subr.mxu0 0.0
        %5683 = vmatpush1.msra.mxu0 0.0
        %5684 = vmatprep.subr.mxu0 0.0
        %5685 = vmatpush1.msra.mxu0 0.0
        %5686 = vmatprep.subr.mxu0 0.0
        %5687 = vmatpush1.msra.mxu0 0.0
        %5688 = vmatprep.subr.mxu0 0.0
        %5689 = vmatpush1.msra.mxu0 0.0
        %5690 = vmatprep.subr.mxu0 0.0
        %5691 = vmatpush1.msra.mxu0 0.0
        %5692 = vmatprep.subr.mxu0 0.0
        %5693 = vmatpush1.msra.mxu0 0.0
        %5694 = vmatprep.subr.mxu0 0.0
        %5695 = vmatpush1.msra.mxu0 0.0
        %5696 = vmatprep.subr.mxu0 0.0
        %5697 = vmatpush1.msra.mxu0 0.0
        %5698 = vmatprep.subr.mxu0 0.0
        %5699 = vmatpush1.msra.mxu0 0.0
        %5700 = vmatprep.subr.mxu0 0.0
        %5701 = vmatpush1.msra.mxu0 0.0
        %5702 = vmatprep.subr.mxu0 0.0
        %5703 = vmatpush1.msra.mxu0 0.0
        %v5704 = vand.u32 %v830, 4294901760
        %v5705 = vsub.f32 %v830, %v5704
        %v5706 = vand.u32 %v5705, 4294901760
        %v5707 = vsub.f32 %v5705, %v5706
        %v5708 = vand.u32 %v5707, 4294901760
        %5709 = vmatprep.subr.mxu0 %v5708
        %v5710 = vand.u32 %v829, 4294901760
        %v5711 = vsub.f32 %v829, %v5710
        %v5712 = vand.u32 %v5711, 4294901760
        %v5713 = vsub.f32 %v5711, %v5712
        %v5714 = vand.u32 %v5713, 4294901760
        %5715 = vmatpush1.msra.mxu0 %v5714
        %5716 = vmatprep.subr.mxu0 0.0
        %5717 = vmatpush2.msra.mxu0 0.0
        %5718 = vmatprep.subr.mxu0 0.0
        %5719 = vmatpush2.msra.mxu0 0.0
        %5720 = vmatprep.subr.mxu0 0.0
        %5721 = vmatpush2.msra.mxu0 0.0
        %5722 = vmatprep.subr.mxu0 0.0
        %5723 = vmatpush2.msra.mxu0 0.0
        %5724 = vmatprep.subr.mxu0 0.0
        %5725 = vmatpush2.msra.mxu0 0.0
        %5726 = vmatprep.subr.mxu0 0.0
        %5727 = vmatpush2.msra.mxu0 0.0
        %5728 = vmatprep.subr.mxu0 0.0
        %5729 = vmatpush2.msra.mxu0 0.0
        %5730 = vmatprep.subr.mxu0 0.0
        %5731 = vmatpush2.msra.mxu0 0.0
        %5732 = vmatprep.subr.mxu0 0.0
        %5733 = vmatpush2.msra.mxu0 0.0
        %5734 = vmatprep.subr.mxu0 0.0
        %5735 = vmatpush2.msra.mxu0 0.0
        %5736 = vmatprep.subr.mxu0 0.0
        %5737 = vmatpush2.msra.mxu0 0.0
        %5738 = vmatprep.subr.mxu0 0.0
        %5739 = vmatpush2.msra.mxu0 0.0
        %5740 = vmatprep.subr.mxu0 0.0
        %5741 = vmatpush2.msra.mxu0 0.0
        %5742 = vmatprep.subr.mxu0 0.0
        %5743 = vmatpush2.msra.mxu0 0.0
        %5744 = vmatprep.subr.mxu0 0.0
        %5745 = vmatpush2.msra.mxu0 0.0
        %5746 = vmatprep.subr.mxu0 0.0
        %5747 = vmatpush2.msra.mxu0 0.0
        %5748 = vmatprep.mubr.f32.mxu0 0.0
        %v5749 = vand.u32 %v5594, 4294901760
        %5750 = vmatmul.mubr.f32.gmra.mxu0 %v5749
        %v5751 = vpop.f32.mrf.mxu0
        %v5752 = vadd.f32 %v5670, %v5751
        %v5753 = vpop.f32.mrf.mxu0
        %v5754 = vadd.f32 %v5672, %v5753
        %5755 = vdwg.mxu0
        %5756 = vmatprep.subr.mxu0 0.0
        %5757 = vmatpush1.msra.mxu0 0.0
        %5758 = vmatprep.subr.mxu0 0.0
        %5759 = vmatpush1.msra.mxu0 0.0
        %5760 = vmatprep.subr.mxu0 0.0
        %5761 = vmatpush1.msra.mxu0 0.0
        %5762 = vmatprep.subr.mxu0 0.0
        %5763 = vmatpush1.msra.mxu0 0.0
        %5764 = vmatprep.subr.mxu0 0.0
        %5765 = vmatpush1.msra.mxu0 0.0
        %5766 = vmatprep.subr.mxu0 0.0
        %5767 = vmatpush1.msra.mxu0 0.0
        %5768 = vmatprep.subr.mxu0 0.0
        %5769 = vmatpush1.msra.mxu0 0.0
        %5770 = vmatprep.subr.mxu0 0.0
        %5771 = vmatpush1.msra.mxu0 0.0
        %5772 = vmatprep.subr.mxu0 0.0
        %5773 = vmatpush1.msra.mxu0 0.0
        %5774 = vmatprep.subr.mxu0 0.0
        %5775 = vmatpush1.msra.mxu0 0.0
        %5776 = vmatprep.subr.mxu0 0.0
        %5777 = vmatpush1.msra.mxu0 0.0
        %5778 = vmatprep.subr.mxu0 0.0
        %5779 = vmatpush1.msra.mxu0 0.0
        %5780 = vmatprep.subr.mxu0 0.0
        %5781 = vmatpush1.msra.mxu0 0.0
        %5782 = vmatprep.subr.mxu0 0.0
        %5783 = vmatpush1.msra.mxu0 0.0
        %5784 = vmatprep.subr.mxu0 0.0
        %5785 = vmatpush1.msra.mxu0 0.0
        %v5786 = vand.u32 %v830, 4294901760
        %v5787 = vsub.f32 %v830, %v5786
        %5788 = vmatprep.subr.mxu0 %v5787
        %v5789 = vand.u32 %v829, 4294901760
        %v5790 = vsub.f32 %v829, %v5789
        %5791 = vmatpush1.msra.mxu0 %v5790
        %5792 = vmatprep.subr.mxu0 0.0
        %5793 = vmatpush2.msra.mxu0 0.0
        %5794 = vmatprep.subr.mxu0 0.0
        %5795 = vmatpush2.msra.mxu0 0.0
        %5796 = vmatprep.subr.mxu0 0.0
        %5797 = vmatpush2.msra.mxu0 0.0
        %5798 = vmatprep.subr.mxu0 0.0
        %5799 = vmatpush2.msra.mxu0 0.0
        %5800 = vmatprep.subr.mxu0 0.0
        %5801 = vmatpush2.msra.mxu0 0.0
        %5802 = vmatprep.subr.mxu0 0.0
        %5803 = vmatpush2.msra.mxu0 0.0
        %5804 = vmatprep.subr.mxu0 0.0
        %5805 = vmatpush2.msra.mxu0 0.0
        %5806 = vmatprep.subr.mxu0 0.0
        %5807 = vmatpush2.msra.mxu0 0.0
        %5808 = vmatprep.subr.mxu0 0.0
        %5809 = vmatpush2.msra.mxu0 0.0
        %5810 = vmatprep.subr.mxu0 0.0
        %5811 = vmatpush2.msra.mxu0 0.0
        %5812 = vmatprep.subr.mxu0 0.0
        %5813 = vmatpush2.msra.mxu0 0.0
        %5814 = vmatprep.subr.mxu0 0.0
        %5815 = vmatpush2.msra.mxu0 0.0
        %5816 = vmatprep.subr.mxu0 0.0
        %5817 = vmatpush2.msra.mxu0 0.0
        %5818 = vmatprep.subr.mxu0 0.0
        %5819 = vmatpush2.msra.mxu0 0.0
        %5820 = vmatprep.subr.mxu0 0.0
        %5821 = vmatpush2.msra.mxu0 0.0
        %5822 = vmatprep.subr.mxu0 0.0
        %5823 = vmatpush2.msra.mxu0 0.0
        %5824 = vmatprep.mubr.f32.mxu0 0.0
        %v5825 = vand.u32 %v5594, 4294901760
        %v5826 = vsub.f32 %v5594, %v5825
        %5827 = vmatmul.mubr.f32.gmra.mxu0 %v5826
        %v5828 = vpop.f32.mrf.mxu0
        %v5829 = vadd.f32 %v5752, %v5828
        %v5830 = vpop.f32.mrf.mxu0
        %v5831 = vadd.f32 %v5754, %v5830
        %5832 = vdwg.mxu0
        %5833 = vmatprep.subr.mxu0 0.0
        %5834 = vmatpush1.msra.mxu0 0.0
        %5835 = vmatprep.subr.mxu0 0.0
        %5836 = vmatpush1.msra.mxu0 0.0
        %5837 = vmatprep.subr.mxu0 0.0
        %5838 = vmatpush1.msra.mxu0 0.0
        %5839 = vmatprep.subr.mxu0 0.0
        %5840 = vmatpush1.msra.mxu0 0.0
        %5841 = vmatprep.subr.mxu0 0.0
        %5842 = vmatpush1.msra.mxu0 0.0
        %5843 = vmatprep.subr.mxu0 0.0
        %5844 = vmatpush1.msra.mxu0 0.0
        %5845 = vmatprep.subr.mxu0 0.0
        %5846 = vmatpush1.msra.mxu0 0.0
        %5847 = vmatprep.subr.mxu0 0.0
        %5848 = vmatpush1.msra.mxu0 0.0
        %5849 = vmatprep.subr.mxu0 0.0
        %5850 = vmatpush1.msra.mxu0 0.0
        %5851 = vmatprep.subr.mxu0 0.0
        %5852 = vmatpush1.msra.mxu0 0.0
        %5853 = vmatprep.subr.mxu0 0.0
        %5854 = vmatpush1.msra.mxu0 0.0
        %5855 = vmatprep.subr.mxu0 0.0
        %5856 = vmatpush1.msra.mxu0 0.0
        %5857 = vmatprep.subr.mxu0 0.0
        %5858 = vmatpush1.msra.mxu0 0.0
        %5859 = vmatprep.subr.mxu0 0.0
        %5860 = vmatpush1.msra.mxu0 0.0
        %5861 = vmatprep.subr.mxu0 0.0
        %5862 = vmatpush1.msra.mxu0 0.0
        %v5863 = vand.u32 %v830, 4294901760
        %5864 = vmatprep.subr.mxu0 %v5863
        %v5865 = vand.u32 %v829, 4294901760
        %5866 = vmatpush1.msra.mxu0 %v5865
        %5867 = vmatprep.subr.mxu0 0.0
        %5868 = vmatpush2.msra.mxu0 0.0
        %5869 = vmatprep.subr.mxu0 0.0
        %5870 = vmatpush2.msra.mxu0 0.0
        %5871 = vmatprep.subr.mxu0 0.0
        %5872 = vmatpush2.msra.mxu0 0.0
        %5873 = vmatprep.subr.mxu0 0.0
        %5874 = vmatpush2.msra.mxu0 0.0
        %5875 = vmatprep.subr.mxu0 0.0
        %5876 = vmatpush2.msra.mxu0 0.0
        %5877 = vmatprep.subr.mxu0 0.0
        %5878 = vmatpush2.msra.mxu0 0.0
        %5879 = vmatprep.subr.mxu0 0.0
        %5880 = vmatpush2.msra.mxu0 0.0
        %5881 = vmatprep.subr.mxu0 0.0
        %5882 = vmatpush2.msra.mxu0 0.0
        %5883 = vmatprep.subr.mxu0 0.0
        %5884 = vmatpush2.msra.mxu0 0.0
        %5885 = vmatprep.subr.mxu0 0.0
        %5886 = vmatpush2.msra.mxu0 0.0
        %5887 = vmatprep.subr.mxu0 0.0
        %5888 = vmatpush2.msra.mxu0 0.0
        %5889 = vmatprep.subr.mxu0 0.0
        %5890 = vmatpush2.msra.mxu0 0.0
        %5891 = vmatprep.subr.mxu0 0.0
        %5892 = vmatpush2.msra.mxu0 0.0
        %5893 = vmatprep.subr.mxu0 0.0
        %5894 = vmatpush2.msra.mxu0 0.0
        %5895 = vmatprep.subr.mxu0 0.0
        %5896 = vmatpush2.msra.mxu0 0.0
        %5897 = vmatprep.subr.mxu0 0.0
        %5898 = vmatpush2.msra.mxu0 0.0
        %5899 = vmatprep.mubr.f32.mxu0 0.0
        %v5900 = vand.u32 %v5594, 4294901760
        %v5901 = vsub.f32 %v5594, %v5900
        %v5902 = vand.u32 %v5901, 4294901760
        %5903 = vmatmul.mubr.f32.gmra.mxu0 %v5902
        %v5904 = vpop.f32.mrf.mxu0
        %v5905 = vadd.f32 %v5829, %v5904
        %v5906 = vpop.f32.mrf.mxu0
        %v5907 = vadd.f32 %v5831, %v5906
        %5908 = vdwg.mxu0
        %5909 = vmatprep.subr.mxu0 0.0
        %5910 = vmatpush1.msra.mxu0 0.0
        %5911 = vmatprep.subr.mxu0 0.0
        %5912 = vmatpush1.msra.mxu0 0.0
        %5913 = vmatprep.subr.mxu0 0.0
        %5914 = vmatpush1.msra.mxu0 0.0
        %5915 = vmatprep.subr.mxu0 0.0
        %5916 = vmatpush1.msra.mxu0 0.0
        %5917 = vmatprep.subr.mxu0 0.0
        %5918 = vmatpush1.msra.mxu0 0.0
        %5919 = vmatprep.subr.mxu0 0.0
        %5920 = vmatpush1.msra.mxu0 0.0
        %5921 = vmatprep.subr.mxu0 0.0
        %5922 = vmatpush1.msra.mxu0 0.0
        %5923 = vmatprep.subr.mxu0 0.0
        %5924 = vmatpush1.msra.mxu0 0.0
        %5925 = vmatprep.subr.mxu0 0.0
        %5926 = vmatpush1.msra.mxu0 0.0
        %5927 = vmatprep.subr.mxu0 0.0
        %5928 = vmatpush1.msra.mxu0 0.0
        %5929 = vmatprep.subr.mxu0 0.0
        %5930 = vmatpush1.msra.mxu0 0.0
        %5931 = vmatprep.subr.mxu0 0.0
        %5932 = vmatpush1.msra.mxu0 0.0
        %5933 = vmatprep.subr.mxu0 0.0
        %5934 = vmatpush1.msra.mxu0 0.0
        %5935 = vmatprep.subr.mxu0 0.0
        %5936 = vmatpush1.msra.mxu0 0.0
        %5937 = vmatprep.subr.mxu0 0.0
        %5938 = vmatpush1.msra.mxu0 0.0
        %v5939 = vand.u32 %v830, 4294901760
        %v5940 = vsub.f32 %v830, %v5939
        %v5941 = vand.u32 %v5940, 4294901760
        %5942 = vmatprep.subr.mxu0 %v5941
        %v5943 = vand.u32 %v829, 4294901760
        %v5944 = vsub.f32 %v829, %v5943
        %v5945 = vand.u32 %v5944, 4294901760
        %5946 = vmatpush1.msra.mxu0 %v5945
        %5947 = vmatprep.subr.mxu0 0.0
        %5948 = vmatpush2.msra.mxu0 0.0
        %5949 = vmatprep.subr.mxu0 0.0
        %5950 = vmatpush2.msra.mxu0 0.0
        %5951 = vmatprep.subr.mxu0 0.0
        %5952 = vmatpush2.msra.mxu0 0.0
        %5953 = vmatprep.subr.mxu0 0.0
        %5954 = vmatpush2.msra.mxu0 0.0
        %5955 = vmatprep.subr.mxu0 0.0
        %5956 = vmatpush2.msra.mxu0 0.0
        %5957 = vmatprep.subr.mxu0 0.0
        %5958 = vmatpush2.msra.mxu0 0.0
        %5959 = vmatprep.subr.mxu0 0.0
        %5960 = vmatpush2.msra.mxu0 0.0
        %5961 = vmatprep.subr.mxu0 0.0
        %5962 = vmatpush2.msra.mxu0 0.0
        %5963 = vmatprep.subr.mxu0 0.0
        %5964 = vmatpush2.msra.mxu0 0.0
        %5965 = vmatprep.subr.mxu0 0.0
        %5966 = vmatpush2.msra.mxu0 0.0
        %5967 = vmatprep.subr.mxu0 0.0
        %5968 = vmatpush2.msra.mxu0 0.0
        %5969 = vmatprep.subr.mxu0 0.0
        %5970 = vmatpush2.msra.mxu0 0.0
        %5971 = vmatprep.subr.mxu0 0.0
        %5972 = vmatpush2.msra.mxu0 0.0
        %5973 = vmatprep.subr.mxu0 0.0
        %5974 = vmatpush2.msra.mxu0 0.0
        %5975 = vmatprep.subr.mxu0 0.0
        %5976 = vmatpush2.msra.mxu0 0.0
        %5977 = vmatprep.subr.mxu0 0.0
        %5978 = vmatpush2.msra.mxu0 0.0
        %5979 = vmatprep.mubr.f32.mxu0 0.0
        %v5980 = vand.u32 %v5594, 4294901760
        %5981 = vmatmul.mubr.f32.gmra.mxu0 %v5980
        %v5982 = vpop.f32.mrf.mxu0
        %v5983 = vadd.f32 %v5905, %v5982
        %v5984 = vpop.f32.mrf.mxu0
        %v5985 = vadd.f32 %v5907, %v5984
        %5986 = vdwg.mxu0
        %5987 = vmatprep.subr.mxu0 0.0
        %5988 = vmatpush1.msra.mxu0 0.0
        %5989 = vmatprep.subr.mxu0 0.0
        %5990 = vmatpush1.msra.mxu0 0.0
        %5991 = vmatprep.subr.mxu0 0.0
        %5992 = vmatpush1.msra.mxu0 0.0
        %5993 = vmatprep.subr.mxu0 0.0
        %5994 = vmatpush1.msra.mxu0 0.0
        %5995 = vmatprep.subr.mxu0 0.0
        %5996 = vmatpush1.msra.mxu0 0.0
        %5997 = vmatprep.subr.mxu0 0.0
        %5998 = vmatpush1.msra.mxu0 0.0
        %5999 = vmatprep.subr.mxu0 0.0
        %6000 = vmatpush1.msra.mxu0 0.0
        %6001 = vmatprep.subr.mxu0 0.0
        %6002 = vmatpush1.msra.mxu0 0.0
        %6003 = vmatprep.subr.mxu0 0.0
        %6004 = vmatpush1.msra.mxu0 0.0
        %6005 = vmatprep.subr.mxu0 0.0
        %6006 = vmatpush1.msra.mxu0 0.0
        %6007 = vmatprep.subr.mxu0 0.0
        %6008 = vmatpush1.msra.mxu0 0.0
        %6009 = vmatprep.subr.mxu0 0.0
        %6010 = vmatpush1.msra.mxu0 0.0
        %6011 = vmatprep.subr.mxu0 0.0
        %6012 = vmatpush1.msra.mxu0 0.0
        %6013 = vmatprep.subr.mxu0 0.0
        %6014 = vmatpush1.msra.mxu0 0.0
        %6015 = vmatprep.subr.mxu0 0.0
        %6016 = vmatpush1.msra.mxu0 0.0
        %v6017 = vand.u32 %v830, 4294901760
        %6018 = vmatprep.subr.mxu0 %v6017
        %v6019 = vand.u32 %v829, 4294901760
        %6020 = vmatpush1.msra.mxu0 %v6019
        %6021 = vmatprep.subr.mxu0 0.0
        %6022 = vmatpush2.msra.mxu0 0.0
        %6023 = vmatprep.subr.mxu0 0.0
        %6024 = vmatpush2.msra.mxu0 0.0
        %6025 = vmatprep.subr.mxu0 0.0
        %6026 = vmatpush2.msra.mxu0 0.0
        %6027 = vmatprep.subr.mxu0 0.0
        %6028 = vmatpush2.msra.mxu0 0.0
        %6029 = vmatprep.subr.mxu0 0.0
        %6030 = vmatpush2.msra.mxu0 0.0
        %6031 = vmatprep.subr.mxu0 0.0
        %6032 = vmatpush2.msra.mxu0 0.0
        %6033 = vmatprep.subr.mxu0 0.0
        %6034 = vmatpush2.msra.mxu0 0.0
        %6035 = vmatprep.subr.mxu0 0.0
        %6036 = vmatpush2.msra.mxu0 0.0
        %6037 = vmatprep.subr.mxu0 0.0
        %6038 = vmatpush2.msra.mxu0 0.0
        %6039 = vmatprep.subr.mxu0 0.0
        %6040 = vmatpush2.msra.mxu0 0.0
        %6041 = vmatprep.subr.mxu0 0.0
        %6042 = vmatpush2.msra.mxu0 0.0
        %6043 = vmatprep.subr.mxu0 0.0
        %6044 = vmatpush2.msra.mxu0 0.0
        %6045 = vmatprep.subr.mxu0 0.0
        %6046 = vmatpush2.msra.mxu0 0.0
        %6047 = vmatprep.subr.mxu0 0.0
        %6048 = vmatpush2.msra.mxu0 0.0
        %6049 = vmatprep.subr.mxu0 0.0
        %6050 = vmatpush2.msra.mxu0 0.0
        %6051 = vmatprep.subr.mxu0 0.0
        %6052 = vmatpush2.msra.mxu0 0.0
        %6053 = vmatprep.mubr.f32.mxu0 0.0
        %v6054 = vand.u32 %v5594, 4294901760
        %6055 = vmatmul.mubr.f32.gmra.mxu0 %v6054
        %v6056 = vpop.f32.mrf.mxu0
        %v6057 = vadd.f32 %v5983, %v6056
        %v6058 = vpop.f32.mrf.mxu0
        %v6059 = vadd.f32 %v5985, %v6058
        %6060 = vdwg.mxu0
        %v6061 = vmax.f32 %v6057, 0.0
        %v6062 = vmax.f32 %v6059, 0.0
        %6063 = vmatprep.subr.mxu0 0.0
        %6064 = vmatpush1.msra.mxu0 0.0
        %6065 = vmatprep.subr.mxu0 0.0
        %6066 = vmatpush1.msra.mxu0 0.0
        %6067 = vmatprep.subr.mxu0 0.0
        %6068 = vmatpush1.msra.mxu0 0.0
        %6069 = vmatprep.subr.mxu0 0.0
        %6070 = vmatpush1.msra.mxu0 0.0
        %6071 = vmatprep.subr.mxu0 0.0
        %6072 = vmatpush1.msra.mxu0 0.0
        %6073 = vmatprep.subr.mxu0 0.0
        %6074 = vmatpush1.msra.mxu0 0.0
        %6075 = vmatprep.subr.mxu0 0.0
        %6076 = vmatpush1.msra.mxu0 0.0
        %6077 = vmatprep.subr.mxu0 0.0
        %6078 = vmatpush1.msra.mxu0 0.0
        %6079 = vmatprep.subr.mxu0 0.0
        %6080 = vmatpush1.msra.mxu0 0.0
        %6081 = vmatprep.subr.mxu0 0.0
        %6082 = vmatpush1.msra.mxu0 0.0
        %6083 = vmatprep.subr.mxu0 0.0
        %6084 = vmatpush1.msra.mxu0 0.0
        %6085 = vmatprep.subr.mxu0 0.0
        %6086 = vmatpush1.msra.mxu0 0.0
        %6087 = vmatprep.subr.mxu0 0.0
        %6088 = vmatpush1.msra.mxu0 0.0
        %6089 = vmatprep.subr.mxu0 0.0
        %6090 = vmatpush1.msra.mxu0 0.0
        %6091 = vmatprep.subr.mxu0 0.0
        %6092 = vmatpush1.msra.mxu0 0.0
        %v6093 = vand.u32 %v6062, 4294901760
        %6094 = vmatprep.subr.mxu0 %v6093
        %v6095 = vand.u32 %v6061, 4294901760
        %6096 = vmatpush1.msra.mxu0 %v6095
        %6097 = vmatprep.subr.mxu0 0.0
        %6098 = vmatpush2.msra.mxu0 0.0
        %6099 = vmatprep.subr.mxu0 0.0
        %6100 = vmatpush2.msra.mxu0 0.0
        %6101 = vmatprep.subr.mxu0 0.0
        %6102 = vmatpush2.msra.mxu0 0.0
        %6103 = vmatprep.subr.mxu0 0.0
        %6104 = vmatpush2.msra.mxu0 0.0
        %6105 = vmatprep.subr.mxu0 0.0
        %6106 = vmatpush2.msra.mxu0 0.0
        %6107 = vmatprep.subr.mxu0 0.0
        %6108 = vmatpush2.msra.mxu0 0.0
        %6109 = vmatprep.subr.mxu0 0.0
        %6110 = vmatpush2.msra.mxu0 0.0
        %6111 = vmatprep.subr.mxu0 0.0
        %6112 = vmatpush2.msra.mxu0 0.0
        %6113 = vmatprep.subr.mxu0 0.0
        %6114 = vmatpush2.msra.mxu0 0.0
        %6115 = vmatprep.subr.mxu0 0.0
        %6116 = vmatpush2.msra.mxu0 0.0
        %6117 = vmatprep.subr.mxu0 0.0
        %6118 = vmatpush2.msra.mxu0 0.0
        %6119 = vmatprep.subr.mxu0 0.0
        %6120 = vmatpush2.msra.mxu0 0.0
        %6121 = vmatprep.subr.mxu0 0.0
        %6122 = vmatpush2.msra.mxu0 0.0
        %6123 = vmatprep.subr.mxu0 0.0
        %6124 = vmatpush2.msra.mxu0 0.0
        %6125 = vmatprep.subr.mxu0 0.0
        %6126 = vmatpush2.msra.mxu0 0.0
        %6127 = vmatprep.subr.mxu0 0.0
        %6128 = vmatpush2.msra.mxu0 0.0
        %6129 = vmatprep.mubr.f32.mxu0 0.0
        %v6130 = vand.u32 %v1317, 4294901760
        %v6131 = vsub.f32 %v1317, %v6130
        %v6132 = vand.u32 %v6131, 4294901760
        %v6133 = vsub.f32 %v6131, %v6132
        %v6134 = vand.u32 %v6133, 4294901760
        %6135 = vmatmul.mubr.f32.gmra.mxu0 %v6134
        %v6136 = vpop.f32.mrf.mxu0
        %v6137 = vadd.f32 %v1314, %v6136
        %v6138 = vpop.f32.mrf.mxu0
        %v6139 = vadd.f32 %v1314, %v6138
        %6140 = vdwg.mxu0
        %6141 = vmatprep.subr.mxu0 0.0
        %6142 = vmatpush1.msra.mxu0 0.0
        %6143 = vmatprep.subr.mxu0 0.0
        %6144 = vmatpush1.msra.mxu0 0.0
        %6145 = vmatprep.subr.mxu0 0.0
        %6146 = vmatpush1.msra.mxu0 0.0
        %6147 = vmatprep.subr.mxu0 0.0
        %6148 = vmatpush1.msra.mxu0 0.0
        %6149 = vmatprep.subr.mxu0 0.0
        %6150 = vmatpush1.msra.mxu0 0.0
        %6151 = vmatprep.subr.mxu0 0.0
        %6152 = vmatpush1.msra.mxu0 0.0
        %6153 = vmatprep.subr.mxu0 0.0
        %6154 = vmatpush1.msra.mxu0 0.0
        %6155 = vmatprep.subr.mxu0 0.0
        %6156 = vmatpush1.msra.mxu0 0.0
        %6157 = vmatprep.subr.mxu0 0.0
        %6158 = vmatpush1.msra.mxu0 0.0
        %6159 = vmatprep.subr.mxu0 0.0
        %6160 = vmatpush1.msra.mxu0 0.0
        %6161 = vmatprep.subr.mxu0 0.0
        %6162 = vmatpush1.msra.mxu0 0.0
        %6163 = vmatprep.subr.mxu0 0.0
        %6164 = vmatpush1.msra.mxu0 0.0
        %6165 = vmatprep.subr.mxu0 0.0
        %6166 = vmatpush1.msra.mxu0 0.0
        %6167 = vmatprep.subr.mxu0 0.0
        %6168 = vmatpush1.msra.mxu0 0.0
        %6169 = vmatprep.subr.mxu0 0.0
        %6170 = vmatpush1.msra.mxu0 0.0
        %v6171 = vand.u32 %v6062, 4294901760
        %v6172 = vsub.f32 %v6062, %v6171
        %v6173 = vand.u32 %v6172, 4294901760
        %v6174 = vsub.f32 %v6172, %v6173
        %v6175 = vand.u32 %v6174, 4294901760
        %6176 = vmatprep.subr.mxu0 %v6175
        %v6177 = vand.u32 %v6061, 4294901760
        %v6178 = vsub.f32 %v6061, %v6177
        %v6179 = vand.u32 %v6178, 4294901760
        %v6180 = vsub.f32 %v6178, %v6179
        %v6181 = vand.u32 %v6180, 4294901760
        %6182 = vmatpush1.msra.mxu0 %v6181
        %6183 = vmatprep.subr.mxu0 0.0
        %6184 = vmatpush2.msra.mxu0 0.0
        %6185 = vmatprep.subr.mxu0 0.0
        %6186 = vmatpush2.msra.mxu0 0.0
        %6187 = vmatprep.subr.mxu0 0.0
        %6188 = vmatpush2.msra.mxu0 0.0
        %6189 = vmatprep.subr.mxu0 0.0
        %6190 = vmatpush2.msra.mxu0 0.0
        %6191 = vmatprep.subr.mxu0 0.0
        %6192 = vmatpush2.msra.mxu0 0.0
        %6193 = vmatprep.subr.mxu0 0.0
        %6194 = vmatpush2.msra.mxu0 0.0
        %6195 = vmatprep.subr.mxu0 0.0
        %6196 = vmatpush2.msra.mxu0 0.0
        %6197 = vmatprep.subr.mxu0 0.0
        %6198 = vmatpush2.msra.mxu0 0.0
        %6199 = vmatprep.subr.mxu0 0.0
        %6200 = vmatpush2.msra.mxu0 0.0
        %6201 = vmatprep.subr.mxu0 0.0
        %6202 = vmatpush2.msra.mxu0 0.0
        %6203 = vmatprep.subr.mxu0 0.0
        %6204 = vmatpush2.msra.mxu0 0.0
        %6205 = vmatprep.subr.mxu0 0.0
        %6206 = vmatpush2.msra.mxu0 0.0
        %6207 = vmatprep.subr.mxu0 0.0
        %6208 = vmatpush2.msra.mxu0 0.0
        %6209 = vmatprep.subr.mxu0 0.0
        %6210 = vmatpush2.msra.mxu0 0.0
        %6211 = vmatprep.subr.mxu0 0.0
        %6212 = vmatpush2.msra.mxu0 0.0
        %6213 = vmatprep.subr.mxu0 0.0
        %6214 = vmatpush2.msra.mxu0 0.0
        %6215 = vmatprep.mubr.f32.mxu0 0.0
        %v6216 = vand.u32 %v1317, 4294901760
        %6217 = vmatmul.mubr.f32.gmra.mxu0 %v6216
        %v6218 = vpop.f32.mrf.mxu0
        %v6219 = vadd.f32 %v6137, %v6218
        %v6220 = vpop.f32.mrf.mxu0
        %v6221 = vadd.f32 %v6139, %v6220
        %6222 = vdwg.mxu0
        %6223 = vmatprep.subr.mxu0 0.0
        %6224 = vmatpush1.msra.mxu0 0.0
        %6225 = vmatprep.subr.mxu0 0.0
        %6226 = vmatpush1.msra.mxu0 0.0
        %6227 = vmatprep.subr.mxu0 0.0
        %6228 = vmatpush1.msra.mxu0 0.0
        %6229 = vmatprep.subr.mxu0 0.0
        %6230 = vmatpush1.msra.mxu0 0.0
        %6231 = vmatprep.subr.mxu0 0.0
        %6232 = vmatpush1.msra.mxu0 0.0
        %6233 = vmatprep.subr.mxu0 0.0
        %6234 = vmatpush1.msra.mxu0 0.0
        %6235 = vmatprep.subr.mxu0 0.0
        %6236 = vmatpush1.msra.mxu0 0.0
        %6237 = vmatprep.subr.mxu0 0.0
        %6238 = vmatpush1.msra.mxu0 0.0
        %6239 = vmatprep.subr.mxu0 0.0
        %6240 = vmatpush1.msra.mxu0 0.0
        %6241 = vmatprep.subr.mxu0 0.0
        %6242 = vmatpush1.msra.mxu0 0.0
        %6243 = vmatprep.subr.mxu0 0.0
        %6244 = vmatpush1.msra.mxu0 0.0
        %6245 = vmatprep.subr.mxu0 0.0
        %6246 = vmatpush1.msra.mxu0 0.0
        %6247 = vmatprep.subr.mxu0 0.0
        %6248 = vmatpush1.msra.mxu0 0.0
        %6249 = vmatprep.subr.mxu0 0.0
        %6250 = vmatpush1.msra.mxu0 0.0
        %6251 = vmatprep.subr.mxu0 0.0
        %6252 = vmatpush1.msra.mxu0 0.0
        %v6253 = vand.u32 %v6062, 4294901760
        %v6254 = vsub.f32 %v6062, %v6253
        %6255 = vmatprep.subr.mxu0 %v6254
        %v6256 = vand.u32 %v6061, 4294901760
        %v6257 = vsub.f32 %v6061, %v6256
        %6258 = vmatpush1.msra.mxu0 %v6257
        %6259 = vmatprep.subr.mxu0 0.0
        %6260 = vmatpush2.msra.mxu0 0.0
        %6261 = vmatprep.subr.mxu0 0.0
        %6262 = vmatpush2.msra.mxu0 0.0
        %6263 = vmatprep.subr.mxu0 0.0
        %6264 = vmatpush2.msra.mxu0 0.0
        %6265 = vmatprep.subr.mxu0 0.0
        %6266 = vmatpush2.msra.mxu0 0.0
        %6267 = vmatprep.subr.mxu0 0.0
        %6268 = vmatpush2.msra.mxu0 0.0
        %6269 = vmatprep.subr.mxu0 0.0
        %6270 = vmatpush2.msra.mxu0 0.0
        %6271 = vmatprep.subr.mxu0 0.0
        %6272 = vmatpush2.msra.mxu0 0.0
        %6273 = vmatprep.subr.mxu0 0.0
        %6274 = vmatpush2.msra.mxu0 0.0
        %6275 = vmatprep.subr.mxu0 0.0
        %6276 = vmatpush2.msra.mxu0 0.0
        %6277 = vmatprep.subr.mxu0 0.0
        %6278 = vmatpush2.msra.mxu0 0.0
        %6279 = vmatprep.subr.mxu0 0.0
        %6280 = vmatpush2.msra.mxu0 0.0
        %6281 = vmatprep.subr.mxu0 0.0
        %6282 = vmatpush2.msra.mxu0 0.0
        %6283 = vmatprep.subr.mxu0 0.0
        %6284 = vmatpush2.msra.mxu0 0.0
        %6285 = vmatprep.subr.mxu0 0.0
        %6286 = vmatpush2.msra.mxu0 0.0
        %6287 = vmatprep.subr.mxu0 0.0
        %6288 = vmatpush2.msra.mxu0 0.0
        %6289 = vmatprep.subr.mxu0 0.0
        %6290 = vmatpush2.msra.mxu0 0.0
        %6291 = vmatprep.mubr.f32.mxu0 0.0
        %v6292 = vand.u32 %v1317, 4294901760
        %v6293 = vsub.f32 %v1317, %v6292
        %6294 = vmatmul.mubr.f32.gmra.mxu0 %v6293
        %v6295 = vpop.f32.mrf.mxu0
        %v6296 = vadd.f32 %v6219, %v6295
        %v6297 = vpop.f32.mrf.mxu0
        %v6298 = vadd.f32 %v6221, %v6297
        %6299 = vdwg.mxu0
        %6300 = vmatprep.subr.mxu0 0.0
        %6301 = vmatpush1.msra.mxu0 0.0
        %6302 = vmatprep.subr.mxu0 0.0
        %6303 = vmatpush1.msra.mxu0 0.0
        %6304 = vmatprep.subr.mxu0 0.0
        %6305 = vmatpush1.msra.mxu0 0.0
        %6306 = vmatprep.subr.mxu0 0.0
        %6307 = vmatpush1.msra.mxu0 0.0
        %6308 = vmatprep.subr.mxu0 0.0
        %6309 = vmatpush1.msra.mxu0 0.0
        %6310 = vmatprep.subr.mxu0 0.0
        %6311 = vmatpush1.msra.mxu0 0.0
        %6312 = vmatprep.subr.mxu0 0.0
        %6313 = vmatpush1.msra.mxu0 0.0
        %6314 = vmatprep.subr.mxu0 0.0
        %6315 = vmatpush1.msra.mxu0 0.0
        %6316 = vmatprep.subr.mxu0 0.0
        %6317 = vmatpush1.msra.mxu0 0.0
        %6318 = vmatprep.subr.mxu0 0.0
        %6319 = vmatpush1.msra.mxu0 0.0
        %6320 = vmatprep.subr.mxu0 0.0
        %6321 = vmatpush1.msra.mxu0 0.0
        %6322 = vmatprep.subr.mxu0 0.0
        %6323 = vmatpush1.msra.mxu0 0.0
        %6324 = vmatprep.subr.mxu0 0.0
        %6325 = vmatpush1.msra.mxu0 0.0
        %6326 = vmatprep.subr.mxu0 0.0
        %6327 = vmatpush1.msra.mxu0 0.0
        %6328 = vmatprep.subr.mxu0 0.0
        %6329 = vmatpush1.msra.mxu0 0.0
        %v6330 = vand.u32 %v6062, 4294901760
        %6331 = vmatprep.subr.mxu0 %v6330
        %v6332 = vand.u32 %v6061, 4294901760
        %6333 = vmatpush1.msra.mxu0 %v6332
        %6334 = vmatprep.subr.mxu0 0.0
        %6335 = vmatpush2.msra.mxu0 0.0
        %6336 = vmatprep.subr.mxu0 0.0
        %6337 = vmatpush2.msra.mxu0 0.0
        %6338 = vmatprep.subr.mxu0 0.0
        %6339 = vmatpush2.msra.mxu0 0.0
        %6340 = vmatprep.subr.mxu0 0.0
        %6341 = vmatpush2.msra.mxu0 0.0
        %6342 = vmatprep.subr.mxu0 0.0
        %6343 = vmatpush2.msra.mxu0 0.0
        %6344 = vmatprep.subr.mxu0 0.0
        %6345 = vmatpush2.msra.mxu0 0.0
        %6346 = vmatprep.subr.mxu0 0.0
        %6347 = vmatpush2.msra.mxu0 0.0
        %6348 = vmatprep.subr.mxu0 0.0
        %6349 = vmatpush2.msra.mxu0 0.0
        %6350 = vmatprep.subr.mxu0 0.0
        %6351 = vmatpush2.msra.mxu0 0.0
        %6352 = vmatprep.subr.mxu0 0.0
        %6353 = vmatpush2.msra.mxu0 0.0
        %6354 = vmatprep.subr.mxu0 0.0
        %6355 = vmatpush2.msra.mxu0 0.0
        %6356 = vmatprep.subr.mxu0 0.0
        %6357 = vmatpush2.msra.mxu0 0.0
        %6358 = vmatprep.subr.mxu0 0.0
        %6359 = vmatpush2.msra.mxu0 0.0
        %6360 = vmatprep.subr.mxu0 0.0
        %6361 = vmatpush2.msra.mxu0 0.0
        %6362 = vmatprep.subr.mxu0 0.0
        %6363 = vmatpush2.msra.mxu0 0.0
        %6364 = vmatprep.subr.mxu0 0.0
        %6365 = vmatpush2.msra.mxu0 0.0
        %6366 = vmatprep.mubr.f32.mxu0 0.0
        %v6367 = vand.u32 %v1317, 4294901760
        %v6368 = vsub.f32 %v1317, %v6367
        %v6369 = vand.u32 %v6368, 4294901760
        %6370 = vmatmul.mubr.f32.gmra.mxu0 %v6369
        %v6371 = vpop.f32.mrf.mxu0
        %v6372 = vadd.f32 %v6296, %v6371
        %v6373 = vpop.f32.mrf.mxu0
        %v6374 = vadd.f32 %v6298, %v6373
        %6375 = vdwg.mxu0
        %6376 = vmatprep.subr.mxu0 0.0
        %6377 = vmatpush1.msra.mxu0 0.0
        %6378 = vmatprep.subr.mxu0 0.0
        %6379 = vmatpush1.msra.mxu0 0.0
        %6380 = vmatprep.subr.mxu0 0.0
        %6381 = vmatpush1.msra.mxu0 0.0
        %6382 = vmatprep.subr.mxu0 0.0
        %6383 = vmatpush1.msra.mxu0 0.0
        %6384 = vmatprep.subr.mxu0 0.0
        %6385 = vmatpush1.msra.mxu0 0.0
        %6386 = vmatprep.subr.mxu0 0.0
        %6387 = vmatpush1.msra.mxu0 0.0
        %6388 = vmatprep.subr.mxu0 0.0
        %6389 = vmatpush1.msra.mxu0 0.0
        %6390 = vmatprep.subr.mxu0 0.0
        %6391 = vmatpush1.msra.mxu0 0.0
        %6392 = vmatprep.subr.mxu0 0.0
        %6393 = vmatpush1.msra.mxu0 0.0
        %6394 = vmatprep.subr.mxu0 0.0
        %6395 = vmatpush1.msra.mxu0 0.0
        %6396 = vmatprep.subr.mxu0 0.0
        %6397 = vmatpush1.msra.mxu0 0.0
        %6398 = vmatprep.subr.mxu0 0.0
        %6399 = vmatpush1.msra.mxu0 0.0
        %6400 = vmatprep.subr.mxu0 0.0
        %6401 = vmatpush1.msra.mxu0 0.0
        %6402 = vmatprep.subr.mxu0 0.0
        %6403 = vmatpush1.msra.mxu0 0.0
        %6404 = vmatprep.subr.mxu0 0.0
        %6405 = vmatpush1.msra.mxu0 0.0
        %v6406 = vand.u32 %v6062, 4294901760
        %v6407 = vsub.f32 %v6062, %v6406
        %v6408 = vand.u32 %v6407, 4294901760
        %6409 = vmatprep.subr.mxu0 %v6408
        %v6410 = vand.u32 %v6061, 4294901760
        %v6411 = vsub.f32 %v6061, %v6410
        %v6412 = vand.u32 %v6411, 4294901760
        %6413 = vmatpush1.msra.mxu0 %v6412
        %6414 = vmatprep.subr.mxu0 0.0
        %6415 = vmatpush2.msra.mxu0 0.0
        %6416 = vmatprep.subr.mxu0 0.0
        %6417 = vmatpush2.msra.mxu0 0.0
        %6418 = vmatprep.subr.mxu0 0.0
        %6419 = vmatpush2.msra.mxu0 0.0
        %6420 = vmatprep.subr.mxu0 0.0
        %6421 = vmatpush2.msra.mxu0 0.0
        %6422 = vmatprep.subr.mxu0 0.0
        %6423 = vmatpush2.msra.mxu0 0.0
        %6424 = vmatprep.subr.mxu0 0.0
        %6425 = vmatpush2.msra.mxu0 0.0
        %6426 = vmatprep.subr.mxu0 0.0
        %6427 = vmatpush2.msra.mxu0 0.0
        %6428 = vmatprep.subr.mxu0 0.0
        %6429 = vmatpush2.msra.mxu0 0.0
        %6430 = vmatprep.subr.mxu0 0.0
        %6431 = vmatpush2.msra.mxu0 0.0
        %6432 = vmatprep.subr.mxu0 0.0
        %6433 = vmatpush2.msra.mxu0 0.0
        %6434 = vmatprep.subr.mxu0 0.0
        %6435 = vmatpush2.msra.mxu0 0.0
        %6436 = vmatprep.subr.mxu0 0.0
        %6437 = vmatpush2.msra.mxu0 0.0
        %6438 = vmatprep.subr.mxu0 0.0
        %6439 = vmatpush2.msra.mxu0 0.0
        %6440 = vmatprep.subr.mxu0 0.0
        %6441 = vmatpush2.msra.mxu0 0.0
        %6442 = vmatprep.subr.mxu0 0.0
        %6443 = vmatpush2.msra.mxu0 0.0
        %6444 = vmatprep.subr.mxu0 0.0
        %6445 = vmatpush2.msra.mxu0 0.0
        %6446 = vmatprep.mubr.f32.mxu0 0.0
        %v6447 = vand.u32 %v1317, 4294901760
        %6448 = vmatmul.mubr.f32.gmra.mxu0 %v6447
        %v6449 = vpop.f32.mrf.mxu0
        %v6450 = vadd.f32 %v6372, %v6449
        %v6451 = vpop.f32.mrf.mxu0
        %v6452 = vadd.f32 %v6374, %v6451
        %6453 = vdwg.mxu0
        %6454 = vmatprep.subr.mxu0 0.0
        %6455 = vmatpush1.msra.mxu0 0.0
        %6456 = vmatprep.subr.mxu0 0.0
        %6457 = vmatpush1.msra.mxu0 0.0
        %6458 = vmatprep.subr.mxu0 0.0
        %6459 = vmatpush1.msra.mxu0 0.0
        %6460 = vmatprep.subr.mxu0 0.0
        %6461 = vmatpush1.msra.mxu0 0.0
        %6462 = vmatprep.subr.mxu0 0.0
        %6463 = vmatpush1.msra.mxu0 0.0
        %6464 = vmatprep.subr.mxu0 0.0
        %6465 = vmatpush1.msra.mxu0 0.0
        %6466 = vmatprep.subr.mxu0 0.0
        %6467 = vmatpush1.msra.mxu0 0.0
        %6468 = vmatprep.subr.mxu0 0.0
        %6469 = vmatpush1.msra.mxu0 0.0
        %6470 = vmatprep.subr.mxu0 0.0
        %6471 = vmatpush1.msra.mxu0 0.0
        %6472 = vmatprep.subr.mxu0 0.0
        %6473 = vmatpush1.msra.mxu0 0.0
        %6474 = vmatprep.subr.mxu0 0.0
        %6475 = vmatpush1.msra.mxu0 0.0
        %6476 = vmatprep.subr.mxu0 0.0
        %6477 = vmatpush1.msra.mxu0 0.0
        %6478 = vmatprep.subr.mxu0 0.0
        %6479 = vmatpush1.msra.mxu0 0.0
        %6480 = vmatprep.subr.mxu0 0.0
        %6481 = vmatpush1.msra.mxu0 0.0
        %6482 = vmatprep.subr.mxu0 0.0
        %6483 = vmatpush1.msra.mxu0 0.0
        %v6484 = vand.u32 %v6062, 4294901760
        %6485 = vmatprep.subr.mxu0 %v6484
        %v6486 = vand.u32 %v6061, 4294901760
        %6487 = vmatpush1.msra.mxu0 %v6486
        %6488 = vmatprep.subr.mxu0 0.0
        %6489 = vmatpush2.msra.mxu0 0.0
        %6490 = vmatprep.subr.mxu0 0.0
        %6491 = vmatpush2.msra.mxu0 0.0
        %6492 = vmatprep.subr.mxu0 0.0
        %6493 = vmatpush2.msra.mxu0 0.0
        %6494 = vmatprep.subr.mxu0 0.0
        %6495 = vmatpush2.msra.mxu0 0.0
        %6496 = vmatprep.subr.mxu0 0.0
        %6497 = vmatpush2.msra.mxu0 0.0
        %6498 = vmatprep.subr.mxu0 0.0
        %6499 = vmatpush2.msra.mxu0 0.0
        %6500 = vmatprep.subr.mxu0 0.0
        %6501 = vmatpush2.msra.mxu0 0.0
        %6502 = vmatprep.subr.mxu0 0.0
        %6503 = vmatpush2.msra.mxu0 0.0
        %6504 = vmatprep.subr.mxu0 0.0
        %6505 = vmatpush2.msra.mxu0 0.0
        %6506 = vmatprep.subr.mxu0 0.0
        %6507 = vmatpush2.msra.mxu0 0.0
        %6508 = vmatprep.subr.mxu0 0.0
        %6509 = vmatpush2.msra.mxu0 0.0
        %6510 = vmatprep.subr.mxu0 0.0
        %6511 = vmatpush2.msra.mxu0 0.0
        %6512 = vmatprep.subr.mxu0 0.0
        %6513 = vmatpush2.msra.mxu0 0.0
        %6514 = vmatprep.subr.mxu0 0.0
        %6515 = vmatpush2.msra.mxu0 0.0
        %6516 = vmatprep.subr.mxu0 0.0
        %6517 = vmatpush2.msra.mxu0 0.0
        %6518 = vmatprep.subr.mxu0 0.0
        %6519 = vmatpush2.msra.mxu0 0.0
        %6520 = vmatprep.mubr.f32.mxu0 0.0
        %v6521 = vand.u32 %v1317, 4294901760
        %6522 = vmatmul.mubr.f32.gmra.mxu0 %v6521
        %v6523 = vpop.f32.mrf.mxu0
        %v6524 = vadd.f32 %v6450, %v6523
        %v6525 = vpop.f32.mrf.mxu0
        %v6526 = vadd.f32 %v6452, %v6525
        %6527 = vdwg.mxu0
        %v6528 = vmax.f32 %v6524, 0.0
        %v6529 = vmax.f32 %v6526, 0.0
        %s6530 = scalar_lea.vmem %s311, 80 [#allocation5]
        %6531 = vst [vmem:[%s6530] sm:$0xff] %v6528
        %6532 = vst [vmem:[%s6530 + $0x8] sm:$0xff] %v6529
        %s6533 = scalar_lea.vmem [#allocation2], 48
        %v6534 = vld [vmem:[%s6533] sm:$0xff]
        %s6535 = scalar_lea.vmem %s4, 48
        %v6536 = vld [vmem:[%s6535] sm:$0xff]
        %6538 = vset.pattern.permute.xlu0 0
        %6539 = vperm.xlu0 %6538, %v6536
        %v6540 = vpop.permute.xlu0 %6539
        %v6543 = vsel %vm840, %v6534, 0
        %6545 = vmatprep.subr.mxu0 0.0
        %6546 = vmatpush1.msra.mxu0 0.0
        %6547 = vmatprep.subr.mxu0 0.0
        %6548 = vmatpush1.msra.mxu0 0.0
        %6549 = vmatprep.subr.mxu0 0.0
        %6550 = vmatpush1.msra.mxu0 0.0
        %6551 = vmatprep.subr.mxu0 0.0
        %6552 = vmatpush1.msra.mxu0 0.0
        %6553 = vmatprep.subr.mxu0 0.0
        %6554 = vmatpush1.msra.mxu0 0.0
        %6555 = vmatprep.subr.mxu0 0.0
        %6556 = vmatpush1.msra.mxu0 0.0
        %6557 = vmatprep.subr.mxu0 0.0
        %6558 = vmatpush1.msra.mxu0 0.0
        %6559 = vmatprep.subr.mxu0 0.0
        %6560 = vmatpush1.msra.mxu0 0.0
        %6561 = vmatprep.subr.mxu0 0.0
        %6562 = vmatpush1.msra.mxu0 0.0
        %6563 = vmatprep.subr.mxu0 0.0
        %6564 = vmatpush1.msra.mxu0 0.0
        %6565 = vmatprep.subr.mxu0 0.0
        %6566 = vmatpush1.msra.mxu0 0.0
        %6567 = vmatprep.subr.mxu0 0.0
        %6568 = vmatpush1.msra.mxu0 0.0
        %6569 = vmatprep.subr.mxu0 0.0
        %6570 = vmatpush1.msra.mxu0 0.0
        %6571 = vmatprep.subr.mxu0 0.0
        %6572 = vmatpush1.msra.mxu0 0.0
        %6573 = vmatprep.subr.mxu0 0.0
        %6574 = vmatpush1.msra.mxu0 0.0
        %v6575 = vand.u32 %v830, 4294901760
        %6576 = vmatprep.subr.mxu0 %v6575
        %v6577 = vand.u32 %v829, 4294901760
        %6578 = vmatpush1.msra.mxu0 %v6577
        %6579 = vmatprep.subr.mxu0 0.0
        %6580 = vmatpush2.msra.mxu0 0.0
        %6581 = vmatprep.subr.mxu0 0.0
        %6582 = vmatpush2.msra.mxu0 0.0
        %6583 = vmatprep.subr.mxu0 0.0
        %6584 = vmatpush2.msra.mxu0 0.0
        %6585 = vmatprep.subr.mxu0 0.0
        %6586 = vmatpush2.msra.mxu0 0.0
        %6587 = vmatprep.subr.mxu0 0.0
        %6588 = vmatpush2.msra.mxu0 0.0
        %6589 = vmatprep.subr.mxu0 0.0
        %6590 = vmatpush2.msra.mxu0 0.0
        %6591 = vmatprep.subr.mxu0 0.0
        %6592 = vmatpush2.msra.mxu0 0.0
        %6593 = vmatprep.subr.mxu0 0.0
        %6594 = vmatpush2.msra.mxu0 0.0
        %6595 = vmatprep.subr.mxu0 0.0
        %6596 = vmatpush2.msra.mxu0 0.0
        %6597 = vmatprep.subr.mxu0 0.0
        %6598 = vmatpush2.msra.mxu0 0.0
        %6599 = vmatprep.subr.mxu0 0.0
        %6600 = vmatpush2.msra.mxu0 0.0
        %6601 = vmatprep.subr.mxu0 0.0
        %6602 = vmatpush2.msra.mxu0 0.0
        %6603 = vmatprep.subr.mxu0 0.0
        %6604 = vmatpush2.msra.mxu0 0.0
        %6605 = vmatprep.subr.mxu0 0.0
        %6606 = vmatpush2.msra.mxu0 0.0
        %6607 = vmatprep.subr.mxu0 0.0
        %6608 = vmatpush2.msra.mxu0 0.0
        %6609 = vmatprep.subr.mxu0 0.0
        %6610 = vmatpush2.msra.mxu0 0.0
        %6611 = vmatprep.mubr.f32.mxu0 0.0
        %v6612 = vand.u32 %v6543, 4294901760
        %v6613 = vsub.f32 %v6543, %v6612
        %v6614 = vand.u32 %v6613, 4294901760
        %v6615 = vsub.f32 %v6613, %v6614
        %v6616 = vand.u32 %v6615, 4294901760
        %6617 = vmatmul.mubr.f32.gmra.mxu0 %v6616
        %v6618 = vpop.f32.mrf.mxu0
        %v6619 = vadd.f32 %v6540, %v6618
        %v6620 = vpop.f32.mrf.mxu0
        %v6621 = vadd.f32 %v6540, %v6620
        %6622 = vdwg.mxu0
        %6623 = vmatprep.subr.mxu0 0.0
        %6624 = vmatpush1.msra.mxu0 0.0
        %6625 = vmatprep.subr.mxu0 0.0
        %6626 = vmatpush1.msra.mxu0 0.0
        %6627 = vmatprep.subr.mxu0 0.0
        %6628 = vmatpush1.msra.mxu0 0.0
        %6629 = vmatprep.subr.mxu0 0.0
        %6630 = vmatpush1.msra.mxu0 0.0
        %6631 = vmatprep.subr.mxu0 0.0
        %6632 = vmatpush1.msra.mxu0 0.0
        %6633 = vmatprep.subr.mxu0 0.0
        %6634 = vmatpush1.msra.mxu0 0.0
        %6635 = vmatprep.subr.mxu0 0.0
        %6636 = vmatpush1.msra.mxu0 0.0
        %6637 = vmatprep.subr.mxu0 0.0
        %6638 = vmatpush1.msra.mxu0 0.0
        %6639 = vmatprep.subr.mxu0 0.0
        %6640 = vmatpush1.msra.mxu0 0.0
        %6641 = vmatprep.subr.mxu0 0.0
        %6642 = vmatpush1.msra.mxu0 0.0
        %6643 = vmatprep.subr.mxu0 0.0
        %6644 = vmatpush1.msra.mxu0 0.0
        %6645 = vmatprep.subr.mxu0 0.0
        %6646 = vmatpush1.msra.mxu0 0.0
        %6647 = vmatprep.subr.mxu0 0.0
        %6648 = vmatpush1.msra.mxu0 0.0
        %6649 = vmatprep.subr.mxu0 0.0
        %6650 = vmatpush1.msra.mxu0 0.0
        %6651 = vmatprep.subr.mxu0 0.0
        %6652 = vmatpush1.msra.mxu0 0.0
        %v6653 = vand.u32 %v830, 4294901760
        %v6654 = vsub.f32 %v830, %v6653
        %v6655 = vand.u32 %v6654, 4294901760
        %v6656 = vsub.f32 %v6654, %v6655
        %v6657 = vand.u32 %v6656, 4294901760
        %6658 = vmatprep.subr.mxu0 %v6657
        %v6659 = vand.u32 %v829, 4294901760
        %v6660 = vsub.f32 %v829, %v6659
        %v6661 = vand.u32 %v6660, 4294901760
        %v6662 = vsub.f32 %v6660, %v6661
        %v6663 = vand.u32 %v6662, 4294901760
        %6664 = vmatpush1.msra.mxu0 %v6663
        %6665 = vmatprep.subr.mxu0 0.0
        %6666 = vmatpush2.msra.mxu0 0.0
        %6667 = vmatprep.subr.mxu0 0.0
        %6668 = vmatpush2.msra.mxu0 0.0
        %6669 = vmatprep.subr.mxu0 0.0
        %6670 = vmatpush2.msra.mxu0 0.0
        %6671 = vmatprep.subr.mxu0 0.0
        %6672 = vmatpush2.msra.mxu0 0.0
        %6673 = vmatprep.subr.mxu0 0.0
        %6674 = vmatpush2.msra.mxu0 0.0
        %6675 = vmatprep.subr.mxu0 0.0
        %6676 = vmatpush2.msra.mxu0 0.0
        %6677 = vmatprep.subr.mxu0 0.0
        %6678 = vmatpush2.msra.mxu0 0.0
        %6679 = vmatprep.subr.mxu0 0.0
        %6680 = vmatpush2.msra.mxu0 0.0
        %6681 = vmatprep.subr.mxu0 0.0
        %6682 = vmatpush2.msra.mxu0 0.0
        %6683 = vmatprep.subr.mxu0 0.0
        %6684 = vmatpush2.msra.mxu0 0.0
        %6685 = vmatprep.subr.mxu0 0.0
        %6686 = vmatpush2.msra.mxu0 0.0
        %6687 = vmatprep.subr.mxu0 0.0
        %6688 = vmatpush2.msra.mxu0 0.0
        %6689 = vmatprep.subr.mxu0 0.0
        %6690 = vmatpush2.msra.mxu0 0.0
        %6691 = vmatprep.subr.mxu0 0.0
        %6692 = vmatpush2.msra.mxu0 0.0
        %6693 = vmatprep.subr.mxu0 0.0
        %6694 = vmatpush2.msra.mxu0 0.0
        %6695 = vmatprep.subr.mxu0 0.0
        %6696 = vmatpush2.msra.mxu0 0.0
        %6697 = vmatprep.mubr.f32.mxu0 0.0
        %v6698 = vand.u32 %v6543, 4294901760
        %6699 = vmatmul.mubr.f32.gmra.mxu0 %v6698
        %v6700 = vpop.f32.mrf.mxu0
        %v6701 = vadd.f32 %v6619, %v6700
        %v6702 = vpop.f32.mrf.mxu0
        %v6703 = vadd.f32 %v6621, %v6702
        %6704 = vdwg.mxu0
        %6705 = vmatprep.subr.mxu0 0.0
        %6706 = vmatpush1.msra.mxu0 0.0
        %6707 = vmatprep.subr.mxu0 0.0
        %6708 = vmatpush1.msra.mxu0 0.0
        %6709 = vmatprep.subr.mxu0 0.0
        %6710 = vmatpush1.msra.mxu0 0.0
        %6711 = vmatprep.subr.mxu0 0.0
        %6712 = vmatpush1.msra.mxu0 0.0
        %6713 = vmatprep.subr.mxu0 0.0
        %6714 = vmatpush1.msra.mxu0 0.0
        %6715 = vmatprep.subr.mxu0 0.0
        %6716 = vmatpush1.msra.mxu0 0.0
        %6717 = vmatprep.subr.mxu0 0.0
        %6718 = vmatpush1.msra.mxu0 0.0
        %6719 = vmatprep.subr.mxu0 0.0
        %6720 = vmatpush1.msra.mxu0 0.0
        %6721 = vmatprep.subr.mxu0 0.0
        %6722 = vmatpush1.msra.mxu0 0.0
        %6723 = vmatprep.subr.mxu0 0.0
        %6724 = vmatpush1.msra.mxu0 0.0
        %6725 = vmatprep.subr.mxu0 0.0
        %6726 = vmatpush1.msra.mxu0 0.0
        %6727 = vmatprep.subr.mxu0 0.0
        %6728 = vmatpush1.msra.mxu0 0.0
        %6729 = vmatprep.subr.mxu0 0.0
        %6730 = vmatpush1.msra.mxu0 0.0
        %6731 = vmatprep.subr.mxu0 0.0
        %6732 = vmatpush1.msra.mxu0 0.0
        %6733 = vmatprep.subr.mxu0 0.0
        %6734 = vmatpush1.msra.mxu0 0.0
        %v6735 = vand.u32 %v830, 4294901760
        %v6736 = vsub.f32 %v830, %v6735
        %6737 = vmatprep.subr.mxu0 %v6736
        %v6738 = vand.u32 %v829, 4294901760
        %v6739 = vsub.f32 %v829, %v6738
        %6740 = vmatpush1.msra.mxu0 %v6739
        %6741 = vmatprep.subr.mxu0 0.0
        %6742 = vmatpush2.msra.mxu0 0.0
        %6743 = vmatprep.subr.mxu0 0.0
        %6744 = vmatpush2.msra.mxu0 0.0
        %6745 = vmatprep.subr.mxu0 0.0
        %6746 = vmatpush2.msra.mxu0 0.0
        %6747 = vmatprep.subr.mxu0 0.0
        %6748 = vmatpush2.msra.mxu0 0.0
        %6749 = vmatprep.subr.mxu0 0.0
        %6750 = vmatpush2.msra.mxu0 0.0
        %6751 = vmatprep.subr.mxu0 0.0
        %6752 = vmatpush2.msra.mxu0 0.0
        %6753 = vmatprep.subr.mxu0 0.0
        %6754 = vmatpush2.msra.mxu0 0.0
        %6755 = vmatprep.subr.mxu0 0.0
        %6756 = vmatpush2.msra.mxu0 0.0
        %6757 = vmatprep.subr.mxu0 0.0
        %6758 = vmatpush2.msra.mxu0 0.0
        %6759 = vmatprep.subr.mxu0 0.0
        %6760 = vmatpush2.msra.mxu0 0.0
        %6761 = vmatprep.subr.mxu0 0.0
        %6762 = vmatpush2.msra.mxu0 0.0
        %6763 = vmatprep.subr.mxu0 0.0
        %6764 = vmatpush2.msra.mxu0 0.0
        %6765 = vmatprep.subr.mxu0 0.0
        %6766 = vmatpush2.msra.mxu0 0.0
        %6767 = vmatprep.subr.mxu0 0.0
        %6768 = vmatpush2.msra.mxu0 0.0
        %6769 = vmatprep.subr.mxu0 0.0
        %6770 = vmatpush2.msra.mxu0 0.0
        %6771 = vmatprep.subr.mxu0 0.0
        %6772 = vmatpush2.msra.mxu0 0.0
        %6773 = vmatprep.mubr.f32.mxu0 0.0
        %v6774 = vand.u32 %v6543, 4294901760
        %v6775 = vsub.f32 %v6543, %v6774
        %6776 = vmatmul.mubr.f32.gmra.mxu0 %v6775
        %v6777 = vpop.f32.mrf.mxu0
        %v6778 = vadd.f32 %v6701, %v6777
        %v6779 = vpop.f32.mrf.mxu0
        %v6780 = vadd.f32 %v6703, %v6779
        %6781 = vdwg.mxu0
        %6782 = vmatprep.subr.mxu0 0.0
        %6783 = vmatpush1.msra.mxu0 0.0
        %6784 = vmatprep.subr.mxu0 0.0
        %6785 = vmatpush1.msra.mxu0 0.0
        %6786 = vmatprep.subr.mxu0 0.0
        %6787 = vmatpush1.msra.mxu0 0.0
        %6788 = vmatprep.subr.mxu0 0.0
        %6789 = vmatpush1.msra.mxu0 0.0
        %6790 = vmatprep.subr.mxu0 0.0
        %6791 = vmatpush1.msra.mxu0 0.0
        %6792 = vmatprep.subr.mxu0 0.0
        %6793 = vmatpush1.msra.mxu0 0.0
        %6794 = vmatprep.subr.mxu0 0.0
        %6795 = vmatpush1.msra.mxu0 0.0
        %6796 = vmatprep.subr.mxu0 0.0
        %6797 = vmatpush1.msra.mxu0 0.0
        %6798 = vmatprep.subr.mxu0 0.0
        %6799 = vmatpush1.msra.mxu0 0.0
        %6800 = vmatprep.subr.mxu0 0.0
        %6801 = vmatpush1.msra.mxu0 0.0
        %6802 = vmatprep.subr.mxu0 0.0
        %6803 = vmatpush1.msra.mxu0 0.0
        %6804 = vmatprep.subr.mxu0 0.0
        %6805 = vmatpush1.msra.mxu0 0.0
        %6806 = vmatprep.subr.mxu0 0.0
        %6807 = vmatpush1.msra.mxu0 0.0
        %6808 = vmatprep.subr.mxu0 0.0
        %6809 = vmatpush1.msra.mxu0 0.0
        %6810 = vmatprep.subr.mxu0 0.0
        %6811 = vmatpush1.msra.mxu0 0.0
        %v6812 = vand.u32 %v830, 4294901760
        %6813 = vmatprep.subr.mxu0 %v6812
        %v6814 = vand.u32 %v829, 4294901760
        %6815 = vmatpush1.msra.mxu0 %v6814
        %6816 = vmatprep.subr.mxu0 0.0
        %6817 = vmatpush2.msra.mxu0 0.0
        %6818 = vmatprep.subr.mxu0 0.0
        %6819 = vmatpush2.msra.mxu0 0.0
        %6820 = vmatprep.subr.mxu0 0.0
        %6821 = vmatpush2.msra.mxu0 0.0
        %6822 = vmatprep.subr.mxu0 0.0
        %6823 = vmatpush2.msra.mxu0 0.0
        %6824 = vmatprep.subr.mxu0 0.0
        %6825 = vmatpush2.msra.mxu0 0.0
        %6826 = vmatprep.subr.mxu0 0.0
        %6827 = vmatpush2.msra.mxu0 0.0
        %6828 = vmatprep.subr.mxu0 0.0
        %6829 = vmatpush2.msra.mxu0 0.0
        %6830 = vmatprep.subr.mxu0 0.0
        %6831 = vmatpush2.msra.mxu0 0.0
        %6832 = vmatprep.subr.mxu0 0.0
        %6833 = vmatpush2.msra.mxu0 0.0
        %6834 = vmatprep.subr.mxu0 0.0
        %6835 = vmatpush2.msra.mxu0 0.0
        %6836 = vmatprep.subr.mxu0 0.0
        %6837 = vmatpush2.msra.mxu0 0.0
        %6838 = vmatprep.subr.mxu0 0.0
        %6839 = vmatpush2.msra.mxu0 0.0
        %6840 = vmatprep.subr.mxu0 0.0
        %6841 = vmatpush2.msra.mxu0 0.0
        %6842 = vmatprep.subr.mxu0 0.0
        %6843 = vmatpush2.msra.mxu0 0.0
        %6844 = vmatprep.subr.mxu0 0.0
        %6845 = vmatpush2.msra.mxu0 0.0
        %6846 = vmatprep.subr.mxu0 0.0
        %6847 = vmatpush2.msra.mxu0 0.0
        %6848 = vmatprep.mubr.f32.mxu0 0.0
        %v6849 = vand.u32 %v6543, 4294901760
        %v6850 = vsub.f32 %v6543, %v6849
        %v6851 = vand.u32 %v6850, 4294901760
        %6852 = vmatmul.mubr.f32.gmra.mxu0 %v6851
        %v6853 = vpop.f32.mrf.mxu0
        %v6854 = vadd.f32 %v6778, %v6853
        %v6855 = vpop.f32.mrf.mxu0
        %v6856 = vadd.f32 %v6780, %v6855
        %6857 = vdwg.mxu0
        %6858 = vmatprep.subr.mxu0 0.0
        %6859 = vmatpush1.msra.mxu0 0.0
        %6860 = vmatprep.subr.mxu0 0.0
        %6861 = vmatpush1.msra.mxu0 0.0
        %6862 = vmatprep.subr.mxu0 0.0
        %6863 = vmatpush1.msra.mxu0 0.0
        %6864 = vmatprep.subr.mxu0 0.0
        %6865 = vmatpush1.msra.mxu0 0.0
        %6866 = vmatprep.subr.mxu0 0.0
        %6867 = vmatpush1.msra.mxu0 0.0
        %6868 = vmatprep.subr.mxu0 0.0
        %6869 = vmatpush1.msra.mxu0 0.0
        %6870 = vmatprep.subr.mxu0 0.0
        %6871 = vmatpush1.msra.mxu0 0.0
        %6872 = vmatprep.subr.mxu0 0.0
        %6873 = vmatpush1.msra.mxu0 0.0
        %6874 = vmatprep.subr.mxu0 0.0
        %6875 = vmatpush1.msra.mxu0 0.0
        %6876 = vmatprep.subr.mxu0 0.0
        %6877 = vmatpush1.msra.mxu0 0.0
        %6878 = vmatprep.subr.mxu0 0.0
        %6879 = vmatpush1.msra.mxu0 0.0
        %6880 = vmatprep.subr.mxu0 0.0
        %6881 = vmatpush1.msra.mxu0 0.0
        %6882 = vmatprep.subr.mxu0 0.0
        %6883 = vmatpush1.msra.mxu0 0.0
        %6884 = vmatprep.subr.mxu0 0.0
        %6885 = vmatpush1.msra.mxu0 0.0
        %6886 = vmatprep.subr.mxu0 0.0
        %6887 = vmatpush1.msra.mxu0 0.0
        %v6888 = vand.u32 %v830, 4294901760
        %v6889 = vsub.f32 %v830, %v6888
        %v6890 = vand.u32 %v6889, 4294901760
        %6891 = vmatprep.subr.mxu0 %v6890
        %v6892 = vand.u32 %v829, 4294901760
        %v6893 = vsub.f32 %v829, %v6892
        %v6894 = vand.u32 %v6893, 4294901760
        %6895 = vmatpush1.msra.mxu0 %v6894
        %6896 = vmatprep.subr.mxu0 0.0
        %6897 = vmatpush2.msra.mxu0 0.0
        %6898 = vmatprep.subr.mxu0 0.0
        %6899 = vmatpush2.msra.mxu0 0.0
        %6900 = vmatprep.subr.mxu0 0.0
        %6901 = vmatpush2.msra.mxu0 0.0
        %6902 = vmatprep.subr.mxu0 0.0
        %6903 = vmatpush2.msra.mxu0 0.0
        %6904 = vmatprep.subr.mxu0 0.0
        %6905 = vmatpush2.msra.mxu0 0.0
        %6906 = vmatprep.subr.mxu0 0.0
        %6907 = vmatpush2.msra.mxu0 0.0
        %6908 = vmatprep.subr.mxu0 0.0
        %6909 = vmatpush2.msra.mxu0 0.0
        %6910 = vmatprep.subr.mxu0 0.0
        %6911 = vmatpush2.msra.mxu0 0.0
        %6912 = vmatprep.subr.mxu0 0.0
        %6913 = vmatpush2.msra.mxu0 0.0
        %6914 = vmatprep.subr.mxu0 0.0
        %6915 = vmatpush2.msra.mxu0 0.0
        %6916 = vmatprep.subr.mxu0 0.0
        %6917 = vmatpush2.msra.mxu0 0.0
        %6918 = vmatprep.subr.mxu0 0.0
        %6919 = vmatpush2.msra.mxu0 0.0
        %6920 = vmatprep.subr.mxu0 0.0
        %6921 = vmatpush2.msra.mxu0 0.0
        %6922 = vmatprep.subr.mxu0 0.0
        %6923 = vmatpush2.msra.mxu0 0.0
        %6924 = vmatprep.subr.mxu0 0.0
        %6925 = vmatpush2.msra.mxu0 0.0
        %6926 = vmatprep.subr.mxu0 0.0
        %6927 = vmatpush2.msra.mxu0 0.0
        %6928 = vmatprep.mubr.f32.mxu0 0.0
        %v6929 = vand.u32 %v6543, 4294901760
        %6930 = vmatmul.mubr.f32.gmra.mxu0 %v6929
        %v6931 = vpop.f32.mrf.mxu0
        %v6932 = vadd.f32 %v6854, %v6931
        %v6933 = vpop.f32.mrf.mxu0
        %v6934 = vadd.f32 %v6856, %v6933
        %6935 = vdwg.mxu0
        %6936 = vmatprep.subr.mxu0 0.0
        %6937 = vmatpush1.msra.mxu0 0.0
        %6938 = vmatprep.subr.mxu0 0.0
        %6939 = vmatpush1.msra.mxu0 0.0
        %6940 = vmatprep.subr.mxu0 0.0
        %6941 = vmatpush1.msra.mxu0 0.0
        %6942 = vmatprep.subr.mxu0 0.0
        %6943 = vmatpush1.msra.mxu0 0.0
        %6944 = vmatprep.subr.mxu0 0.0
        %6945 = vmatpush1.msra.mxu0 0.0
        %6946 = vmatprep.subr.mxu0 0.0
        %6947 = vmatpush1.msra.mxu0 0.0
        %6948 = vmatprep.subr.mxu0 0.0
        %6949 = vmatpush1.msra.mxu0 0.0
        %6950 = vmatprep.subr.mxu0 0.0
        %6951 = vmatpush1.msra.mxu0 0.0
        %6952 = vmatprep.subr.mxu0 0.0
        %6953 = vmatpush1.msra.mxu0 0.0
        %6954 = vmatprep.subr.mxu0 0.0
        %6955 = vmatpush1.msra.mxu0 0.0
        %6956 = vmatprep.subr.mxu0 0.0
        %6957 = vmatpush1.msra.mxu0 0.0
        %6958 = vmatprep.subr.mxu0 0.0
        %6959 = vmatpush1.msra.mxu0 0.0
        %6960 = vmatprep.subr.mxu0 0.0
        %6961 = vmatpush1.msra.mxu0 0.0
        %6962 = vmatprep.subr.mxu0 0.0
        %6963 = vmatpush1.msra.mxu0 0.0
        %6964 = vmatprep.subr.mxu0 0.0
        %6965 = vmatpush1.msra.mxu0 0.0
        %v6966 = vand.u32 %v830, 4294901760
        %6967 = vmatprep.subr.mxu0 %v6966
        %v6968 = vand.u32 %v829, 4294901760
        %6969 = vmatpush1.msra.mxu0 %v6968
        %6970 = vmatprep.subr.mxu0 0.0
        %6971 = vmatpush2.msra.mxu0 0.0
        %6972 = vmatprep.subr.mxu0 0.0
        %6973 = vmatpush2.msra.mxu0 0.0
        %6974 = vmatprep.subr.mxu0 0.0
        %6975 = vmatpush2.msra.mxu0 0.0
        %6976 = vmatprep.subr.mxu0 0.0
        %6977 = vmatpush2.msra.mxu0 0.0
        %6978 = vmatprep.subr.mxu0 0.0
        %6979 = vmatpush2.msra.mxu0 0.0
        %6980 = vmatprep.subr.mxu0 0.0
        %6981 = vmatpush2.msra.mxu0 0.0
        %6982 = vmatprep.subr.mxu0 0.0
        %6983 = vmatpush2.msra.mxu0 0.0
        %6984 = vmatprep.subr.mxu0 0.0
        %6985 = vmatpush2.msra.mxu0 0.0
        %6986 = vmatprep.subr.mxu0 0.0
        %6987 = vmatpush2.msra.mxu0 0.0
        %6988 = vmatprep.subr.mxu0 0.0
        %6989 = vmatpush2.msra.mxu0 0.0
        %6990 = vmatprep.subr.mxu0 0.0
        %6991 = vmatpush2.msra.mxu0 0.0
        %6992 = vmatprep.subr.mxu0 0.0
        %6993 = vmatpush2.msra.mxu0 0.0
        %6994 = vmatprep.subr.mxu0 0.0
        %6995 = vmatpush2.msra.mxu0 0.0
        %6996 = vmatprep.subr.mxu0 0.0
        %6997 = vmatpush2.msra.mxu0 0.0
        %6998 = vmatprep.subr.mxu0 0.0
        %6999 = vmatpush2.msra.mxu0 0.0
        %7000 = vmatprep.subr.mxu0 0.0
        %7001 = vmatpush2.msra.mxu0 0.0
        %7002 = vmatprep.mubr.f32.mxu0 0.0
        %v7003 = vand.u32 %v6543, 4294901760
        %7004 = vmatmul.mubr.f32.gmra.mxu0 %v7003
        %v7005 = vpop.f32.mrf.mxu0
        %v7006 = vadd.f32 %v6932, %v7005
        %v7007 = vpop.f32.mrf.mxu0
        %v7008 = vadd.f32 %v6934, %v7007
        %7009 = vdwg.mxu0
        %v7010 = vmax.f32 %v7006, 0.0
        %v7011 = vmax.f32 %v7008, 0.0
        %7012 = vmatprep.subr.mxu0 0.0
        %7013 = vmatpush1.msra.mxu0 0.0
        %7014 = vmatprep.subr.mxu0 0.0
        %7015 = vmatpush1.msra.mxu0 0.0
        %7016 = vmatprep.subr.mxu0 0.0
        %7017 = vmatpush1.msra.mxu0 0.0
        %7018 = vmatprep.subr.mxu0 0.0
        %7019 = vmatpush1.msra.mxu0 0.0
        %7020 = vmatprep.subr.mxu0 0.0
        %7021 = vmatpush1.msra.mxu0 0.0
        %7022 = vmatprep.subr.mxu0 0.0
        %7023 = vmatpush1.msra.mxu0 0.0
        %7024 = vmatprep.subr.mxu0 0.0
        %7025 = vmatpush1.msra.mxu0 0.0
        %7026 = vmatprep.subr.mxu0 0.0
        %7027 = vmatpush1.msra.mxu0 0.0
        %7028 = vmatprep.subr.mxu0 0.0
        %7029 = vmatpush1.msra.mxu0 0.0
        %7030 = vmatprep.subr.mxu0 0.0
        %7031 = vmatpush1.msra.mxu0 0.0
        %7032 = vmatprep.subr.mxu0 0.0
        %7033 = vmatpush1.msra.mxu0 0.0
        %7034 = vmatprep.subr.mxu0 0.0
        %7035 = vmatpush1.msra.mxu0 0.0
        %7036 = vmatprep.subr.mxu0 0.0
        %7037 = vmatpush1.msra.mxu0 0.0
        %7038 = vmatprep.subr.mxu0 0.0
        %7039 = vmatpush1.msra.mxu0 0.0
        %7040 = vmatprep.subr.mxu0 0.0
        %7041 = vmatpush1.msra.mxu0 0.0
        %v7042 = vand.u32 %v7011, 4294901760
        %7043 = vmatprep.subr.mxu0 %v7042
        %v7044 = vand.u32 %v7010, 4294901760
        %7045 = vmatpush1.msra.mxu0 %v7044
        %7046 = vmatprep.subr.mxu0 0.0
        %7047 = vmatpush2.msra.mxu0 0.0
        %7048 = vmatprep.subr.mxu0 0.0
        %7049 = vmatpush2.msra.mxu0 0.0
        %7050 = vmatprep.subr.mxu0 0.0
        %7051 = vmatpush2.msra.mxu0 0.0
        %7052 = vmatprep.subr.mxu0 0.0
        %7053 = vmatpush2.msra.mxu0 0.0
        %7054 = vmatprep.subr.mxu0 0.0
        %7055 = vmatpush2.msra.mxu0 0.0
        %7056 = vmatprep.subr.mxu0 0.0
        %7057 = vmatpush2.msra.mxu0 0.0
        %7058 = vmatprep.subr.mxu0 0.0
        %7059 = vmatpush2.msra.mxu0 0.0
        %7060 = vmatprep.subr.mxu0 0.0
        %7061 = vmatpush2.msra.mxu0 0.0
        %7062 = vmatprep.subr.mxu0 0.0
        %7063 = vmatpush2.msra.mxu0 0.0
        %7064 = vmatprep.subr.mxu0 0.0
        %7065 = vmatpush2.msra.mxu0 0.0
        %7066 = vmatprep.subr.mxu0 0.0
        %7067 = vmatpush2.msra.mxu0 0.0
        %7068 = vmatprep.subr.mxu0 0.0
        %7069 = vmatpush2.msra.mxu0 0.0
        %7070 = vmatprep.subr.mxu0 0.0
        %7071 = vmatpush2.msra.mxu0 0.0
        %7072 = vmatprep.subr.mxu0 0.0
        %7073 = vmatpush2.msra.mxu0 0.0
        %7074 = vmatprep.subr.mxu0 0.0
        %7075 = vmatpush2.msra.mxu0 0.0
        %7076 = vmatprep.subr.mxu0 0.0
        %7077 = vmatpush2.msra.mxu0 0.0
        %7078 = vmatprep.mubr.f32.mxu0 0.0
        %v7079 = vand.u32 %v1317, 4294901760
        %v7080 = vsub.f32 %v1317, %v7079
        %v7081 = vand.u32 %v7080, 4294901760
        %v7082 = vsub.f32 %v7080, %v7081
        %v7083 = vand.u32 %v7082, 4294901760
        %7084 = vmatmul.mubr.f32.gmra.mxu0 %v7083
        %v7085 = vpop.f32.mrf.mxu0
        %v7086 = vadd.f32 %v1314, %v7085
        %v7087 = vpop.f32.mrf.mxu0
        %v7088 = vadd.f32 %v1314, %v7087
        %7089 = vdwg.mxu0
        %7090 = vmatprep.subr.mxu0 0.0
        %7091 = vmatpush1.msra.mxu0 0.0
        %7092 = vmatprep.subr.mxu0 0.0
        %7093 = vmatpush1.msra.mxu0 0.0
        %7094 = vmatprep.subr.mxu0 0.0
        %7095 = vmatpush1.msra.mxu0 0.0
        %7096 = vmatprep.subr.mxu0 0.0
        %7097 = vmatpush1.msra.mxu0 0.0
        %7098 = vmatprep.subr.mxu0 0.0
        %7099 = vmatpush1.msra.mxu0 0.0
        %7100 = vmatprep.subr.mxu0 0.0
        %7101 = vmatpush1.msra.mxu0 0.0
        %7102 = vmatprep.subr.mxu0 0.0
        %7103 = vmatpush1.msra.mxu0 0.0
        %7104 = vmatprep.subr.mxu0 0.0
        %7105 = vmatpush1.msra.mxu0 0.0
        %7106 = vmatprep.subr.mxu0 0.0
        %7107 = vmatpush1.msra.mxu0 0.0
        %7108 = vmatprep.subr.mxu0 0.0
        %7109 = vmatpush1.msra.mxu0 0.0
        %7110 = vmatprep.subr.mxu0 0.0
        %7111 = vmatpush1.msra.mxu0 0.0
        %7112 = vmatprep.subr.mxu0 0.0
        %7113 = vmatpush1.msra.mxu0 0.0
        %7114 = vmatprep.subr.mxu0 0.0
        %7115 = vmatpush1.msra.mxu0 0.0
        %7116 = vmatprep.subr.mxu0 0.0
        %7117 = vmatpush1.msra.mxu0 0.0
        %7118 = vmatprep.subr.mxu0 0.0
        %7119 = vmatpush1.msra.mxu0 0.0
        %v7120 = vand.u32 %v7011, 4294901760
        %v7121 = vsub.f32 %v7011, %v7120
        %v7122 = vand.u32 %v7121, 4294901760
        %v7123 = vsub.f32 %v7121, %v7122
        %v7124 = vand.u32 %v7123, 4294901760
        %7125 = vmatprep.subr.mxu0 %v7124
        %v7126 = vand.u32 %v7010, 4294901760
        %v7127 = vsub.f32 %v7010, %v7126
        %v7128 = vand.u32 %v7127, 4294901760
        %v7129 = vsub.f32 %v7127, %v7128
        %v7130 = vand.u32 %v7129, 4294901760
        %7131 = vmatpush1.msra.mxu0 %v7130
        %7132 = vmatprep.subr.mxu0 0.0
        %7133 = vmatpush2.msra.mxu0 0.0
        %7134 = vmatprep.subr.mxu0 0.0
        %7135 = vmatpush2.msra.mxu0 0.0
        %7136 = vmatprep.subr.mxu0 0.0
        %7137 = vmatpush2.msra.mxu0 0.0
        %7138 = vmatprep.subr.mxu0 0.0
        %7139 = vmatpush2.msra.mxu0 0.0
        %7140 = vmatprep.subr.mxu0 0.0
        %7141 = vmatpush2.msra.mxu0 0.0
        %7142 = vmatprep.subr.mxu0 0.0
        %7143 = vmatpush2.msra.mxu0 0.0
        %7144 = vmatprep.subr.mxu0 0.0
        %7145 = vmatpush2.msra.mxu0 0.0
        %7146 = vmatprep.subr.mxu0 0.0
        %7147 = vmatpush2.msra.mxu0 0.0
        %7148 = vmatprep.subr.mxu0 0.0
        %7149 = vmatpush2.msra.mxu0 0.0
        %7150 = vmatprep.subr.mxu0 0.0
        %7151 = vmatpush2.msra.mxu0 0.0
        %7152 = vmatprep.subr.mxu0 0.0
        %7153 = vmatpush2.msra.mxu0 0.0
        %7154 = vmatprep.subr.mxu0 0.0
        %7155 = vmatpush2.msra.mxu0 0.0
        %7156 = vmatprep.subr.mxu0 0.0
        %7157 = vmatpush2.msra.mxu0 0.0
        %7158 = vmatprep.subr.mxu0 0.0
        %7159 = vmatpush2.msra.mxu0 0.0
        %7160 = vmatprep.subr.mxu0 0.0
        %7161 = vmatpush2.msra.mxu0 0.0
        %7162 = vmatprep.subr.mxu0 0.0
        %7163 = vmatpush2.msra.mxu0 0.0
        %7164 = vmatprep.mubr.f32.mxu0 0.0
        %v7165 = vand.u32 %v1317, 4294901760
        %7166 = vmatmul.mubr.f32.gmra.mxu0 %v7165
        %v7167 = vpop.f32.mrf.mxu0
        %v7168 = vadd.f32 %v7086, %v7167
        %v7169 = vpop.f32.mrf.mxu0
        %v7170 = vadd.f32 %v7088, %v7169
        %7171 = vdwg.mxu0
        %7172 = vmatprep.subr.mxu0 0.0
        %7173 = vmatpush1.msra.mxu0 0.0
        %7174 = vmatprep.subr.mxu0 0.0
        %7175 = vmatpush1.msra.mxu0 0.0
        %7176 = vmatprep.subr.mxu0 0.0
        %7177 = vmatpush1.msra.mxu0 0.0
        %7178 = vmatprep.subr.mxu0 0.0
        %7179 = vmatpush1.msra.mxu0 0.0
        %7180 = vmatprep.subr.mxu0 0.0
        %7181 = vmatpush1.msra.mxu0 0.0
        %7182 = vmatprep.subr.mxu0 0.0
        %7183 = vmatpush1.msra.mxu0 0.0
        %7184 = vmatprep.subr.mxu0 0.0
        %7185 = vmatpush1.msra.mxu0 0.0
        %7186 = vmatprep.subr.mxu0 0.0
        %7187 = vmatpush1.msra.mxu0 0.0
        %7188 = vmatprep.subr.mxu0 0.0
        %7189 = vmatpush1.msra.mxu0 0.0
        %7190 = vmatprep.subr.mxu0 0.0
        %7191 = vmatpush1.msra.mxu0 0.0
        %7192 = vmatprep.subr.mxu0 0.0
        %7193 = vmatpush1.msra.mxu0 0.0
        %7194 = vmatprep.subr.mxu0 0.0
        %7195 = vmatpush1.msra.mxu0 0.0
        %7196 = vmatprep.subr.mxu0 0.0
        %7197 = vmatpush1.msra.mxu0 0.0
        %7198 = vmatprep.subr.mxu0 0.0
        %7199 = vmatpush1.msra.mxu0 0.0
        %7200 = vmatprep.subr.mxu0 0.0
        %7201 = vmatpush1.msra.mxu0 0.0
        %v7202 = vand.u32 %v7011, 4294901760
        %v7203 = vsub.f32 %v7011, %v7202
        %7204 = vmatprep.subr.mxu0 %v7203
        %v7205 = vand.u32 %v7010, 4294901760
        %v7206 = vsub.f32 %v7010, %v7205
        %7207 = vmatpush1.msra.mxu0 %v7206
        %7208 = vmatprep.subr.mxu0 0.0
        %7209 = vmatpush2.msra.mxu0 0.0
        %7210 = vmatprep.subr.mxu0 0.0
        %7211 = vmatpush2.msra.mxu0 0.0
        %7212 = vmatprep.subr.mxu0 0.0
        %7213 = vmatpush2.msra.mxu0 0.0
        %7214 = vmatprep.subr.mxu0 0.0
        %7215 = vmatpush2.msra.mxu0 0.0
        %7216 = vmatprep.subr.mxu0 0.0
        %7217 = vmatpush2.msra.mxu0 0.0
        %7218 = vmatprep.subr.mxu0 0.0
        %7219 = vmatpush2.msra.mxu0 0.0
        %7220 = vmatprep.subr.mxu0 0.0
        %7221 = vmatpush2.msra.mxu0 0.0
        %7222 = vmatprep.subr.mxu0 0.0
        %7223 = vmatpush2.msra.mxu0 0.0
        %7224 = vmatprep.subr.mxu0 0.0
        %7225 = vmatpush2.msra.mxu0 0.0
        %7226 = vmatprep.subr.mxu0 0.0
        %7227 = vmatpush2.msra.mxu0 0.0
        %7228 = vmatprep.subr.mxu0 0.0
        %7229 = vmatpush2.msra.mxu0 0.0
        %7230 = vmatprep.subr.mxu0 0.0
        %7231 = vmatpush2.msra.mxu0 0.0
        %7232 = vmatprep.subr.mxu0 0.0
        %7233 = vmatpush2.msra.mxu0 0.0
        %7234 = vmatprep.subr.mxu0 0.0
        %7235 = vmatpush2.msra.mxu0 0.0
        %7236 = vmatprep.subr.mxu0 0.0
        %7237 = vmatpush2.msra.mxu0 0.0
        %7238 = vmatprep.subr.mxu0 0.0
        %7239 = vmatpush2.msra.mxu0 0.0
        %7240 = vmatprep.mubr.f32.mxu0 0.0
        %v7241 = vand.u32 %v1317, 4294901760
        %v7242 = vsub.f32 %v1317, %v7241
        %7243 = vmatmul.mubr.f32.gmra.mxu0 %v7242
        %v7244 = vpop.f32.mrf.mxu0
        %v7245 = vadd.f32 %v7168, %v7244
        %v7246 = vpop.f32.mrf.mxu0
        %v7247 = vadd.f32 %v7170, %v7246
        %7248 = vdwg.mxu0
        %7249 = vmatprep.subr.mxu0 0.0
        %7250 = vmatpush1.msra.mxu0 0.0
        %7251 = vmatprep.subr.mxu0 0.0
        %7252 = vmatpush1.msra.mxu0 0.0
        %7253 = vmatprep.subr.mxu0 0.0
        %7254 = vmatpush1.msra.mxu0 0.0
        %7255 = vmatprep.subr.mxu0 0.0
        %7256 = vmatpush1.msra.mxu0 0.0
        %7257 = vmatprep.subr.mxu0 0.0
        %7258 = vmatpush1.msra.mxu0 0.0
        %7259 = vmatprep.subr.mxu0 0.0
        %7260 = vmatpush1.msra.mxu0 0.0
        %7261 = vmatprep.subr.mxu0 0.0
        %7262 = vmatpush1.msra.mxu0 0.0
        %7263 = vmatprep.subr.mxu0 0.0
        %7264 = vmatpush1.msra.mxu0 0.0
        %7265 = vmatprep.subr.mxu0 0.0
        %7266 = vmatpush1.msra.mxu0 0.0
        %7267 = vmatprep.subr.mxu0 0.0
        %7268 = vmatpush1.msra.mxu0 0.0
        %7269 = vmatprep.subr.mxu0 0.0
        %7270 = vmatpush1.msra.mxu0 0.0
        %7271 = vmatprep.subr.mxu0 0.0
        %7272 = vmatpush1.msra.mxu0 0.0
        %7273 = vmatprep.subr.mxu0 0.0
        %7274 = vmatpush1.msra.mxu0 0.0
        %7275 = vmatprep.subr.mxu0 0.0
        %7276 = vmatpush1.msra.mxu0 0.0
        %7277 = vmatprep.subr.mxu0 0.0
        %7278 = vmatpush1.msra.mxu0 0.0
        %v7279 = vand.u32 %v7011, 4294901760
        %7280 = vmatprep.subr.mxu0 %v7279
        %v7281 = vand.u32 %v7010, 4294901760
        %7282 = vmatpush1.msra.mxu0 %v7281
        %7283 = vmatprep.subr.mxu0 0.0
        %7284 = vmatpush2.msra.mxu0 0.0
        %7285 = vmatprep.subr.mxu0 0.0
        %7286 = vmatpush2.msra.mxu0 0.0
        %7287 = vmatprep.subr.mxu0 0.0
        %7288 = vmatpush2.msra.mxu0 0.0
        %7289 = vmatprep.subr.mxu0 0.0
        %7290 = vmatpush2.msra.mxu0 0.0
        %7291 = vmatprep.subr.mxu0 0.0
        %7292 = vmatpush2.msra.mxu0 0.0
        %7293 = vmatprep.subr.mxu0 0.0
        %7294 = vmatpush2.msra.mxu0 0.0
        %7295 = vmatprep.subr.mxu0 0.0
        %7296 = vmatpush2.msra.mxu0 0.0
        %7297 = vmatprep.subr.mxu0 0.0
        %7298 = vmatpush2.msra.mxu0 0.0
        %7299 = vmatprep.subr.mxu0 0.0
        %7300 = vmatpush2.msra.mxu0 0.0
        %7301 = vmatprep.subr.mxu0 0.0
        %7302 = vmatpush2.msra.mxu0 0.0
        %7303 = vmatprep.subr.mxu0 0.0
        %7304 = vmatpush2.msra.mxu0 0.0
        %7305 = vmatprep.subr.mxu0 0.0
        %7306 = vmatpush2.msra.mxu0 0.0
        %7307 = vmatprep.subr.mxu0 0.0
        %7308 = vmatpush2.msra.mxu0 0.0
        %7309 = vmatprep.subr.mxu0 0.0
        %7310 = vmatpush2.msra.mxu0 0.0
        %7311 = vmatprep.subr.mxu0 0.0
        %7312 = vmatpush2.msra.mxu0 0.0
        %7313 = vmatprep.subr.mxu0 0.0
        %7314 = vmatpush2.msra.mxu0 0.0
        %7315 = vmatprep.mubr.f32.mxu0 0.0
        %v7316 = vand.u32 %v1317, 4294901760
        %v7317 = vsub.f32 %v1317, %v7316
        %v7318 = vand.u32 %v7317, 4294901760
        %7319 = vmatmul.mubr.f32.gmra.mxu0 %v7318
        %v7320 = vpop.f32.mrf.mxu0
        %v7321 = vadd.f32 %v7245, %v7320
        %v7322 = vpop.f32.mrf.mxu0
        %v7323 = vadd.f32 %v7247, %v7322
        %7324 = vdwg.mxu0
        %7325 = vmatprep.subr.mxu0 0.0
        %7326 = vmatpush1.msra.mxu0 0.0
        %7327 = vmatprep.subr.mxu0 0.0
        %7328 = vmatpush1.msra.mxu0 0.0
        %7329 = vmatprep.subr.mxu0 0.0
        %7330 = vmatpush1.msra.mxu0 0.0
        %7331 = vmatprep.subr.mxu0 0.0
        %7332 = vmatpush1.msra.mxu0 0.0
        %7333 = vmatprep.subr.mxu0 0.0
        %7334 = vmatpush1.msra.mxu0 0.0
        %7335 = vmatprep.subr.mxu0 0.0
        %7336 = vmatpush1.msra.mxu0 0.0
        %7337 = vmatprep.subr.mxu0 0.0
        %7338 = vmatpush1.msra.mxu0 0.0
        %7339 = vmatprep.subr.mxu0 0.0
        %7340 = vmatpush1.msra.mxu0 0.0
        %7341 = vmatprep.subr.mxu0 0.0
        %7342 = vmatpush1.msra.mxu0 0.0
        %7343 = vmatprep.subr.mxu0 0.0
        %7344 = vmatpush1.msra.mxu0 0.0
        %7345 = vmatprep.subr.mxu0 0.0
        %7346 = vmatpush1.msra.mxu0 0.0
        %7347 = vmatprep.subr.mxu0 0.0
        %7348 = vmatpush1.msra.mxu0 0.0
        %7349 = vmatprep.subr.mxu0 0.0
        %7350 = vmatpush1.msra.mxu0 0.0
        %7351 = vmatprep.subr.mxu0 0.0
        %7352 = vmatpush1.msra.mxu0 0.0
        %7353 = vmatprep.subr.mxu0 0.0
        %7354 = vmatpush1.msra.mxu0 0.0
        %v7355 = vand.u32 %v7011, 4294901760
        %v7356 = vsub.f32 %v7011, %v7355
        %v7357 = vand.u32 %v7356, 4294901760
        %7358 = vmatprep.subr.mxu0 %v7357
        %v7359 = vand.u32 %v7010, 4294901760
        %v7360 = vsub.f32 %v7010, %v7359
        %v7361 = vand.u32 %v7360, 4294901760
        %7362 = vmatpush1.msra.mxu0 %v7361
        %7363 = vmatprep.subr.mxu0 0.0
        %7364 = vmatpush2.msra.mxu0 0.0
        %7365 = vmatprep.subr.mxu0 0.0
        %7366 = vmatpush2.msra.mxu0 0.0
        %7367 = vmatprep.subr.mxu0 0.0
        %7368 = vmatpush2.msra.mxu0 0.0
        %7369 = vmatprep.subr.mxu0 0.0
        %7370 = vmatpush2.msra.mxu0 0.0
        %7371 = vmatprep.subr.mxu0 0.0
        %7372 = vmatpush2.msra.mxu0 0.0
        %7373 = vmatprep.subr.mxu0 0.0
        %7374 = vmatpush2.msra.mxu0 0.0
        %7375 = vmatprep.subr.mxu0 0.0
        %7376 = vmatpush2.msra.mxu0 0.0
        %7377 = vmatprep.subr.mxu0 0.0
        %7378 = vmatpush2.msra.mxu0 0.0
        %7379 = vmatprep.subr.mxu0 0.0
        %7380 = vmatpush2.msra.mxu0 0.0
        %7381 = vmatprep.subr.mxu0 0.0
        %7382 = vmatpush2.msra.mxu0 0.0
        %7383 = vmatprep.subr.mxu0 0.0
        %7384 = vmatpush2.msra.mxu0 0.0
        %7385 = vmatprep.subr.mxu0 0.0
        %7386 = vmatpush2.msra.mxu0 0.0
        %7387 = vmatprep.subr.mxu0 0.0
        %7388 = vmatpush2.msra.mxu0 0.0
        %7389 = vmatprep.subr.mxu0 0.0
        %7390 = vmatpush2.msra.mxu0 0.0
        %7391 = vmatprep.subr.mxu0 0.0
        %7392 = vmatpush2.msra.mxu0 0.0
        %7393 = vmatprep.subr.mxu0 0.0
        %7394 = vmatpush2.msra.mxu0 0.0
        %7395 = vmatprep.mubr.f32.mxu0 0.0
        %v7396 = vand.u32 %v1317, 4294901760
        %7397 = vmatmul.mubr.f32.gmra.mxu0 %v7396
        %v7398 = vpop.f32.mrf.mxu0
        %v7399 = vadd.f32 %v7321, %v7398
        %v7400 = vpop.f32.mrf.mxu0
        %v7401 = vadd.f32 %v7323, %v7400
        %7402 = vdwg.mxu0
        %7403 = vmatprep.subr.mxu0 0.0
        %7404 = vmatpush1.msra.mxu0 0.0
        %7405 = vmatprep.subr.mxu0 0.0
        %7406 = vmatpush1.msra.mxu0 0.0
        %7407 = vmatprep.subr.mxu0 0.0
        %7408 = vmatpush1.msra.mxu0 0.0
        %7409 = vmatprep.subr.mxu0 0.0
        %7410 = vmatpush1.msra.mxu0 0.0
        %7411 = vmatprep.subr.mxu0 0.0
        %7412 = vmatpush1.msra.mxu0 0.0
        %7413 = vmatprep.subr.mxu0 0.0
        %7414 = vmatpush1.msra.mxu0 0.0
        %7415 = vmatprep.subr.mxu0 0.0
        %7416 = vmatpush1.msra.mxu0 0.0
        %7417 = vmatprep.subr.mxu0 0.0
        %7418 = vmatpush1.msra.mxu0 0.0
        %7419 = vmatprep.subr.mxu0 0.0
        %7420 = vmatpush1.msra.mxu0 0.0
        %7421 = vmatprep.subr.mxu0 0.0
        %7422 = vmatpush1.msra.mxu0 0.0
        %7423 = vmatprep.subr.mxu0 0.0
        %7424 = vmatpush1.msra.mxu0 0.0
        %7425 = vmatprep.subr.mxu0 0.0
        %7426 = vmatpush1.msra.mxu0 0.0
        %7427 = vmatprep.subr.mxu0 0.0
        %7428 = vmatpush1.msra.mxu0 0.0
        %7429 = vmatprep.subr.mxu0 0.0
        %7430 = vmatpush1.msra.mxu0 0.0
        %7431 = vmatprep.subr.mxu0 0.0
        %7432 = vmatpush1.msra.mxu0 0.0
        %v7433 = vand.u32 %v7011, 4294901760
        %7434 = vmatprep.subr.mxu0 %v7433
        %v7435 = vand.u32 %v7010, 4294901760
        %7436 = vmatpush1.msra.mxu0 %v7435
        %7437 = vmatprep.subr.mxu0 0.0
        %7438 = vmatpush2.msra.mxu0 0.0
        %7439 = vmatprep.subr.mxu0 0.0
        %7440 = vmatpush2.msra.mxu0 0.0
        %7441 = vmatprep.subr.mxu0 0.0
        %7442 = vmatpush2.msra.mxu0 0.0
        %7443 = vmatprep.subr.mxu0 0.0
        %7444 = vmatpush2.msra.mxu0 0.0
        %7445 = vmatprep.subr.mxu0 0.0
        %7446 = vmatpush2.msra.mxu0 0.0
        %7447 = vmatprep.subr.mxu0 0.0
        %7448 = vmatpush2.msra.mxu0 0.0
        %7449 = vmatprep.subr.mxu0 0.0
        %7450 = vmatpush2.msra.mxu0 0.0
        %7451 = vmatprep.subr.mxu0 0.0
        %7452 = vmatpush2.msra.mxu0 0.0
        %7453 = vmatprep.subr.mxu0 0.0
        %7454 = vmatpush2.msra.mxu0 0.0
        %7455 = vmatprep.subr.mxu0 0.0
        %7456 = vmatpush2.msra.mxu0 0.0
        %7457 = vmatprep.subr.mxu0 0.0
        %7458 = vmatpush2.msra.mxu0 0.0
        %7459 = vmatprep.subr.mxu0 0.0
        %7460 = vmatpush2.msra.mxu0 0.0
        %7461 = vmatprep.subr.mxu0 0.0
        %7462 = vmatpush2.msra.mxu0 0.0
        %7463 = vmatprep.subr.mxu0 0.0
        %7464 = vmatpush2.msra.mxu0 0.0
        %7465 = vmatprep.subr.mxu0 0.0
        %7466 = vmatpush2.msra.mxu0 0.0
        %7467 = vmatprep.subr.mxu0 0.0
        %7468 = vmatpush2.msra.mxu0 0.0
        %7469 = vmatprep.mubr.f32.mxu0 0.0
        %v7470 = vand.u32 %v1317, 4294901760
        %7471 = vmatmul.mubr.f32.gmra.mxu0 %v7470
        %v7472 = vpop.f32.mrf.mxu0
        %v7473 = vadd.f32 %v7399, %v7472
        %v7474 = vpop.f32.mrf.mxu0
        %v7475 = vadd.f32 %v7401, %v7474
        %7476 = vdwg.mxu0
        %v7477 = vmax.f32 %v7473, 0.0
        %v7478 = vmax.f32 %v7475, 0.0
        %s7479 = scalar_lea.vmem %s311, 96 [#allocation5]
        %7480 = vst [vmem:[%s7479] sm:$0xff] %v7477
        %7481 = vst [vmem:[%s7479 + $0x8] sm:$0xff] %v7478
        %s7482 = scalar_lea.vmem [#allocation2], 56
        %v7483 = vld [vmem:[%s7482] sm:$0xff]
        %s7484 = scalar_lea.vmem %s4, 56
        %v7485 = vld [vmem:[%s7484] sm:$0xff]
        %7487 = vset.pattern.permute.xlu0 0
        %7488 = vperm.xlu0 %7487, %v7485
        %v7489 = vpop.permute.xlu0 %7488
        %v7492 = vsel %vm840, %v7483, 0
        %7494 = vmatprep.subr.mxu0 0.0
        %7495 = vmatpush1.msra.mxu0 0.0
        %7496 = vmatprep.subr.mxu0 0.0
        %7497 = vmatpush1.msra.mxu0 0.0
        %7498 = vmatprep.subr.mxu0 0.0
        %7499 = vmatpush1.msra.mxu0 0.0
        %7500 = vmatprep.subr.mxu0 0.0
        %7501 = vmatpush1.msra.mxu0 0.0
        %7502 = vmatprep.subr.mxu0 0.0
        %7503 = vmatpush1.msra.mxu0 0.0
        %7504 = vmatprep.subr.mxu0 0.0
        %7505 = vmatpush1.msra.mxu0 0.0
        %7506 = vmatprep.subr.mxu0 0.0
        %7507 = vmatpush1.msra.mxu0 0.0
        %7508 = vmatprep.subr.mxu0 0.0
        %7509 = vmatpush1.msra.mxu0 0.0
        %7510 = vmatprep.subr.mxu0 0.0
        %7511 = vmatpush1.msra.mxu0 0.0
        %7512 = vmatprep.subr.mxu0 0.0
        %7513 = vmatpush1.msra.mxu0 0.0
        %7514 = vmatprep.subr.mxu0 0.0
        %7515 = vmatpush1.msra.mxu0 0.0
        %7516 = vmatprep.subr.mxu0 0.0
        %7517 = vmatpush1.msra.mxu0 0.0
        %7518 = vmatprep.subr.mxu0 0.0
        %7519 = vmatpush1.msra.mxu0 0.0
        %7520 = vmatprep.subr.mxu0 0.0
        %7521 = vmatpush1.msra.mxu0 0.0
        %7522 = vmatprep.subr.mxu0 0.0
        %7523 = vmatpush1.msra.mxu0 0.0
        %v7524 = vand.u32 %v830, 4294901760
        %7525 = vmatprep.subr.mxu0 %v7524
        %v7526 = vand.u32 %v829, 4294901760
        %7527 = vmatpush1.msra.mxu0 %v7526
        %7528 = vmatprep.subr.mxu0 0.0
        %7529 = vmatpush2.msra.mxu0 0.0
        %7530 = vmatprep.subr.mxu0 0.0
        %7531 = vmatpush2.msra.mxu0 0.0
        %7532 = vmatprep.subr.mxu0 0.0
        %7533 = vmatpush2.msra.mxu0 0.0
        %7534 = vmatprep.subr.mxu0 0.0
        %7535 = vmatpush2.msra.mxu0 0.0
        %7536 = vmatprep.subr.mxu0 0.0
        %7537 = vmatpush2.msra.mxu0 0.0
        %7538 = vmatprep.subr.mxu0 0.0
        %7539 = vmatpush2.msra.mxu0 0.0
        %7540 = vmatprep.subr.mxu0 0.0
        %7541 = vmatpush2.msra.mxu0 0.0
        %7542 = vmatprep.subr.mxu0 0.0
        %7543 = vmatpush2.msra.mxu0 0.0
        %7544 = vmatprep.subr.mxu0 0.0
        %7545 = vmatpush2.msra.mxu0 0.0
        %7546 = vmatprep.subr.mxu0 0.0
        %7547 = vmatpush2.msra.mxu0 0.0
        %7548 = vmatprep.subr.mxu0 0.0
        %7549 = vmatpush2.msra.mxu0 0.0
        %7550 = vmatprep.subr.mxu0 0.0
        %7551 = vmatpush2.msra.mxu0 0.0
        %7552 = vmatprep.subr.mxu0 0.0
        %7553 = vmatpush2.msra.mxu0 0.0
        %7554 = vmatprep.subr.mxu0 0.0
        %7555 = vmatpush2.msra.mxu0 0.0
        %7556 = vmatprep.subr.mxu0 0.0
        %7557 = vmatpush2.msra.mxu0 0.0
        %7558 = vmatprep.subr.mxu0 0.0
        %7559 = vmatpush2.msra.mxu0 0.0
        %7560 = vmatprep.mubr.f32.mxu0 0.0
        %v7561 = vand.u32 %v7492, 4294901760
        %v7562 = vsub.f32 %v7492, %v7561
        %v7563 = vand.u32 %v7562, 4294901760
        %v7564 = vsub.f32 %v7562, %v7563
        %v7565 = vand.u32 %v7564, 4294901760
        %7566 = vmatmul.mubr.f32.gmra.mxu0 %v7565
        %v7567 = vpop.f32.mrf.mxu0
        %v7568 = vadd.f32 %v7489, %v7567
        %v7569 = vpop.f32.mrf.mxu0
        %v7570 = vadd.f32 %v7489, %v7569
        %7571 = vdwg.mxu0
        %7572 = vmatprep.subr.mxu0 0.0
        %7573 = vmatpush1.msra.mxu0 0.0
        %7574 = vmatprep.subr.mxu0 0.0
        %7575 = vmatpush1.msra.mxu0 0.0
        %7576 = vmatprep.subr.mxu0 0.0
        %7577 = vmatpush1.msra.mxu0 0.0
        %7578 = vmatprep.subr.mxu0 0.0
        %7579 = vmatpush1.msra.mxu0 0.0
        %7580 = vmatprep.subr.mxu0 0.0
        %7581 = vmatpush1.msra.mxu0 0.0
        %7582 = vmatprep.subr.mxu0 0.0
        %7583 = vmatpush1.msra.mxu0 0.0
        %7584 = vmatprep.subr.mxu0 0.0
        %7585 = vmatpush1.msra.mxu0 0.0
        %7586 = vmatprep.subr.mxu0 0.0
        %7587 = vmatpush1.msra.mxu0 0.0
        %7588 = vmatprep.subr.mxu0 0.0
        %7589 = vmatpush1.msra.mxu0 0.0
        %7590 = vmatprep.subr.mxu0 0.0
        %7591 = vmatpush1.msra.mxu0 0.0
        %7592 = vmatprep.subr.mxu0 0.0
        %7593 = vmatpush1.msra.mxu0 0.0
        %7594 = vmatprep.subr.mxu0 0.0
        %7595 = vmatpush1.msra.mxu0 0.0
        %7596 = vmatprep.subr.mxu0 0.0
        %7597 = vmatpush1.msra.mxu0 0.0
        %7598 = vmatprep.subr.mxu0 0.0
        %7599 = vmatpush1.msra.mxu0 0.0
        %7600 = vmatprep.subr.mxu0 0.0
        %7601 = vmatpush1.msra.mxu0 0.0
        %v7602 = vand.u32 %v830, 4294901760
        %v7603 = vsub.f32 %v830, %v7602
        %v7604 = vand.u32 %v7603, 4294901760
        %v7605 = vsub.f32 %v7603, %v7604
        %v7606 = vand.u32 %v7605, 4294901760
        %7607 = vmatprep.subr.mxu0 %v7606
        %v7608 = vand.u32 %v829, 4294901760
        %v7609 = vsub.f32 %v829, %v7608
        %v7610 = vand.u32 %v7609, 4294901760
        %v7611 = vsub.f32 %v7609, %v7610
        %v7612 = vand.u32 %v7611, 4294901760
        %7613 = vmatpush1.msra.mxu0 %v7612
        %7614 = vmatprep.subr.mxu0 0.0
        %7615 = vmatpush2.msra.mxu0 0.0
        %7616 = vmatprep.subr.mxu0 0.0
        %7617 = vmatpush2.msra.mxu0 0.0
        %7618 = vmatprep.subr.mxu0 0.0
        %7619 = vmatpush2.msra.mxu0 0.0
        %7620 = vmatprep.subr.mxu0 0.0
        %7621 = vmatpush2.msra.mxu0 0.0
        %7622 = vmatprep.subr.mxu0 0.0
        %7623 = vmatpush2.msra.mxu0 0.0
        %7624 = vmatprep.subr.mxu0 0.0
        %7625 = vmatpush2.msra.mxu0 0.0
        %7626 = vmatprep.subr.mxu0 0.0
        %7627 = vmatpush2.msra.mxu0 0.0
        %7628 = vmatprep.subr.mxu0 0.0
        %7629 = vmatpush2.msra.mxu0 0.0
        %7630 = vmatprep.subr.mxu0 0.0
        %7631 = vmatpush2.msra.mxu0 0.0
        %7632 = vmatprep.subr.mxu0 0.0
        %7633 = vmatpush2.msra.mxu0 0.0
        %7634 = vmatprep.subr.mxu0 0.0
        %7635 = vmatpush2.msra.mxu0 0.0
        %7636 = vmatprep.subr.mxu0 0.0
        %7637 = vmatpush2.msra.mxu0 0.0
        %7638 = vmatprep.subr.mxu0 0.0
        %7639 = vmatpush2.msra.mxu0 0.0
        %7640 = vmatprep.subr.mxu0 0.0
        %7641 = vmatpush2.msra.mxu0 0.0
        %7642 = vmatprep.subr.mxu0 0.0
        %7643 = vmatpush2.msra.mxu0 0.0
        %7644 = vmatprep.subr.mxu0 0.0
        %7645 = vmatpush2.msra.mxu0 0.0
        %7646 = vmatprep.mubr.f32.mxu0 0.0
        %v7647 = vand.u32 %v7492, 4294901760
        %7648 = vmatmul.mubr.f32.gmra.mxu0 %v7647
        %v7649 = vpop.f32.mrf.mxu0
        %v7650 = vadd.f32 %v7568, %v7649
        %v7651 = vpop.f32.mrf.mxu0
        %v7652 = vadd.f32 %v7570, %v7651
        %7653 = vdwg.mxu0
        %7654 = vmatprep.subr.mxu0 0.0
        %7655 = vmatpush1.msra.mxu0 0.0
        %7656 = vmatprep.subr.mxu0 0.0
        %7657 = vmatpush1.msra.mxu0 0.0
        %7658 = vmatprep.subr.mxu0 0.0
        %7659 = vmatpush1.msra.mxu0 0.0
        %7660 = vmatprep.subr.mxu0 0.0
        %7661 = vmatpush1.msra.mxu0 0.0
        %7662 = vmatprep.subr.mxu0 0.0
        %7663 = vmatpush1.msra.mxu0 0.0
        %7664 = vmatprep.subr.mxu0 0.0
        %7665 = vmatpush1.msra.mxu0 0.0
        %7666 = vmatprep.subr.mxu0 0.0
        %7667 = vmatpush1.msra.mxu0 0.0
        %7668 = vmatprep.subr.mxu0 0.0
        %7669 = vmatpush1.msra.mxu0 0.0
        %7670 = vmatprep.subr.mxu0 0.0
        %7671 = vmatpush1.msra.mxu0 0.0
        %7672 = vmatprep.subr.mxu0 0.0
        %7673 = vmatpush1.msra.mxu0 0.0
        %7674 = vmatprep.subr.mxu0 0.0
        %7675 = vmatpush1.msra.mxu0 0.0
        %7676 = vmatprep.subr.mxu0 0.0
        %7677 = vmatpush1.msra.mxu0 0.0
        %7678 = vmatprep.subr.mxu0 0.0
        %7679 = vmatpush1.msra.mxu0 0.0
        %7680 = vmatprep.subr.mxu0 0.0
        %7681 = vmatpush1.msra.mxu0 0.0
        %7682 = vmatprep.subr.mxu0 0.0
        %7683 = vmatpush1.msra.mxu0 0.0
        %v7684 = vand.u32 %v830, 4294901760
        %v7685 = vsub.f32 %v830, %v7684
        %7686 = vmatprep.subr.mxu0 %v7685
        %v7687 = vand.u32 %v829, 4294901760
        %v7688 = vsub.f32 %v829, %v7687
        %7689 = vmatpush1.msra.mxu0 %v7688
        %7690 = vmatprep.subr.mxu0 0.0
        %7691 = vmatpush2.msra.mxu0 0.0
        %7692 = vmatprep.subr.mxu0 0.0
        %7693 = vmatpush2.msra.mxu0 0.0
        %7694 = vmatprep.subr.mxu0 0.0
        %7695 = vmatpush2.msra.mxu0 0.0
        %7696 = vmatprep.subr.mxu0 0.0
        %7697 = vmatpush2.msra.mxu0 0.0
        %7698 = vmatprep.subr.mxu0 0.0
        %7699 = vmatpush2.msra.mxu0 0.0
        %7700 = vmatprep.subr.mxu0 0.0
        %7701 = vmatpush2.msra.mxu0 0.0
        %7702 = vmatprep.subr.mxu0 0.0
        %7703 = vmatpush2.msra.mxu0 0.0
        %7704 = vmatprep.subr.mxu0 0.0
        %7705 = vmatpush2.msra.mxu0 0.0
        %7706 = vmatprep.subr.mxu0 0.0
        %7707 = vmatpush2.msra.mxu0 0.0
        %7708 = vmatprep.subr.mxu0 0.0
        %7709 = vmatpush2.msra.mxu0 0.0
        %7710 = vmatprep.subr.mxu0 0.0
        %7711 = vmatpush2.msra.mxu0 0.0
        %7712 = vmatprep.subr.mxu0 0.0
        %7713 = vmatpush2.msra.mxu0 0.0
        %7714 = vmatprep.subr.mxu0 0.0
        %7715 = vmatpush2.msra.mxu0 0.0
        %7716 = vmatprep.subr.mxu0 0.0
        %7717 = vmatpush2.msra.mxu0 0.0
        %7718 = vmatprep.subr.mxu0 0.0
        %7719 = vmatpush2.msra.mxu0 0.0
        %7720 = vmatprep.subr.mxu0 0.0
        %7721 = vmatpush2.msra.mxu0 0.0
        %7722 = vmatprep.mubr.f32.mxu0 0.0
        %v7723 = vand.u32 %v7492, 4294901760
        %v7724 = vsub.f32 %v7492, %v7723
        %7725 = vmatmul.mubr.f32.gmra.mxu0 %v7724
        %v7726 = vpop.f32.mrf.mxu0
        %v7727 = vadd.f32 %v7650, %v7726
        %v7728 = vpop.f32.mrf.mxu0
        %v7729 = vadd.f32 %v7652, %v7728
        %7730 = vdwg.mxu0
        %7731 = vmatprep.subr.mxu0 0.0
        %7732 = vmatpush1.msra.mxu0 0.0
        %7733 = vmatprep.subr.mxu0 0.0
        %7734 = vmatpush1.msra.mxu0 0.0
        %7735 = vmatprep.subr.mxu0 0.0
        %7736 = vmatpush1.msra.mxu0 0.0
        %7737 = vmatprep.subr.mxu0 0.0
        %7738 = vmatpush1.msra.mxu0 0.0
        %7739 = vmatprep.subr.mxu0 0.0
        %7740 = vmatpush1.msra.mxu0 0.0
        %7741 = vmatprep.subr.mxu0 0.0
        %7742 = vmatpush1.msra.mxu0 0.0
        %7743 = vmatprep.subr.mxu0 0.0
        %7744 = vmatpush1.msra.mxu0 0.0
        %7745 = vmatprep.subr.mxu0 0.0
        %7746 = vmatpush1.msra.mxu0 0.0
        %7747 = vmatprep.subr.mxu0 0.0
        %7748 = vmatpush1.msra.mxu0 0.0
        %7749 = vmatprep.subr.mxu0 0.0
        %7750 = vmatpush1.msra.mxu0 0.0
        %7751 = vmatprep.subr.mxu0 0.0
        %7752 = vmatpush1.msra.mxu0 0.0
        %7753 = vmatprep.subr.mxu0 0.0
        %7754 = vmatpush1.msra.mxu0 0.0
        %7755 = vmatprep.subr.mxu0 0.0
        %7756 = vmatpush1.msra.mxu0 0.0
        %7757 = vmatprep.subr.mxu0 0.0
        %7758 = vmatpush1.msra.mxu0 0.0
        %7759 = vmatprep.subr.mxu0 0.0
        %7760 = vmatpush1.msra.mxu0 0.0
        %v7761 = vand.u32 %v830, 4294901760
        %7762 = vmatprep.subr.mxu0 %v7761
        %v7763 = vand.u32 %v829, 4294901760
        %7764 = vmatpush1.msra.mxu0 %v7763
        %7765 = vmatprep.subr.mxu0 0.0
        %7766 = vmatpush2.msra.mxu0 0.0
        %7767 = vmatprep.subr.mxu0 0.0
        %7768 = vmatpush2.msra.mxu0 0.0
        %7769 = vmatprep.subr.mxu0 0.0
        %7770 = vmatpush2.msra.mxu0 0.0
        %7771 = vmatprep.subr.mxu0 0.0
        %7772 = vmatpush2.msra.mxu0 0.0
        %7773 = vmatprep.subr.mxu0 0.0
        %7774 = vmatpush2.msra.mxu0 0.0
        %7775 = vmatprep.subr.mxu0 0.0
        %7776 = vmatpush2.msra.mxu0 0.0
        %7777 = vmatprep.subr.mxu0 0.0
        %7778 = vmatpush2.msra.mxu0 0.0
        %7779 = vmatprep.subr.mxu0 0.0
        %7780 = vmatpush2.msra.mxu0 0.0
        %7781 = vmatprep.subr.mxu0 0.0
        %7782 = vmatpush2.msra.mxu0 0.0
        %7783 = vmatprep.subr.mxu0 0.0
        %7784 = vmatpush2.msra.mxu0 0.0
        %7785 = vmatprep.subr.mxu0 0.0
        %7786 = vmatpush2.msra.mxu0 0.0
        %7787 = vmatprep.subr.mxu0 0.0
        %7788 = vmatpush2.msra.mxu0 0.0
        %7789 = vmatprep.subr.mxu0 0.0
        %7790 = vmatpush2.msra.mxu0 0.0
        %7791 = vmatprep.subr.mxu0 0.0
        %7792 = vmatpush2.msra.mxu0 0.0
        %7793 = vmatprep.subr.mxu0 0.0
        %7794 = vmatpush2.msra.mxu0 0.0
        %7795 = vmatprep.subr.mxu0 0.0
        %7796 = vmatpush2.msra.mxu0 0.0
        %7797 = vmatprep.mubr.f32.mxu0 0.0
        %v7798 = vand.u32 %v7492, 4294901760
        %v7799 = vsub.f32 %v7492, %v7798
        %v7800 = vand.u32 %v7799, 4294901760
        %7801 = vmatmul.mubr.f32.gmra.mxu0 %v7800
        %v7802 = vpop.f32.mrf.mxu0
        %v7803 = vadd.f32 %v7727, %v7802
        %v7804 = vpop.f32.mrf.mxu0
        %v7805 = vadd.f32 %v7729, %v7804
        %7806 = vdwg.mxu0
        %7807 = vmatprep.subr.mxu0 0.0
        %7808 = vmatpush1.msra.mxu0 0.0
        %7809 = vmatprep.subr.mxu0 0.0
        %7810 = vmatpush1.msra.mxu0 0.0
        %7811 = vmatprep.subr.mxu0 0.0
        %7812 = vmatpush1.msra.mxu0 0.0
        %7813 = vmatprep.subr.mxu0 0.0
        %7814 = vmatpush1.msra.mxu0 0.0
        %7815 = vmatprep.subr.mxu0 0.0
        %7816 = vmatpush1.msra.mxu0 0.0
        %7817 = vmatprep.subr.mxu0 0.0
        %7818 = vmatpush1.msra.mxu0 0.0
        %7819 = vmatprep.subr.mxu0 0.0
        %7820 = vmatpush1.msra.mxu0 0.0
        %7821 = vmatprep.subr.mxu0 0.0
        %7822 = vmatpush1.msra.mxu0 0.0
        %7823 = vmatprep.subr.mxu0 0.0
        %7824 = vmatpush1.msra.mxu0 0.0
        %7825 = vmatprep.subr.mxu0 0.0
        %7826 = vmatpush1.msra.mxu0 0.0
        %7827 = vmatprep.subr.mxu0 0.0
        %7828 = vmatpush1.msra.mxu0 0.0
        %7829 = vmatprep.subr.mxu0 0.0
        %7830 = vmatpush1.msra.mxu0 0.0
        %7831 = vmatprep.subr.mxu0 0.0
        %7832 = vmatpush1.msra.mxu0 0.0
        %7833 = vmatprep.subr.mxu0 0.0
        %7834 = vmatpush1.msra.mxu0 0.0
        %7835 = vmatprep.subr.mxu0 0.0
        %7836 = vmatpush1.msra.mxu0 0.0
        %v7837 = vand.u32 %v830, 4294901760
        %v7838 = vsub.f32 %v830, %v7837
        %v7839 = vand.u32 %v7838, 4294901760
        %7840 = vmatprep.subr.mxu0 %v7839
        %v7841 = vand.u32 %v829, 4294901760
        %v7842 = vsub.f32 %v829, %v7841
        %v7843 = vand.u32 %v7842, 4294901760
        %7844 = vmatpush1.msra.mxu0 %v7843
        %7845 = vmatprep.subr.mxu0 0.0
        %7846 = vmatpush2.msra.mxu0 0.0
        %7847 = vmatprep.subr.mxu0 0.0
        %7848 = vmatpush2.msra.mxu0 0.0
        %7849 = vmatprep.subr.mxu0 0.0
        %7850 = vmatpush2.msra.mxu0 0.0
        %7851 = vmatprep.subr.mxu0 0.0
        %7852 = vmatpush2.msra.mxu0 0.0
        %7853 = vmatprep.subr.mxu0 0.0
        %7854 = vmatpush2.msra.mxu0 0.0
        %7855 = vmatprep.subr.mxu0 0.0
        %7856 = vmatpush2.msra.mxu0 0.0
        %7857 = vmatprep.subr.mxu0 0.0
        %7858 = vmatpush2.msra.mxu0 0.0
        %7859 = vmatprep.subr.mxu0 0.0
        %7860 = vmatpush2.msra.mxu0 0.0
        %7861 = vmatprep.subr.mxu0 0.0
        %7862 = vmatpush2.msra.mxu0 0.0
        %7863 = vmatprep.subr.mxu0 0.0
        %7864 = vmatpush2.msra.mxu0 0.0
        %7865 = vmatprep.subr.mxu0 0.0
        %7866 = vmatpush2.msra.mxu0 0.0
        %7867 = vmatprep.subr.mxu0 0.0
        %7868 = vmatpush2.msra.mxu0 0.0
        %7869 = vmatprep.subr.mxu0 0.0
        %7870 = vmatpush2.msra.mxu0 0.0
        %7871 = vmatprep.subr.mxu0 0.0
        %7872 = vmatpush2.msra.mxu0 0.0
        %7873 = vmatprep.subr.mxu0 0.0
        %7874 = vmatpush2.msra.mxu0 0.0
        %7875 = vmatprep.subr.mxu0 0.0
        %7876 = vmatpush2.msra.mxu0 0.0
        %7877 = vmatprep.mubr.f32.mxu0 0.0
        %v7878 = vand.u32 %v7492, 4294901760
        %7879 = vmatmul.mubr.f32.gmra.mxu0 %v7878
        %v7880 = vpop.f32.mrf.mxu0
        %v7881 = vadd.f32 %v7803, %v7880
        %v7882 = vpop.f32.mrf.mxu0
        %v7883 = vadd.f32 %v7805, %v7882
        %7884 = vdwg.mxu0
        %7885 = vmatprep.subr.mxu0 0.0
        %7886 = vmatpush1.msra.mxu0 0.0
        %7887 = vmatprep.subr.mxu0 0.0
        %7888 = vmatpush1.msra.mxu0 0.0
        %7889 = vmatprep.subr.mxu0 0.0
        %7890 = vmatpush1.msra.mxu0 0.0
        %7891 = vmatprep.subr.mxu0 0.0
        %7892 = vmatpush1.msra.mxu0 0.0
        %7893 = vmatprep.subr.mxu0 0.0
        %7894 = vmatpush1.msra.mxu0 0.0
        %7895 = vmatprep.subr.mxu0 0.0
        %7896 = vmatpush1.msra.mxu0 0.0
        %7897 = vmatprep.subr.mxu0 0.0
        %7898 = vmatpush1.msra.mxu0 0.0
        %7899 = vmatprep.subr.mxu0 0.0
        %7900 = vmatpush1.msra.mxu0 0.0
        %7901 = vmatprep.subr.mxu0 0.0
        %7902 = vmatpush1.msra.mxu0 0.0
        %7903 = vmatprep.subr.mxu0 0.0
        %7904 = vmatpush1.msra.mxu0 0.0
        %7905 = vmatprep.subr.mxu0 0.0
        %7906 = vmatpush1.msra.mxu0 0.0
        %7907 = vmatprep.subr.mxu0 0.0
        %7908 = vmatpush1.msra.mxu0 0.0
        %7909 = vmatprep.subr.mxu0 0.0
        %7910 = vmatpush1.msra.mxu0 0.0
        %7911 = vmatprep.subr.mxu0 0.0
        %7912 = vmatpush1.msra.mxu0 0.0
        %7913 = vmatprep.subr.mxu0 0.0
        %7914 = vmatpush1.msra.mxu0 0.0
        %v7915 = vand.u32 %v830, 4294901760
        %7916 = vmatprep.subr.mxu0 %v7915
        %v7917 = vand.u32 %v829, 4294901760
        %7918 = vmatpush1.msra.mxu0 %v7917
        %7919 = vmatprep.subr.mxu0 0.0
        %7920 = vmatpush2.msra.mxu0 0.0
        %7921 = vmatprep.subr.mxu0 0.0
        %7922 = vmatpush2.msra.mxu0 0.0
        %7923 = vmatprep.subr.mxu0 0.0
        %7924 = vmatpush2.msra.mxu0 0.0
        %7925 = vmatprep.subr.mxu0 0.0
        %7926 = vmatpush2.msra.mxu0 0.0
        %7927 = vmatprep.subr.mxu0 0.0
        %7928 = vmatpush2.msra.mxu0 0.0
        %7929 = vmatprep.subr.mxu0 0.0
        %7930 = vmatpush2.msra.mxu0 0.0
        %7931 = vmatprep.subr.mxu0 0.0
        %7932 = vmatpush2.msra.mxu0 0.0
        %7933 = vmatprep.subr.mxu0 0.0
        %7934 = vmatpush2.msra.mxu0 0.0
        %7935 = vmatprep.subr.mxu0 0.0
        %7936 = vmatpush2.msra.mxu0 0.0
        %7937 = vmatprep.subr.mxu0 0.0
        %7938 = vmatpush2.msra.mxu0 0.0
        %7939 = vmatprep.subr.mxu0 0.0
        %7940 = vmatpush2.msra.mxu0 0.0
        %7941 = vmatprep.subr.mxu0 0.0
        %7942 = vmatpush2.msra.mxu0 0.0
        %7943 = vmatprep.subr.mxu0 0.0
        %7944 = vmatpush2.msra.mxu0 0.0
        %7945 = vmatprep.subr.mxu0 0.0
        %7946 = vmatpush2.msra.mxu0 0.0
        %7947 = vmatprep.subr.mxu0 0.0
        %7948 = vmatpush2.msra.mxu0 0.0
        %7949 = vmatprep.subr.mxu0 0.0
        %7950 = vmatpush2.msra.mxu0 0.0
        %7951 = vmatprep.mubr.f32.mxu0 0.0
        %v7952 = vand.u32 %v7492, 4294901760
        %7953 = vmatmul.mubr.f32.gmra.mxu0 %v7952
        %v7954 = vpop.f32.mrf.mxu0
        %v7955 = vadd.f32 %v7881, %v7954
        %v7956 = vpop.f32.mrf.mxu0
        %v7957 = vadd.f32 %v7883, %v7956
        %7958 = vdwg.mxu0
        %v7959 = vmax.f32 %v7955, 0.0
        %v7960 = vmax.f32 %v7957, 0.0
        %7961 = vmatprep.subr.mxu0 0.0
        %7962 = vmatpush1.msra.mxu0 0.0
        %7963 = vmatprep.subr.mxu0 0.0
        %7964 = vmatpush1.msra.mxu0 0.0
        %7965 = vmatprep.subr.mxu0 0.0
        %7966 = vmatpush1.msra.mxu0 0.0
        %7967 = vmatprep.subr.mxu0 0.0
        %7968 = vmatpush1.msra.mxu0 0.0
        %7969 = vmatprep.subr.mxu0 0.0
        %7970 = vmatpush1.msra.mxu0 0.0
        %7971 = vmatprep.subr.mxu0 0.0
        %7972 = vmatpush1.msra.mxu0 0.0
        %7973 = vmatprep.subr.mxu0 0.0
        %7974 = vmatpush1.msra.mxu0 0.0
        %7975 = vmatprep.subr.mxu0 0.0
        %7976 = vmatpush1.msra.mxu0 0.0
        %7977 = vmatprep.subr.mxu0 0.0
        %7978 = vmatpush1.msra.mxu0 0.0
        %7979 = vmatprep.subr.mxu0 0.0
        %7980 = vmatpush1.msra.mxu0 0.0
        %7981 = vmatprep.subr.mxu0 0.0
        %7982 = vmatpush1.msra.mxu0 0.0
        %7983 = vmatprep.subr.mxu0 0.0
        %7984 = vmatpush1.msra.mxu0 0.0
        %7985 = vmatprep.subr.mxu0 0.0
        %7986 = vmatpush1.msra.mxu0 0.0
        %7987 = vmatprep.subr.mxu0 0.0
        %7988 = vmatpush1.msra.mxu0 0.0
        %7989 = vmatprep.subr.mxu0 0.0
        %7990 = vmatpush1.msra.mxu0 0.0
        %v7991 = vand.u32 %v7960, 4294901760
        %7992 = vmatprep.subr.mxu0 %v7991
        %v7993 = vand.u32 %v7959, 4294901760
        %7994 = vmatpush1.msra.mxu0 %v7993
        %7995 = vmatprep.subr.mxu0 0.0
        %7996 = vmatpush2.msra.mxu0 0.0
        %7997 = vmatprep.subr.mxu0 0.0
        %7998 = vmatpush2.msra.mxu0 0.0
        %7999 = vmatprep.subr.mxu0 0.0
        %8000 = vmatpush2.msra.mxu0 0.0
        %8001 = vmatprep.subr.mxu0 0.0
        %8002 = vmatpush2.msra.mxu0 0.0
        %8003 = vmatprep.subr.mxu0 0.0
        %8004 = vmatpush2.msra.mxu0 0.0
        %8005 = vmatprep.subr.mxu0 0.0
        %8006 = vmatpush2.msra.mxu0 0.0
        %8007 = vmatprep.subr.mxu0 0.0
        %8008 = vmatpush2.msra.mxu0 0.0
        %8009 = vmatprep.subr.mxu0 0.0
        %8010 = vmatpush2.msra.mxu0 0.0
        %8011 = vmatprep.subr.mxu0 0.0
        %8012 = vmatpush2.msra.mxu0 0.0
        %8013 = vmatprep.subr.mxu0 0.0
        %8014 = vmatpush2.msra.mxu0 0.0
        %8015 = vmatprep.subr.mxu0 0.0
        %8016 = vmatpush2.msra.mxu0 0.0
        %8017 = vmatprep.subr.mxu0 0.0
        %8018 = vmatpush2.msra.mxu0 0.0
        %8019 = vmatprep.subr.mxu0 0.0
        %8020 = vmatpush2.msra.mxu0 0.0
        %8021 = vmatprep.subr.mxu0 0.0
        %8022 = vmatpush2.msra.mxu0 0.0
        %8023 = vmatprep.subr.mxu0 0.0
        %8024 = vmatpush2.msra.mxu0 0.0
        %8025 = vmatprep.subr.mxu0 0.0
        %8026 = vmatpush2.msra.mxu0 0.0
        %8027 = vmatprep.mubr.f32.mxu0 0.0
        %v8028 = vand.u32 %v1317, 4294901760
        %v8029 = vsub.f32 %v1317, %v8028
        %v8030 = vand.u32 %v8029, 4294901760
        %v8031 = vsub.f32 %v8029, %v8030
        %v8032 = vand.u32 %v8031, 4294901760
        %8033 = vmatmul.mubr.f32.gmra.mxu0 %v8032
        %v8034 = vpop.f32.mrf.mxu0
        %v8035 = vadd.f32 %v1314, %v8034
        %v8036 = vpop.f32.mrf.mxu0
        %v8037 = vadd.f32 %v1314, %v8036
        %8038 = vdwg.mxu0
        %8039 = vmatprep.subr.mxu0 0.0
        %8040 = vmatpush1.msra.mxu0 0.0
        %8041 = vmatprep.subr.mxu0 0.0
        %8042 = vmatpush1.msra.mxu0 0.0
        %8043 = vmatprep.subr.mxu0 0.0
        %8044 = vmatpush1.msra.mxu0 0.0
        %8045 = vmatprep.subr.mxu0 0.0
        %8046 = vmatpush1.msra.mxu0 0.0
        %8047 = vmatprep.subr.mxu0 0.0
        %8048 = vmatpush1.msra.mxu0 0.0
        %8049 = vmatprep.subr.mxu0 0.0
        %8050 = vmatpush1.msra.mxu0 0.0
        %8051 = vmatprep.subr.mxu0 0.0
        %8052 = vmatpush1.msra.mxu0 0.0
        %8053 = vmatprep.subr.mxu0 0.0
        %8054 = vmatpush1.msra.mxu0 0.0
        %8055 = vmatprep.subr.mxu0 0.0
        %8056 = vmatpush1.msra.mxu0 0.0
        %8057 = vmatprep.subr.mxu0 0.0
        %8058 = vmatpush1.msra.mxu0 0.0
        %8059 = vmatprep.subr.mxu0 0.0
        %8060 = vmatpush1.msra.mxu0 0.0
        %8061 = vmatprep.subr.mxu0 0.0
        %8062 = vmatpush1.msra.mxu0 0.0
        %8063 = vmatprep.subr.mxu0 0.0
        %8064 = vmatpush1.msra.mxu0 0.0
        %8065 = vmatprep.subr.mxu0 0.0
        %8066 = vmatpush1.msra.mxu0 0.0
        %8067 = vmatprep.subr.mxu0 0.0
        %8068 = vmatpush1.msra.mxu0 0.0
        %v8069 = vand.u32 %v7960, 4294901760
        %v8070 = vsub.f32 %v7960, %v8069
        %v8071 = vand.u32 %v8070, 4294901760
        %v8072 = vsub.f32 %v8070, %v8071
        %v8073 = vand.u32 %v8072, 4294901760
        %8074 = vmatprep.subr.mxu0 %v8073
        %v8075 = vand.u32 %v7959, 4294901760
        %v8076 = vsub.f32 %v7959, %v8075
        %v8077 = vand.u32 %v8076, 4294901760
        %v8078 = vsub.f32 %v8076, %v8077
        %v8079 = vand.u32 %v8078, 4294901760
        %8080 = vmatpush1.msra.mxu0 %v8079
        %8081 = vmatprep.subr.mxu0 0.0
        %8082 = vmatpush2.msra.mxu0 0.0
        %8083 = vmatprep.subr.mxu0 0.0
        %8084 = vmatpush2.msra.mxu0 0.0
        %8085 = vmatprep.subr.mxu0 0.0
        %8086 = vmatpush2.msra.mxu0 0.0
        %8087 = vmatprep.subr.mxu0 0.0
        %8088 = vmatpush2.msra.mxu0 0.0
        %8089 = vmatprep.subr.mxu0 0.0
        %8090 = vmatpush2.msra.mxu0 0.0
        %8091 = vmatprep.subr.mxu0 0.0
        %8092 = vmatpush2.msra.mxu0 0.0
        %8093 = vmatprep.subr.mxu0 0.0
        %8094 = vmatpush2.msra.mxu0 0.0
        %8095 = vmatprep.subr.mxu0 0.0
        %8096 = vmatpush2.msra.mxu0 0.0
        %8097 = vmatprep.subr.mxu0 0.0
        %8098 = vmatpush2.msra.mxu0 0.0
        %8099 = vmatprep.subr.mxu0 0.0
        %8100 = vmatpush2.msra.mxu0 0.0
        %8101 = vmatprep.subr.mxu0 0.0
        %8102 = vmatpush2.msra.mxu0 0.0
        %8103 = vmatprep.subr.mxu0 0.0
        %8104 = vmatpush2.msra.mxu0 0.0
        %8105 = vmatprep.subr.mxu0 0.0
        %8106 = vmatpush2.msra.mxu0 0.0
        %8107 = vmatprep.subr.mxu0 0.0
        %8108 = vmatpush2.msra.mxu0 0.0
        %8109 = vmatprep.subr.mxu0 0.0
        %8110 = vmatpush2.msra.mxu0 0.0
        %8111 = vmatprep.subr.mxu0 0.0
        %8112 = vmatpush2.msra.mxu0 0.0
        %8113 = vmatprep.mubr.f32.mxu0 0.0
        %v8114 = vand.u32 %v1317, 4294901760
        %8115 = vmatmul.mubr.f32.gmra.mxu0 %v8114
        %v8116 = vpop.f32.mrf.mxu0
        %v8117 = vadd.f32 %v8035, %v8116
        %v8118 = vpop.f32.mrf.mxu0
        %v8119 = vadd.f32 %v8037, %v8118
        %8120 = vdwg.mxu0
        %8121 = vmatprep.subr.mxu0 0.0
        %8122 = vmatpush1.msra.mxu0 0.0
        %8123 = vmatprep.subr.mxu0 0.0
        %8124 = vmatpush1.msra.mxu0 0.0
        %8125 = vmatprep.subr.mxu0 0.0
        %8126 = vmatpush1.msra.mxu0 0.0
        %8127 = vmatprep.subr.mxu0 0.0
        %8128 = vmatpush1.msra.mxu0 0.0
        %8129 = vmatprep.subr.mxu0 0.0
        %8130 = vmatpush1.msra.mxu0 0.0
        %8131 = vmatprep.subr.mxu0 0.0
        %8132 = vmatpush1.msra.mxu0 0.0
        %8133 = vmatprep.subr.mxu0 0.0
        %8134 = vmatpush1.msra.mxu0 0.0
        %8135 = vmatprep.subr.mxu0 0.0
        %8136 = vmatpush1.msra.mxu0 0.0
        %8137 = vmatprep.subr.mxu0 0.0
        %8138 = vmatpush1.msra.mxu0 0.0
        %8139 = vmatprep.subr.mxu0 0.0
        %8140 = vmatpush1.msra.mxu0 0.0
        %8141 = vmatprep.subr.mxu0 0.0
        %8142 = vmatpush1.msra.mxu0 0.0
        %8143 = vmatprep.subr.mxu0 0.0
        %8144 = vmatpush1.msra.mxu0 0.0
        %8145 = vmatprep.subr.mxu0 0.0
        %8146 = vmatpush1.msra.mxu0 0.0
        %8147 = vmatprep.subr.mxu0 0.0
        %8148 = vmatpush1.msra.mxu0 0.0
        %8149 = vmatprep.subr.mxu0 0.0
        %8150 = vmatpush1.msra.mxu0 0.0
        %v8151 = vand.u32 %v7960, 4294901760
        %v8152 = vsub.f32 %v7960, %v8151
        %8153 = vmatprep.subr.mxu0 %v8152
        %v8154 = vand.u32 %v7959, 4294901760
        %v8155 = vsub.f32 %v7959, %v8154
        %8156 = vmatpush1.msra.mxu0 %v8155
        %8157 = vmatprep.subr.mxu0 0.0
        %8158 = vmatpush2.msra.mxu0 0.0
        %8159 = vmatprep.subr.mxu0 0.0
        %8160 = vmatpush2.msra.mxu0 0.0
        %8161 = vmatprep.subr.mxu0 0.0
        %8162 = vmatpush2.msra.mxu0 0.0
        %8163 = vmatprep.subr.mxu0 0.0
        %8164 = vmatpush2.msra.mxu0 0.0
        %8165 = vmatprep.subr.mxu0 0.0
        %8166 = vmatpush2.msra.mxu0 0.0
        %8167 = vmatprep.subr.mxu0 0.0
        %8168 = vmatpush2.msra.mxu0 0.0
        %8169 = vmatprep.subr.mxu0 0.0
        %8170 = vmatpush2.msra.mxu0 0.0
        %8171 = vmatprep.subr.mxu0 0.0
        %8172 = vmatpush2.msra.mxu0 0.0
        %8173 = vmatprep.subr.mxu0 0.0
        %8174 = vmatpush2.msra.mxu0 0.0
        %8175 = vmatprep.subr.mxu0 0.0
        %8176 = vmatpush2.msra.mxu0 0.0
        %8177 = vmatprep.subr.mxu0 0.0
        %8178 = vmatpush2.msra.mxu0 0.0
        %8179 = vmatprep.subr.mxu0 0.0
        %8180 = vmatpush2.msra.mxu0 0.0
        %8181 = vmatprep.subr.mxu0 0.0
        %8182 = vmatpush2.msra.mxu0 0.0
        %8183 = vmatprep.subr.mxu0 0.0
        %8184 = vmatpush2.msra.mxu0 0.0
        %8185 = vmatprep.subr.mxu0 0.0
        %8186 = vmatpush2.msra.mxu0 0.0
        %8187 = vmatprep.subr.mxu0 0.0
        %8188 = vmatpush2.msra.mxu0 0.0
        %8189 = vmatprep.mubr.f32.mxu0 0.0
        %v8190 = vand.u32 %v1317, 4294901760
        %v8191 = vsub.f32 %v1317, %v8190
        %8192 = vmatmul.mubr.f32.gmra.mxu0 %v8191
        %v8193 = vpop.f32.mrf.mxu0
        %v8194 = vadd.f32 %v8117, %v8193
        %v8195 = vpop.f32.mrf.mxu0
        %v8196 = vadd.f32 %v8119, %v8195
        %8197 = vdwg.mxu0
        %8198 = vmatprep.subr.mxu0 0.0
        %8199 = vmatpush1.msra.mxu0 0.0
        %8200 = vmatprep.subr.mxu0 0.0
        %8201 = vmatpush1.msra.mxu0 0.0
        %8202 = vmatprep.subr.mxu0 0.0
        %8203 = vmatpush1.msra.mxu0 0.0
        %8204 = vmatprep.subr.mxu0 0.0
        %8205 = vmatpush1.msra.mxu0 0.0
        %8206 = vmatprep.subr.mxu0 0.0
        %8207 = vmatpush1.msra.mxu0 0.0
        %8208 = vmatprep.subr.mxu0 0.0
        %8209 = vmatpush1.msra.mxu0 0.0
        %8210 = vmatprep.subr.mxu0 0.0
        %8211 = vmatpush1.msra.mxu0 0.0
        %8212 = vmatprep.subr.mxu0 0.0
        %8213 = vmatpush1.msra.mxu0 0.0
        %8214 = vmatprep.subr.mxu0 0.0
        %8215 = vmatpush1.msra.mxu0 0.0
        %8216 = vmatprep.subr.mxu0 0.0
        %8217 = vmatpush1.msra.mxu0 0.0
        %8218 = vmatprep.subr.mxu0 0.0
        %8219 = vmatpush1.msra.mxu0 0.0
        %8220 = vmatprep.subr.mxu0 0.0
        %8221 = vmatpush1.msra.mxu0 0.0
        %8222 = vmatprep.subr.mxu0 0.0
        %8223 = vmatpush1.msra.mxu0 0.0
        %8224 = vmatprep.subr.mxu0 0.0
        %8225 = vmatpush1.msra.mxu0 0.0
        %8226 = vmatprep.subr.mxu0 0.0
        %8227 = vmatpush1.msra.mxu0 0.0
        %v8228 = vand.u32 %v7960, 4294901760
        %8229 = vmatprep.subr.mxu0 %v8228
        %v8230 = vand.u32 %v7959, 4294901760
        %8231 = vmatpush1.msra.mxu0 %v8230
        %8232 = vmatprep.subr.mxu0 0.0
        %8233 = vmatpush2.msra.mxu0 0.0
        %8234 = vmatprep.subr.mxu0 0.0
        %8235 = vmatpush2.msra.mxu0 0.0
        %8236 = vmatprep.subr.mxu0 0.0
        %8237 = vmatpush2.msra.mxu0 0.0
        %8238 = vmatprep.subr.mxu0 0.0
        %8239 = vmatpush2.msra.mxu0 0.0
        %8240 = vmatprep.subr.mxu0 0.0
        %8241 = vmatpush2.msra.mxu0 0.0
        %8242 = vmatprep.subr.mxu0 0.0
        %8243 = vmatpush2.msra.mxu0 0.0
        %8244 = vmatprep.subr.mxu0 0.0
        %8245 = vmatpush2.msra.mxu0 0.0
        %8246 = vmatprep.subr.mxu0 0.0
        %8247 = vmatpush2.msra.mxu0 0.0
        %8248 = vmatprep.subr.mxu0 0.0
        %8249 = vmatpush2.msra.mxu0 0.0
        %8250 = vmatprep.subr.mxu0 0.0
        %8251 = vmatpush2.msra.mxu0 0.0
        %8252 = vmatprep.subr.mxu0 0.0
        %8253 = vmatpush2.msra.mxu0 0.0
        %8254 = vmatprep.subr.mxu0 0.0
        %8255 = vmatpush2.msra.mxu0 0.0
        %8256 = vmatprep.subr.mxu0 0.0
        %8257 = vmatpush2.msra.mxu0 0.0
        %8258 = vmatprep.subr.mxu0 0.0
        %8259 = vmatpush2.msra.mxu0 0.0
        %8260 = vmatprep.subr.mxu0 0.0
        %8261 = vmatpush2.msra.mxu0 0.0
        %8262 = vmatprep.subr.mxu0 0.0
        %8263 = vmatpush2.msra.mxu0 0.0
        %8264 = vmatprep.mubr.f32.mxu0 0.0
        %v8265 = vand.u32 %v1317, 4294901760
        %v8266 = vsub.f32 %v1317, %v8265
        %v8267 = vand.u32 %v8266, 4294901760
        %8268 = vmatmul.mubr.f32.gmra.mxu0 %v8267
        %v8269 = vpop.f32.mrf.mxu0
        %v8270 = vadd.f32 %v8194, %v8269
        %v8271 = vpop.f32.mrf.mxu0
        %v8272 = vadd.f32 %v8196, %v8271
        %8273 = vdwg.mxu0
        %8274 = vmatprep.subr.mxu0 0.0
        %8275 = vmatpush1.msra.mxu0 0.0
        %8276 = vmatprep.subr.mxu0 0.0
        %8277 = vmatpush1.msra.mxu0 0.0
        %8278 = vmatprep.subr.mxu0 0.0
        %8279 = vmatpush1.msra.mxu0 0.0
        %8280 = vmatprep.subr.mxu0 0.0
        %8281 = vmatpush1.msra.mxu0 0.0
        %8282 = vmatprep.subr.mxu0 0.0
        %8283 = vmatpush1.msra.mxu0 0.0
        %8284 = vmatprep.subr.mxu0 0.0
        %8285 = vmatpush1.msra.mxu0 0.0
        %8286 = vmatprep.subr.mxu0 0.0
        %8287 = vmatpush1.msra.mxu0 0.0
        %8288 = vmatprep.subr.mxu0 0.0
        %8289 = vmatpush1.msra.mxu0 0.0
        %8290 = vmatprep.subr.mxu0 0.0
        %8291 = vmatpush1.msra.mxu0 0.0
        %8292 = vmatprep.subr.mxu0 0.0
        %8293 = vmatpush1.msra.mxu0 0.0
        %8294 = vmatprep.subr.mxu0 0.0
        %8295 = vmatpush1.msra.mxu0 0.0
        %8296 = vmatprep.subr.mxu0 0.0
        %8297 = vmatpush1.msra.mxu0 0.0
        %8298 = vmatprep.subr.mxu0 0.0
        %8299 = vmatpush1.msra.mxu0 0.0
        %8300 = vmatprep.subr.mxu0 0.0
        %8301 = vmatpush1.msra.mxu0 0.0
        %8302 = vmatprep.subr.mxu0 0.0
        %8303 = vmatpush1.msra.mxu0 0.0
        %v8304 = vand.u32 %v7960, 4294901760
        %v8305 = vsub.f32 %v7960, %v8304
        %v8306 = vand.u32 %v8305, 4294901760
        %8307 = vmatprep.subr.mxu0 %v8306
        %v8308 = vand.u32 %v7959, 4294901760
        %v8309 = vsub.f32 %v7959, %v8308
        %v8310 = vand.u32 %v8309, 4294901760
        %8311 = vmatpush1.msra.mxu0 %v8310
        %8312 = vmatprep.subr.mxu0 0.0
        %8313 = vmatpush2.msra.mxu0 0.0
        %8314 = vmatprep.subr.mxu0 0.0
        %8315 = vmatpush2.msra.mxu0 0.0
        %8316 = vmatprep.subr.mxu0 0.0
        %8317 = vmatpush2.msra.mxu0 0.0
        %8318 = vmatprep.subr.mxu0 0.0
        %8319 = vmatpush2.msra.mxu0 0.0
        %8320 = vmatprep.subr.mxu0 0.0
        %8321 = vmatpush2.msra.mxu0 0.0
        %8322 = vmatprep.subr.mxu0 0.0
        %8323 = vmatpush2.msra.mxu0 0.0
        %8324 = vmatprep.subr.mxu0 0.0
        %8325 = vmatpush2.msra.mxu0 0.0
        %8326 = vmatprep.subr.mxu0 0.0
        %8327 = vmatpush2.msra.mxu0 0.0
        %8328 = vmatprep.subr.mxu0 0.0
        %8329 = vmatpush2.msra.mxu0 0.0
        %8330 = vmatprep.subr.mxu0 0.0
        %8331 = vmatpush2.msra.mxu0 0.0
        %8332 = vmatprep.subr.mxu0 0.0
        %8333 = vmatpush2.msra.mxu0 0.0
        %8334 = vmatprep.subr.mxu0 0.0
        %8335 = vmatpush2.msra.mxu0 0.0
        %8336 = vmatprep.subr.mxu0 0.0
        %8337 = vmatpush2.msra.mxu0 0.0
        %8338 = vmatprep.subr.mxu0 0.0
        %8339 = vmatpush2.msra.mxu0 0.0
        %8340 = vmatprep.subr.mxu0 0.0
        %8341 = vmatpush2.msra.mxu0 0.0
        %8342 = vmatprep.subr.mxu0 0.0
        %8343 = vmatpush2.msra.mxu0 0.0
        %8344 = vmatprep.mubr.f32.mxu0 0.0
        %v8345 = vand.u32 %v1317, 4294901760
        %8346 = vmatmul.mubr.f32.gmra.mxu0 %v8345
        %v8347 = vpop.f32.mrf.mxu0
        %v8348 = vadd.f32 %v8270, %v8347
        %v8349 = vpop.f32.mrf.mxu0
        %v8350 = vadd.f32 %v8272, %v8349
        %8351 = vdwg.mxu0
        %8352 = vmatprep.subr.mxu0 0.0
        %8353 = vmatpush1.msra.mxu0 0.0
        %8354 = vmatprep.subr.mxu0 0.0
        %8355 = vmatpush1.msra.mxu0 0.0
        %8356 = vmatprep.subr.mxu0 0.0
        %8357 = vmatpush1.msra.mxu0 0.0
        %8358 = vmatprep.subr.mxu0 0.0
        %8359 = vmatpush1.msra.mxu0 0.0
        %8360 = vmatprep.subr.mxu0 0.0
        %8361 = vmatpush1.msra.mxu0 0.0
        %8362 = vmatprep.subr.mxu0 0.0
        %8363 = vmatpush1.msra.mxu0 0.0
        %8364 = vmatprep.subr.mxu0 0.0
        %8365 = vmatpush1.msra.mxu0 0.0
        %8366 = vmatprep.subr.mxu0 0.0
        %8367 = vmatpush1.msra.mxu0 0.0
        %8368 = vmatprep.subr.mxu0 0.0
        %8369 = vmatpush1.msra.mxu0 0.0
        %8370 = vmatprep.subr.mxu0 0.0
        %8371 = vmatpush1.msra.mxu0 0.0
        %8372 = vmatprep.subr.mxu0 0.0
        %8373 = vmatpush1.msra.mxu0 0.0
        %8374 = vmatprep.subr.mxu0 0.0
        %8375 = vmatpush1.msra.mxu0 0.0
        %8376 = vmatprep.subr.mxu0 0.0
        %8377 = vmatpush1.msra.mxu0 0.0
        %8378 = vmatprep.subr.mxu0 0.0
        %8379 = vmatpush1.msra.mxu0 0.0
        %8380 = vmatprep.subr.mxu0 0.0
        %8381 = vmatpush1.msra.mxu0 0.0
        %v8382 = vand.u32 %v7960, 4294901760
        %8383 = vmatprep.subr.mxu0 %v8382
        %v8384 = vand.u32 %v7959, 4294901760
        %8385 = vmatpush1.msra.mxu0 %v8384
        %8386 = vmatprep.subr.mxu0 0.0
        %8387 = vmatpush2.msra.mxu0 0.0
        %8388 = vmatprep.subr.mxu0 0.0
        %8389 = vmatpush2.msra.mxu0 0.0
        %8390 = vmatprep.subr.mxu0 0.0
        %8391 = vmatpush2.msra.mxu0 0.0
        %8392 = vmatprep.subr.mxu0 0.0
        %8393 = vmatpush2.msra.mxu0 0.0
        %8394 = vmatprep.subr.mxu0 0.0
        %8395 = vmatpush2.msra.mxu0 0.0
        %8396 = vmatprep.subr.mxu0 0.0
        %8397 = vmatpush2.msra.mxu0 0.0
        %8398 = vmatprep.subr.mxu0 0.0
        %8399 = vmatpush2.msra.mxu0 0.0
        %8400 = vmatprep.subr.mxu0 0.0
        %8401 = vmatpush2.msra.mxu0 0.0
        %8402 = vmatprep.subr.mxu0 0.0
        %8403 = vmatpush2.msra.mxu0 0.0
        %8404 = vmatprep.subr.mxu0 0.0
        %8405 = vmatpush2.msra.mxu0 0.0
        %8406 = vmatprep.subr.mxu0 0.0
        %8407 = vmatpush2.msra.mxu0 0.0
        %8408 = vmatprep.subr.mxu0 0.0
        %8409 = vmatpush2.msra.mxu0 0.0
        %8410 = vmatprep.subr.mxu0 0.0
        %8411 = vmatpush2.msra.mxu0 0.0
        %8412 = vmatprep.subr.mxu0 0.0
        %8413 = vmatpush2.msra.mxu0 0.0
        %8414 = vmatprep.subr.mxu0 0.0
        %8415 = vmatpush2.msra.mxu0 0.0
        %8416 = vmatprep.subr.mxu0 0.0
        %8417 = vmatpush2.msra.mxu0 0.0
        %8418 = vmatprep.mubr.f32.mxu0 0.0
        %v8419 = vand.u32 %v1317, 4294901760
        %8420 = vmatmul.mubr.f32.gmra.mxu0 %v8419
        %v8421 = vpop.f32.mrf.mxu0
        %v8422 = vadd.f32 %v8348, %v8421
        %v8423 = vpop.f32.mrf.mxu0
        %v8424 = vadd.f32 %v8350, %v8423
        %8425 = vdwg.mxu0
        %v8426 = vmax.f32 %v8422, 0.0
        %v8427 = vmax.f32 %v8424, 0.0
        %s8428 = scalar_lea.vmem %s311, 112 [#allocation5]
        %8429 = vst [vmem:[%s8428] sm:$0xff] %v8426
        %8430 = vst [vmem:[%s8428 + $0x8] sm:$0xff] %v8427
        %s8431 = sand.u32 %s198, 1
        %s8432 = scalar_lea.sflag [#allocation4], %s8431
        %s8433 = sand.u32 %s198, 1
        %s8434 = smul.addr %s8433, 128
        %s8435 = scalar_lea.vmem [#allocation5], %s8434
        // Predicated region
        $region53: #{tpu_custom_call.1} parent=47 // pred_check
          %p8436 = pneg %p208
        $region54: #{tpu_custom_call.1} parent=47 // pred_check_branch
          %8438 = sbr.rel (%p8436) target = $region56
        $region55: #{tpu_custom_call.1} parent=47 // pred_region
          %s8439 = smul.u32 2, %s27
          %s8441 = ssub.s32 2048, 2048
          %8442 = vsyncadd %s8432, %s8441
          %s8443 = smul.addr %s26, 16
          %s8444 = sadd.s32 %s8439, %s8443
          %s8445 = smul.addr %s8444, 128
          %s8446 = scalar_lea.hbm %s7, %s8445
          %s8447 = sshll.u32 %s8435, 4
          %s8448 = int_to_ptr.vmem [resolvable:$true] %s8447
          %8453 = dma.vmem_to_hbm [thread:$0]  %s8448, 2048, %s8446, %s8432, 256, 256, 16
        $region56: #{tpu_custom_call.1} parent=47 // pred_fallthru
          _
      $region48: #{tpu_custom_call.1} parent=5 // pred_fallthru
        _
      %p8454 = scmp.le.s32.totalorder 2, %s17
      // Predicated region
      $region57: #{tpu_custom_call.1} parent=5 // pred_check
        %p8455 = pneg %p8454
      $region58: #{tpu_custom_call.1} parent=5 // pred_check_branch
        %8457 = sbr.rel (%p8455) target = $region60
      $region59: #{tpu_custom_call.1} parent=5 // pred_region
        %s8458 = ssub.s32 %s17, 2
        // Predicated region
        $region61: #{tpu_custom_call.1} parent=59 // pred_check
          %p8459 = pneg %p214
        $region62: #{tpu_custom_call.1} parent=59 // pred_check_branch
          %8461 = sbr.rel (%p8459) target = $region64
        $region63: #{tpu_custom_call.1} parent=59 // pred_region
          %s8462 = sand.u32 %s199, 1
          %s8463 = scalar_lea.sflag [#allocation4], %s8462
          %s8464 = sand.u32 %s199, 1
          %s8465 = smul.addr %s8464, 128
          %s8466 = scalar_lea.vmem [#allocation5], %s8465
          %8467 = dma.done %s8463, 2048
        $region64: #{tpu_custom_call.1} parent=59 // pred_fallthru
          _
      $region60: #{tpu_custom_call.1} parent=5 // pred_fallthru
        _
    $region6: #{tpu_custom_call.1} parent=1 // loop_footer
      %s21 = sadd.s32 1, %s17
    $region7: #{tpu_custom_call.1} parent=1 // loop_footer_branch
      %16 = sbr.rel target = $region3
    $region8: #{tpu_custom_call.1} parent=1 // loop_exit
      _
    %8468 = vsyncpa [#allocation3], 1
    %s8469 = scalar_lea.sflag [#allocation3], 1
    %8470 = vsyncpa %s8469, 1
    %8471 = vsyncpa [#allocation4], 1
    %s8472 = scalar_lea.sflag [#allocation4], 1
    %8473 = vsyncpa %s8472, 1

</llo_original>
